<compile_context>
chip_gen: v7x
topology: tpu7x:2x2x1
jax: 0.10.0
libtpu: 0.0.40
codegen_flags: <defaults>
</compile_context>

<pallas_src>
import functools

import jax
import jax.numpy as jnp
from jax.experimental import pallas as pl
from jax.experimental.pallas import tpu as pltpu


def _round_up(x, m):
    return (x + m - 1) // m * m


# ----------------------------------------------------------------------------
# Tiled linear:  y = act(x @ w + b)
# ----------------------------------------------------------------------------
def _linear_kernel(x_ref, w_ref, b_ref, o_ref, acc_ref, *, act):
    k = pl.program_id(2)

    @pl.when(k == 0)
    def _():
        acc_ref[...] = jnp.zeros_like(acc_ref)

    acc_ref[...] += jnp.dot(x_ref[...], w_ref[...],
                            preferred_element_type=jnp.float32)

    @pl.when(k == pl.num_programs(2) - 1)
    def _():
        y = acc_ref[...] + b_ref[...]        # bias / epilogue in f32
        if act == "relu":
            y = jnp.maximum(y, 0.0)
        o_ref[...] = y.astype(o_ref.dtype)


def linear(x, w, b, act=None, out_dtype=jnp.float32):
    """x: (M, K) f32, w: (K, N) f32, b: (N,) f32.  MXU operands are bf16,
    accumulation is f32.  Inputs are zero-padded up to tile multiples."""
    M, K = x.shape
    N = w.shape[1]
    # Tile sizes: small enough for v7x's 64 MiB VMEM even with double
    # buffering, big enough to hit the HBM roofline.
    tm = min(256, _round_up(M, 8))
    tn = min(256, _round_up(N, 128))
    tk = min(512, _round_up(K, 128))
    Mp, Np, Kp = _round_up(M, tm), _round_up(N, tn), _round_up(K, tk)

    xp = x.astype(jnp.bfloat16)
    wp = w.astype(jnp.bfloat16)
    if (Mp, Kp) != (M, K):
        xp = jnp.pad(xp, ((0, Mp - M), (0, Kp - K)))
    if (Kp, Np) != (K, N):
        wp = jnp.pad(wp, ((0, Kp - K), (0, Np - N)))
    bp = b.astype(jnp.float32).reshape(1, N)
    if Np != N:
        bp = jnp.pad(bp, ((0, 0), (0, Np - N)))

    grid = (Mp // tm, Np // tn, Kp // tk)
    out = pl.pallas_call(
        functools.partial(_linear_kernel, act=act),
        out_shape=jax.ShapeDtypeStruct((Mp, Np), out_dtype),
        grid=grid,
        in_specs=[pl.BlockSpec((tm, tk), lambda i, j, k: (i, k)),
                  pl.BlockSpec((tk, tn), lambda i, j, k: (k, j)),
                  pl.BlockSpec((1, tn), lambda i, j, k: (0, j))],
        out_specs=pl.BlockSpec((tm, tn), lambda i, j, k: (i, j)),
        scratch_shapes=[pltpu.VMEM((tm, tn), jnp.float32)],
        compiler_params=pltpu.CompilerParams(
            dimension_semantics=("parallel", "parallel", "arbitrary")),
        cost_estimate=pl.CostEstimate(
            flops=2 * Mp * Np * Kp,
            transcendentals=0,
            bytes_accessed=(Mp * Kp + Kp * Np) * 2 + Mp * Np * 4),
    )(xp, wp, bp)
    if (Mp, Np) != (M, N):
        out = out[:M, :N]
    return out


# ----------------------------------------------------------------------------
# 2x2 / stride-2 max pool (single pass over HBM)
# ----------------------------------------------------------------------------
def _maxpool_kernel(x_ref, o_ref, *, C):
    x = x_ref[...]                                 # (rb, Wo, 2C): [even-w | odd-w]
    w = jnp.maximum(x[:, :, :C], x[:, :, C:])      # pool along W (lane slices)
    w = w.reshape(w.shape[0] // 2, 2, w.shape[1], C)   # leading-dim regroup (free)
    o_ref[...] = jnp.maximum(w[:, 0], w[:, 1])     # pool along H


def maxpool2(x):
    """x: (N, H, W, C) NHWC -> (N, H//2, W//2, C)."""
    N, H, W, C = x.shape
    Ho, Wo = H // 2, W // 2
    x = x[:, :2 * Ho, :2 * Wo, :]                  # drop odd remainder (PyTorch floor)
    # Free reshape: lanes become [C channels of even w | C channels of odd w].
    xr = x.reshape(N * 2 * Ho, Wo, 2 * C)
    nb = 8 if N % 8 == 0 else (4 if N % 4 == 0 else (2 if N % 2 == 0 else 1))
    rb = nb * 2 * Ho
    grid = (N * 2 * Ho // rb,)
    y = pl.pallas_call(
        functools.partial(_maxpool_kernel, C=C),
        out_shape=jax.ShapeDtypeStruct((N * Ho, Wo, C), x.dtype),
        grid=grid,
        in_specs=[pl.BlockSpec((rb, Wo, 2 * C), lambda i: (i, 0, 0))],
        out_specs=pl.BlockSpec((rb // 2, Wo, C), lambda i: (i, 0, 0)),
        compiler_params=pltpu.CompilerParams(dimension_semantics=("parallel",)),
    )(xr)
    return y.reshape(N, Ho, Wo, C)


def conv2d_relu(x, w, b):
    """Valid conv, stride 1, + ReLU.  x: (N,H,W,Cin) NHWC; w: (Cout,Cin,kh,kw)."""
    N, H, W, Cin = x.shape
    Cout, _, kh, kw = w.shape
    Ho, Wo = H - kh + 1, W - kw + 1
    cols = []
    for i in range(kh):
        for j in range(kw):
            cols.append(x[:, i:i + Ho, j:j + Wo, :])
    patches = jnp.stack(cols, axis=3).reshape(N * Ho * Wo, kh * kw * Cin)
    wm = jnp.transpose(w, (2, 3, 1, 0)).reshape(kh * kw * Cin, Cout)
    y = linear(patches, wm, b, act="relu")          # matmul hot path in Pallas
    return y.reshape(N, Ho, Wo, Cout)


# ----------------------------------------------------------------------------
# Bidirectional LSTM recurrence
#   * grid = (2 directions ["parallel" -> 2nd TC on v7x], T/Tb time blocks)
#   * Tb time steps per grid iteration (static unroll)
#   * gate order (i, f, o, g): weights are permuted in the wrapper.
# ----------------------------------------------------------------------------
def _lstm_block_kernel(xg_ref, m_ref, whh_ref, hseq_ref, hn_ref, cn_ref,
                       h_sc, c_sc, *, H, Tb):
    tb = pl.program_id(1)

    @pl.when(tb == 0)
    def _():
        h_sc[...] = jnp.zeros_like(h_sc)
        c_sc[...] = jnp.zeros_like(c_sc)

    xg = xg_ref[0]            # (B, Tb, 4H)  bf16
    mm = m_ref[...]           # (B, Tb, 1)   f32; 1.0 while t < length[b]
    whh = whh_ref[0]          # (H, 4H)      bf16
    h = h_sc[...]             # f32 carries
    c = c_sc[...]

    def sigmoid(z):           # EUP exp + EUP approx reciprocal
        return pl.reciprocal(1.0 + jnp.exp(-z), approx=True)

    for s in range(Tb):       # small static unroll
        g = xg[:, s, :].astype(jnp.float32) + jnp.dot(
            h.astype(jnp.bfloat16), whh, preferred_element_type=jnp.float32)
        ifo = sigmoid(g[:, :3 * H])            # contiguous (i, f, o) slab
        i_g = ifo[:, :H]
        f_g = ifo[:, H:2 * H]
        o_g = ifo[:, 2 * H:]
        g_g = jnp.tanh(g[:, 3 * H:])
        c_new = f_g * c + i_g * g_g
        h_new = o_g * jnp.tanh(c_new)
        m = mm[:, s, :]                         # (B, 1)
        c = m * c_new + (1.0 - m) * c           # padded steps don't advance state
        h = m * h_new + (1.0 - m) * h
        hseq_ref[0, :, s, :] = (m * h_new).astype(hseq_ref.dtype)  # zeros when padded

    h_sc[...] = h
    c_sc[...] = c

    @pl.when(tb == pl.num_programs(1) - 1)
    def _():
        hn_ref[0] = h
        cn_ref[0] = c


def lstm_recurrence(xg, mask, whh, H, Tb=8):
    """Both directions of one LSTM layer.
       xg  : (2, B, Tp, 4H) bf16 = x@W_ih^T + b_ih + b_hh (precomputed, reordered)
       mask: (B, Tp, 1) f32
       whh : (2, H, 4H) bf16
       Returns h_seq (2,B,Tp,H), h_n (2,B,H), c_n (2,B,H)."""
    _, B, Tp, _ = xg.shape
    nblk = Tp // Tb
    return pl.pallas_call(
        functools.partial(_lstm_block_kernel, H=H, Tb=Tb),
        out_shape=(jax.ShapeDtypeStruct((2, B, Tp, H), jnp.float32),
                   jax.ShapeDtypeStruct((2, B, H), jnp.float32),
                   jax.ShapeDtypeStruct((2, B, H), jnp.float32)),
        grid=(2, nblk),
        in_specs=[pl.BlockSpec((1, B, Tb, 4 * H), lambda d, t: (d, 0, t, 0)),
                  pl.BlockSpec((B, Tb, 1), lambda d, t: (0, t, 0)),
                  pl.BlockSpec((1, H, 4 * H), lambda d, t: (d, 0, 0))],
        out_specs=(pl.BlockSpec((1, B, Tb, H), lambda d, t: (d, 0, t, 0)),
                   pl.BlockSpec((1, B, H), lambda d, t: (d, 0, 0)),
                   pl.BlockSpec((1, B, H), lambda d, t: (d, 0, 0))),
        scratch_shapes=[pltpu.VMEM((B, H), jnp.float32),
                        pltpu.VMEM((B, H), jnp.float32)],
        compiler_params=pltpu.CompilerParams(
            dimension_semantics=("parallel", "arbitrary")),
        cost_estimate=pl.CostEstimate(
            flops=2 * Tp * B * 2 * H * 4 * H,
            transcendentals=2 * Tp * B * 6 * H,
            bytes_accessed=2 * B * Tp * 4 * H * 2 + 2 * B * Tp * H * 4),
    )(xg, mask, whh)


def _reorder_gates(w, H, axis=0):
    """PyTorch gate order (i, f, g, o) -> kernel order (i, f, o, g)."""
    i, f, g, o = jnp.split(w, 4, axis=axis)
    return jnp.concatenate([i, f, o, g], axis=axis)


# ----------------------------------------------------------------------------
# Parameters (deterministic, synthetic)
# ----------------------------------------------------------------------------
def init_params(key, *, img_h, img_w, input_size=128, hidden=64, num_layers=2,
                num_directions=2, output_size=27, embed_out=128):
    ks = iter(jax.random.split(key, 64))

    def u(shape, k):
        return jax.random.uniform(next(ks), shape, jnp.float32, -k, k)

    # TODO(synk): Lenet5.LeNet5 source is not provided; classic LeNet-5 topology assumed
    # (conv5x5->6, pool2, conv5x5->16, pool2, fc->120, fc->84, fc->embed_out).
    side = lambda s: ((s - 4) // 2 - 4) // 2
    flat = side(img_h) * side(img_w) * 16
    p = {}
    p["c1_w"] = u((6, 1, 5, 5), (1 * 25) ** -0.5)
    p["c1_b"] = u((6,), (1 * 25) ** -0.5)
    p["c2_w"] = u((16, 6, 5, 5), (6 * 25) ** -0.5)
    p["c2_b"] = u((16,), (6 * 25) ** -0.5)
    p["f1_w"] = u((120, flat), flat ** -0.5)
    p["f1_b"] = u((120,), flat ** -0.5)
    p["f2_w"] = u((84, 120), 120 ** -0.5)
    p["f2_b"] = u((84,), 120 ** -0.5)
    p["f3_w"] = u((embed_out, 84), 84 ** -0.5)
    p["f3_b"] = u((embed_out,), 84 ** -0.5)
    # bilstm (PyTorch gate order i, f, g, o — reordered to i,f,o,g at use time)
    kH = hidden ** -0.5
    for l in range(num_layers):
        in_l = input_size if l == 0 else hidden * num_directions
        for d in range(num_directions):
            p[f"w_ih_{l}_{d}"] = u((4 * hidden, in_l), kH)
            p[f"w_hh_{l}_{d}"] = u((4 * hidden, hidden), kH)
            p[f"b_ih_{l}_{d}"] = u((4 * hidden,), kH)
            p[f"b_hh_{l}_{d}"] = u((4 * hidden,), kH)
    # biout
    fin = hidden * num_directions
    p["out_w"] = u((output_size, fin), fin ** -0.5)
    p["out_b"] = u((output_size,), fin ** -0.5)
    return p


# ----------------------------------------------------------------------------
# EncoderLSTM forward
# ----------------------------------------------------------------------------
def encoder_lstm_forward(params, source_inputs, source_lengths, *, hidden, num_layers=2):
    bs, ts, cn, h, w = source_inputs.shape
    x = source_inputs.reshape(bs * ts, cn, h, w)

    # --- self.embed = LeNet5 ---
    x = jnp.transpose(x, (0, 2, 3, 1))                              # NCHW -> NHWC
    x = conv2d_relu(x, params["c1_w"], params["c1_b"])
    x = maxpool2(x)
    x = conv2d_relu(x, params["c2_w"], params["c2_b"])
    x = maxpool2(x)
    x = jnp.transpose(x, (0, 3, 1, 2)).reshape(bs * ts, -1)         # NCHW flatten order
    x = linear(x, params["f1_w"].T, params["f1_b"], act="relu")
    x = linear(x, params["f2_w"].T, params["f2_b"], act="relu")
    x = linear(x, params["f3_w"].T, params["f3_b"])
    embed = x.reshape(bs, ts, -1)                                   # (B, T, 128)

    # --- packed bidirectional 2-layer LSTM (enforce_sorted=True, zero init state) ---
    # pack_padded / pad_packed semantics reproduced with a length mask:
    # padded time steps emit zeros and do not advance the (h, c) carry.
    T = ts  # lengths[0] == ts (sorted descending), so pad_packed restores full length
    H = hidden
    Tb = 8
    Tp = _round_up(T, Tb)          # time padding is harmless: mask is 0 there
    mask = (jnp.arange(Tp)[None, :] < source_lengths[:, None]
            ).astype(jnp.float32)[:, :, None]                       # (B, Tp, 1)

    def reverse_padded(seq):  # per-sequence time reversal over the first len[b] steps
        L = seq.shape[1]
        t_idx = jnp.arange(L)[None, :]
        rev = source_lengths[:, None] - 1 - t_idx
        valid = rev >= 0
        rev = jnp.clip(rev, 0, L - 1)
        out = jnp.take_along_axis(seq, rev[:, :, None], axis=1)
        return jnp.where(valid[:, :, None], out, 0.0)

    layer_in = embed
    h_n, c_n = [], []
    for l in range(num_layers):
        xg_dirs, whh_dirs = [], []
        for d in range(2):
            xin = layer_in if d == 0 else reverse_padded(layer_in)
            w_ih = _reorder_gates(params[f"w_ih_{l}_{d}"], H)
            w_hh = _reorder_gates(params[f"w_hh_{l}_{d}"], H)
            bias = _reorder_gates(params[f"b_ih_{l}_{d}"] + params[f"b_hh_{l}_{d}"], H)
            # Input projection (Pallas tiled matmul), emitted directly in bf16.
            xg = linear(xin.reshape(bs * T, -1), w_ih.T, bias,
                        out_dtype=jnp.bfloat16).reshape(bs, T, 4 * H)
            if Tp != T:
                xg = jnp.pad(xg, ((0, 0), (0, Tp - T), (0, 0)))
            xg_dirs.append(xg)
            whh_dirs.append(w_hh.T.astype(jnp.bfloat16))
        xg_all = jnp.stack(xg_dirs, axis=0)                         # (2, B, Tp, 4H)
        whh_all = jnp.stack(whh_dirs, axis=0)                       # (2, H, 4H)
        h_seq, hn, cn_ = lstm_recurrence(xg_all, mask, whh_all, H, Tb=Tb)
        h_seq = h_seq[:, :, :T, :]
        fwd = h_seq[0]
        bwd = reverse_padded(h_seq[1])
        layer_in = jnp.concatenate([fwd, bwd], axis=-1)             # (B, T, 2H)
        h_n.extend([hn[0], hn[1]])
        c_n.extend([cn_[0], cn_[1]])
        # Note: the module constructs nn.LSTM without a dropout kwarg, so no dropout here.

    lstm_out = layer_in

    # --- self.biout ---
    out = linear(lstm_out.reshape(bs * T, -1), params["out_w"].T, params["out_b"])
    outputs = out.reshape(bs, T, -1)
    hiddens = (jnp.stack(h_n, axis=0), jnp.stack(c_n, axis=0))      # (num_layer*2, B, H)
    return outputs, hiddens


# ----------------------------------------------------------------------------
if __name__ == "__main__":
    key = jax.random.PRNGKey(0)
    pkey, xkey = jax.random.split(key)

    # Small shapes consistent with the module's forward (B, T, C, H, W).
    bs, ts, cn, img_h, img_w = 2, 8, 1, 32, 32
    HIDDEN = 64          # Hidden_size (small for the example; default is 512)
    NUM_LAYERS = 2
    OUTPUT_SIZE = 27

    params = init_params(pkey, img_h=img_h, img_w=img_w, input_size=128,
                         hidden=HIDDEN, num_layers=NUM_LAYERS, num_directions=2,
                         output_size=OUTPUT_SIZE, embed_out=128)

    source_inputs = jax.random.normal(xkey, (bs, ts, cn, img_h, img_w), jnp.float32)
    source_lengths = jnp.array([8, 6], dtype=jnp.int32)  # sorted descending (enforce_sorted=True)

    fwd = jax.jit(functools.partial(encoder_lstm_forward,
                                    hidden=HIDDEN, num_layers=NUM_LAYERS))
    outputs, (h_n, c_n) = fwd(params, source_inputs, source_lengths)
    jax.block_until_ready((outputs, h_n, c_n))

    assert outputs.shape == (bs, ts, OUTPUT_SIZE)
    assert h_n.shape == (NUM_LAYERS * 2, bs, HIDDEN)
    assert c_n.shape == (NUM_LAYERS * 2, bs, HIDDEN)
    print("KERNEL_OK")
</pallas_src>

<mosaic_0001>
module attributes {stable_mosaic.version = 11 : i64} {
  func.func @_linear_kernel(%arg0: i32, %arg1: i32, %arg2: i32, %arg3: memref<256x128xbf16, #tpu.memory_space<vmem>>, %arg4: memref<128x128xbf16, #tpu.memory_space<vmem>>, %arg5: memref<1x128xf32, #tpu.memory_space<vmem>>, %arg6: memref<256x128xf32, #tpu.memory_space<vmem>>, %arg7: memref<256x128xf32, #tpu.memory_space<vmem>>) attributes {dimension_semantics = [#tpu.dimension_semantics<parallel>, #tpu.dimension_semantics<parallel>, #tpu.dimension_semantics<arbitrary>], iteration_bounds = array<i64: 49, 1, 1>, scalar_prefetch = 0 : i64, scratch_operands = 1 : i64, tpu.core_type = #tpu.core_type<tc>, window_params = [{transform_indices = @transform_0, window_bounds = array<i64: 256, 128>}, {transform_indices = @transform_1, window_bounds = array<i64: 128, 128>}, {transform_indices = @transform_2, window_bounds = array<i64: 1, 128>}, {transform_indices = @transform_3, window_bounds = array<i64: 256, 128>}]} {
    %c0_i32 = arith.constant 0 : i32
    %0 = arith.cmpi eq, %arg2, %c0_i32 : i32
    %1 = arith.extui %0 : i1 to i32
    %c0_i32_0 = arith.constant 0 : i32
    %2 = arith.cmpi ne, %1, %c0_i32_0 : i32
    scf.if %2 {
      %cst_10 = arith.constant 0.000000e+00 : f32
      %12 = vector.broadcast %cst_10 : f32 to vector<256x128xf32>
      %c0_11 = arith.constant 0 : index
      %c0_12 = arith.constant 0 : index
      %13 = vector.load %arg7[%c0_11, %c0_12] : memref<256x128xf32, #tpu.memory_space<vmem>>, vector<256x128xf32>
      tpu.vector_store %arg7[%c0_11, %c0_12], %12 {strides = array<i32>} : memref<256x128xf32, #tpu.memory_space<vmem>>, vector<256x128xf32>,
    } else {
    }
    %c0 = arith.constant 0 : index
    %c0_1 = arith.constant 0 : index
    %3 = vector.load %arg7[%c0, %c0_1] : memref<256x128xf32, #tpu.memory_space<vmem>>, vector<256x128xf32>
    %c0_2 = arith.constant 0 : index
    %c0_3 = arith.constant 0 : index
    %4 = vector.load %arg3[%c0_2, %c0_3] : memref<256x128xbf16, #tpu.memory_space<vmem>>, vector<256x128xbf16>
    %c0_4 = arith.constant 0 : index
    %c0_5 = arith.constant 0 : index
    %5 = vector.load %arg4[%c0_4, %c0_5] : memref<128x128xbf16, #tpu.memory_space<vmem>>, vector<128x128xbf16>
    %cst = arith.constant dense<0.000000e+00> : vector<256x128xf32>
    %6 = tpu.matmul %4, %5, %cst {dimension_numbers = #tpu.dot_dimension_numbers<[1], [0], [0], [1], [0, 0, 1, 1], [], []>} : vector<256x128xbf16>, vector<128x128xbf16>, vector<256x128xf32> -> vector<256x128xf32>
    %7 = arith.addf %3, %6 : vector<256x128xf32>
    %c0_6 = arith.constant 0 : index
    %c0_7 = arith.constant 0 : index
    %8 = vector.load %arg7[%c0_6, %c0_7] : memref<256x128xf32, #tpu.memory_space<vmem>>, vector<256x128xf32>
    tpu.vector_store %arg7[%c0_6, %c0_7], %7 {strides = array<i32>} : memref<256x128xf32, #tpu.memory_space<vmem>>, vector<256x128xf32>,
    %c0_i32_8 = arith.constant 0 : i32
    %9 = arith.cmpi eq, %arg2, %c0_i32_8 : i32
    %10 = arith.extui %9 : i1 to i32
    %c0_i32_9 = arith.constant 0 : i32
    %11 = arith.cmpi ne, %10, %c0_i32_9 : i32
    scf.if %11 {
      %c0_10 = arith.constant 0 : index
      %c0_11 = arith.constant 0 : index
      %12 = vector.load %arg7[%c0_10, %c0_11] : memref<256x128xf32, #tpu.memory_space<vmem>>, vector<256x128xf32>
      %c0_12 = arith.constant 0 : index
      %c0_13 = arith.constant 0 : index
      %13 = vector.load %arg5[%c0_12, %c0_13] : memref<1x128xf32, #tpu.memory_space<vmem>>, vector<1x128xf32>
      %14 = vector.broadcast %13 : vector<1x128xf32> to vector<256x128xf32>
      %15 = arith.addf %12, %14 : vector<256x128xf32>
      %cst_14 = arith.constant 0.000000e+00 : f32
      %16 = vector.broadcast %cst_14 : f32 to vector<256x128xf32>
      %17 = arith.maximumf %15, %16 : vector<256x128xf32>
      %c0_15 = arith.constant 0 : index
      %c0_16 = arith.constant 0 : index
      %18 = vector.load %arg6[%c0_15, %c0_16] : memref<256x128xf32, #tpu.memory_space<vmem>>, vector<256x128xf32>
      tpu.vector_store %arg6[%c0_15, %c0_16], %17 {strides = array<i32>} : memref<256x128xf32, #tpu.memory_space<vmem>>, vector<256x128xf32>,
    } else {
    }
    return
  }
  func.func @transform_0(%arg0: i32, %arg1: i32, %arg2: i32) -> (i32, i32) {
    %c0_i32 = arith.constant 0 : i32
    return %arg0, %arg2 : i32, i32
  }
  func.func @transform_1(%arg0: i32, %arg1: i32, %arg2: i32) -> (i32, i32) {
    %c0_i32 = arith.constant 0 : i32
    return %arg2, %arg1 : i32, i32
  }
  func.func @transform_2(%arg0: i32, %arg1: i32, %arg2: i32) -> (i32, i32) {
    %c0_i32 = arith.constant 0 : i32
    %c0_i32_0 = arith.constant 0 : i32
    return %c0_i32, %arg1 : i32, i32
  }
  func.func @transform_3(%arg0: i32, %arg1: i32, %arg2: i32) -> (i32, i32) {
    %c0_i32 = arith.constant 0 : i32
    return %arg0, %arg1 : i32, i32
  }
}

module attributes {stable_mosaic.version = 11 : i64} {
  func.func @_maxpool_kernel(%arg0: i32, %arg1: memref<224x14x12xf32, #tpu.memory_space<vmem>>, %arg2: memref<112x14x6xf32, #tpu.memory_space<vmem>>) attributes {dimension_semantics = [#tpu.dimension_semantics<parallel>], iteration_bounds = array<i64: 2>, scalar_prefetch = 0 : i64, scratch_operands = 0 : i64, tpu.core_type = #tpu.core_type<tc>, window_params = [{transform_indices = @transform_0, window_bounds = array<i64: 224, 14, 12>}, {transform_indices = @transform_1, window_bounds = array<i64: 112, 14, 6>}]} {
    %c0 = arith.constant 0 : index
    %c0_0 = arith.constant 0 : index
    %c0_1 = arith.constant 0 : index
    %0 = vector.load %arg1[%c0, %c0_0, %c0_1] : memref<224x14x12xf32, #tpu.memory_space<vmem>>, vector<224x14x12xf32>
    %1 = vector.extract_strided_slice %0 {offsets = [0, 0, 0], sizes = [224, 14, 6], strides = [1, 1, 1]} : vector<224x14x12xf32> to vector<224x14x6xf32>
    %2 = vector.extract_strided_slice %0 {offsets = [0, 0, 6], sizes = [224, 14, 6], strides = [1, 1, 1]} : vector<224x14x12xf32> to vector<224x14x6xf32>
    %3 = arith.maximumf %1, %2 : vector<224x14x6xf32>
    %4 = vector.shape_cast %3 : vector<224x14x6xf32> to vector<112x2x14x6xf32>
    %5 = vector.extract_strided_slice %4 {offsets = [0, 0, 0, 0], sizes = [112, 1, 14, 6], strides = [1, 1, 1, 1]} : vector<112x2x14x6xf32> to vector<112x1x14x6xf32>
    %6 = vector.shape_cast %5 : vector<112x1x14x6xf32> to vector<112x14x6xf32>
    %7 = vector.extract_strided_slice %4 {offsets = [0, 1, 0, 0], sizes = [112, 1, 14, 6], strides = [1, 1, 1, 1]} : vector<112x2x14x6xf32> to vector<112x1x14x6xf32>
    %8 = vector.shape_cast %7 : vector<112x1x14x6xf32> to vector<112x14x6xf32>
    %9 = arith.maximumf %6, %8 : vector<112x14x6xf32>
    %c0_2 = arith.constant 0 : index
    %c0_3 = arith.constant 0 : index
    %c0_4 = arith.constant 0 : index
    %10 = vector.load %arg2[%c0_2, %c0_3, %c0_4] : memref<112x14x6xf32, #tpu.memory_space<vmem>>, vector<112x14x6xf32>
    tpu.vector_store %arg2[%c0_2, %c0_3, %c0_4], %9 {strides = array<i32>} : memref<112x14x6xf32, #tpu.memory_space<vmem>>, vector<112x14x6xf32>,
    return
  }
  func.func @transform_0(%arg0: i32) -> (i32, i32, i32) {
    %c0_i32 = arith.constant 0 : i32
    %c0_i32_0 = arith.constant 0 : i32
    %c0_i32_1 = arith.constant 0 : i32
    return %arg0, %c0_i32, %c0_i32_0 : i32, i32, i32
  }
  func.func @transform_1(%arg0: i32) -> (i32, i32, i32) {
    %c0_i32 = arith.constant 0 : i32
    %c0_i32_0 = arith.constant 0 : i32
    %c0_i32_1 = arith.constant 0 : i32
    return %arg0, %c0_i32, %c0_i32_0 : i32, i32, i32
  }
}

module attributes {stable_mosaic.version = 11 : i64} {
  func.func @_linear_kernel(%arg0: i32, %arg1: i32, %arg2: i32, %arg3: memref<256x256xbf16, #tpu.memory_space<vmem>>, %arg4: memref<256x128xbf16, #tpu.memory_space<vmem>>, %arg5: memref<1x128xf32, #tpu.memory_space<vmem>>, %arg6: memref<256x128xf32, #tpu.memory_space<vmem>>, %arg7: memref<256x128xf32, #tpu.memory_space<vmem>>) attributes {dimension_semantics = [#tpu.dimension_semantics<parallel>, #tpu.dimension_semantics<parallel>, #tpu.dimension_semantics<arbitrary>], iteration_bounds = array<i64: 7, 1, 1>, scalar_prefetch = 0 : i64, scratch_operands = 1 : i64, tpu.core_type = #tpu.core_type<tc>, window_params = [{transform_indices = @transform_0, window_bounds = array<i64: 256, 256>}, {transform_indices = @transform_1, window_bounds = array<i64: 256, 128>}, {transform_indices = @transform_2, window_bounds = array<i64: 1, 128>}, {transform_indices = @transform_3, window_bounds = array<i64: 256, 128>}]} {
    %c0_i32 = arith.constant 0 : i32
    %0 = arith.cmpi eq, %arg2, %c0_i32 : i32
    %1 = arith.extui %0 : i1 to i32
    %c0_i32_0 = arith.constant 0 : i32
    %2 = arith.cmpi ne, %1, %c0_i32_0 : i32
    scf.if %2 {
      %cst_10 = arith.constant 0.000000e+00 : f32
      %12 = vector.broadcast %cst_10 : f32 to vector<256x128xf32>
      %c0_11 = arith.constant 0 : index
      %c0_12 = arith.constant 0 : index
      %13 = vector.load %arg7[%c0_11, %c0_12] : memref<256x128xf32, #tpu.memory_space<vmem>>, vector<256x128xf32>
      tpu.vector_store %arg7[%c0_11, %c0_12], %12 {strides = array<i32>} : memref<256x128xf32, #tpu.memory_space<vmem>>, vector<256x128xf32>,
    } else {
    }
    %c0 = arith.constant 0 : index
    %c0_1 = arith.constant 0 : index
    %3 = vector.load %arg7[%c0, %c0_1] : memref<256x128xf32, #tpu.memory_space<vmem>>, vector<256x128xf32>
    %c0_2 = arith.constant 0 : index
    %c0_3 = arith.constant 0 : index
    %4 = vector.load %arg3[%c0_2, %c0_3] : memref<256x256xbf16, #tpu.memory_space<vmem>>, vector<256x256xbf16>
    %c0_4 = arith.constant 0 : index
    %c0_5 = arith.constant 0 : index
    %5 = vector.load %arg4[%c0_4, %c0_5] : memref<256x128xbf16, #tpu.memory_space<vmem>>, vector<256x128xbf16>
    %cst = arith.constant dense<0.000000e+00> : vector<256x128xf32>
    %6 = tpu.matmul %4, %5, %cst {dimension_numbers = #tpu.dot_dimension_numbers<[1], [0], [0], [1], [0, 0, 1, 1], [], []>} : vector<256x256xbf16>, vector<256x128xbf16>, vector<256x128xf32> -> vector<256x128xf32>
    %7 = arith.addf %3, %6 : vector<256x128xf32>
    %c0_6 = arith.constant 0 : index
    %c0_7 = arith.constant 0 : index
    %8 = vector.load %arg7[%c0_6, %c0_7] : memref<256x128xf32, #tpu.memory_space<vmem>>, vector<256x128xf32>
    tpu.vector_store %arg7[%c0_6, %c0_7], %7 {strides = array<i32>} : memref<256x128xf32, #tpu.memory_space<vmem>>, vector<256x128xf32>,
    %c0_i32_8 = arith.constant 0 : i32
    %9 = arith.cmpi eq, %arg2, %c0_i32_8 : i32
    %10 = arith.extui %9 : i1 to i32
    %c0_i32_9 = arith.constant 0 : i32
    %11 = arith.cmpi ne, %10, %c0_i32_9 : i32
    scf.if %11 {
      %c0_10 = arith.constant 0 : index
      %c0_11 = arith.constant 0 : index
      %12 = vector.load %arg7[%c0_10, %c0_11] : memref<256x128xf32, #tpu.memory_space<vmem>>, vector<256x128xf32>
      %c0_12 = arith.constant 0 : index
      %c0_13 = arith.constant 0 : index
      %13 = vector.load %arg5[%c0_12, %c0_13] : memref<1x128xf32, #tpu.memory_space<vmem>>, vector<1x128xf32>
      %14 = vector.broadcast %13 : vector<1x128xf32> to vector<256x128xf32>
      %15 = arith.addf %12, %14 : vector<256x128xf32>
      %cst_14 = arith.constant 0.000000e+00 : f32
      %16 = vector.broadcast %cst_14 : f32 to vector<256x128xf32>
      %17 = arith.maximumf %15, %16 : vector<256x128xf32>
      %c0_15 = arith.constant 0 : index
      %c0_16 = arith.constant 0 : index
      %18 = vector.load %arg6[%c0_15, %c0_16] : memref<256x128xf32, #tpu.memory_space<vmem>>, vector<256x128xf32>
      tpu.vector_store %arg6[%c0_15, %c0_16], %17 {strides = array<i32>} : memref<256x128xf32, #tpu.memory_space<vmem>>, vector<256x128xf32>,
    } else {
    }
    return
  }
  func.func @transform_0(%arg0: i32, %arg1: i32, %arg2: i32) -> (i32, i32) {
    %c0_i32 = arith.constant 0 : i32
    return %arg0, %arg2 : i32, i32
  }
  func.func @transform_1(%arg0: i32, %arg1: i32, %arg2: i32) -> (i32, i32) {
    %c0_i32 = arith.constant 0 : i32
    return %arg2, %arg1 : i32, i32
  }
  func.func @transform_2(%arg0: i32, %arg1: i32, %arg2: i32) -> (i32, i32) {
    %c0_i32 = arith.constant 0 : i32
    %c0_i32_0 = arith.constant 0 : i32
    return %c0_i32, %arg1 : i32, i32
  }
  func.func @transform_3(%arg0: i32, %arg1: i32, %arg2: i32) -> (i32, i32) {
    %c0_i32 = arith.constant 0 : i32
    return %arg0, %arg1 : i32, i32
  }
}

module attributes {stable_mosaic.version = 11 : i64} {
  func.func @_maxpool_kernel(%arg0: i32, %arg1: memref<80x5x32xf32, #tpu.memory_space<vmem>>, %arg2: memref<40x5x16xf32, #tpu.memory_space<vmem>>) attributes {dimension_semantics = [#tpu.dimension_semantics<parallel>], iteration_bounds = array<i64: 2>, scalar_prefetch = 0 : i64, scratch_operands = 0 : i64, tpu.core_type = #tpu.core_type<tc>, window_params = [{transform_indices = @transform_0, window_bounds = array<i64: 80, 5, 32>}, {transform_indices = @transform_1, window_bounds = array<i64: 40, 5, 16>}]} {
    %c0 = arith.constant 0 : index
    %c0_0 = arith.constant 0 : index
    %c0_1 = arith.constant 0 : index
    %0 = vector.load %arg1[%c0, %c0_0, %c0_1] : memref<80x5x32xf32, #tpu.memory_space<vmem>>, vector<80x5x32xf32>
    %1 = vector.extract_strided_slice %0 {offsets = [0, 0, 0], sizes = [80, 5, 16], strides = [1, 1, 1]} : vector<80x5x32xf32> to vector<80x5x16xf32>
    %2 = vector.extract_strided_slice %0 {offsets = [0, 0, 16], sizes = [80, 5, 16], strides = [1, 1, 1]} : vector<80x5x32xf32> to vector<80x5x16xf32>
    %3 = arith.maximumf %1, %2 : vector<80x5x16xf32>
    %4 = vector.shape_cast %3 : vector<80x5x16xf32> to vector<40x2x5x16xf32>
    %5 = vector.extract_strided_slice %4 {offsets = [0, 0, 0, 0], sizes = [40, 1, 5, 16], strides = [1, 1, 1, 1]} : vector<40x2x5x16xf32> to vector<40x1x5x16xf32>
    %6 = vector.shape_cast %5 : vector<40x1x5x16xf32> to vector<40x5x16xf32>
    %7 = vector.extract_strided_slice %4 {offsets = [0, 1, 0, 0], sizes = [40, 1, 5, 16], strides = [1, 1, 1, 1]} : vector<40x2x5x16xf32> to vector<40x1x5x16xf32>
    %8 = vector.shape_cast %7 : vector<40x1x5x16xf32> to vector<40x5x16xf32>
    %9 = arith.maximumf %6, %8 : vector<40x5x16xf32>
    %c0_2 = arith.constant 0 : index
    %c0_3 = arith.constant 0 : index
    %c0_4 = arith.constant 0 : index
    %10 = vector.load %arg2[%c0_2, %c0_3, %c0_4] : memref<40x5x16xf32, #tpu.memory_space<vmem>>, vector<40x5x16xf32>
    tpu.vector_store %arg2[%c0_2, %c0_3, %c0_4], %9 {strides = array<i32>} : memref<40x5x16xf32, #tpu.memory_space<vmem>>, vector<40x5x16xf32>,
    return
  }
  func.func @transform_0(%arg0: i32) -> (i32, i32, i32) {
    %c0_i32 = arith.constant 0 : i32
    %c0_i32_0 = arith.constant 0 : i32
    %c0_i32_1 = arith.constant 0 : i32
    return %arg0, %c0_i32, %c0_i32_0 : i32, i32, i32
  }
  func.func @transform_1(%arg0: i32) -> (i32, i32, i32) {
    %c0_i32 = arith.constant 0 : i32
    %c0_i32_0 = arith.constant 0 : i32
    %c0_i32_1 = arith.constant 0 : i32
    return %arg0, %c0_i32, %c0_i32_0 : i32, i32, i32
  }
}

module attributes {stable_mosaic.version = 11 : i64} {
  func.func @_linear_kernel(%arg0: i32, %arg1: i32, %arg2: i32, %arg3: memref<16x512xbf16, #tpu.memory_space<vmem>>, %arg4: memref<512x128xbf16, #tpu.memory_space<vmem>>, %arg5: memref<1x128xf32, #tpu.memory_space<vmem>>, %arg6: memref<16x128xf32, #tpu.memory_space<vmem>>, %arg7: memref<16x128xf32, #tpu.memory_space<vmem>>) attributes {dimension_semantics = [#tpu.dimension_semantics<parallel>, #tpu.dimension_semantics<parallel>, #tpu.dimension_semantics<arbitrary>], iteration_bounds = array<i64: 1, 1, 1>, scalar_prefetch = 0 : i64, scratch_operands = 1 : i64, tpu.core_type = #tpu.core_type<tc>, window_params = [{transform_indices = @transform_0, window_bounds = array<i64: 16, 512>}, {transform_indices = @transform_1, window_bounds = array<i64: 512, 128>}, {transform_indices = @transform_2, window_bounds = array<i64: 1, 128>}, {transform_indices = @transform_3, window_bounds = array<i64: 16, 128>}]} {
    %c0_i32 = arith.constant 0 : i32
    %0 = arith.cmpi eq, %arg2, %c0_i32 : i32
    %1 = arith.extui %0 : i1 to i32
    %c0_i32_0 = arith.constant 0 : i32
    %2 = arith.cmpi ne, %1, %c0_i32_0 : i32
    scf.if %2 {
      %cst_10 = arith.constant 0.000000e+00 : f32
      %12 = vector.broadcast %cst_10 : f32 to vector<16x128xf32>
      %c0_11 = arith.constant 0 : index
      %c0_12 = arith.constant 0 : index
      %13 = vector.load %arg7[%c0_11, %c0_12] : memref<16x128xf32, #tpu.memory_space<vmem>>, vector<16x128xf32>
      tpu.vector_store %arg7[%c0_11, %c0_12], %12 {strides = array<i32>} : memref<16x128xf32, #tpu.memory_space<vmem>>, vector<16x128xf32>,
    } else {
    }
    %c0 = arith.constant 0 : index
    %c0_1 = arith.constant 0 : index
    %3 = vector.load %arg7[%c0, %c0_1] : memref<16x128xf32, #tpu.memory_space<vmem>>, vector<16x128xf32>
    %c0_2 = arith.constant 0 : index
    %c0_3 = arith.constant 0 : index
    %4 = vector.load %arg3[%c0_2, %c0_3] : memref<16x512xbf16, #tpu.memory_space<vmem>>, vector<16x512xbf16>
    %c0_4 = arith.constant 0 : index
    %c0_5 = arith.constant 0 : index
    %5 = vector.load %arg4[%c0_4, %c0_5] : memref<512x128xbf16, #tpu.memory_space<vmem>>, vector<512x128xbf16>
    %cst = arith.constant dense<0.000000e+00> : vector<16x128xf32>
    %6 = tpu.matmul %4, %5, %cst {dimension_numbers = #tpu.dot_dimension_numbers<[1], [0], [0], [1], [0, 0, 1, 1], [], []>} : vector<16x512xbf16>, vector<512x128xbf16>, vector<16x128xf32> -> vector<16x128xf32>
    %7 = arith.addf %3, %6 : vector<16x128xf32>
    %c0_6 = arith.constant 0 : index
    %c0_7 = arith.constant 0 : index
    %8 = vector.load %arg7[%c0_6, %c0_7] : memref<16x128xf32, #tpu.memory_space<vmem>>, vector<16x128xf32>
    tpu.vector_store %arg7[%c0_6, %c0_7], %7 {strides = array<i32>} : memref<16x128xf32, #tpu.memory_space<vmem>>, vector<16x128xf32>,
    %c0_i32_8 = arith.constant 0 : i32
    %9 = arith.cmpi eq, %arg2, %c0_i32_8 : i32
    %10 = arith.extui %9 : i1 to i32
    %c0_i32_9 = arith.constant 0 : i32
    %11 = arith.cmpi ne, %10, %c0_i32_9 : i32
    scf.if %11 {
      %c0_10 = arith.constant 0 : index
      %c0_11 = arith.constant 0 : index
      %12 = vector.load %arg7[%c0_10, %c0_11] : memref<16x128xf32, #tpu.memory_space<vmem>>, vector<16x128xf32>
      %c0_12 = arith.constant 0 : index
      %c0_13 = arith.constant 0 : index
      %13 = vector.load %arg5[%c0_12, %c0_13] : memref<1x128xf32, #tpu.memory_space<vmem>>, vector<1x128xf32>
      %14 = vector.broadcast %13 : vector<1x128xf32> to vector<16x128xf32>
      %15 = arith.addf %12, %14 : vector<16x128xf32>
      %cst_14 = arith.constant 0.000000e+00 : f32
      %16 = vector.broadcast %cst_14 : f32 to vector<16x128xf32>
      %17 = arith.maximumf %15, %16 : vector<16x128xf32>
      %c0_15 = arith.constant 0 : index
      %c0_16 = arith.constant 0 : index
      %18 = vector.load %arg6[%c0_15, %c0_16] : memref<16x128xf32, #tpu.memory_space<vmem>>, vector<16x128xf32>
      tpu.vector_store %arg6[%c0_15, %c0_16], %17 {strides = array<i32>} : memref<16x128xf32, #tpu.memory_space<vmem>>, vector<16x128xf32>,
    } else {
    }
    return
  }
  func.func @transform_0(%arg0: i32, %arg1: i32, %arg2: i32) -> (i32, i32) {
    %c0_i32 = arith.constant 0 : i32
    return %arg0, %arg2 : i32, i32
  }
  func.func @transform_1(%arg0: i32, %arg1: i32, %arg2: i32) -> (i32, i32) {
    %c0_i32 = arith.constant 0 : i32
    return %arg2, %arg1 : i32, i32
  }
  func.func @transform_2(%arg0: i32, %arg1: i32, %arg2: i32) -> (i32, i32) {
    %c0_i32 = arith.constant 0 : i32
    %c0_i32_0 = arith.constant 0 : i32
    return %c0_i32, %arg1 : i32, i32
  }
  func.func @transform_3(%arg0: i32, %arg1: i32, %arg2: i32) -> (i32, i32) {
    %c0_i32 = arith.constant 0 : i32
    return %arg0, %arg1 : i32, i32
  }
}

module attributes {stable_mosaic.version = 11 : i64} {
  func.func @_linear_kernel(%arg0: i32, %arg1: i32, %arg2: i32, %arg3: memref<16x128xbf16, #tpu.memory_space<vmem>>, %arg4: memref<128x128xbf16, #tpu.memory_space<vmem>>, %arg5: memref<1x128xf32, #tpu.memory_space<vmem>>, %arg6: memref<16x128xf32, #tpu.memory_space<vmem>>, %arg7: memref<16x128xf32, #tpu.memory_space<vmem>>) attributes {dimension_semantics = [#tpu.dimension_semantics<parallel>, #tpu.dimension_semantics<parallel>, #tpu.dimension_semantics<arbitrary>], iteration_bounds = array<i64: 1, 1, 1>, scalar_prefetch = 0 : i64, scratch_operands = 1 : i64, tpu.core_type = #tpu.core_type<tc>, window_params = [{transform_indices = @transform_0, window_bounds = array<i64: 16, 128>}, {transform_indices = @transform_1, window_bounds = array<i64: 128, 128>}, {transform_indices = @transform_2, window_bounds = array<i64: 1, 128>}, {transform_indices = @transform_3, window_bounds = array<i64: 16, 128>}]} {
    %c0_i32 = arith.constant 0 : i32
    %0 = arith.cmpi eq, %arg2, %c0_i32 : i32
    %1 = arith.extui %0 : i1 to i32
    %c0_i32_0 = arith.constant 0 : i32
    %2 = arith.cmpi ne, %1, %c0_i32_0 : i32
    scf.if %2 {
      %cst_10 = arith.constant 0.000000e+00 : f32
      %12 = vector.broadcast %cst_10 : f32 to vector<16x128xf32>
      %c0_11 = arith.constant 0 : index
      %c0_12 = arith.constant 0 : index
      %13 = vector.load %arg7[%c0_11, %c0_12] : memref<16x128xf32, #tpu.memory_space<vmem>>, vector<16x128xf32>
      tpu.vector_store %arg7[%c0_11, %c0_12], %12 {strides = array<i32>} : memref<16x128xf32, #tpu.memory_space<vmem>>, vector<16x128xf32>,
    } else {
    }
    %c0 = arith.constant 0 : index
    %c0_1 = arith.constant 0 : index
    %3 = vector.load %arg7[%c0, %c0_1] : memref<16x128xf32, #tpu.memory_space<vmem>>, vector<16x128xf32>
    %c0_2 = arith.constant 0 : index
    %c0_3 = arith.constant 0 : index
    %4 = vector.load %arg3[%c0_2, %c0_3] : memref<16x128xbf16, #tpu.memory_space<vmem>>, vector<16x128xbf16>
    %c0_4 = arith.constant 0 : index
    %c0_5 = arith.constant 0 : index
    %5 = vector.load %arg4[%c0_4, %c0_5] : memref<128x128xbf16, #tpu.memory_space<vmem>>, vector<128x128xbf16>
    %cst = arith.constant dense<0.000000e+00> : vector<16x128xf32>
    %6 = tpu.matmul %4, %5, %cst {dimension_numbers = #tpu.dot_dimension_numbers<[1], [0], [0], [1], [0, 0, 1, 1], [], []>} : vector<16x128xbf16>, vector<128x128xbf16>, vector<16x128xf32> -> vector<16x128xf32>
    %7 = arith.addf %3, %6 : vector<16x128xf32>
    %c0_6 = arith.constant 0 : index
    %c0_7 = arith.constant 0 : index
    %8 = vector.load %arg7[%c0_6, %c0_7] : memref<16x128xf32, #tpu.memory_space<vmem>>, vector<16x128xf32>
    tpu.vector_store %arg7[%c0_6, %c0_7], %7 {strides = array<i32>} : memref<16x128xf32, #tpu.memory_space<vmem>>, vector<16x128xf32>,
    %c0_i32_8 = arith.constant 0 : i32
    %9 = arith.cmpi eq, %arg2, %c0_i32_8 : i32
    %10 = arith.extui %9 : i1 to i32
    %c0_i32_9 = arith.constant 0 : i32
    %11 = arith.cmpi ne, %10, %c0_i32_9 : i32
    scf.if %11 {
      %c0_10 = arith.constant 0 : index
      %c0_11 = arith.constant 0 : index
      %12 = vector.load %arg7[%c0_10, %c0_11] : memref<16x128xf32, #tpu.memory_space<vmem>>, vector<16x128xf32>
      %c0_12 = arith.constant 0 : index
      %c0_13 = arith.constant 0 : index
      %13 = vector.load %arg5[%c0_12, %c0_13] : memref<1x128xf32, #tpu.memory_space<vmem>>, vector<1x128xf32>
      %14 = vector.broadcast %13 : vector<1x128xf32> to vector<16x128xf32>
      %15 = arith.addf %12, %14 : vector<16x128xf32>
      %cst_14 = arith.constant 0.000000e+00 : f32
      %16 = vector.broadcast %cst_14 : f32 to vector<16x128xf32>
      %17 = arith.maximumf %15, %16 : vector<16x128xf32>
      %c0_15 = arith.constant 0 : index
      %c0_16 = arith.constant 0 : index
      %18 = vector.load %arg6[%c0_15, %c0_16] : memref<16x128xf32, #tpu.memory_space<vmem>>, vector<16x128xf32>
      tpu.vector_store %arg6[%c0_15, %c0_16], %17 {strides = array<i32>} : memref<16x128xf32, #tpu.memory_space<vmem>>, vector<16x128xf32>,
    } else {
    }
    return
  }
  func.func @transform_0(%arg0: i32, %arg1: i32, %arg2: i32) -> (i32, i32) {
    %c0_i32 = arith.constant 0 : i32
    return %arg0, %arg2 : i32, i32
  }
  func.func @transform_1(%arg0: i32, %arg1: i32, %arg2: i32) -> (i32, i32) {
    %c0_i32 = arith.constant 0 : i32
    return %arg2, %arg1 : i32, i32
  }
  func.func @transform_2(%arg0: i32, %arg1: i32, %arg2: i32) -> (i32, i32) {
    %c0_i32 = arith.constant 0 : i32
    %c0_i32_0 = arith.constant 0 : i32
    return %c0_i32, %arg1 : i32, i32
  }
  func.func @transform_3(%arg0: i32, %arg1: i32, %arg2: i32) -> (i32, i32) {
    %c0_i32 = arith.constant 0 : i32
    return %arg0, %arg1 : i32, i32
  }
}

module attributes {stable_mosaic.version = 11 : i64} {
  func.func @_linear_kernel(%arg0: i32, %arg1: i32, %arg2: i32, %arg3: memref<16x128xbf16, #tpu.memory_space<vmem>>, %arg4: memref<128x128xbf16, #tpu.memory_space<vmem>>, %arg5: memref<1x128xf32, #tpu.memory_space<vmem>>, %arg6: memref<16x128xf32, #tpu.memory_space<vmem>>, %arg7: memref<16x128xf32, #tpu.memory_space<vmem>>) attributes {dimension_semantics = [#tpu.dimension_semantics<parallel>, #tpu.dimension_semantics<parallel>, #tpu.dimension_semantics<arbitrary>], iteration_bounds = array<i64: 1, 1, 1>, scalar_prefetch = 0 : i64, scratch_operands = 1 : i64, tpu.core_type = #tpu.core_type<tc>, window_params = [{transform_indices = @transform_0, window_bounds = array<i64: 16, 128>}, {transform_indices = @transform_1, window_bounds = array<i64: 128, 128>}, {transform_indices = @transform_2, window_bounds = array<i64: 1, 128>}, {transform_indices = @transform_3, window_bounds = array<i64: 16, 128>}]} {
    %c0_i32 = arith.constant 0 : i32
    %0 = arith.cmpi eq, %arg2, %c0_i32 : i32
    %1 = arith.extui %0 : i1 to i32
    %c0_i32_0 = arith.constant 0 : i32
    %2 = arith.cmpi ne, %1, %c0_i32_0 : i32
    scf.if %2 {
      %cst_10 = arith.constant 0.000000e+00 : f32
      %12 = vector.broadcast %cst_10 : f32 to vector<16x128xf32>
      %c0_11 = arith.constant 0 : index
      %c0_12 = arith.constant 0 : index
      %13 = vector.load %arg7[%c0_11, %c0_12] : memref<16x128xf32, #tpu.memory_space<vmem>>, vector<16x128xf32>
      tpu.vector_store %arg7[%c0_11, %c0_12], %12 {strides = array<i32>} : memref<16x128xf32, #tpu.memory_space<vmem>>, vector<16x128xf32>,
    } else {
    }
    %c0 = arith.constant 0 : index
    %c0_1 = arith.constant 0 : index
    %3 = vector.load %arg7[%c0, %c0_1] : memref<16x128xf32, #tpu.memory_space<vmem>>, vector<16x128xf32>
    %c0_2 = arith.constant 0 : index
    %c0_3 = arith.constant 0 : index
    %4 = vector.load %arg3[%c0_2, %c0_3] : memref<16x128xbf16, #tpu.memory_space<vmem>>, vector<16x128xbf16>
    %c0_4 = arith.constant 0 : index
    %c0_5 = arith.constant 0 : index
    %5 = vector.load %arg4[%c0_4, %c0_5] : memref<128x128xbf16, #tpu.memory_space<vmem>>, vector<128x128xbf16>
    %cst = arith.constant dense<0.000000e+00> : vector<16x128xf32>
    %6 = tpu.matmul %4, %5, %cst {dimension_numbers = #tpu.dot_dimension_numbers<[1], [0], [0], [1], [0, 0, 1, 1], [], []>} : vector<16x128xbf16>, vector<128x128xbf16>, vector<16x128xf32> -> vector<16x128xf32>
    %7 = arith.addf %3, %6 : vector<16x128xf32>
    %c0_6 = arith.constant 0 : index
    %c0_7 = arith.constant 0 : index
    %8 = vector.load %arg7[%c0_6, %c0_7] : memref<16x128xf32, #tpu.memory_space<vmem>>, vector<16x128xf32>
    tpu.vector_store %arg7[%c0_6, %c0_7], %7 {strides = array<i32>} : memref<16x128xf32, #tpu.memory_space<vmem>>, vector<16x128xf32>,
    %c0_i32_8 = arith.constant 0 : i32
    %9 = arith.cmpi eq, %arg2, %c0_i32_8 : i32
    %10 = arith.extui %9 : i1 to i32
    %c0_i32_9 = arith.constant 0 : i32
    %11 = arith.cmpi ne, %10, %c0_i32_9 : i32
    scf.if %11 {
      %c0_10 = arith.constant 0 : index
      %c0_11 = arith.constant 0 : index
      %12 = vector.load %arg7[%c0_10, %c0_11] : memref<16x128xf32, #tpu.memory_space<vmem>>, vector<16x128xf32>
      %c0_12 = arith.constant 0 : index
      %c0_13 = arith.constant 0 : index
      %13 = vector.load %arg5[%c0_12, %c0_13] : memref<1x128xf32, #tpu.memory_space<vmem>>, vector<1x128xf32>
      %14 = vector.broadcast %13 : vector<1x128xf32> to vector<16x128xf32>
      %15 = arith.addf %12, %14 : vector<16x128xf32>
      %c0_14 = arith.constant 0 : index
      %c0_15 = arith.constant 0 : index
      %16 = vector.load %arg6[%c0_14, %c0_15] : memref<16x128xf32, #tpu.memory_space<vmem>>, vector<16x128xf32>
      tpu.vector_store %arg6[%c0_14, %c0_15], %15 {strides = array<i32>} : memref<16x128xf32, #tpu.memory_space<vmem>>, vector<16x128xf32>,
    } else {
    }
    return
  }
  func.func @transform_0(%arg0: i32, %arg1: i32, %arg2: i32) -> (i32, i32) {
    %c0_i32 = arith.constant 0 : i32
    return %arg0, %arg2 : i32, i32
  }
  func.func @transform_1(%arg0: i32, %arg1: i32, %arg2: i32) -> (i32, i32) {
    %c0_i32 = arith.constant 0 : i32
    return %arg2, %arg1 : i32, i32
  }
  func.func @transform_2(%arg0: i32, %arg1: i32, %arg2: i32) -> (i32, i32) {
    %c0_i32 = arith.constant 0 : i32
    %c0_i32_0 = arith.constant 0 : i32
    return %c0_i32, %arg1 : i32, i32
  }
  func.func @transform_3(%arg0: i32, %arg1: i32, %arg2: i32) -> (i32, i32) {
    %c0_i32 = arith.constant 0 : i32
    return %arg0, %arg1 : i32, i32
  }
}

module attributes {stable_mosaic.version = 11 : i64} {
  func.func @_linear_kernel(%arg0: i32, %arg1: i32, %arg2: i32, %arg3: memref<16x128xbf16, #tpu.memory_space<vmem>>, %arg4: memref<128x256xbf16, #tpu.memory_space<vmem>>, %arg5: memref<1x256xf32, #tpu.memory_space<vmem>>, %arg6: memref<16x256xbf16, #tpu.memory_space<vmem>>, %arg7: memref<16x256xf32, #tpu.memory_space<vmem>>) attributes {dimension_semantics = [#tpu.dimension_semantics<parallel>, #tpu.dimension_semantics<parallel>, #tpu.dimension_semantics<arbitrary>], iteration_bounds = array<i64: 1, 1, 1>, scalar_prefetch = 0 : i64, scratch_operands = 1 : i64, tpu.core_type = #tpu.core_type<tc>, window_params = [{transform_indices = @transform_0, window_bounds = array<i64: 16, 128>}, {transform_indices = @transform_1, window_bounds = array<i64: 128, 256>}, {transform_indices = @transform_2, window_bounds = array<i64: 1, 256>}, {transform_indices = @transform_3, window_bounds = array<i64: 16, 256>}]} {
    %c0_i32 = arith.constant 0 : i32
    %0 = arith.cmpi eq, %arg2, %c0_i32 : i32
    %1 = arith.extui %0 : i1 to i32
    %c0_i32_0 = arith.constant 0 : i32
    %2 = arith.cmpi ne, %1, %c0_i32_0 : i32
    scf.if %2 {
      %cst_10 = arith.constant 0.000000e+00 : f32
      %12 = vector.broadcast %cst_10 : f32 to vector<16x256xf32>
      %c0_11 = arith.constant 0 : index
      %c0_12 = arith.constant 0 : index
      %13 = vector.load %arg7[%c0_11, %c0_12] : memref<16x256xf32, #tpu.memory_space<vmem>>, vector<16x256xf32>
      tpu.vector_store %arg7[%c0_11, %c0_12], %12 {strides = array<i32>} : memref<16x256xf32, #tpu.memory_space<vmem>>, vector<16x256xf32>,
    } else {
    }
    %c0 = arith.constant 0 : index
    %c0_1 = arith.constant 0 : index
    %3 = vector.load %arg7[%c0, %c0_1] : memref<16x256xf32, #tpu.memory_space<vmem>>, vector<16x256xf32>
    %c0_2 = arith.constant 0 : index
    %c0_3 = arith.constant 0 : index
    %4 = vector.load %arg3[%c0_2, %c0_3] : memref<16x128xbf16, #tpu.memory_space<vmem>>, vector<16x128xbf16>
    %c0_4 = arith.constant 0 : index
    %c0_5 = arith.constant 0 : index
    %5 = vector.load %arg4[%c0_4, %c0_5] : memref<128x256xbf16, #tpu.memory_space<vmem>>, vector<128x256xbf16>
    %cst = arith.constant dense<0.000000e+00> : vector<16x256xf32>
    %6 = tpu.matmul %4, %5, %cst {dimension_numbers = #tpu.dot_dimension_numbers<[1], [0], [0], [1], [0, 0, 1, 1], [], []>} : vector<16x128xbf16>, vector<128x256xbf16>, vector<16x256xf32> -> vector<16x256xf32>
    %7 = arith.addf %3, %6 : vector<16x256xf32>
    %c0_6 = arith.constant 0 : index
    %c0_7 = arith.constant 0 : index
    %8 = vector.load %arg7[%c0_6, %c0_7] : memref<16x256xf32, #tpu.memory_space<vmem>>, vector<16x256xf32>
    tpu.vector_store %arg7[%c0_6, %c0_7], %7 {strides = array<i32>} : memref<16x256xf32, #tpu.memory_space<vmem>>, vector<16x256xf32>,
    %c0_i32_8 = arith.constant 0 : i32
    %9 = arith.cmpi eq, %arg2, %c0_i32_8 : i32
    %10 = arith.extui %9 : i1 to i32
    %c0_i32_9 = arith.constant 0 : i32
    %11 = arith.cmpi ne, %10, %c0_i32_9 : i32
    scf.if %11 {
      %c0_10 = arith.constant 0 : index
      %c0_11 = arith.constant 0 : index
      %12 = vector.load %arg7[%c0_10, %c0_11] : memref<16x256xf32, #tpu.memory_space<vmem>>, vector<16x256xf32>
      %c0_12 = arith.constant 0 : index
      %c0_13 = arith.constant 0 : index
      %13 = vector.load %arg5[%c0_12, %c0_13] : memref<1x256xf32, #tpu.memory_space<vmem>>, vector<1x256xf32>
      %14 = vector.broadcast %13 : vector<1x256xf32> to vector<16x256xf32>
      %15 = arith.addf %12, %14 : vector<16x256xf32>
      %16 = arith.truncf %15 : vector<16x256xf32> to vector<16x256xbf16>
      %c0_14 = arith.constant 0 : index
      %c0_15 = arith.constant 0 : index
      %17 = vector.load %arg6[%c0_14, %c0_15] : memref<16x256xbf16, #tpu.memory_space<vmem>>, vector<16x256xbf16>
      tpu.vector_store %arg6[%c0_14, %c0_15], %16 {strides = array<i32>} : memref<16x256xbf16, #tpu.memory_space<vmem>>, vector<16x256xbf16>,
    } else {
    }
    return
  }
  func.func @transform_0(%arg0: i32, %arg1: i32, %arg2: i32) -> (i32, i32) {
    %c0_i32 = arith.constant 0 : i32
    return %arg0, %arg2 : i32, i32
  }
  func.func @transform_1(%arg0: i32, %arg1: i32, %arg2: i32) -> (i32, i32) {
    %c0_i32 = arith.constant 0 : i32
    return %arg2, %arg1 : i32, i32
  }
  func.func @transform_2(%arg0: i32, %arg1: i32, %arg2: i32) -> (i32, i32) {
    %c0_i32 = arith.constant 0 : i32
    %c0_i32_0 = arith.constant 0 : i32
    return %c0_i32, %arg1 : i32, i32
  }
  func.func @transform_3(%arg0: i32, %arg1: i32, %arg2: i32) -> (i32, i32) {
    %c0_i32 = arith.constant 0 : i32
    return %arg0, %arg1 : i32, i32
  }
}

module attributes {stable_mosaic.version = 11 : i64} {
  func.func @_lstm_block_kernel(%arg0: i32, %arg1: i32, %arg2: memref<1x2x8x256xbf16, #tpu.memory_space<vmem>>, %arg3: memref<2x8x1xf32, #tpu.memory_space<vmem>>, %arg4: memref<1x64x256xbf16, #tpu.memory_space<vmem>>, %arg5: memref<1x2x8x64xf32, #tpu.memory_space<vmem>>, %arg6: memref<1x2x64xf32, #tpu.memory_space<vmem>>, %arg7: memref<1x2x64xf32, #tpu.memory_space<vmem>>, %arg8: memref<2x64xf32, #tpu.memory_space<vmem>>, %arg9: memref<2x64xf32, #tpu.memory_space<vmem>>) attributes {dimension_semantics = [#tpu.dimension_semantics<parallel>, #tpu.dimension_semantics<arbitrary>], iteration_bounds = array<i64: 2, 1>, scalar_prefetch = 0 : i64, scratch_operands = 2 : i64, tpu.core_type = #tpu.core_type<tc>, window_params = [{transform_indices = @transform_0, window_bounds = array<i64: 1, 2, 8, 256>}, {transform_indices = @transform_1, window_bounds = array<i64: 2, 8, 1>}, {transform_indices = @transform_2, window_bounds = array<i64: 1, 64, 256>}, {transform_indices = @transform_3, window_bounds = array<i64: 1, 2, 8, 64>}, {transform_indices = @transform_4, window_bounds = array<i64: 1, 2, 64>}, {transform_indices = @transform_5, window_bounds = array<i64: 1, 2, 64>}]} {
    %c0_i32 = arith.constant 0 : i32
    %0 = arith.cmpi eq, %arg1, %c0_i32 : i32
    %1 = arith.extui %0 : i1 to i32
    %c0_i32_0 = arith.constant 0 : i32
    %2 = arith.cmpi ne, %1, %c0_i32_0 : i32
    scf.if %2 {
      %cst_84 = arith.constant 0.000000e+00 : f32
      %367 = vector.broadcast %cst_84 : f32 to vector<2x64xf32>
      %c0_85 = arith.constant 0 : index
      %c0_86 = arith.constant 0 : index
      %368 = vector.load %arg8[%c0_85, %c0_86] : memref<2x64xf32, #tpu.memory_space<vmem>>, vector<2x64xf32>
      tpu.vector_store %arg8[%c0_85, %c0_86], %367 {strides = array<i32>} : memref<2x64xf32, #tpu.memory_space<vmem>>, vector<2x64xf32>,
      %cst_87 = arith.constant 0.000000e+00 : f32
      %369 = vector.broadcast %cst_87 : f32 to vector<2x64xf32>
      %c0_88 = arith.constant 0 : index
      %c0_89 = arith.constant 0 : index
      %370 = vector.load %arg9[%c0_88, %c0_89] : memref<2x64xf32, #tpu.memory_space<vmem>>, vector<2x64xf32>
      tpu.vector_store %arg9[%c0_88, %c0_89], %369 {strides = array<i32>} : memref<2x64xf32, #tpu.memory_space<vmem>>, vector<2x64xf32>,
    } else {
    }
    %c0 = arith.constant 0 : index
    %c0_1 = arith.constant 0 : index
    %c0_2 = arith.constant 0 : index
    %c0_3 = arith.constant 0 : index
    %3 = vector.load %arg2[%c0, %c0_1, %c0_2, %c0_3] : memref<1x2x8x256xbf16, #tpu.memory_space<vmem>>, vector<1x2x8x256xbf16>
    %4 = vector.shape_cast %3 : vector<1x2x8x256xbf16> to vector<2x8x256xbf16>
    %c0_4 = arith.constant 0 : index
    %c0_5 = arith.constant 0 : index
    %c0_6 = arith.constant 0 : index
    %5 = vector.load %arg3[%c0_4, %c0_5, %c0_6] : memref<2x8x1xf32, #tpu.memory_space<vmem>>, vector<2x8x1xf32>
    %c0_7 = arith.constant 0 : index
    %c0_8 = arith.constant 0 : index
    %c0_9 = arith.constant 0 : index
    %6 = vector.load %arg4[%c0_7, %c0_8, %c0_9] : memref<1x64x256xbf16, #tpu.memory_space<vmem>>, vector<1x64x256xbf16>
    %7 = vector.shape_cast %6 : vector<1x64x256xbf16> to vector<64x256xbf16>
    %c0_10 = arith.constant 0 : index
    %c0_11 = arith.constant 0 : index
    %8 = vector.load %arg8[%c0_10, %c0_11] : memref<2x64xf32, #tpu.memory_space<vmem>>, vector<2x64xf32>
    %c0_12 = arith.constant 0 : index
    %c0_13 = arith.constant 0 : index
    %9 = vector.load %arg9[%c0_12, %c0_13] : memref<2x64xf32, #tpu.memory_space<vmem>>, vector<2x64xf32>
    %10 = vector.extract_strided_slice %4 {offsets = [0, 0, 0], sizes = [2, 1, 256], strides = [1, 1, 1]} : vector<2x8x256xbf16> to vector<2x1x256xbf16>
    %11 = vector.shape_cast %10 : vector<2x1x256xbf16> to vector<2x256xbf16>
    %12 = arith.extf %11 : vector<2x256xbf16> to vector<2x256xf32>
    %13 = arith.truncf %8 : vector<2x64xf32> to vector<2x64xbf16>
    %cst = arith.constant dense<0.000000e+00> : vector<2x256xf32>
    %14 = tpu.matmul %13, %7, %cst {dimension_numbers = #tpu.dot_dimension_numbers<[1], [0], [0], [1], [0, 0, 1, 1], [], []>} : vector<2x64xbf16>, vector<64x256xbf16>, vector<2x256xf32> -> vector<2x256xf32>
    %15 = arith.addf %12, %14 : vector<2x256xf32>
    %16 = vector.extract_strided_slice %15 {offsets = [0, 0], sizes = [2, 192], strides = [1, 1]} : vector<2x256xf32> to vector<2x192xf32>
    %cst_14 = arith.constant 0.000000e+00 : f32
    %17 = vector.broadcast %cst_14 : f32 to vector<2x192xf32>
    %18 = arith.subf %17, %16 : vector<2x192xf32>
    %19 = math.exp %18 : vector<2x192xf32>
    %cst_15 = arith.constant 1.000000e+00 : f32
    %20 = vector.broadcast %cst_15 : f32 to vector<2x192xf32>
    %21 = arith.addf %20, %19 : vector<2x192xf32>
    %22 = tpu.reciprocal %21 {approx = true} : vector<2x192xf32> -> vector<2x192xf32>
    %23 = vector.extract_strided_slice %22 {offsets = [0, 0], sizes = [2, 64], strides = [1, 1]} : vector<2x192xf32> to vector<2x64xf32>
    %24 = vector.extract_strided_slice %22 {offsets = [0, 64], sizes = [2, 64], strides = [1, 1]} : vector<2x192xf32> to vector<2x64xf32>
    %25 = vector.extract_strided_slice %22 {offsets = [0, 128], sizes = [2, 64], strides = [1, 1]} : vector<2x192xf32> to vector<2x64xf32>
    %26 = vector.extract_strided_slice %15 {offsets = [0, 192], sizes = [2, 64], strides = [1, 1]} : vector<2x256xf32> to vector<2x64xf32>
    %27 = math.tanh %26 : vector<2x64xf32>
    %28 = arith.mulf %24, %9 : vector<2x64xf32>
    %29 = arith.mulf %23, %27 : vector<2x64xf32>
    %30 = arith.addf %28, %29 : vector<2x64xf32>
    %31 = math.tanh %30 : vector<2x64xf32>
    %32 = arith.mulf %25, %31 : vector<2x64xf32>
    %33 = vector.extract_strided_slice %5 {offsets = [0, 0, 0], sizes = [2, 1, 1], strides = [1, 1, 1]} : vector<2x8x1xf32> to vector<2x1x1xf32>
    %34 = vector.shape_cast %33 : vector<2x1x1xf32> to vector<2x1xf32>
    %35 = vector.broadcast %34 : vector<2x1xf32> to vector<2x64xf32>
    %36 = arith.mulf %35, %30 : vector<2x64xf32>
    %cst_16 = arith.constant 1.000000e+00 : f32
    %37 = vector.broadcast %cst_16 : f32 to vector<2x1xf32>
    %38 = arith.subf %37, %34 : vector<2x1xf32>
    %39 = vector.broadcast %38 : vector<2x1xf32> to vector<2x64xf32>
    %40 = arith.mulf %39, %9 : vector<2x64xf32>
    %41 = arith.addf %36, %40 : vector<2x64xf32>
    %42 = vector.broadcast %34 : vector<2x1xf32> to vector<2x64xf32>
    %43 = arith.mulf %42, %32 : vector<2x64xf32>
    %cst_17 = arith.constant 1.000000e+00 : f32
    %44 = vector.broadcast %cst_17 : f32 to vector<2x1xf32>
    %45 = arith.subf %44, %34 : vector<2x1xf32>
    %46 = vector.broadcast %45 : vector<2x1xf32> to vector<2x64xf32>
    %47 = arith.mulf %46, %8 : vector<2x64xf32>
    %48 = arith.addf %43, %47 : vector<2x64xf32>
    %49 = vector.broadcast %34 : vector<2x1xf32> to vector<2x64xf32>
    %50 = arith.mulf %49, %32 : vector<2x64xf32>
    %c0_18 = arith.constant 0 : index
    %c0_19 = arith.constant 0 : index
    %c0_20 = arith.constant 0 : index
    %c0_21 = arith.constant 0 : index
    %51 = vector.load %arg5[%c0_18, %c0_19, %c0_20, %c0_21] : memref<1x2x8x64xf32, #tpu.memory_space<vmem>>, vector<1x2x1x64xf32>
    %52 = vector.shape_cast %51 : vector<1x2x1x64xf32> to vector<2x64xf32>
    %53 = vector.shape_cast %50 : vector<2x64xf32> to vector<1x2x1x64xf32>
    tpu.vector_store %arg5[%c0_18, %c0_19, %c0_20, %c0_21], %53 {strides = array<i32>} : memref<1x2x8x64xf32, #tpu.memory_space<vmem>>, vector<1x2x1x64xf32>,
    %54 = vector.extract_strided_slice %4 {offsets = [0, 1, 0], sizes = [2, 1, 256], strides = [1, 1, 1]} : vector<2x8x256xbf16> to vector<2x1x256xbf16>
    %55 = vector.shape_cast %54 : vector<2x1x256xbf16> to vector<2x256xbf16>
    %56 = arith.extf %55 : vector<2x256xbf16> to vector<2x256xf32>
    %57 = arith.truncf %48 : vector<2x64xf32> to vector<2x64xbf16>
    %cst_22 = arith.constant dense<0.000000e+00> : vector<2x256xf32>
    %58 = tpu.matmul %57, %7, %cst_22 {dimension_numbers = #tpu.dot_dimension_numbers<[1], [0], [0], [1], [0, 0, 1, 1], [], []>} : vector<2x64xbf16>, vector<64x256xbf16>, vector<2x256xf32> -> vector<2x256xf32>
    %59 = arith.addf %56, %58 : vector<2x256xf32>
    %60 = vector.extract_strided_slice %59 {offsets = [0, 0], sizes = [2, 192], strides = [1, 1]} : vector<2x256xf32> to vector<2x192xf32>
    %cst_23 = arith.constant 0.000000e+00 : f32
    %61 = vector.broadcast %cst_23 : f32 to vector<2x192xf32>
    %62 = arith.subf %61, %60 : vector<2x192xf32>
    %63 = math.exp %62 : vector<2x192xf32>
    %cst_24 = arith.constant 1.000000e+00 : f32
    %64 = vector.broadcast %cst_24 : f32 to vector<2x192xf32>
    %65 = arith.addf %64, %63 : vector<2x192xf32>
    %66 = tpu.reciprocal %65 {approx = true} : vector<2x192xf32> -> vector<2x192xf32>
    %67 = vector.extract_strided_slice %66 {offsets = [0, 0], sizes = [2, 64], strides = [1, 1]} : vector<2x192xf32> to vector<2x64xf32>
    %68 = vector.extract_strided_slice %66 {offsets = [0, 64], sizes = [2, 64], strides = [1, 1]} : vector<2x192xf32> to vector<2x64xf32>
    %69 = vector.extract_strided_slice %66 {offsets = [0, 128], sizes = [2, 64], strides = [1, 1]} : vector<2x192xf32> to vector<2x64xf32>
    %70 = vector.extract_strided_slice %59 {offsets = [0, 192], sizes = [2, 64], strides = [1, 1]} : vector<2x256xf32> to vector<2x64xf32>
    %71 = math.tanh %70 : vector<2x64xf32>
    %72 = arith.mulf %68, %41 : vector<2x64xf32>
    %73 = arith.mulf %67, %71 : vector<2x64xf32>
    %74 = arith.addf %72, %73 : vector<2x64xf32>
    %75 = math.tanh %74 : vector<2x64xf32>
    %76 = arith.mulf %69, %75 : vector<2x64xf32>
    %77 = vector.extract_strided_slice %5 {offsets = [0, 1, 0], sizes = [2, 1, 1], strides = [1, 1, 1]} : vector<2x8x1xf32> to vector<2x1x1xf32>
    %78 = vector.shape_cast %77 : vector<2x1x1xf32> to vector<2x1xf32>
    %79 = vector.broadcast %78 : vector<2x1xf32> to vector<2x64xf32>
    %80 = arith.mulf %79, %74 : vector<2x64xf32>
    %cst_25 = arith.constant 1.000000e+00 : f32
    %81 = vector.broadcast %cst_25 : f32 to vector<2x1xf32>
    %82 = arith.subf %81, %78 : vector<2x1xf32>
    %83 = vector.broadcast %82 : vector<2x1xf32> to vector<2x64xf32>
    %84 = arith.mulf %83, %41 : vector<2x64xf32>
    %85 = arith.addf %80, %84 : vector<2x64xf32>
    %86 = vector.broadcast %78 : vector<2x1xf32> to vector<2x64xf32>
    %87 = arith.mulf %86, %76 : vector<2x64xf32>
    %cst_26 = arith.constant 1.000000e+00 : f32
    %88 = vector.broadcast %cst_26 : f32 to vector<2x1xf32>
    %89 = arith.subf %88, %78 : vector<2x1xf32>
    %90 = vector.broadcast %89 : vector<2x1xf32> to vector<2x64xf32>
    %91 = arith.mulf %90, %48 : vector<2x64xf32>
    %92 = arith.addf %87, %91 : vector<2x64xf32>
    %93 = vector.broadcast %78 : vector<2x1xf32> to vector<2x64xf32>
    %94 = arith.mulf %93, %76 : vector<2x64xf32>
    %c0_27 = arith.constant 0 : index
    %c0_28 = arith.constant 0 : index
    %c1 = arith.constant 1 : index
    %c0_29 = arith.constant 0 : index
    %95 = vector.load %arg5[%c0_27, %c0_28, %c1, %c0_29] : memref<1x2x8x64xf32, #tpu.memory_space<vmem>>, vector<1x2x1x64xf32>
    %96 = vector.shape_cast %95 : vector<1x2x1x64xf32> to vector<2x64xf32>
    %97 = vector.shape_cast %94 : vector<2x64xf32> to vector<1x2x1x64xf32>
    tpu.vector_store %arg5[%c0_27, %c0_28, %c1, %c0_29], %97 {strides = array<i32>} : memref<1x2x8x64xf32, #tpu.memory_space<vmem>>, vector<1x2x1x64xf32>,
    %98 = vector.extract_strided_slice %4 {offsets = [0, 2, 0], sizes = [2, 1, 256], strides = [1, 1, 1]} : vector<2x8x256xbf16> to vector<2x1x256xbf16>
    %99 = vector.shape_cast %98 : vector<2x1x256xbf16> to vector<2x256xbf16>
    %100 = arith.extf %99 : vector<2x256xbf16> to vector<2x256xf32>
    %101 = arith.truncf %92 : vector<2x64xf32> to vector<2x64xbf16>
    %cst_30 = arith.constant dense<0.000000e+00> : vector<2x256xf32>
    %102 = tpu.matmul %101, %7, %cst_30 {dimension_numbers = #tpu.dot_dimension_numbers<[1], [0], [0], [1], [0, 0, 1, 1], [], []>} : vector<2x64xbf16>, vector<64x256xbf16>, vector<2x256xf32> -> vector<2x256xf32>
    %103 = arith.addf %100, %102 : vector<2x256xf32>
    %104 = vector.extract_strided_slice %103 {offsets = [0, 0], sizes = [2, 192], strides = [1, 1]} : vector<2x256xf32> to vector<2x192xf32>
    %cst_31 = arith.constant 0.000000e+00 : f32
    %105 = vector.broadcast %cst_31 : f32 to vector<2x192xf32>
    %106 = arith.subf %105, %104 : vector<2x192xf32>
    %107 = math.exp %106 : vector<2x192xf32>
    %cst_32 = arith.constant 1.000000e+00 : f32
    %108 = vector.broadcast %cst_32 : f32 to vector<2x192xf32>
    %109 = arith.addf %108, %107 : vector<2x192xf32>
    %110 = tpu.reciprocal %109 {approx = true} : vector<2x192xf32> -> vector<2x192xf32>
    %111 = vector.extract_strided_slice %110 {offsets = [0, 0], sizes = [2, 64], strides = [1, 1]} : vector<2x192xf32> to vector<2x64xf32>
    %112 = vector.extract_strided_slice %110 {offsets = [0, 64], sizes = [2, 64], strides = [1, 1]} : vector<2x192xf32> to vector<2x64xf32>
    %113 = vector.extract_strided_slice %110 {offsets = [0, 128], sizes = [2, 64], strides = [1, 1]} : vector<2x192xf32> to vector<2x64xf32>
    %114 = vector.extract_strided_slice %103 {offsets = [0, 192], sizes = [2, 64], strides = [1, 1]} : vector<2x256xf32> to vector<2x64xf32>
    %115 = math.tanh %114 : vector<2x64xf32>
    %116 = arith.mulf %112, %85 : vector<2x64xf32>
    %117 = arith.mulf %111, %115 : vector<2x64xf32>
    %118 = arith.addf %116, %117 : vector<2x64xf32>
    %119 = math.tanh %118 : vector<2x64xf32>
    %120 = arith.mulf %113, %119 : vector<2x64xf32>
    %121 = vector.extract_strided_slice %5 {offsets = [0, 2, 0], sizes = [2, 1, 1], strides = [1, 1, 1]} : vector<2x8x1xf32> to vector<2x1x1xf32>
    %122 = vector.shape_cast %121 : vector<2x1x1xf32> to vector<2x1xf32>
    %123 = vector.broadcast %122 : vector<2x1xf32> to vector<2x64xf32>
    %124 = arith.mulf %123, %118 : vector<2x64xf32>
    %cst_33 = arith.constant 1.000000e+00 : f32
    %125 = vector.broadcast %cst_33 : f32 to vector<2x1xf32>
    %126 = arith.subf %125, %122 : vector<2x1xf32>
    %127 = vector.broadcast %126 : vector<2x1xf32> to vector<2x64xf32>
    %128 = arith.mulf %127, %85 : vector<2x64xf32>
    %129 = arith.addf %124, %128 : vector<2x64xf32>
    %130 = vector.broadcast %122 : vector<2x1xf32> to vector<2x64xf32>
    %131 = arith.mulf %130, %120 : vector<2x64xf32>
    %cst_34 = arith.constant 1.000000e+00 : f32
    %132 = vector.broadcast %cst_34 : f32 to vector<2x1xf32>
    %133 = arith.subf %132, %122 : vector<2x1xf32>
    %134 = vector.broadcast %133 : vector<2x1xf32> to vector<2x64xf32>
    %135 = arith.mulf %134, %92 : vector<2x64xf32>
    %136 = arith.addf %131, %135 : vector<2x64xf32>
    %137 = vector.broadcast %122 : vector<2x1xf32> to vector<2x64xf32>
    %138 = arith.mulf %137, %120 : vector<2x64xf32>
    %c0_35 = arith.constant 0 : index
    %c0_36 = arith.constant 0 : index
    %c2 = arith.constant 2 : index
    %c0_37 = arith.constant 0 : index
    %139 = vector.load %arg5[%c0_35, %c0_36, %c2, %c0_37] : memref<1x2x8x64xf32, #tpu.memory_space<vmem>>, vector<1x2x1x64xf32>
    %140 = vector.shape_cast %139 : vector<1x2x1x64xf32> to vector<2x64xf32>
    %141 = vector.shape_cast %138 : vector<2x64xf32> to vector<1x2x1x64xf32>
    tpu.vector_store %arg5[%c0_35, %c0_36, %c2, %c0_37], %141 {strides = array<i32>} : memref<1x2x8x64xf32, #tpu.memory_space<vmem>>, vector<1x2x1x64xf32>,
    %142 = vector.extract_strided_slice %4 {offsets = [0, 3, 0], sizes = [2, 1, 256], strides = [1, 1, 1]} : vector<2x8x256xbf16> to vector<2x1x256xbf16>
    %143 = vector.shape_cast %142 : vector<2x1x256xbf16> to vector<2x256xbf16>
    %144 = arith.extf %143 : vector<2x256xbf16> to vector<2x256xf32>
    %145 = arith.truncf %136 : vector<2x64xf32> to vector<2x64xbf16>
    %cst_38 = arith.constant dense<0.000000e+00> : vector<2x256xf32>
    %146 = tpu.matmul %145, %7, %cst_38 {dimension_numbers = #tpu.dot_dimension_numbers<[1], [0], [0], [1], [0, 0, 1, 1], [], []>} : vector<2x64xbf16>, vector<64x256xbf16>, vector<2x256xf32> -> vector<2x256xf32>
    %147 = arith.addf %144, %146 : vector<2x256xf32>
    %148 = vector.extract_strided_slice %147 {offsets = [0, 0], sizes = [2, 192], strides = [1, 1]} : vector<2x256xf32> to vector<2x192xf32>
    %cst_39 = arith.constant 0.000000e+00 : f32
    %149 = vector.broadcast %cst_39 : f32 to vector<2x192xf32>
    %150 = arith.subf %149, %148 : vector<2x192xf32>
    %151 = math.exp %150 : vector<2x192xf32>
    %cst_40 = arith.constant 1.000000e+00 : f32
    %152 = vector.broadcast %cst_40 : f32 to vector<2x192xf32>
    %153 = arith.addf %152, %151 : vector<2x192xf32>
    %154 = tpu.reciprocal %153 {approx = true} : vector<2x192xf32> -> vector<2x192xf32>
    %155 = vector.extract_strided_slice %154 {offsets = [0, 0], sizes = [2, 64], strides = [1, 1]} : vector<2x192xf32> to vector<2x64xf32>
    %156 = vector.extract_strided_slice %154 {offsets = [0, 64], sizes = [2, 64], strides = [1, 1]} : vector<2x192xf32> to vector<2x64xf32>
    %157 = vector.extract_strided_slice %154 {offsets = [0, 128], sizes = [2, 64], strides = [1, 1]} : vector<2x192xf32> to vector<2x64xf32>
    %158 = vector.extract_strided_slice %147 {offsets = [0, 192], sizes = [2, 64], strides = [1, 1]} : vector<2x256xf32> to vector<2x64xf32>
    %159 = math.tanh %158 : vector<2x64xf32>
    %160 = arith.mulf %156, %129 : vector<2x64xf32>
    %161 = arith.mulf %155, %159 : vector<2x64xf32>
    %162 = arith.addf %160, %161 : vector<2x64xf32>
    %163 = math.tanh %162 : vector<2x64xf32>
    %164 = arith.mulf %157, %163 : vector<2x64xf32>
    %165 = vector.extract_strided_slice %5 {offsets = [0, 3, 0], sizes = [2, 1, 1], strides = [1, 1, 1]} : vector<2x8x1xf32> to vector<2x1x1xf32>
    %166 = vector.shape_cast %165 : vector<2x1x1xf32> to vector<2x1xf32>
    %167 = vector.broadcast %166 : vector<2x1xf32> to vector<2x64xf32>
    %168 = arith.mulf %167, %162 : vector<2x64xf32>
    %cst_41 = arith.constant 1.000000e+00 : f32
    %169 = vector.broadcast %cst_41 : f32 to vector<2x1xf32>
    %170 = arith.subf %169, %166 : vector<2x1xf32>
    %171 = vector.broadcast %170 : vector<2x1xf32> to vector<2x64xf32>
    %172 = arith.mulf %171, %129 : vector<2x64xf32>
    %173 = arith.addf %168, %172 : vector<2x64xf32>
    %174 = vector.broadcast %166 : vector<2x1xf32> to vector<2x64xf32>
    %175 = arith.mulf %174, %164 : vector<2x64xf32>
    %cst_42 = arith.constant 1.000000e+00 : f32
    %176 = vector.broadcast %cst_42 : f32 to vector<2x1xf32>
    %177 = arith.subf %176, %166 : vector<2x1xf32>
    %178 = vector.broadcast %177 : vector<2x1xf32> to vector<2x64xf32>
    %179 = arith.mulf %178, %136 : vector<2x64xf32>
    %180 = arith.addf %175, %179 : vector<2x64xf32>
    %181 = vector.broadcast %166 : vector<2x1xf32> to vector<2x64xf32>
    %182 = arith.mulf %181, %164 : vector<2x64xf32>
    %c0_43 = arith.constant 0 : index
    %c0_44 = arith.constant 0 : index
    %c3 = arith.constant 3 : index
    %c0_45 = arith.constant 0 : index
    %183 = vector.load %arg5[%c0_43, %c0_44, %c3, %c0_45] : memref<1x2x8x64xf32, #tpu.memory_space<vmem>>, vector<1x2x1x64xf32>
    %184 = vector.shape_cast %183 : vector<1x2x1x64xf32> to vector<2x64xf32>
    %185 = vector.shape_cast %182 : vector<2x64xf32> to vector<1x2x1x64xf32>
    tpu.vector_store %arg5[%c0_43, %c0_44, %c3, %c0_45], %185 {strides = array<i32>} : memref<1x2x8x64xf32, #tpu.memory_space<vmem>>, vector<1x2x1x64xf32>,
    %186 = vector.extract_strided_slice %4 {offsets = [0, 4, 0], sizes = [2, 1, 256], strides = [1, 1, 1]} : vector<2x8x256xbf16> to vector<2x1x256xbf16>
    %187 = vector.shape_cast %186 : vector<2x1x256xbf16> to vector<2x256xbf16>
    %188 = arith.extf %187 : vector<2x256xbf16> to vector<2x256xf32>
    %189 = arith.truncf %180 : vector<2x64xf32> to vector<2x64xbf16>
    %cst_46 = arith.constant dense<0.000000e+00> : vector<2x256xf32>
    %190 = tpu.matmul %189, %7, %cst_46 {dimension_numbers = #tpu.dot_dimension_numbers<[1], [0], [0], [1], [0, 0, 1, 1], [], []>} : vector<2x64xbf16>, vector<64x256xbf16>, vector<2x256xf32> -> vector<2x256xf32>
    %191 = arith.addf %188, %190 : vector<2x256xf32>
    %192 = vector.extract_strided_slice %191 {offsets = [0, 0], sizes = [2, 192], strides = [1, 1]} : vector<2x256xf32> to vector<2x192xf32>
    %cst_47 = arith.constant 0.000000e+00 : f32
    %193 = vector.broadcast %cst_47 : f32 to vector<2x192xf32>
    %194 = arith.subf %193, %192 : vector<2x192xf32>
    %195 = math.exp %194 : vector<2x192xf32>
    %cst_48 = arith.constant 1.000000e+00 : f32
    %196 = vector.broadcast %cst_48 : f32 to vector<2x192xf32>
    %197 = arith.addf %196, %195 : vector<2x192xf32>
    %198 = tpu.reciprocal %197 {approx = true} : vector<2x192xf32> -> vector<2x192xf32>
    %199 = vector.extract_strided_slice %198 {offsets = [0, 0], sizes = [2, 64], strides = [1, 1]} : vector<2x192xf32> to vector<2x64xf32>
    %200 = vector.extract_strided_slice %198 {offsets = [0, 64], sizes = [2, 64], strides = [1, 1]} : vector<2x192xf32> to vector<2x64xf32>
    %201 = vector.extract_strided_slice %198 {offsets = [0, 128], sizes = [2, 64], strides = [1, 1]} : vector<2x192xf32> to vector<2x64xf32>
    %202 = vector.extract_strided_slice %191 {offsets = [0, 192], sizes = [2, 64], strides = [1, 1]} : vector<2x256xf32> to vector<2x64xf32>
    %203 = math.tanh %202 : vector<2x64xf32>
    %204 = arith.mulf %200, %173 : vector<2x64xf32>
    %205 = arith.mulf %199, %203 : vector<2x64xf32>
    %206 = arith.addf %204, %205 : vector<2x64xf32>
    %207 = math.tanh %206 : vector<2x64xf32>
    %208 = arith.mulf %201, %207 : vector<2x64xf32>
    %209 = vector.extract_strided_slice %5 {offsets = [0, 4, 0], sizes = [2, 1, 1], strides = [1, 1, 1]} : vector<2x8x1xf32> to vector<2x1x1xf32>
    %210 = vector.shape_cast %209 : vector<2x1x1xf32> to vector<2x1xf32>
    %211 = vector.broadcast %210 : vector<2x1xf32> to vector<2x64xf32>
    %212 = arith.mulf %211, %206 : vector<2x64xf32>
    %cst_49 = arith.constant 1.000000e+00 : f32
    %213 = vector.broadcast %cst_49 : f32 to vector<2x1xf32>
    %214 = arith.subf %213, %210 : vector<2x1xf32>
    %215 = vector.broadcast %214 : vector<2x1xf32> to vector<2x64xf32>
    %216 = arith.mulf %215, %173 : vector<2x64xf32>
    %217 = arith.addf %212, %216 : vector<2x64xf32>
    %218 = vector.broadcast %210 : vector<2x1xf32> to vector<2x64xf32>
    %219 = arith.mulf %218, %208 : vector<2x64xf32>
    %cst_50 = arith.constant 1.000000e+00 : f32
    %220 = vector.broadcast %cst_50 : f32 to vector<2x1xf32>
    %221 = arith.subf %220, %210 : vector<2x1xf32>
    %222 = vector.broadcast %221 : vector<2x1xf32> to vector<2x64xf32>
    %223 = arith.mulf %222, %180 : vector<2x64xf32>
    %224 = arith.addf %219, %223 : vector<2x64xf32>
    %225 = vector.broadcast %210 : vector<2x1xf32> to vector<2x64xf32>
    %226 = arith.mulf %225, %208 : vector<2x64xf32>
    %c0_51 = arith.constant 0 : index
    %c0_52 = arith.constant 0 : index
    %c4 = arith.constant 4 : index
    %c0_53 = arith.constant 0 : index
    %227 = vector.load %arg5[%c0_51, %c0_52, %c4, %c0_53] : memref<1x2x8x64xf32, #tpu.memory_space<vmem>>, vector<1x2x1x64xf32>
    %228 = vector.shape_cast %227 : vector<1x2x1x64xf32> to vector<2x64xf32>
    %229 = vector.shape_cast %226 : vector<2x64xf32> to vector<1x2x1x64xf32>
    tpu.vector_store %arg5[%c0_51, %c0_52, %c4, %c0_53], %229 {strides = array<i32>} : memref<1x2x8x64xf32, #tpu.memory_space<vmem>>, vector<1x2x1x64xf32>,
    %230 = vector.extract_strided_slice %4 {offsets = [0, 5, 0], sizes = [2, 1, 256], strides = [1, 1, 1]} : vector<2x8x256xbf16> to vector<2x1x256xbf16>
    %231 = vector.shape_cast %230 : vector<2x1x256xbf16> to vector<2x256xbf16>
    %232 = arith.extf %231 : vector<2x256xbf16> to vector<2x256xf32>
    %233 = arith.truncf %224 : vector<2x64xf32> to vector<2x64xbf16>
    %cst_54 = arith.constant dense<0.000000e+00> : vector<2x256xf32>
    %234 = tpu.matmul %233, %7, %cst_54 {dimension_numbers = #tpu.dot_dimension_numbers<[1], [0], [0], [1], [0, 0, 1, 1], [], []>} : vector<2x64xbf16>, vector<64x256xbf16>, vector<2x256xf32> -> vector<2x256xf32>
    %235 = arith.addf %232, %234 : vector<2x256xf32>
    %236 = vector.extract_strided_slice %235 {offsets = [0, 0], sizes = [2, 192], strides = [1, 1]} : vector<2x256xf32> to vector<2x192xf32>
    %cst_55 = arith.constant 0.000000e+00 : f32
    %237 = vector.broadcast %cst_55 : f32 to vector<2x192xf32>
    %238 = arith.subf %237, %236 : vector<2x192xf32>
    %239 = math.exp %238 : vector<2x192xf32>
    %cst_56 = arith.constant 1.000000e+00 : f32
    %240 = vector.broadcast %cst_56 : f32 to vector<2x192xf32>
    %241 = arith.addf %240, %239 : vector<2x192xf32>
    %242 = tpu.reciprocal %241 {approx = true} : vector<2x192xf32> -> vector<2x192xf32>
    %243 = vector.extract_strided_slice %242 {offsets = [0, 0], sizes = [2, 64], strides = [1, 1]} : vector<2x192xf32> to vector<2x64xf32>
    %244 = vector.extract_strided_slice %242 {offsets = [0, 64], sizes = [2, 64], strides = [1, 1]} : vector<2x192xf32> to vector<2x64xf32>
    %245 = vector.extract_strided_slice %242 {offsets = [0, 128], sizes = [2, 64], strides = [1, 1]} : vector<2x192xf32> to vector<2x64xf32>
    %246 = vector.extract_strided_slice %235 {offsets = [0, 192], sizes = [2, 64], strides = [1, 1]} : vector<2x256xf32> to vector<2x64xf32>
    %247 = math.tanh %246 : vector<2x64xf32>
    %248 = arith.mulf %244, %217 : vector<2x64xf32>
    %249 = arith.mulf %243, %247 : vector<2x64xf32>
    %250 = arith.addf %248, %249 : vector<2x64xf32>
    %251 = math.tanh %250 : vector<2x64xf32>
    %252 = arith.mulf %245, %251 : vector<2x64xf32>
    %253 = vector.extract_strided_slice %5 {offsets = [0, 5, 0], sizes = [2, 1, 1], strides = [1, 1, 1]} : vector<2x8x1xf32> to vector<2x1x1xf32>
    %254 = vector.shape_cast %253 : vector<2x1x1xf32> to vector<2x1xf32>
    %255 = vector.broadcast %254 : vector<2x1xf32> to vector<2x64xf32>
    %256 = arith.mulf %255, %250 : vector<2x64xf32>
    %cst_57 = arith.constant 1.000000e+00 : f32
    %257 = vector.broadcast %cst_57 : f32 to vector<2x1xf32>
    %258 = arith.subf %257, %254 : vector<2x1xf32>
    %259 = vector.broadcast %258 : vector<2x1xf32> to vector<2x64xf32>
    %260 = arith.mulf %259, %217 : vector<2x64xf32>
    %261 = arith.addf %256, %260 : vector<2x64xf32>
    %262 = vector.broadcast %254 : vector<2x1xf32> to vector<2x64xf32>
    %263 = arith.mulf %262, %252 : vector<2x64xf32>
    %cst_58 = arith.constant 1.000000e+00 : f32
    %264 = vector.broadcast %cst_58 : f32 to vector<2x1xf32>
    %265 = arith.subf %264, %254 : vector<2x1xf32>
    %266 = vector.broadcast %265 : vector<2x1xf32> to vector<2x64xf32>
    %267 = arith.mulf %266, %224 : vector<2x64xf32>
    %268 = arith.addf %263, %267 : vector<2x64xf32>
    %269 = vector.broadcast %254 : vector<2x1xf32> to vector<2x64xf32>
    %270 = arith.mulf %269, %252 : vector<2x64xf32>
    %c0_59 = arith.constant 0 : index
    %c0_60 = arith.constant 0 : index
    %c5 = arith.constant 5 : index
    %c0_61 = arith.constant 0 : index
    %271 = vector.load %arg5[%c0_59, %c0_60, %c5, %c0_61] : memref<1x2x8x64xf32, #tpu.memory_space<vmem>>, vector<1x2x1x64xf32>
    %272 = vector.shape_cast %271 : vector<1x2x1x64xf32> to vector<2x64xf32>
    %273 = vector.shape_cast %270 : vector<2x64xf32> to vector<1x2x1x64xf32>
    tpu.vector_store %arg5[%c0_59, %c0_60, %c5, %c0_61], %273 {strides = array<i32>} : memref<1x2x8x64xf32, #tpu.memory_space<vmem>>, vector<1x2x1x64xf32>,
    %274 = vector.extract_strided_slice %4 {offsets = [0, 6, 0], sizes = [2, 1, 256], strides = [1, 1, 1]} : vector<2x8x256xbf16> to vector<2x1x256xbf16>
    %275 = vector.shape_cast %274 : vector<2x1x256xbf16> to vector<2x256xbf16>
    %276 = arith.extf %275 : vector<2x256xbf16> to vector<2x256xf32>
    %277 = arith.truncf %268 : vector<2x64xf32> to vector<2x64xbf16>
    %cst_62 = arith.constant dense<0.000000e+00> : vector<2x256xf32>
    %278 = tpu.matmul %277, %7, %cst_62 {dimension_numbers = #tpu.dot_dimension_numbers<[1], [0], [0], [1], [0, 0, 1, 1], [], []>} : vector<2x64xbf16>, vector<64x256xbf16>, vector<2x256xf32> -> vector<2x256xf32>
    %279 = arith.addf %276, %278 : vector<2x256xf32>
    %280 = vector.extract_strided_slice %279 {offsets = [0, 0], sizes = [2, 192], strides = [1, 1]} : vector<2x256xf32> to vector<2x192xf32>
    %cst_63 = arith.constant 0.000000e+00 : f32
    %281 = vector.broadcast %cst_63 : f32 to vector<2x192xf32>
    %282 = arith.subf %281, %280 : vector<2x192xf32>
    %283 = math.exp %282 : vector<2x192xf32>
    %cst_64 = arith.constant 1.000000e+00 : f32
    %284 = vector.broadcast %cst_64 : f32 to vector<2x192xf32>
    %285 = arith.addf %284, %283 : vector<2x192xf32>
    %286 = tpu.reciprocal %285 {approx = true} : vector<2x192xf32> -> vector<2x192xf32>
    %287 = vector.extract_strided_slice %286 {offsets = [0, 0], sizes = [2, 64], strides = [1, 1]} : vector<2x192xf32> to vector<2x64xf32>
    %288 = vector.extract_strided_slice %286 {offsets = [0, 64], sizes = [2, 64], strides = [1, 1]} : vector<2x192xf32> to vector<2x64xf32>
    %289 = vector.extract_strided_slice %286 {offsets = [0, 128], sizes = [2, 64], strides = [1, 1]} : vector<2x192xf32> to vector<2x64xf32>
    %290 = vector.extract_strided_slice %279 {offsets = [0, 192], sizes = [2, 64], strides = [1, 1]} : vector<2x256xf32> to vector<2x64xf32>
    %291 = math.tanh %290 : vector<2x64xf32>
    %292 = arith.mulf %288, %261 : vector<2x64xf32>
    %293 = arith.mulf %287, %291 : vector<2x64xf32>
    %294 = arith.addf %292, %293 : vector<2x64xf32>
    %295 = math.tanh %294 : vector<2x64xf32>
    %296 = arith.mulf %289, %295 : vector<2x64xf32>
    %297 = vector.extract_strided_slice %5 {offsets = [0, 6, 0], sizes = [2, 1, 1], strides = [1, 1, 1]} : vector<2x8x1xf32> to vector<2x1x1xf32>
    %298 = vector.shape_cast %297 : vector<2x1x1xf32> to vector<2x1xf32>
    %299 = vector.broadcast %298 : vector<2x1xf32> to vector<2x64xf32>
    %300 = arith.mulf %299, %294 : vector<2x64xf32>
    %cst_65 = arith.constant 1.000000e+00 : f32
    %301 = vector.broadcast %cst_65 : f32 to vector<2x1xf32>
    %302 = arith.subf %301, %298 : vector<2x1xf32>
    %303 = vector.broadcast %302 : vector<2x1xf32> to vector<2x64xf32>
    %304 = arith.mulf %303, %261 : vector<2x64xf32>
    %305 = arith.addf %300, %304 : vector<2x64xf32>
    %306 = vector.broadcast %298 : vector<2x1xf32> to vector<2x64xf32>
    %307 = arith.mulf %306, %296 : vector<2x64xf32>
    %cst_66 = arith.constant 1.000000e+00 : f32
    %308 = vector.broadcast %cst_66 : f32 to vector<2x1xf32>
    %309 = arith.subf %308, %298 : vector<2x1xf32>
    %310 = vector.broadcast %309 : vector<2x1xf32> to vector<2x64xf32>
    %311 = arith.mulf %310, %268 : vector<2x64xf32>
    %312 = arith.addf %307, %311 : vector<2x64xf32>
    %313 = vector.broadcast %298 : vector<2x1xf32> to vector<2x64xf32>
    %314 = arith.mulf %313, %296 : vector<2x64xf32>
    %c0_67 = arith.constant 0 : index
    %c0_68 = arith.constant 0 : index
    %c6 = arith.constant 6 : index
    %c0_69 = arith.constant 0 : index
    %315 = vector.load %arg5[%c0_67, %c0_68, %c6, %c0_69] : memref<1x2x8x64xf32, #tpu.memory_space<vmem>>, vector<1x2x1x64xf32>
    %316 = vector.shape_cast %315 : vector<1x2x1x64xf32> to vector<2x64xf32>
    %317 = vector.shape_cast %314 : vector<2x64xf32> to vector<1x2x1x64xf32>
    tpu.vector_store %arg5[%c0_67, %c0_68, %c6, %c0_69], %317 {strides = array<i32>} : memref<1x2x8x64xf32, #tpu.memory_space<vmem>>, vector<1x2x1x64xf32>,
    %318 = vector.extract_strided_slice %4 {offsets = [0, 7, 0], sizes = [2, 1, 256], strides = [1, 1, 1]} : vector<2x8x256xbf16> to vector<2x1x256xbf16>
    %319 = vector.shape_cast %318 : vector<2x1x256xbf16> to vector<2x256xbf16>
    %320 = arith.extf %319 : vector<2x256xbf16> to vector<2x256xf32>
    %321 = arith.truncf %312 : vector<2x64xf32> to vector<2x64xbf16>
    %cst_70 = arith.constant dense<0.000000e+00> : vector<2x256xf32>
    %322 = tpu.matmul %321, %7, %cst_70 {dimension_numbers = #tpu.dot_dimension_numbers<[1], [0], [0], [1], [0, 0, 1, 1], [], []>} : vector<2x64xbf16>, vector<64x256xbf16>, vector<2x256xf32> -> vector<2x256xf32>
    %323 = arith.addf %320, %322 : vector<2x256xf32>
    %324 = vector.extract_strided_slice %323 {offsets = [0, 0], sizes = [2, 192], strides = [1, 1]} : vector<2x256xf32> to vector<2x192xf32>
    %cst_71 = arith.constant 0.000000e+00 : f32
    %325 = vector.broadcast %cst_71 : f32 to vector<2x192xf32>
    %326 = arith.subf %325, %324 : vector<2x192xf32>
    %327 = math.exp %326 : vector<2x192xf32>
    %cst_72 = arith.constant 1.000000e+00 : f32
    %328 = vector.broadcast %cst_72 : f32 to vector<2x192xf32>
    %329 = arith.addf %328, %327 : vector<2x192xf32>
    %330 = tpu.reciprocal %329 {approx = true} : vector<2x192xf32> -> vector<2x192xf32>
    %331 = vector.extract_strided_slice %330 {offsets = [0, 0], sizes = [2, 64], strides = [1, 1]} : vector<2x192xf32> to vector<2x64xf32>
    %332 = vector.extract_strided_slice %330 {offsets = [0, 64], sizes = [2, 64], strides = [1, 1]} : vector<2x192xf32> to vector<2x64xf32>
    %333 = vector.extract_strided_slice %330 {offsets = [0, 128], sizes = [2, 64], strides = [1, 1]} : vector<2x192xf32> to vector<2x64xf32>
    %334 = vector.extract_strided_slice %323 {offsets = [0, 192], sizes = [2, 64], strides = [1, 1]} : vector<2x256xf32> to vector<2x64xf32>
    %335 = math.tanh %334 : vector<2x64xf32>
    %336 = arith.mulf %332, %305 : vector<2x64xf32>
    %337 = arith.mulf %331, %335 : vector<2x64xf32>
    %338 = arith.addf %336, %337 : vector<2x64xf32>
    %339 = math.tanh %338 : vector<2x64xf32>
    %340 = arith.mulf %333, %339 : vector<2x64xf32>
    %341 = vector.extract_strided_slice %5 {offsets = [0, 7, 0], sizes = [2, 1, 1], strides = [1, 1, 1]} : vector<2x8x1xf32> to vector<2x1x1xf32>
    %342 = vector.shape_cast %341 : vector<2x1x1xf32> to vector<2x1xf32>
    %343 = vector.broadcast %342 : vector<2x1xf32> to vector<2x64xf32>
    %344 = arith.mulf %343, %338 : vector<2x64xf32>
    %cst_73 = arith.constant 1.000000e+00 : f32
    %345 = vector.broadcast %cst_73 : f32 to vector<2x1xf32>
    %346 = arith.subf %345, %342 : vector<2x1xf32>
    %347 = vector.broadcast %346 : vector<2x1xf32> to vector<2x64xf32>
    %348 = arith.mulf %347, %305 : vector<2x64xf32>
    %349 = arith.addf %344, %348 : vector<2x64xf32>
    %350 = vector.broadcast %342 : vector<2x1xf32> to vector<2x64xf32>
    %351 = arith.mulf %350, %340 : vector<2x64xf32>
    %cst_74 = arith.constant 1.000000e+00 : f32
    %352 = vector.broadcast %cst_74 : f32 to vector<2x1xf32>
    %353 = arith.subf %352, %342 : vector<2x1xf32>
    %354 = vector.broadcast %353 : vector<2x1xf32> to vector<2x64xf32>
    %355 = arith.mulf %354, %312 : vector<2x64xf32>
    %356 = arith.addf %351, %355 : vector<2x64xf32>
    %357 = vector.broadcast %342 : vector<2x1xf32> to vector<2x64xf32>
    %358 = arith.mulf %357, %340 : vector<2x64xf32>
    %c0_75 = arith.constant 0 : index
    %c0_76 = arith.constant 0 : index
    %c7 = arith.constant 7 : index
    %c0_77 = arith.constant 0 : index
    %359 = vector.load %arg5[%c0_75, %c0_76, %c7, %c0_77] : memref<1x2x8x64xf32, #tpu.memory_space<vmem>>, vector<1x2x1x64xf32>
    %360 = vector.shape_cast %359 : vector<1x2x1x64xf32> to vector<2x64xf32>
    %361 = vector.shape_cast %358 : vector<2x64xf32> to vector<1x2x1x64xf32>
    tpu.vector_store %arg5[%c0_75, %c0_76, %c7, %c0_77], %361 {strides = array<i32>} : memref<1x2x8x64xf32, #tpu.memory_space<vmem>>, vector<1x2x1x64xf32>,
    %c0_78 = arith.constant 0 : index
    %c0_79 = arith.constant 0 : index
    %362 = vector.load %arg8[%c0_78, %c0_79] : memref<2x64xf32, #tpu.memory_space<vmem>>, vector<2x64xf32>
    tpu.vector_store %arg8[%c0_78, %c0_79], %356 {strides = array<i32>} : memref<2x64xf32, #tpu.memory_space<vmem>>, vector<2x64xf32>,
    %c0_80 = arith.constant 0 : index
    %c0_81 = arith.constant 0 : index
    %363 = vector.load %arg9[%c0_80, %c0_81] : memref<2x64xf32, #tpu.memory_space<vmem>>, vector<2x64xf32>
    tpu.vector_store %arg9[%c0_80, %c0_81], %349 {strides = array<i32>} : memref<2x64xf32, #tpu.memory_space<vmem>>, vector<2x64xf32>,
    %c0_i32_82 = arith.constant 0 : i32
    %364 = arith.cmpi eq, %arg1, %c0_i32_82 : i32
    %365 = arith.extui %364 : i1 to i32
    %c0_i32_83 = arith.constant 0 : i32
    %366 = arith.cmpi ne, %365, %c0_i32_83 : i32
    scf.if %366 {
      %c0_84 = arith.constant 0 : index
      %c0_85 = arith.constant 0 : index
      %c0_86 = arith.constant 0 : index
      %367 = vector.load %arg6[%c0_84, %c0_85, %c0_86] : memref<1x2x64xf32, #tpu.memory_space<vmem>>, vector<1x2x64xf32>
      %368 = vector.shape_cast %367 : vector<1x2x64xf32> to vector<2x64xf32>
      %369 = vector.shape_cast %356 : vector<2x64xf32> to vector<1x2x64xf32>
      tpu.vector_store %arg6[%c0_84, %c0_85, %c0_86], %369 {strides = array<i32>} : memref<1x2x64xf32, #tpu.memory_space<vmem>>, vector<1x2x64xf32>,
      %c0_87 = arith.constant 0 : index
      %c0_88 = arith.constant 0 : index
      %c0_89 = arith.constant 0 : index
      %370 = vector.load %arg7[%c0_87, %c0_88, %c0_89] : memref<1x2x64xf32, #tpu.memory_space<vmem>>, vector<1x2x64xf32>
      %371 = vector.shape_cast %370 : vector<1x2x64xf32> to vector<2x64xf32>
      %372 = vector.shape_cast %349 : vector<2x64xf32> to vector<1x2x64xf32>
      tpu.vector_store %arg7[%c0_87, %c0_88, %c0_89], %372 {strides = array<i32>} : memref<1x2x64xf32, #tpu.memory_space<vmem>>, vector<1x2x64xf32>,
    } else {
    }
    return
  }
  func.func @transform_0(%arg0: i32, %arg1: i32) -> (i32, i32, i32, i32) {
    %c0_i32 = arith.constant 0 : i32
    %c0_i32_0 = arith.constant 0 : i32
    %c0_i32_1 = arith.constant 0 : i32
    return %arg0, %c0_i32, %arg1, %c0_i32_0 : i32, i32, i32, i32
  }
  func.func @transform_1(%arg0: i32, %arg1: i32) -> (i32, i32, i32) {
    %c0_i32 = arith.constant 0 : i32
    %c0_i32_0 = arith.constant 0 : i32
    %c0_i32_1 = arith.constant 0 : i32
    return %c0_i32, %arg1, %c0_i32_0 : i32, i32, i32
  }
  func.func @transform_2(%arg0: i32, %arg1: i32) -> (i32, i32, i32) {
    %c0_i32 = arith.constant 0 : i32
    %c0_i32_0 = arith.constant 0 : i32
    %c0_i32_1 = arith.constant 0 : i32
    return %arg0, %c0_i32, %c0_i32_0 : i32, i32, i32
  }
  func.func @transform_3(%arg0: i32, %arg1: i32) -> (i32, i32, i32, i32) {
    %c0_i32 = arith.constant 0 : i32
    %c0_i32_0 = arith.constant 0 : i32
    %c0_i32_1 = arith.constant 0 : i32
    return %arg0, %c0_i32, %arg1, %c0_i32_0 : i32, i32, i32, i32
  }
  func.func @transform_4(%arg0: i32, %arg1: i32) -> (i32, i32, i32) {
    %c0_i32 = arith.constant 0 : i32
    %c0_i32_0 = arith.constant 0 : i32
    %c0_i32_1 = arith.constant 0 : i32
    return %arg0, %c0_i32, %c0_i32_0 : i32, i32, i32
  }
  func.func @transform_5(%arg0: i32, %arg1: i32) -> (i32, i32, i32) {
    %c0_i32 = arith.constant 0 : i32
    %c0_i32_0 = arith.constant 0 : i32
    %c0_i32_1 = arith.constant 0 : i32
    return %arg0, %c0_i32, %c0_i32_0 : i32, i32, i32
  }
}

</mosaic_0001>

<llo_original>
// kernel: encoder_lstm_forward.14
$region0: #{encoder_lstm_forward.14}
  #allocation0 [shape = 'u32[]', space=smem, size = 0x4, offset = 0x4, fixed_abs, tag = 'smem constant byte address 0x4 - core index']
  #allocation1 [shape = 'u32[144,128]{1,0:T(1,128)}', space=vmem, size = 0x12000, scoped, tag = 'internal scratch']
  #allocation2 [shape = 'f32[256,128]{1,0:T(8,128)}', space=vmem, size = 0x20000, scoped, tag = 'scratch operand']
  %s0 = inlined_call_operand.vmem [shape: bf16[12544,128], index: 0, kind: input, shape index: {}]
  %s1 = inlined_call_operand.vmem [shape: bf16[128,128], index: 1, kind: input, shape index: {}]
  %s2 = inlined_call_operand.vmem [shape: f32[1,128], index: 2, kind: input, shape index: {}]
  %s3 = inlined_call_operand.vmem [shape: f32[12544,128], index: 3, kind: output, shape index: {}]
  %s4 = sld [smem:[#allocation0]]
  $region53: #{encoder_lstm_forward.14} parent=0
    _
  %s6 = ssub.s32 1, %s4
  %s7 = scalar_select 0, %s6, %s4
  loop: start=0, step=1, limit=51
  $region2: #{encoder_lstm_forward.14} parent=0 // loop_pre_header
    _
  $region3: #{encoder_lstm_forward.14} parent=0 // loop_header
    %s9 = sphi 0, %s13
    %p10 = scmp.ge.s32.totalorder %s9, 51
    %s16 = sphi 0, %s35
    %s17 = sphi 0, %s31
    %s18 = sphi 0, %s27
    %s19 = sphi 0, %s16
    %s20 = sphi 0, %s17
    %s21 = sphi 0, %s18
    %s22 = sphi 0, %s19
    %s23 = sphi 0, %s20
    %s24 = sphi 0, %s21
    %s40 = sphi 0, %s42
    %s43 = sphi 0, %s40
    %s44 = sphi 0, %s43
    %s60 = sphi 0, %s44
    %s68 = sphi 0, %s70
    %s71 = sphi 0, %s68
    %s72 = sphi 0, %s71
    %s88 = sphi 0, %s72
    %s94 = sphi 0, %s96
    %s97 = sphi 0, %s94
    %s98 = sphi 0, %s97
    %s114 = sphi 0, %s98
    %s122 = sphi 0, %s124
    %s125 = sphi 0, %s122
    %s126 = sphi 0, %s125
    %s142 = sphi 0, %s126
  $region4: #{encoder_lstm_forward.14} parent=0 // loop_header_branch
    %12 = sbr.rel (%p10) target = $region8
  $region5: #{encoder_lstm_forward.14} parent=0 // loop_body
    %s14 = ssub.s32 %s9, 1
    %s15 = ssub.s32 %s9, 2
    %s25 = sadd.s32 1, %s18
    %p26 = scmp.ge.s32.totalorder %s25, 1
    %s27 = scalar_select %p26, 0, %s25
    %s28 = sadd.s32 1, %s17
    %s29 = scalar_select %p26, %s28, %s17
    %p30 = scmp.ge.s32.totalorder %s29, 1
    %s31 = scalar_select %p30, 0, %s29
    %s32 = sadd.s32 1, %s16
    %s33 = scalar_select %p30, %s32, %s16
    %p34 = scmp.ge.s32.totalorder %s33, 49
    %s35 = scalar_select %p34, 0, %s33
    %s36 = ssub.s32 %s16, %s35
    %s37 = ssub.s32 %s18, %s27
    %s38 = sor.u32 %s36, %s37
    %p39 = scmp.eq.s32.totalorder %s38, 0
    %s41 = sadd.s32 %s40, 1
    %s42 = scalar_select %p39, %s40, %s41
    %p45 = pneg %p39
    %p46 = scmp.eq.s32.totalorder %s9, 48
    %p47 = por %p45, %p46
    %p48 = scmp.ne.s32.totalorder %s40, %s43
    %p49 = scmp.eq.s32.totalorder %s9, 0
    %p50 = por %p48, %p49
    %p51 = scmp.ne.s32.totalorder %s40, %s43
    %p52 = scmp.eq.s32.totalorder %s14, 48
    %p53 = por %p51, %p52
    %p54 = scmp.ne.s32.totalorder %s43, %s44
    %p55 = scmp.eq.s32.totalorder %s14, 0
    %p56 = por %p54, %p55
    %p57 = scmp.ne.s32.totalorder %s43, %s44
    %p58 = scmp.eq.s32.totalorder %s15, 48
    %p59 = por %p57, %p58
    %p61 = scmp.ne.s32.totalorder %s44, %s60
    %p62 = scmp.eq.s32.totalorder %s15, 0
    %p63 = por %p61, %p62
    %s64 = ssub.s32 %s18, %s27
    %s65 = ssub.s32 %s17, %s31
    %s66 = sor.u32 %s64, %s65
    %p67 = scmp.eq.s32.totalorder %s66, 0
    %s69 = sadd.s32 %s68, 1
    %s70 = scalar_select %p67, %s68, %s69
    %p73 = pneg %p67
    %p74 = scmp.eq.s32.totalorder %s9, 48
    %p75 = por %p73, %p74
    %p76 = scmp.ne.s32.totalorder %s68, %s71
    %p77 = scmp.eq.s32.totalorder %s9, 0
    %p78 = por %p76, %p77
    %p79 = scmp.ne.s32.totalorder %s68, %s71
    %p80 = scmp.eq.s32.totalorder %s14, 48
    %p81 = por %p79, %p80
    %p82 = scmp.ne.s32.totalorder %s71, %s72
    %p83 = scmp.eq.s32.totalorder %s14, 0
    %p84 = por %p82, %p83
    %p85 = scmp.ne.s32.totalorder %s71, %s72
    %p86 = scmp.eq.s32.totalorder %s15, 48
    %p87 = por %p85, %p86
    %p89 = scmp.ne.s32.totalorder %s72, %s88
    %p90 = scmp.eq.s32.totalorder %s15, 0
    %p91 = por %p89, %p90
    %s92 = ssub.s32 %s17, %s31
    %p93 = scmp.eq.s32.totalorder %s92, 0
    %s95 = sadd.s32 %s94, 1
    %s96 = scalar_select %p93, %s94, %s95
    %p99 = pneg %p93
    %p100 = scmp.eq.s32.totalorder %s9, 48
    %p101 = por %p99, %p100
    %p102 = scmp.ne.s32.totalorder %s94, %s97
    %p103 = scmp.eq.s32.totalorder %s9, 0
    %p104 = por %p102, %p103
    %p105 = scmp.ne.s32.totalorder %s94, %s97
    %p106 = scmp.eq.s32.totalorder %s14, 48
    %p107 = por %p105, %p106
    %p108 = scmp.ne.s32.totalorder %s97, %s98
    %p109 = scmp.eq.s32.totalorder %s14, 0
    %p110 = por %p108, %p109
    %p111 = scmp.ne.s32.totalorder %s97, %s98
    %p112 = scmp.eq.s32.totalorder %s15, 48
    %p113 = por %p111, %p112
    %p115 = scmp.ne.s32.totalorder %s98, %s114
    %p116 = scmp.eq.s32.totalorder %s15, 0
    %p117 = por %p115, %p116
    %s118 = ssub.s32 %s16, %s35
    %s119 = ssub.s32 %s17, %s31
    %s120 = sor.u32 %s118, %s119
    %p121 = scmp.eq.s32.totalorder %s120, 0
    %s123 = sadd.s32 %s122, 1
    %s124 = scalar_select %p121, %s122, %s123
    %p127 = pneg %p121
    %p128 = scmp.eq.s32.totalorder %s9, 48
    %p129 = por %p127, %p128
    %p130 = scmp.ne.s32.totalorder %s122, %s125
    %p131 = scmp.eq.s32.totalorder %s9, 0
    %p132 = por %p130, %p131
    %p133 = scmp.ne.s32.totalorder %s122, %s125
    %p134 = scmp.eq.s32.totalorder %s14, 48
    %p135 = por %p133, %p134
    %p136 = scmp.ne.s32.totalorder %s125, %s126
    %p137 = scmp.eq.s32.totalorder %s14, 0
    %p138 = por %p136, %p137
    %p139 = scmp.ne.s32.totalorder %s125, %s126
    %p140 = scmp.eq.s32.totalorder %s15, 48
    %p141 = por %p139, %p140
    %p143 = scmp.ne.s32.totalorder %s126, %s142
    %p144 = scmp.eq.s32.totalorder %s15, 0
    %p145 = por %p143, %p144
    %p146 = scmp.le.s32.totalorder 1, %s9
    %p147 = scmp.lt.s32.totalorder %s9, 50
    %p148 = pnand %p146, %p147
    %p149 = pneg %p148
    // Predicated region
    $region9: #{encoder_lstm_forward.14} parent=5 // pred_check
      _
    $region10: #{encoder_lstm_forward.14} parent=5 // pred_check_branch
      %151 = sbr.rel (%p148) target = $region12
    $region11: #{encoder_lstm_forward.14} parent=5 // pred_region
      %s152 = ssub.s32 %s9, 1
      // Predicated region
      $region13: #{encoder_lstm_forward.14} parent=11 // pred_check
        %p153 = pneg %p84
      $region14: #{encoder_lstm_forward.14} parent=11 // pred_check_branch
        %155 = sbr.rel (%p153) target = $region16
      $region15: #{encoder_lstm_forward.14} parent=11 // pred_region
        %s156 = smul.u32 16, %s21
        %p157 = scmp.lt.s32.totalorder %s156, 15
        %s158 = scalar_select %p157, %s156, 15
        %p159 = scmp.lt.s32.totalorder %s20, 0
        %s160 = scalar_select %p159, %s20, 0
        %s161 = sadd.s32 %s160, %s158
        %s162 = smul.addr %s161, 4
        %s163 = scalar_lea.vmem %s1, %s162
        %s164 = smul.u32 16, %s21
      $region16: #{encoder_lstm_forward.14} parent=11 // pred_fallthru
        _
      // Predicated region
      $region17: #{encoder_lstm_forward.14} parent=11 // pred_check
        %p165 = pneg %p110
      $region18: #{encoder_lstm_forward.14} parent=11 // pred_check_branch
        %167 = sbr.rel (%p165) target = $region20
      $region19: #{encoder_lstm_forward.14} parent=11 // pred_region
        %p168 = scmp.lt.s32.totalorder %s20, 0
        %s169 = scalar_select %p168, %s20, 0
        %s170 = scalar_lea.vmem %s2, %s169
      $region20: #{encoder_lstm_forward.14} parent=11 // pred_fallthru
        _
    $region12: #{encoder_lstm_forward.14} parent=5 // pred_fallthru
      _
    %p171 = scmp.lt.s32.totalorder %s9, 49
    // Predicated region
    $region21: #{encoder_lstm_forward.14} parent=5 // pred_check
      %p172 = pneg %p171
    $region22: #{encoder_lstm_forward.14} parent=5 // pred_check_branch
      %174 = sbr.rel (%p172) target = $region24
    $region23: #{encoder_lstm_forward.14} parent=5 // pred_region
      // Predicated region
      $region25: #{encoder_lstm_forward.14} parent=23 // pred_check
        %p175 = pneg %p50
      $region26: #{encoder_lstm_forward.14} parent=23 // pred_check_branch
        %177 = sbr.rel (%p175) target = $region28
      $region27: #{encoder_lstm_forward.14} parent=23 // pred_region
        %s178 = smul.u32 32, %s16
        %p179 = scmp.lt.s32.totalorder %s178, 1567
        %s180 = scalar_select %p179, %s178, 1567
        %p181 = scmp.lt.s32.totalorder %s18, 0
        %s182 = scalar_select %p181, %s18, 0
        %s183 = sadd.s32 %s182, %s180
        %s184 = smul.addr %s183, 4
        %s185 = scalar_lea.vmem %s0, %s184
        %s186 = smul.u32 32, %s16
      $region28: #{encoder_lstm_forward.14} parent=23 // pred_fallthru
        _
    $region24: #{encoder_lstm_forward.14} parent=5 // pred_fallthru
      _
    %p187 = scmp.le.s32.totalorder 1, %s9
    %p188 = scmp.lt.s32.totalorder %s9, 50
    %p189 = pnand %p187, %p188
    %p190 = pneg %p189
    // Predicated region
    $region29: #{encoder_lstm_forward.14} parent=5 // pred_check
      _
    $region30: #{encoder_lstm_forward.14} parent=5 // pred_check_branch
      %192 = sbr.rel (%p189) target = $region32
    $region31: #{encoder_lstm_forward.14} parent=5 // pred_region
      %s193 = ssub.s32 %s9, 1
      %s194 = smul.u32 32, %s19
      %p195 = scmp.lt.s32.totalorder %s194, 1567
      %s196 = scalar_select %p195, %s194, 1567
      %p197 = scmp.lt.s32.totalorder %s21, 0
      %s198 = scalar_select %p197, %s21, 0
      %s199 = sadd.s32 %s198, %s196
      %s200 = smul.addr %s199, 4
      %s201 = scalar_lea.vmem %s0, %s200
      %p202 = pneg %p56
      %p203 = pneg %p53
      %s204 = smul.u32 16, %s21
      %p205 = scmp.lt.s32.totalorder %s204, 15
      %s206 = scalar_select %p205, %s204, 15
      %p207 = scmp.lt.s32.totalorder %s20, 0
      %s208 = scalar_select %p207, %s20, 0
      %s209 = sadd.s32 %s208, %s206
      %s210 = smul.addr %s209, 4
      %s211 = scalar_lea.vmem %s1, %s210
      %p212 = pneg %p84
      %p213 = pneg %p81
      %p214 = scmp.lt.s32.totalorder %s20, 0
      %s215 = scalar_select %p214, %s20, 0
      %s216 = scalar_lea.vmem %s2, %s215
      %p217 = pneg %p110
      %p218 = pneg %p107
      %p219 = pneg %p138
      %p220 = pneg %p135
      %s221 = smul.u32 32, %s19
      %p222 = scmp.lt.s32.totalorder %s221, 1567
      %s223 = scalar_select %p222, %s221, 1567
      %p224 = scmp.lt.s32.totalorder %s20, 0
      %s225 = scalar_select %p224, %s20, 0
      %s226 = sadd.s32 %s225, %s223
      %s227 = smul.addr %s226, 8
      %s228 = scalar_lea.vmem %s3, %s227
      %s229 = smul.u32 32, %s19
      %p230 = scmp.lt.s32.totalorder %s229, 1567
      %s231 = scalar_select %p230, %s229, 1567
      %p232 = scmp.lt.s32.totalorder %s21, 0
      %s233 = scalar_select %p232, %s21, 0
      %s234 = sadd.s32 %s233, %s231
      %s235 = smul.addr %s234, 4
      %s236 = scalar_lea.vmem %s0, %s235
      %s237 = smul.u32 32, %s19
      %s238 = smul.u32 16, %s21
      %p239 = scmp.lt.s32.totalorder %s238, 15
      %s240 = scalar_select %p239, %s238, 15
      %p241 = scmp.lt.s32.totalorder %s20, 0
      %s242 = scalar_select %p241, %s20, 0
      %s243 = sadd.s32 %s242, %s240
      %s244 = smul.addr %s243, 4
      %s245 = scalar_lea.vmem %s1, %s244
      %s246 = smul.u32 16, %s21
      %p247 = scmp.lt.s32.totalorder %s20, 0
      %s248 = scalar_select %p247, %s20, 0
      %s249 = scalar_lea.vmem %s2, %s248
      %s250 = smul.u32 32, %s19
      %p251 = scmp.lt.s32.totalorder %s250, 1567
      %s252 = scalar_select %p251, %s250, 1567
      %p253 = scmp.lt.s32.totalorder %s20, 0
      %s254 = scalar_select %p253, %s20, 0
      %s255 = sadd.s32 %s254, %s252
      %s256 = smul.addr %s255, 8
      %s257 = scalar_lea.vmem %s3, %s256
      %s258 = smul.u32 32, %s19
      %p260 = scmp.eq.s32.totalorder %s21, 0
      // Predicated region
      $region33: #{encoder_lstm_forward.14} parent=31 // pred_check
        %p261 = pneg %p260
      $region34: #{encoder_lstm_forward.14} parent=31 // pred_check_branch
        %263 = sbr.rel (%p261) target = $region36
      $region35: #{encoder_lstm_forward.14} parent=31 // pred_region
        %264 = vst [vmem:[#allocation2] sm:$0xff] 0.0
        %265 = vst [vmem:[#allocation2 + $0x8] sm:$0xff] 0.0
        %266 = vst [vmem:[#allocation2 + $0x10] sm:$0xff] 0.0
        %267 = vst [vmem:[#allocation2 + $0x18] sm:$0xff] 0.0
        %268 = vst [vmem:[#allocation2 + $0x20] sm:$0xff] 0.0
        %269 = vst [vmem:[#allocation2 + $0x28] sm:$0xff] 0.0
        %270 = vst [vmem:[#allocation2 + $0x30] sm:$0xff] 0.0
        %271 = vst [vmem:[#allocation2 + $0x38] sm:$0xff] 0.0
        %272 = vst [vmem:[#allocation2 + $0x40] sm:$0xff] 0.0
        %273 = vst [vmem:[#allocation2 + $0x48] sm:$0xff] 0.0
        %274 = vst [vmem:[#allocation2 + $0x50] sm:$0xff] 0.0
        %275 = vst [vmem:[#allocation2 + $0x58] sm:$0xff] 0.0
        %276 = vst [vmem:[#allocation2 + $0x60] sm:$0xff] 0.0
        %277 = vst [vmem:[#allocation2 + $0x68] sm:$0xff] 0.0
        %278 = vst [vmem:[#allocation2 + $0x70] sm:$0xff] 0.0
        %279 = vst [vmem:[#allocation2 + $0x78] sm:$0xff] 0.0
        %280 = vst [vmem:[#allocation2 + $0x80] sm:$0xff] 0.0
        %281 = vst [vmem:[#allocation2 + $0x88] sm:$0xff] 0.0
        %282 = vst [vmem:[#allocation2 + $0x90] sm:$0xff] 0.0
        %283 = vst [vmem:[#allocation2 + $0x98] sm:$0xff] 0.0
        %284 = vst [vmem:[#allocation2 + $0xa0] sm:$0xff] 0.0
        %285 = vst [vmem:[#allocation2 + $0xa8] sm:$0xff] 0.0
        %286 = vst [vmem:[#allocation2 + $0xb0] sm:$0xff] 0.0
        %287 = vst [vmem:[#allocation2 + $0xb8] sm:$0xff] 0.0
        %288 = vst [vmem:[#allocation2 + $0xc0] sm:$0xff] 0.0
        %289 = vst [vmem:[#allocation2 + $0xc8] sm:$0xff] 0.0
        %290 = vst [vmem:[#allocation2 + $0xd0] sm:$0xff] 0.0
        %291 = vst [vmem:[#allocation2 + $0xd8] sm:$0xff] 0.0
        %292 = vst [vmem:[#allocation2 + $0xe0] sm:$0xff] 0.0
        %293 = vst [vmem:[#allocation2 + $0xe8] sm:$0xff] 0.0
        %294 = vst [vmem:[#allocation2 + $0xf0] sm:$0xff] 0.0
        %295 = vst [vmem:[#allocation2 + $0xf8] sm:$0xff] 0.0
      $region36: #{encoder_lstm_forward.14} parent=31 // pred_fallthru
        _
      %v296 = vld [vmem:[#allocation2] sm:$0xff]
      %v297 = vld [vmem:[#allocation2 + $0x8] sm:$0xff]
      %v298 = vld [vmem:[#allocation2 + $0x10] sm:$0xff]
      %v299 = vld [vmem:[#allocation2 + $0x18] sm:$0xff]
      %v300 = vld [vmem:[#allocation2 + $0x20] sm:$0xff]
      %v301 = vld [vmem:[#allocation2 + $0x28] sm:$0xff]
      %v302 = vld [vmem:[#allocation2 + $0x30] sm:$0xff]
      %v303 = vld [vmem:[#allocation2 + $0x38] sm:$0xff]
      %v304 = vld [vmem:[#allocation2 + $0x40] sm:$0xff]
      %v305 = vld [vmem:[#allocation2 + $0x48] sm:$0xff]
      %v306 = vld [vmem:[#allocation2 + $0x50] sm:$0xff]
      %v307 = vld [vmem:[#allocation2 + $0x58] sm:$0xff]
      %v308 = vld [vmem:[#allocation2 + $0x60] sm:$0xff]
      %v309 = vld [vmem:[#allocation2 + $0x68] sm:$0xff]
      %v310 = vld [vmem:[#allocation2 + $0x70] sm:$0xff]
      %v311 = vld [vmem:[#allocation2 + $0x78] sm:$0xff]
      %v312 = vld [vmem:[#allocation2 + $0x80] sm:$0xff]
      %v313 = vld [vmem:[#allocation2 + $0x88] sm:$0xff]
      %v314 = vld [vmem:[#allocation2 + $0x90] sm:$0xff]
      %v315 = vld [vmem:[#allocation2 + $0x98] sm:$0xff]
      %v316 = vld [vmem:[#allocation2 + $0xa0] sm:$0xff]
      %v317 = vld [vmem:[#allocation2 + $0xa8] sm:$0xff]
      %v318 = vld [vmem:[#allocation2 + $0xb0] sm:$0xff]
      %v319 = vld [vmem:[#allocation2 + $0xb8] sm:$0xff]
      %v320 = vld [vmem:[#allocation2 + $0xc0] sm:$0xff]
      %v321 = vld [vmem:[#allocation2 + $0xc8] sm:$0xff]
      %v322 = vld [vmem:[#allocation2 + $0xd0] sm:$0xff]
      %v323 = vld [vmem:[#allocation2 + $0xd8] sm:$0xff]
      %v324 = vld [vmem:[#allocation2 + $0xe0] sm:$0xff]
      %v325 = vld [vmem:[#allocation2 + $0xe8] sm:$0xff]
      %v326 = vld [vmem:[#allocation2 + $0xf0] sm:$0xff]
      %v327 = vld [vmem:[#allocation2 + $0xf8] sm:$0xff]
      %v328 = vld [vmem:[%s236] sm:$0xf]
      %v329 = vld [vmem:[%s236 + $0x4] sm:$0xf]
      %v330 = vld [vmem:[%s236 + $0x8] sm:$0xf]
      %v331 = vld [vmem:[%s236 + $0xc] sm:$0xf]
      %v332 = vld [vmem:[%s236 + $0x10] sm:$0xf]
      %v333 = vld [vmem:[%s236 + $0x14] sm:$0xf]
      %v334 = vld [vmem:[%s236 + $0x18] sm:$0xf]
      %v335 = vld [vmem:[%s236 + $0x1c] sm:$0xf]
      %v336 = vld [vmem:[%s236 + $0x20] sm:$0xf]
      %v337 = vld [vmem:[%s236 + $0x24] sm:$0xf]
      %v338 = vld [vmem:[%s236 + $0x28] sm:$0xf]
      %v339 = vld [vmem:[%s236 + $0x2c] sm:$0xf]
      %v340 = vld [vmem:[%s236 + $0x30] sm:$0xf]
      %v341 = vld [vmem:[%s236 + $0x34] sm:$0xf]
      %v342 = vld [vmem:[%s236 + $0x38] sm:$0xf]
      %v343 = vld [vmem:[%s236 + $0x3c] sm:$0xf]
      %v344 = vld [vmem:[%s236 + $0x40] sm:$0xf]
      %v345 = vld [vmem:[%s236 + $0x44] sm:$0xf]
      %v346 = vld [vmem:[%s236 + $0x48] sm:$0xf]
      %v347 = vld [vmem:[%s236 + $0x4c] sm:$0xf]
      %v348 = vld [vmem:[%s236 + $0x50] sm:$0xf]
      %v349 = vld [vmem:[%s236 + $0x54] sm:$0xf]
      %v350 = vld [vmem:[%s236 + $0x58] sm:$0xf]
      %v351 = vld [vmem:[%s236 + $0x5c] sm:$0xf]
      %v352 = vld [vmem:[%s236 + $0x60] sm:$0xf]
      %v353 = vld [vmem:[%s236 + $0x64] sm:$0xf]
      %v354 = vld [vmem:[%s236 + $0x68] sm:$0xf]
      %v355 = vld [vmem:[%s236 + $0x6c] sm:$0xf]
      %v356 = vld [vmem:[%s236 + $0x70] sm:$0xf]
      %v357 = vld [vmem:[%s236 + $0x74] sm:$0xf]
      %v358 = vld [vmem:[%s236 + $0x78] sm:$0xf]
      %v359 = vld [vmem:[%s236 + $0x7c] sm:$0xf]
      %v360 = vld [vmem:[%s245] sm:$0xf]
      %v361 = vld [vmem:[%s245 + $0x4] sm:$0xf]
      %v362 = vld [vmem:[%s245 + $0x8] sm:$0xf]
      %v363 = vld [vmem:[%s245 + $0xc] sm:$0xf]
      %v364 = vld [vmem:[%s245 + $0x10] sm:$0xf]
      %v365 = vld [vmem:[%s245 + $0x14] sm:$0xf]
      %v366 = vld [vmem:[%s245 + $0x18] sm:$0xf]
      %v367 = vld [vmem:[%s245 + $0x1c] sm:$0xf]
      %v368 = vld [vmem:[%s245 + $0x20] sm:$0xf]
      %v369 = vld [vmem:[%s245 + $0x24] sm:$0xf]
      %v370 = vld [vmem:[%s245 + $0x28] sm:$0xf]
      %v371 = vld [vmem:[%s245 + $0x2c] sm:$0xf]
      %v372 = vld [vmem:[%s245 + $0x30] sm:$0xf]
      %v373 = vld [vmem:[%s245 + $0x34] sm:$0xf]
      %v374 = vld [vmem:[%s245 + $0x38] sm:$0xf]
      %v375 = vld [vmem:[%s245 + $0x3c] sm:$0xf]
      %v408 = vunpack.c.l.b16 %v328
      %v409 = vunpack.c.l.b16 %v329
      %v410 = vunpack.c.l.b16 %v330
      %v411 = vunpack.c.l.b16 %v331
      %v412 = vunpack.c.l.b16 %v332
      %v413 = vunpack.c.l.b16 %v333
      %v414 = vunpack.c.l.b16 %v334
      %v415 = vunpack.c.l.b16 %v335
      %v416 = vunpack.c.l.b16 %v336
      %v417 = vunpack.c.l.b16 %v337
      %v418 = vunpack.c.l.b16 %v338
      %v419 = vunpack.c.l.b16 %v339
      %v420 = vunpack.c.l.b16 %v340
      %v421 = vunpack.c.l.b16 %v341
      %v422 = vunpack.c.l.b16 %v342
      %v423 = vunpack.c.l.b16 %v343
      %v424 = vunpack.c.l.b16 %v344
      %v425 = vunpack.c.l.b16 %v345
      %v426 = vunpack.c.l.b16 %v346
      %v427 = vunpack.c.l.b16 %v347
      %v428 = vunpack.c.l.b16 %v348
      %v429 = vunpack.c.l.b16 %v349
      %v430 = vunpack.c.l.b16 %v350
      %v431 = vunpack.c.l.b16 %v351
      %v432 = vunpack.c.l.b16 %v352
      %v433 = vunpack.c.l.b16 %v353
      %v434 = vunpack.c.l.b16 %v354
      %v435 = vunpack.c.l.b16 %v355
      %v436 = vunpack.c.l.b16 %v356
      %v437 = vunpack.c.l.b16 %v357
      %v438 = vunpack.c.l.b16 %v358
      %v439 = vunpack.c.l.b16 %v359
      %v440 = vpack.c.b16 %v409, %v408
      %v441 = vpack.c.b16 %v411, %v410
      %v442 = vpack.c.b16 %v413, %v412
      %v443 = vpack.c.b16 %v415, %v414
      %v444 = vpack.c.b16 %v417, %v416
      %v445 = vpack.c.b16 %v419, %v418
      %v446 = vpack.c.b16 %v421, %v420
      %v447 = vpack.c.b16 %v423, %v422
      %v448 = vpack.c.b16 %v425, %v424
      %v449 = vpack.c.b16 %v427, %v426
      %v450 = vpack.c.b16 %v429, %v428
      %v451 = vpack.c.b16 %v431, %v430
      %v452 = vpack.c.b16 %v433, %v432
      %v453 = vpack.c.b16 %v435, %v434
      %v454 = vpack.c.b16 %v437, %v436
      %v455 = vpack.c.b16 %v439, %v438
      %v488 = vunpack.c.l.b16 %v360
      %v489 = vunpack.c.l.b16 %v361
      %v490 = vunpack.c.l.b16 %v362
      %v491 = vunpack.c.l.b16 %v363
      %v492 = vunpack.c.l.b16 %v364
      %v493 = vunpack.c.l.b16 %v365
      %v494 = vunpack.c.l.b16 %v366
      %v495 = vunpack.c.l.b16 %v367
      %v496 = vunpack.c.l.b16 %v368
      %v497 = vunpack.c.l.b16 %v369
      %v498 = vunpack.c.l.b16 %v370
      %v499 = vunpack.c.l.b16 %v371
      %v500 = vunpack.c.l.b16 %v372
      %v501 = vunpack.c.l.b16 %v373
      %v502 = vunpack.c.l.b16 %v374
      %v503 = vunpack.c.l.b16 %v375
      %v504 = vpack.c.b16 %v489, %v488
      %v505 = vpack.c.b16 %v491, %v490
      %v506 = vpack.c.b16 %v493, %v492
      %v507 = vpack.c.b16 %v495, %v494
      %v508 = vpack.c.b16 %v497, %v496
      %v509 = vpack.c.b16 %v499, %v498
      %v510 = vpack.c.b16 %v501, %v500
      %v511 = vpack.c.b16 %v503, %v502
      %520 = vmatprep.subr.bf16.mxu0 0
      %521 = vmatpush1.bf16.msra.mxu0 %v504
      %522 = vmatprep.subr.bf16.mxu0 0
      %523 = vmatpush1.bf16.msra.mxu0 %v505
      %524 = vmatprep.subr.bf16.mxu0 0
      %525 = vmatpush1.bf16.msra.mxu0 %v506
      %526 = vmatprep.subr.bf16.mxu0 0
      %527 = vmatpush1.bf16.msra.mxu0 %v507
      %528 = vmatprep.subr.bf16.mxu0 0
      %529 = vmatpush1.bf16.msra.mxu0 %v508
      %530 = vmatprep.subr.bf16.mxu0 0
      %531 = vmatpush1.bf16.msra.mxu0 %v509
      %532 = vmatprep.subr.bf16.mxu0 0
      %533 = vmatpush1.bf16.msra.mxu0 %v510
      %534 = vmatprep.subr.bf16.mxu0 0
      %535 = vmatpush1.bf16.msra.mxu0 %v511
      %536 = vmatprep.subr.bf16.mxu0 0
      %537 = vmatpush1.bf16.msra.mxu0 0
      %538 = vmatprep.subr.bf16.mxu0 0
      %539 = vmatpush1.bf16.msra.mxu0 0
      %540 = vmatprep.subr.bf16.mxu0 0
      %541 = vmatpush1.bf16.msra.mxu0 0
      %542 = vmatprep.subr.bf16.mxu0 0
      %543 = vmatpush1.bf16.msra.mxu0 0
      %544 = vmatprep.subr.bf16.mxu0 0
      %545 = vmatpush1.bf16.msra.mxu0 0
      %546 = vmatprep.subr.bf16.mxu0 0
      %547 = vmatpush1.bf16.msra.mxu0 0
      %548 = vmatprep.subr.bf16.mxu0 0
      %549 = vmatpush1.bf16.msra.mxu0 0
      %550 = vmatprep.subr.bf16.mxu0 0
      %551 = vmatpush1.bf16.msra.mxu0 0
      %552 = vmatprep.mubr.bf16.mxu0 0
      %553 = vmatmul.mubr.bf16.gmra.mrb[0].mxu0 %v440
      %v554 = vpop.f32.mrb[0].mxu0
      %v555 = vadd.f32 0.0, %v554
      %v556 = vpop.f32.mrb[0].mxu0
      %v557 = vpop.f32.mrb[0].mxu0
      %v558 = vadd.f32 0.0, %v557
      %v559 = vpop.f32.mrb[0].mxu0
      %560 = vmatprep.mubr.bf16.mxu0 0
      %561 = vmatmul.mubr.bf16.gmra.mrb[0].mxu0 %v441
      %v562 = vpop.f32.mrb[0].mxu0
      %v563 = vadd.f32 0.0, %v562
      %v564 = vpop.f32.mrb[0].mxu0
      %v565 = vpop.f32.mrb[0].mxu0
      %v566 = vadd.f32 0.0, %v565
      %v567 = vpop.f32.mrb[0].mxu0
      %568 = vmatprep.mubr.bf16.mxu0 0
      %569 = vmatmul.mubr.bf16.gmra.mrb[0].mxu0 %v442
      %v570 = vpop.f32.mrb[0].mxu0
      %v571 = vadd.f32 0.0, %v570
      %v572 = vpop.f32.mrb[0].mxu0
      %v573 = vpop.f32.mrb[0].mxu0
      %v574 = vadd.f32 0.0, %v573
      %v575 = vpop.f32.mrb[0].mxu0
      %576 = vmatprep.mubr.bf16.mxu0 0
      %577 = vmatmul.mubr.bf16.gmra.mrb[0].mxu0 %v443
      %v578 = vpop.f32.mrb[0].mxu0
      %v579 = vadd.f32 0.0, %v578
      %v580 = vpop.f32.mrb[0].mxu0
      %v581 = vpop.f32.mrb[0].mxu0
      %v582 = vadd.f32 0.0, %v581
      %v583 = vpop.f32.mrb[0].mxu0
      %584 = vmatprep.mubr.bf16.mxu0 0
      %585 = vmatmul.mubr.bf16.gmra.mrb[0].mxu0 %v444
      %v586 = vpop.f32.mrb[0].mxu0
      %v587 = vadd.f32 0.0, %v586
      %v588 = vpop.f32.mrb[0].mxu0
      %v589 = vpop.f32.mrb[0].mxu0
      %v590 = vadd.f32 0.0, %v589
      %v591 = vpop.f32.mrb[0].mxu0
      %592 = vmatprep.mubr.bf16.mxu0 0
      %593 = vmatmul.mubr.bf16.gmra.mrb[0].mxu0 %v445
      %v594 = vpop.f32.mrb[0].mxu0
      %v595 = vadd.f32 0.0, %v594
      %v596 = vpop.f32.mrb[0].mxu0
      %v597 = vpop.f32.mrb[0].mxu0
      %v598 = vadd.f32 0.0, %v597
      %v599 = vpop.f32.mrb[0].mxu0
      %600 = vmatprep.mubr.bf16.mxu0 0
      %601 = vmatmul.mubr.bf16.gmra.mrb[0].mxu0 %v446
      %v602 = vpop.f32.mrb[0].mxu0
      %v603 = vadd.f32 0.0, %v602
      %v604 = vpop.f32.mrb[0].mxu0
      %v605 = vpop.f32.mrb[0].mxu0
      %v606 = vadd.f32 0.0, %v605
      %v607 = vpop.f32.mrb[0].mxu0
      %608 = vmatprep.mubr.bf16.mxu0 0
      %609 = vmatmul.mubr.bf16.gmra.mrb[0].mxu0 %v447
      %v610 = vpop.f32.mrb[0].mxu0
      %v611 = vadd.f32 0.0, %v610
      %v612 = vpop.f32.mrb[0].mxu0
      %v613 = vpop.f32.mrb[0].mxu0
      %v614 = vadd.f32 0.0, %v613
      %v615 = vpop.f32.mrb[0].mxu0
      %616 = vmatprep.mubr.bf16.mxu0 0
      %617 = vmatmul.mubr.bf16.gmra.mrb[0].mxu0 %v448
      %v618 = vpop.f32.mrb[0].mxu0
      %v619 = vadd.f32 0.0, %v618
      %v620 = vpop.f32.mrb[0].mxu0
      %v621 = vpop.f32.mrb[0].mxu0
      %v622 = vadd.f32 0.0, %v621
      %v623 = vpop.f32.mrb[0].mxu0
      %624 = vmatprep.mubr.bf16.mxu0 0
      %625 = vmatmul.mubr.bf16.gmra.mrb[0].mxu0 %v449
      %v626 = vpop.f32.mrb[0].mxu0
      %v627 = vadd.f32 0.0, %v626
      %v628 = vpop.f32.mrb[0].mxu0
      %v629 = vpop.f32.mrb[0].mxu0
      %v630 = vadd.f32 0.0, %v629
      %v631 = vpop.f32.mrb[0].mxu0
      %632 = vmatprep.mubr.bf16.mxu0 0
      %633 = vmatmul.mubr.bf16.gmra.mrb[0].mxu0 %v450
      %v634 = vpop.f32.mrb[0].mxu0
      %v635 = vadd.f32 0.0, %v634
      %v636 = vpop.f32.mrb[0].mxu0
      %v637 = vpop.f32.mrb[0].mxu0
      %v638 = vadd.f32 0.0, %v637
      %v639 = vpop.f32.mrb[0].mxu0
      %640 = vmatprep.mubr.bf16.mxu0 0
      %641 = vmatmul.mubr.bf16.gmra.mrb[0].mxu0 %v451
      %v642 = vpop.f32.mrb[0].mxu0
      %v643 = vadd.f32 0.0, %v642
      %v644 = vpop.f32.mrb[0].mxu0
      %v645 = vpop.f32.mrb[0].mxu0
      %v646 = vadd.f32 0.0, %v645
      %v647 = vpop.f32.mrb[0].mxu0
      %648 = vmatprep.mubr.bf16.mxu0 0
      %649 = vmatmul.mubr.bf16.gmra.mrb[0].mxu0 %v452
      %v650 = vpop.f32.mrb[0].mxu0
      %v651 = vadd.f32 0.0, %v650
      %v652 = vpop.f32.mrb[0].mxu0
      %v653 = vpop.f32.mrb[0].mxu0
      %v654 = vadd.f32 0.0, %v653
      %v655 = vpop.f32.mrb[0].mxu0
      %656 = vmatprep.mubr.bf16.mxu0 0
      %657 = vmatmul.mubr.bf16.gmra.mrb[0].mxu0 %v453
      %v658 = vpop.f32.mrb[0].mxu0
      %v659 = vadd.f32 0.0, %v658
      %v660 = vpop.f32.mrb[0].mxu0
      %v661 = vpop.f32.mrb[0].mxu0
      %v662 = vadd.f32 0.0, %v661
      %v663 = vpop.f32.mrb[0].mxu0
      %664 = vmatprep.mubr.bf16.mxu0 0
      %665 = vmatmul.mubr.bf16.gmra.mrb[0].mxu0 %v454
      %v666 = vpop.f32.mrb[0].mxu0
      %v667 = vadd.f32 0.0, %v666
      %v668 = vpop.f32.mrb[0].mxu0
      %v669 = vpop.f32.mrb[0].mxu0
      %v670 = vadd.f32 0.0, %v669
      %v671 = vpop.f32.mrb[0].mxu0
      %672 = vmatprep.mubr.bf16.mxu0 0
      %673 = vmatmul.mubr.bf16.gmra.mrb[0].mxu0 %v455
      %v674 = vpop.f32.mrb[0].mxu0
      %v675 = vadd.f32 0.0, %v674
      %v676 = vpop.f32.mrb[0].mxu0
      %v677 = vpop.f32.mrb[0].mxu0
      %v678 = vadd.f32 0.0, %v677
      %v679 = vpop.f32.mrb[0].mxu0
      %680 = vdwg.mxu0
      %v681 = vadd.f32 %v296, %v555
      %v682 = vadd.f32 %v297, %v558
      %v683 = vadd.f32 %v298, %v563
      %v684 = vadd.f32 %v299, %v566
      %v685 = vadd.f32 %v300, %v571
      %v686 = vadd.f32 %v301, %v574
      %v687 = vadd.f32 %v302, %v579
      %v688 = vadd.f32 %v303, %v582
      %v689 = vadd.f32 %v304, %v587
      %v690 = vadd.f32 %v305, %v590
      %v691 = vadd.f32 %v306, %v595
      %v692 = vadd.f32 %v307, %v598
      %v693 = vadd.f32 %v308, %v603
      %v694 = vadd.f32 %v309, %v606
      %v695 = vadd.f32 %v310, %v611
      %v696 = vadd.f32 %v311, %v614
      %v697 = vadd.f32 %v312, %v619
      %v698 = vadd.f32 %v313, %v622
      %v699 = vadd.f32 %v314, %v627
      %v700 = vadd.f32 %v315, %v630
      %v701 = vadd.f32 %v316, %v635
      %v702 = vadd.f32 %v317, %v638
      %v703 = vadd.f32 %v318, %v643
      %v704 = vadd.f32 %v319, %v646
      %v705 = vadd.f32 %v320, %v651
      %v706 = vadd.f32 %v321, %v654
      %v707 = vadd.f32 %v322, %v659
      %v708 = vadd.f32 %v323, %v662
      %v709 = vadd.f32 %v324, %v667
      %v710 = vadd.f32 %v325, %v670
      %v711 = vadd.f32 %v326, %v675
      %v712 = vadd.f32 %v327, %v678
      %713 = vst [vmem:[#allocation2] sm:$0xff] %v681
      %714 = vst [vmem:[#allocation2 + $0x8] sm:$0xff] %v682
      %715 = vst [vmem:[#allocation2 + $0x10] sm:$0xff] %v683
      %716 = vst [vmem:[#allocation2 + $0x18] sm:$0xff] %v684
      %717 = vst [vmem:[#allocation2 + $0x20] sm:$0xff] %v685
      %718 = vst [vmem:[#allocation2 + $0x28] sm:$0xff] %v686
      %719 = vst [vmem:[#allocation2 + $0x30] sm:$0xff] %v687
      %720 = vst [vmem:[#allocation2 + $0x38] sm:$0xff] %v688
      %721 = vst [vmem:[#allocation2 + $0x40] sm:$0xff] %v689
      %722 = vst [vmem:[#allocation2 + $0x48] sm:$0xff] %v690
      %723 = vst [vmem:[#allocation2 + $0x50] sm:$0xff] %v691
      %724 = vst [vmem:[#allocation2 + $0x58] sm:$0xff] %v692
      %725 = vst [vmem:[#allocation2 + $0x60] sm:$0xff] %v693
      %726 = vst [vmem:[#allocation2 + $0x68] sm:$0xff] %v694
      %727 = vst [vmem:[#allocation2 + $0x70] sm:$0xff] %v695
      %728 = vst [vmem:[#allocation2 + $0x78] sm:$0xff] %v696
      %729 = vst [vmem:[#allocation2 + $0x80] sm:$0xff] %v697
      %730 = vst [vmem:[#allocation2 + $0x88] sm:$0xff] %v698
      %731 = vst [vmem:[#allocation2 + $0x90] sm:$0xff] %v699
      %732 = vst [vmem:[#allocation2 + $0x98] sm:$0xff] %v700
      %733 = vst [vmem:[#allocation2 + $0xa0] sm:$0xff] %v701
      %734 = vst [vmem:[#allocation2 + $0xa8] sm:$0xff] %v702
      %735 = vst [vmem:[#allocation2 + $0xb0] sm:$0xff] %v703
      %736 = vst [vmem:[#allocation2 + $0xb8] sm:$0xff] %v704
      %737 = vst [vmem:[#allocation2 + $0xc0] sm:$0xff] %v705
      %738 = vst [vmem:[#allocation2 + $0xc8] sm:$0xff] %v706
      %739 = vst [vmem:[#allocation2 + $0xd0] sm:$0xff] %v707
      %740 = vst [vmem:[#allocation2 + $0xd8] sm:$0xff] %v708
      %741 = vst [vmem:[#allocation2 + $0xe0] sm:$0xff] %v709
      %742 = vst [vmem:[#allocation2 + $0xe8] sm:$0xff] %v710
      %743 = vst [vmem:[#allocation2 + $0xf0] sm:$0xff] %v711
      %744 = vst [vmem:[#allocation2 + $0xf8] sm:$0xff] %v712
      // Predicated region
      $region37: #{encoder_lstm_forward.14} parent=31 // pred_check
        %p745 = pneg %p260
      $region38: #{encoder_lstm_forward.14} parent=31 // pred_check_branch
        %747 = sbr.rel (%p745) target = $region40
      $region39: #{encoder_lstm_forward.14} parent=31 // pred_region
        %v748 = vld [vmem:[#allocation2] sm:$0xff]
        %v749 = vld [vmem:[#allocation2 + $0x8] sm:$0xff]
        %v750 = vld [vmem:[#allocation2 + $0x10] sm:$0xff]
        %v751 = vld [vmem:[#allocation2 + $0x18] sm:$0xff]
        %v752 = vld [vmem:[#allocation2 + $0x20] sm:$0xff]
        %v753 = vld [vmem:[#allocation2 + $0x28] sm:$0xff]
        %v754 = vld [vmem:[#allocation2 + $0x30] sm:$0xff]
        %v755 = vld [vmem:[#allocation2 + $0x38] sm:$0xff]
        %v756 = vld [vmem:[#allocation2 + $0x40] sm:$0xff]
        %v757 = vld [vmem:[#allocation2 + $0x48] sm:$0xff]
        %v758 = vld [vmem:[#allocation2 + $0x50] sm:$0xff]
        %v759 = vld [vmem:[#allocation2 + $0x58] sm:$0xff]
        %v760 = vld [vmem:[#allocation2 + $0x60] sm:$0xff]
        %v761 = vld [vmem:[#allocation2 + $0x68] sm:$0xff]
        %v762 = vld [vmem:[#allocation2 + $0x70] sm:$0xff]
        %v763 = vld [vmem:[#allocation2 + $0x78] sm:$0xff]
        %v764 = vld [vmem:[#allocation2 + $0x80] sm:$0xff]
        %v765 = vld [vmem:[#allocation2 + $0x88] sm:$0xff]
        %v766 = vld [vmem:[#allocation2 + $0x90] sm:$0xff]
        %v767 = vld [vmem:[#allocation2 + $0x98] sm:$0xff]
        %v768 = vld [vmem:[#allocation2 + $0xa0] sm:$0xff]
        %v769 = vld [vmem:[#allocation2 + $0xa8] sm:$0xff]
        %v770 = vld [vmem:[#allocation2 + $0xb0] sm:$0xff]
        %v771 = vld [vmem:[#allocation2 + $0xb8] sm:$0xff]
        %v772 = vld [vmem:[#allocation2 + $0xc0] sm:$0xff]
        %v773 = vld [vmem:[#allocation2 + $0xc8] sm:$0xff]
        %v774 = vld [vmem:[#allocation2 + $0xd0] sm:$0xff]
        %v775 = vld [vmem:[#allocation2 + $0xd8] sm:$0xff]
        %v776 = vld [vmem:[#allocation2 + $0xe0] sm:$0xff]
        %v777 = vld [vmem:[#allocation2 + $0xe8] sm:$0xff]
        %v778 = vld [vmem:[#allocation2 + $0xf0] sm:$0xff]
        %v779 = vld [vmem:[#allocation2 + $0xf8] sm:$0xff]
        %v780 = vld [vmem:[%s249] sm:$0x1]
        %v782 = vlaneseq
        %v783 = vshrl.u32 %v782, 7
        %v784 = vsub.s32 0, %v783
        %v785 = vrot.slane %v780, %v784
        %v787 = vadd.f32 %v748, %v785
        %v788 = vadd.f32 %v749, %v785
        %v789 = vadd.f32 %v750, %v785
        %v790 = vadd.f32 %v751, %v785
        %v791 = vadd.f32 %v752, %v785
        %v792 = vadd.f32 %v753, %v785
        %v793 = vadd.f32 %v754, %v785
        %v794 = vadd.f32 %v755, %v785
        %v795 = vadd.f32 %v756, %v785
        %v796 = vadd.f32 %v757, %v785
        %v797 = vadd.f32 %v758, %v785
        %v798 = vadd.f32 %v759, %v785
        %v799 = vadd.f32 %v760, %v785
        %v800 = vadd.f32 %v761, %v785
        %v801 = vadd.f32 %v762, %v785
        %v802 = vadd.f32 %v763, %v785
        %v803 = vadd.f32 %v764, %v785
        %v804 = vadd.f32 %v765, %v785
        %v805 = vadd.f32 %v766, %v785
        %v806 = vadd.f32 %v767, %v785
        %v807 = vadd.f32 %v768, %v785
        %v808 = vadd.f32 %v769, %v785
        %v809 = vadd.f32 %v770, %v785
        %v810 = vadd.f32 %v771, %v785
        %v811 = vadd.f32 %v772, %v785
        %v812 = vadd.f32 %v773, %v785
        %v813 = vadd.f32 %v774, %v785
        %v814 = vadd.f32 %v775, %v785
        %v815 = vadd.f32 %v776, %v785
        %v816 = vadd.f32 %v777, %v785
        %v817 = vadd.f32 %v778, %v785
        %v818 = vadd.f32 %v779, %v785
        %v819 = vmax.f32 %v787, 0.0
        %v820 = vmax.f32 %v788, 0.0
        %v821 = vmax.f32 %v789, 0.0
        %v822 = vmax.f32 %v790, 0.0
        %v823 = vmax.f32 %v791, 0.0
        %v824 = vmax.f32 %v792, 0.0
        %v825 = vmax.f32 %v793, 0.0
        %v826 = vmax.f32 %v794, 0.0
        %v827 = vmax.f32 %v795, 0.0
        %v828 = vmax.f32 %v796, 0.0
        %v829 = vmax.f32 %v797, 0.0
        %v830 = vmax.f32 %v798, 0.0
        %v831 = vmax.f32 %v799, 0.0
        %v832 = vmax.f32 %v800, 0.0
        %v833 = vmax.f32 %v801, 0.0
        %v834 = vmax.f32 %v802, 0.0
        %v835 = vmax.f32 %v803, 0.0
        %v836 = vmax.f32 %v804, 0.0
        %v837 = vmax.f32 %v805, 0.0
        %v838 = vmax.f32 %v806, 0.0
        %v839 = vmax.f32 %v807, 0.0
        %v840 = vmax.f32 %v808, 0.0
        %v841 = vmax.f32 %v809, 0.0
        %v842 = vmax.f32 %v810, 0.0
        %v843 = vmax.f32 %v811, 0.0
        %v844 = vmax.f32 %v812, 0.0
        %v845 = vmax.f32 %v813, 0.0
        %v846 = vmax.f32 %v814, 0.0
        %v847 = vmax.f32 %v815, 0.0
        %v848 = vmax.f32 %v816, 0.0
        %v849 = vmax.f32 %v817, 0.0
        %v850 = vmax.f32 %v818, 0.0
        %851 = vst [vmem:[%s257] sm:$0xff] %v819
        %852 = vst [vmem:[%s257 + $0x8] sm:$0xff] %v820
        %853 = vst [vmem:[%s257 + $0x10] sm:$0xff] %v821
        %854 = vst [vmem:[%s257 + $0x18] sm:$0xff] %v822
        %855 = vst [vmem:[%s257 + $0x20] sm:$0xff] %v823
        %856 = vst [vmem:[%s257 + $0x28] sm:$0xff] %v824
        %857 = vst [vmem:[%s257 + $0x30] sm:$0xff] %v825
        %858 = vst [vmem:[%s257 + $0x38] sm:$0xff] %v826
        %859 = vst [vmem:[%s257 + $0x40] sm:$0xff] %v827
        %860 = vst [vmem:[%s257 + $0x48] sm:$0xff] %v828
        %861 = vst [vmem:[%s257 + $0x50] sm:$0xff] %v829
        %862 = vst [vmem:[%s257 + $0x58] sm:$0xff] %v830
        %863 = vst [vmem:[%s257 + $0x60] sm:$0xff] %v831
        %864 = vst [vmem:[%s257 + $0x68] sm:$0xff] %v832
        %865 = vst [vmem:[%s257 + $0x70] sm:$0xff] %v833
        %866 = vst [vmem:[%s257 + $0x78] sm:$0xff] %v834
        %867 = vst [vmem:[%s257 + $0x80] sm:$0xff] %v835
        %868 = vst [vmem:[%s257 + $0x88] sm:$0xff] %v836
        %869 = vst [vmem:[%s257 + $0x90] sm:$0xff] %v837
        %870 = vst [vmem:[%s257 + $0x98] sm:$0xff] %v838
        %871 = vst [vmem:[%s257 + $0xa0] sm:$0xff] %v839
        %872 = vst [vmem:[%s257 + $0xa8] sm:$0xff] %v840
        %873 = vst [vmem:[%s257 + $0xb0] sm:$0xff] %v841
        %874 = vst [vmem:[%s257 + $0xb8] sm:$0xff] %v842
        %875 = vst [vmem:[%s257 + $0xc0] sm:$0xff] %v843
        %876 = vst [vmem:[%s257 + $0xc8] sm:$0xff] %v844
        %877 = vst [vmem:[%s257 + $0xd0] sm:$0xff] %v845
        %878 = vst [vmem:[%s257 + $0xd8] sm:$0xff] %v846
        %879 = vst [vmem:[%s257 + $0xe0] sm:$0xff] %v847
        %880 = vst [vmem:[%s257 + $0xe8] sm:$0xff] %v848
        %881 = vst [vmem:[%s257 + $0xf0] sm:$0xff] %v849
        %882 = vst [vmem:[%s257 + $0xf8] sm:$0xff] %v850
      $region40: #{encoder_lstm_forward.14} parent=31 // pred_fallthru
        _
      %s883 = smul.u32 32, %s19
      %p884 = scmp.lt.s32.totalorder %s883, 1567
      %s885 = scalar_select %p884, %s883, 1567
      %p886 = scmp.lt.s32.totalorder %s20, 0
      %s887 = scalar_select %p886, %s20, 0
      %s888 = sadd.s32 %s887, %s885
      %s889 = smul.addr %s888, 8
      %s890 = scalar_lea.vmem %s3, %s889
      // Predicated region
      $region41: #{encoder_lstm_forward.14} parent=31 // pred_check
        %p891 = pneg %p135
      $region42: #{encoder_lstm_forward.14} parent=31 // pred_check_branch
        %893 = sbr.rel (%p891) target = $region44
      $region43: #{encoder_lstm_forward.14} parent=31 // pred_region
        %s894 = smul.u32 32, %s19
      $region44: #{encoder_lstm_forward.14} parent=31 // pred_fallthru
        _
    $region32: #{encoder_lstm_forward.14} parent=5 // pred_fallthru
      _
    %p895 = scmp.le.s32.totalorder 2, %s9
    // Predicated region
    $region45: #{encoder_lstm_forward.14} parent=5 // pred_check
      %p896 = pneg %p895
    $region46: #{encoder_lstm_forward.14} parent=5 // pred_check_branch
      %898 = sbr.rel (%p896) target = $region48
    $region47: #{encoder_lstm_forward.14} parent=5 // pred_region
      %s899 = ssub.s32 %s9, 2
      // Predicated region
      $region49: #{encoder_lstm_forward.14} parent=47 // pred_check
        %p900 = pneg %p141
      $region50: #{encoder_lstm_forward.14} parent=47 // pred_check_branch
        %902 = sbr.rel (%p900) target = $region52
      $region51: #{encoder_lstm_forward.14} parent=47 // pred_region
        %s903 = smul.u32 32, %s22
        %p904 = scmp.lt.s32.totalorder %s903, 1567
        %s905 = scalar_select %p904, %s903, 1567
        %p906 = scmp.lt.s32.totalorder %s23, 0
        %s907 = scalar_select %p906, %s23, 0
        %s908 = sadd.s32 %s907, %s905
        %s909 = smul.addr %s908, 8
        %s910 = scalar_lea.vmem %s3, %s909
      $region52: #{encoder_lstm_forward.14} parent=47 // pred_fallthru
        _
    $region48: #{encoder_lstm_forward.14} parent=5 // pred_fallthru
      _
  $region6: #{encoder_lstm_forward.14} parent=0 // loop_footer
    %s13 = sadd.s32 1, %s9
  $region7: #{encoder_lstm_forward.14} parent=0 // loop_footer_branch
    %8 = sbr.rel target = $region3
  $region8: #{encoder_lstm_forward.14} parent=0 // loop_exit
    _

// kernel: encoder_lstm_forward.15
$region0: #{encoder_lstm_forward.15}
  #allocation0 [shape = 'u32[]', space=smem, size = 0x4, offset = 0x4, fixed_abs, tag = 'smem constant byte address 0x4 - core index']
  #allocation1 [shape = 'u32[144,128]{1,0:T(1,128)}', space=vmem, size = 0x12000, scoped, tag = 'internal scratch']
  %s0 = inlined_call_operand.vmem [shape: f32[448,14,12], index: 0, kind: input, shape index: {}]
  %s1 = inlined_call_operand.vmem [shape: f32[224,14,6], index: 1, kind: output, shape index: {}]
  %s2 = sld [smem:[#allocation0]]
  $region37: #{encoder_lstm_forward.15} parent=0
    _
  %s4 = ssub.s32 1, %s2
  %s5 = scalar_select 0, %s4, %s2
  loop: start=0, step=1, limit=4
  $region2: #{encoder_lstm_forward.15} parent=0 // loop_pre_header
    _
  $region3: #{encoder_lstm_forward.15} parent=0 // loop_header
    %s7 = sphi 0, %s11
    %p8 = scmp.ge.s32.totalorder %s7, 4
    %s17 = sphi 0, %s19
    %s20 = sphi 0, %s17
    %s21 = sphi 0, %s20
    %s37 = sphi 0, %s21
    %s43 = sphi 0, %s45
    %s46 = sphi 0, %s43
    %s47 = sphi 0, %s46
    %s63 = sphi 0, %s47
  $region4: #{encoder_lstm_forward.15} parent=0 // loop_header_branch
    %10 = sbr.rel (%p8) target = $region8
  $region5: #{encoder_lstm_forward.15} parent=0 // loop_body
    %s12 = ssub.s32 %s7, 1
    %s13 = ssub.s32 %s7, 2
    %s14 = sadd.s32 %s7, 1
    %s15 = ssub.s32 %s7, %s14
    %p16 = scmp.eq.s32.totalorder %s15, 0
    %s18 = sadd.s32 %s17, 1
    %s19 = scalar_select %p16, %s17, %s18
    %p22 = pneg %p16
    %p23 = scmp.eq.s32.totalorder %s7, 1
    %p24 = por %p22, %p23
    %p25 = scmp.ne.s32.totalorder %s17, %s20
    %p26 = scmp.eq.s32.totalorder %s7, 0
    %p27 = por %p25, %p26
    %p28 = scmp.ne.s32.totalorder %s17, %s20
    %p29 = scmp.eq.s32.totalorder %s12, 1
    %p30 = por %p28, %p29
    %p31 = scmp.ne.s32.totalorder %s20, %s21
    %p32 = scmp.eq.s32.totalorder %s12, 0
    %p33 = por %p31, %p32
    %p34 = scmp.ne.s32.totalorder %s20, %s21
    %p35 = scmp.eq.s32.totalorder %s13, 1
    %p36 = por %p34, %p35
    %p38 = scmp.ne.s32.totalorder %s21, %s37
    %p39 = scmp.eq.s32.totalorder %s13, 0
    %p40 = por %p38, %p39
    %s41 = ssub.s32 %s7, %s14
    %p42 = scmp.eq.s32.totalorder %s41, 0
    %s44 = sadd.s32 %s43, 1
    %s45 = scalar_select %p42, %s43, %s44
    %p48 = pneg %p42
    %p49 = scmp.eq.s32.totalorder %s7, 1
    %p50 = por %p48, %p49
    %p51 = scmp.ne.s32.totalorder %s43, %s46
    %p52 = scmp.eq.s32.totalorder %s7, 0
    %p53 = por %p51, %p52
    %p54 = scmp.ne.s32.totalorder %s43, %s46
    %p55 = scmp.eq.s32.totalorder %s12, 1
    %p56 = por %p54, %p55
    %p57 = scmp.ne.s32.totalorder %s46, %s47
    %p58 = scmp.eq.s32.totalorder %s12, 0
    %p59 = por %p57, %p58
    %p60 = scmp.ne.s32.totalorder %s46, %s47
    %p61 = scmp.eq.s32.totalorder %s13, 1
    %p62 = por %p60, %p61
    %p64 = scmp.ne.s32.totalorder %s47, %s63
    %p65 = scmp.eq.s32.totalorder %s13, 0
    %p66 = por %p64, %p65
    %p67 = scmp.le.s32.totalorder 1, %s7
    %p68 = scmp.lt.s32.totalorder %s7, 3
    %p69 = pnand %p67, %p68
    %p70 = pneg %p69
    // Predicated region
    $region9: #{encoder_lstm_forward.15} parent=5 // pred_check
      _
    $region10: #{encoder_lstm_forward.15} parent=5 // pred_check_branch
      %72 = sbr.rel (%p69) target = $region12
    $region11: #{encoder_lstm_forward.15} parent=5 // pred_region
      %s73 = ssub.s32 %s7, 1
    $region12: #{encoder_lstm_forward.15} parent=5 // pred_fallthru
      _
    %p74 = scmp.lt.s32.totalorder %s7, 2
    // Predicated region
    $region13: #{encoder_lstm_forward.15} parent=5 // pred_check
      %p75 = pneg %p74
    $region14: #{encoder_lstm_forward.15} parent=5 // pred_check_branch
      %77 = sbr.rel (%p75) target = $region16
    $region15: #{encoder_lstm_forward.15} parent=5 // pred_region
      // Predicated region
      $region17: #{encoder_lstm_forward.15} parent=15 // pred_check
        %p78 = pneg %p27
      $region18: #{encoder_lstm_forward.15} parent=15 // pred_check_branch
        %80 = sbr.rel (%p78) target = $region20
      $region19: #{encoder_lstm_forward.15} parent=15 // pred_region
        %s81 = smul.u32 224, %s7
        %p82 = scmp.lt.s32.totalorder %s81, 447
        %s83 = scalar_select %p82, %s81, 447
        %s84 = smul.addr %s83, 2
        %s85 = smul.addr %s84, 8
        %s86 = scalar_lea.vmem %s0, %s85
        %s87 = smul.u32 224, %s7
      $region20: #{encoder_lstm_forward.15} parent=15 // pred_fallthru
        _
    $region16: #{encoder_lstm_forward.15} parent=5 // pred_fallthru
      _
    %p88 = scmp.le.s32.totalorder 1, %s7
    %p89 = scmp.lt.s32.totalorder %s7, 3
    %p90 = pnand %p88, %p89
    %p91 = pneg %p90
    // Predicated region
    $region21: #{encoder_lstm_forward.15} parent=5 // pred_check
      _
    $region22: #{encoder_lstm_forward.15} parent=5 // pred_check_branch
      %93 = sbr.rel (%p90) target = $region24
    $region23: #{encoder_lstm_forward.15} parent=5 // pred_region
      %s94 = ssub.s32 %s7, 1
      %s95 = smul.u32 224, %s12
      %p96 = scmp.lt.s32.totalorder %s95, 447
      %s97 = scalar_select %p96, %s95, 447
      %s98 = smul.addr %s97, 2
      %s99 = smul.addr %s98, 8
      %s100 = scalar_lea.vmem %s0, %s99
      %p101 = pneg %p33
      %p102 = pneg %p30
      %p103 = pneg %p59
      %p104 = pneg %p56
      %s105 = smul.u32 112, %s12
      %p106 = scmp.lt.s32.totalorder %s105, 223
      %s107 = scalar_select %p106, %s105, 223
      %s108 = smul.addr %s107, 2
      %s109 = smul.addr %s108, 8
      %s110 = scalar_lea.vmem %s1, %s109
      %s111 = smul.u32 224, %s12
      %p112 = scmp.lt.s32.totalorder %s111, 447
      %s113 = scalar_select %p112, %s111, 447
      %s114 = smul.addr %s113, 2
      %s115 = smul.addr %s114, 8
      %s116 = scalar_lea.vmem %s0, %s115
      %s117 = smul.u32 224, %s12
      %s118 = smul.u32 112, %s12
      %p119 = scmp.lt.s32.totalorder %s118, 223
      %s120 = scalar_select %p119, %s118, 223
      %s121 = smul.addr %s120, 2
      %s122 = smul.addr %s121, 8
      %s123 = scalar_lea.vmem %s1, %s122
      %s124 = smul.u32 112, %s12
      %v125 = vld [vmem:[%s116] sm:$0xff]
      %v126 = vld [vmem:[%s116 + $0x8] sm:$0x3f]
      %v127 = vld [vmem:[%s116 + $0x10] sm:$0xff]
      %v128 = vld [vmem:[%s116 + $0x18] sm:$0x3f]
      %v129 = vld [vmem:[%s116 + $0x20] sm:$0xff]
      %v130 = vld [vmem:[%s116 + $0x28] sm:$0x3f]
      %v131 = vld [vmem:[%s116 + $0x30] sm:$0xff]
      %v132 = vld [vmem:[%s116 + $0x38] sm:$0x3f]
      %v133 = vld [vmem:[%s116 + $0x40] sm:$0xff]
      %v134 = vld [vmem:[%s116 + $0x48] sm:$0x3f]
      %v135 = vld [vmem:[%s116 + $0x50] sm:$0xff]
      %v136 = vld [vmem:[%s116 + $0x58] sm:$0x3f]
      %v137 = vld [vmem:[%s116 + $0x60] sm:$0xff]
      %v138 = vld [vmem:[%s116 + $0x68] sm:$0x3f]
      %v139 = vld [vmem:[%s116 + $0x70] sm:$0xff]
      %v140 = vld [vmem:[%s116 + $0x78] sm:$0x3f]
      %v141 = vld [vmem:[%s116 + $0x80] sm:$0xff]
      %v142 = vld [vmem:[%s116 + $0x88] sm:$0x3f]
      %v143 = vld [vmem:[%s116 + $0x90] sm:$0xff]
      %v144 = vld [vmem:[%s116 + $0x98] sm:$0x3f]
      %v145 = vld [vmem:[%s116 + $0xa0] sm:$0xff]
      %v146 = vld [vmem:[%s116 + $0xa8] sm:$0x3f]
      %v147 = vld [vmem:[%s116 + $0xb0] sm:$0xff]
      %v148 = vld [vmem:[%s116 + $0xb8] sm:$0x3f]
      %v149 = vld [vmem:[%s116 + $0xc0] sm:$0xff]
      %v150 = vld [vmem:[%s116 + $0xc8] sm:$0x3f]
      %v151 = vld [vmem:[%s116 + $0xd0] sm:$0xff]
      %v152 = vld [vmem:[%s116 + $0xd8] sm:$0x3f]
      %v153 = vld [vmem:[%s116 + $0xe0] sm:$0xff]
      %v154 = vld [vmem:[%s116 + $0xe8] sm:$0x3f]
      %v155 = vld [vmem:[%s116 + $0xf0] sm:$0xff]
      %v156 = vld [vmem:[%s116 + $0xf8] sm:$0x3f]
      %v157 = vld [vmem:[%s116 + $0x100] sm:$0xff]
      %v158 = vld [vmem:[%s116 + $0x108] sm:$0x3f]
      %v159 = vld [vmem:[%s116 + $0x110] sm:$0xff]
      %v160 = vld [vmem:[%s116 + $0x118] sm:$0x3f]
      %v161 = vld [vmem:[%s116 + $0x120] sm:$0xff]
      %v162 = vld [vmem:[%s116 + $0x128] sm:$0x3f]
      %v163 = vld [vmem:[%s116 + $0x130] sm:$0xff]
      %v164 = vld [vmem:[%s116 + $0x138] sm:$0x3f]
      %v165 = vld [vmem:[%s116 + $0x140] sm:$0xff]
      %v166 = vld [vmem:[%s116 + $0x148] sm:$0x3f]
      %v167 = vld [vmem:[%s116 + $0x150] sm:$0xff]
      %v168 = vld [vmem:[%s116 + $0x158] sm:$0x3f]
      %v169 = vld [vmem:[%s116 + $0x160] sm:$0xff]
      %v170 = vld [vmem:[%s116 + $0x168] sm:$0x3f]
      %v171 = vld [vmem:[%s116 + $0x170] sm:$0xff]
      %v172 = vld [vmem:[%s116 + $0x178] sm:$0x3f]
      %v173 = vld [vmem:[%s116 + $0x180] sm:$0xff]
      %v174 = vld [vmem:[%s116 + $0x188] sm:$0x3f]
      %v175 = vld [vmem:[%s116 + $0x190] sm:$0xff]
      %v176 = vld [vmem:[%s116 + $0x198] sm:$0x3f]
      %v177 = vld [vmem:[%s116 + $0x1a0] sm:$0xff]
      %v178 = vld [vmem:[%s116 + $0x1a8] sm:$0x3f]
      %v179 = vld [vmem:[%s116 + $0x1b0] sm:$0xff]
      %v180 = vld [vmem:[%s116 + $0x1b8] sm:$0x3f]
      %v181 = vld [vmem:[%s116 + $0x1c0] sm:$0xff]
      %v182 = vld [vmem:[%s116 + $0x1c8] sm:$0x3f]
      %v183 = vld [vmem:[%s116 + $0x1d0] sm:$0xff]
      %v184 = vld [vmem:[%s116 + $0x1d8] sm:$0x3f]
      %v185 = vld [vmem:[%s116 + $0x1e0] sm:$0xff]
      %v186 = vld [vmem:[%s116 + $0x1e8] sm:$0x3f]
      %v187 = vld [vmem:[%s116 + $0x1f0] sm:$0xff]
      %v188 = vld [vmem:[%s116 + $0x1f8] sm:$0x3f]
      %v189 = vld [vmem:[%s116 + $0x200] sm:$0xff]
      %v190 = vld [vmem:[%s116 + $0x208] sm:$0x3f]
      %v191 = vld [vmem:[%s116 + $0x210] sm:$0xff]
      %v192 = vld [vmem:[%s116 + $0x218] sm:$0x3f]
      %v193 = vld [vmem:[%s116 + $0x220] sm:$0xff]
      %v194 = vld [vmem:[%s116 + $0x228] sm:$0x3f]
      %v195 = vld [vmem:[%s116 + $0x230] sm:$0xff]
      %v196 = vld [vmem:[%s116 + $0x238] sm:$0x3f]
      %v197 = vld [vmem:[%s116 + $0x240] sm:$0xff]
      %v198 = vld [vmem:[%s116 + $0x248] sm:$0x3f]
      %v199 = vld [vmem:[%s116 + $0x250] sm:$0xff]
      %v200 = vld [vmem:[%s116 + $0x258] sm:$0x3f]
      %v201 = vld [vmem:[%s116 + $0x260] sm:$0xff]
      %v202 = vld [vmem:[%s116 + $0x268] sm:$0x3f]
      %v203 = vld [vmem:[%s116 + $0x270] sm:$0xff]
      %v204 = vld [vmem:[%s116 + $0x278] sm:$0x3f]
      %v205 = vld [vmem:[%s116 + $0x280] sm:$0xff]
      %v206 = vld [vmem:[%s116 + $0x288] sm:$0x3f]
      %v207 = vld [vmem:[%s116 + $0x290] sm:$0xff]
      %v208 = vld [vmem:[%s116 + $0x298] sm:$0x3f]
      %v209 = vld [vmem:[%s116 + $0x2a0] sm:$0xff]
      %v210 = vld [vmem:[%s116 + $0x2a8] sm:$0x3f]
      %v211 = vld [vmem:[%s116 + $0x2b0] sm:$0xff]
      %v212 = vld [vmem:[%s116 + $0x2b8] sm:$0x3f]
      %v213 = vld [vmem:[%s116 + $0x2c0] sm:$0xff]
      %v214 = vld [vmem:[%s116 + $0x2c8] sm:$0x3f]
      %v215 = vld [vmem:[%s116 + $0x2d0] sm:$0xff]
      %v216 = vld [vmem:[%s116 + $0x2d8] sm:$0x3f]
      %v217 = vld [vmem:[%s116 + $0x2e0] sm:$0xff]
      %v218 = vld [vmem:[%s116 + $0x2e8] sm:$0x3f]
      %v219 = vld [vmem:[%s116 + $0x2f0] sm:$0xff]
      %v220 = vld [vmem:[%s116 + $0x2f8] sm:$0x3f]
      %v221 = vld [vmem:[%s116 + $0x300] sm:$0xff]
      %v222 = vld [vmem:[%s116 + $0x308] sm:$0x3f]
      %v223 = vld [vmem:[%s116 + $0x310] sm:$0xff]
      %v224 = vld [vmem:[%s116 + $0x318] sm:$0x3f]
      %v225 = vld [vmem:[%s116 + $0x320] sm:$0xff]
      %v226 = vld [vmem:[%s116 + $0x328] sm:$0x3f]
      %v227 = vld [vmem:[%s116 + $0x330] sm:$0xff]
      %v228 = vld [vmem:[%s116 + $0x338] sm:$0x3f]
      %v229 = vld [vmem:[%s116 + $0x340] sm:$0xff]
      %v230 = vld [vmem:[%s116 + $0x348] sm:$0x3f]
      %v231 = vld [vmem:[%s116 + $0x350] sm:$0xff]
      %v232 = vld [vmem:[%s116 + $0x358] sm:$0x3f]
      %v233 = vld [vmem:[%s116 + $0x360] sm:$0xff]
      %v234 = vld [vmem:[%s116 + $0x368] sm:$0x3f]
      %v235 = vld [vmem:[%s116 + $0x370] sm:$0xff]
      %v236 = vld [vmem:[%s116 + $0x378] sm:$0x3f]
      %v237 = vld [vmem:[%s116 + $0x380] sm:$0xff]
      %v238 = vld [vmem:[%s116 + $0x388] sm:$0x3f]
      %v239 = vld [vmem:[%s116 + $0x390] sm:$0xff]
      %v240 = vld [vmem:[%s116 + $0x398] sm:$0x3f]
      %v241 = vld [vmem:[%s116 + $0x3a0] sm:$0xff]
      %v242 = vld [vmem:[%s116 + $0x3a8] sm:$0x3f]
      %v243 = vld [vmem:[%s116 + $0x3b0] sm:$0xff]
      %v244 = vld [vmem:[%s116 + $0x3b8] sm:$0x3f]
      %v245 = vld [vmem:[%s116 + $0x3c0] sm:$0xff]
      %v246 = vld [vmem:[%s116 + $0x3c8] sm:$0x3f]
      %v247 = vld [vmem:[%s116 + $0x3d0] sm:$0xff]
      %v248 = vld [vmem:[%s116 + $0x3d8] sm:$0x3f]
      %v249 = vld [vmem:[%s116 + $0x3e0] sm:$0xff]
      %v250 = vld [vmem:[%s116 + $0x3e8] sm:$0x3f]
      %v251 = vld [vmem:[%s116 + $0x3f0] sm:$0xff]
      %v252 = vld [vmem:[%s116 + $0x3f8] sm:$0x3f]
      %v253 = vld [vmem:[%s116 + $0x400] sm:$0xff]
      %v254 = vld [vmem:[%s116 + $0x408] sm:$0x3f]
      %v255 = vld [vmem:[%s116 + $0x410] sm:$0xff]
      %v256 = vld [vmem:[%s116 + $0x418] sm:$0x3f]
      %v257 = vld [vmem:[%s116 + $0x420] sm:$0xff]
      %v258 = vld [vmem:[%s116 + $0x428] sm:$0x3f]
      %v259 = vld [vmem:[%s116 + $0x430] sm:$0xff]
      %v260 = vld [vmem:[%s116 + $0x438] sm:$0x3f]
      %v261 = vld [vmem:[%s116 + $0x440] sm:$0xff]
      %v262 = vld [vmem:[%s116 + $0x448] sm:$0x3f]
      %v263 = vld [vmem:[%s116 + $0x450] sm:$0xff]
      %v264 = vld [vmem:[%s116 + $0x458] sm:$0x3f]
      %v265 = vld [vmem:[%s116 + $0x460] sm:$0xff]
      %v266 = vld [vmem:[%s116 + $0x468] sm:$0x3f]
      %v267 = vld [vmem:[%s116 + $0x470] sm:$0xff]
      %v268 = vld [vmem:[%s116 + $0x478] sm:$0x3f]
      %v269 = vld [vmem:[%s116 + $0x480] sm:$0xff]
      %v270 = vld [vmem:[%s116 + $0x488] sm:$0x3f]
      %v271 = vld [vmem:[%s116 + $0x490] sm:$0xff]
      %v272 = vld [vmem:[%s116 + $0x498] sm:$0x3f]
      %v273 = vld [vmem:[%s116 + $0x4a0] sm:$0xff]
      %v274 = vld [vmem:[%s116 + $0x4a8] sm:$0x3f]
      %v275 = vld [vmem:[%s116 + $0x4b0] sm:$0xff]
      %v276 = vld [vmem:[%s116 + $0x4b8] sm:$0x3f]
      %v277 = vld [vmem:[%s116 + $0x4c0] sm:$0xff]
      %v278 = vld [vmem:[%s116 + $0x4c8] sm:$0x3f]
      %v279 = vld [vmem:[%s116 + $0x4d0] sm:$0xff]
      %v280 = vld [vmem:[%s116 + $0x4d8] sm:$0x3f]
      %v281 = vld [vmem:[%s116 + $0x4e0] sm:$0xff]
      %v282 = vld [vmem:[%s116 + $0x4e8] sm:$0x3f]
      %v283 = vld [vmem:[%s116 + $0x4f0] sm:$0xff]
      %v284 = vld [vmem:[%s116 + $0x4f8] sm:$0x3f]
      %v285 = vld [vmem:[%s116 + $0x500] sm:$0xff]
      %v286 = vld [vmem:[%s116 + $0x508] sm:$0x3f]
      %v287 = vld [vmem:[%s116 + $0x510] sm:$0xff]
      %v288 = vld [vmem:[%s116 + $0x518] sm:$0x3f]
      %v289 = vld [vmem:[%s116 + $0x520] sm:$0xff]
      %v290 = vld [vmem:[%s116 + $0x528] sm:$0x3f]
      %v291 = vld [vmem:[%s116 + $0x530] sm:$0xff]
      %v292 = vld [vmem:[%s116 + $0x538] sm:$0x3f]
      %v293 = vld [vmem:[%s116 + $0x540] sm:$0xff]
      %v294 = vld [vmem:[%s116 + $0x548] sm:$0x3f]
      %v295 = vld [vmem:[%s116 + $0x550] sm:$0xff]
      %v296 = vld [vmem:[%s116 + $0x558] sm:$0x3f]
      %v297 = vld [vmem:[%s116 + $0x560] sm:$0xff]
      %v298 = vld [vmem:[%s116 + $0x568] sm:$0x3f]
      %v299 = vld [vmem:[%s116 + $0x570] sm:$0xff]
      %v300 = vld [vmem:[%s116 + $0x578] sm:$0x3f]
      %v301 = vld [vmem:[%s116 + $0x580] sm:$0xff]
      %v302 = vld [vmem:[%s116 + $0x588] sm:$0x3f]
      %v303 = vld [vmem:[%s116 + $0x590] sm:$0xff]
      %v304 = vld [vmem:[%s116 + $0x598] sm:$0x3f]
      %v305 = vld [vmem:[%s116 + $0x5a0] sm:$0xff]
      %v306 = vld [vmem:[%s116 + $0x5a8] sm:$0x3f]
      %v307 = vld [vmem:[%s116 + $0x5b0] sm:$0xff]
      %v308 = vld [vmem:[%s116 + $0x5b8] sm:$0x3f]
      %v309 = vld [vmem:[%s116 + $0x5c0] sm:$0xff]
      %v310 = vld [vmem:[%s116 + $0x5c8] sm:$0x3f]
      %v311 = vld [vmem:[%s116 + $0x5d0] sm:$0xff]
      %v312 = vld [vmem:[%s116 + $0x5d8] sm:$0x3f]
      %v313 = vld [vmem:[%s116 + $0x5e0] sm:$0xff]
      %v314 = vld [vmem:[%s116 + $0x5e8] sm:$0x3f]
      %v315 = vld [vmem:[%s116 + $0x5f0] sm:$0xff]
      %v316 = vld [vmem:[%s116 + $0x5f8] sm:$0x3f]
      %v317 = vld [vmem:[%s116 + $0x600] sm:$0xff]
      %v318 = vld [vmem:[%s116 + $0x608] sm:$0x3f]
      %v319 = vld [vmem:[%s116 + $0x610] sm:$0xff]
      %v320 = vld [vmem:[%s116 + $0x618] sm:$0x3f]
      %v321 = vld [vmem:[%s116 + $0x620] sm:$0xff]
      %v322 = vld [vmem:[%s116 + $0x628] sm:$0x3f]
      %v323 = vld [vmem:[%s116 + $0x630] sm:$0xff]
      %v324 = vld [vmem:[%s116 + $0x638] sm:$0x3f]
      %v325 = vld [vmem:[%s116 + $0x640] sm:$0xff]
      %v326 = vld [vmem:[%s116 + $0x648] sm:$0x3f]
      %v327 = vld [vmem:[%s116 + $0x650] sm:$0xff]
      %v328 = vld [vmem:[%s116 + $0x658] sm:$0x3f]
      %v329 = vld [vmem:[%s116 + $0x660] sm:$0xff]
      %v330 = vld [vmem:[%s116 + $0x668] sm:$0x3f]
      %v331 = vld [vmem:[%s116 + $0x670] sm:$0xff]
      %v332 = vld [vmem:[%s116 + $0x678] sm:$0x3f]
      %v333 = vld [vmem:[%s116 + $0x680] sm:$0xff]
      %v334 = vld [vmem:[%s116 + $0x688] sm:$0x3f]
      %v335 = vld [vmem:[%s116 + $0x690] sm:$0xff]
      %v336 = vld [vmem:[%s116 + $0x698] sm:$0x3f]
      %v337 = vld [vmem:[%s116 + $0x6a0] sm:$0xff]
      %v338 = vld [vmem:[%s116 + $0x6a8] sm:$0x3f]
      %v339 = vld [vmem:[%s116 + $0x6b0] sm:$0xff]
      %v340 = vld [vmem:[%s116 + $0x6b8] sm:$0x3f]
      %v341 = vld [vmem:[%s116 + $0x6c0] sm:$0xff]
      %v342 = vld [vmem:[%s116 + $0x6c8] sm:$0x3f]
      %v343 = vld [vmem:[%s116 + $0x6d0] sm:$0xff]
      %v344 = vld [vmem:[%s116 + $0x6d8] sm:$0x3f]
      %v345 = vld [vmem:[%s116 + $0x6e0] sm:$0xff]
      %v346 = vld [vmem:[%s116 + $0x6e8] sm:$0x3f]
      %v347 = vld [vmem:[%s116 + $0x6f0] sm:$0xff]
      %v348 = vld [vmem:[%s116 + $0x6f8] sm:$0x3f]
      %v349 = vld [vmem:[%s116 + $0x700] sm:$0xff]
      %v350 = vld [vmem:[%s116 + $0x708] sm:$0x3f]
      %v351 = vld [vmem:[%s116 + $0x710] sm:$0xff]
      %v352 = vld [vmem:[%s116 + $0x718] sm:$0x3f]
      %v353 = vld [vmem:[%s116 + $0x720] sm:$0xff]
      %v354 = vld [vmem:[%s116 + $0x728] sm:$0x3f]
      %v355 = vld [vmem:[%s116 + $0x730] sm:$0xff]
      %v356 = vld [vmem:[%s116 + $0x738] sm:$0x3f]
      %v357 = vld [vmem:[%s116 + $0x740] sm:$0xff]
      %v358 = vld [vmem:[%s116 + $0x748] sm:$0x3f]
      %v359 = vld [vmem:[%s116 + $0x750] sm:$0xff]
      %v360 = vld [vmem:[%s116 + $0x758] sm:$0x3f]
      %v361 = vld [vmem:[%s116 + $0x760] sm:$0xff]
      %v362 = vld [vmem:[%s116 + $0x768] sm:$0x3f]
      %v363 = vld [vmem:[%s116 + $0x770] sm:$0xff]
      %v364 = vld [vmem:[%s116 + $0x778] sm:$0x3f]
      %v365 = vld [vmem:[%s116 + $0x780] sm:$0xff]
      %v366 = vld [vmem:[%s116 + $0x788] sm:$0x3f]
      %v367 = vld [vmem:[%s116 + $0x790] sm:$0xff]
      %v368 = vld [vmem:[%s116 + $0x798] sm:$0x3f]
      %v369 = vld [vmem:[%s116 + $0x7a0] sm:$0xff]
      %v370 = vld [vmem:[%s116 + $0x7a8] sm:$0x3f]
      %v371 = vld [vmem:[%s116 + $0x7b0] sm:$0xff]
      %v372 = vld [vmem:[%s116 + $0x7b8] sm:$0x3f]
      %v373 = vld [vmem:[%s116 + $0x7c0] sm:$0xff]
      %v374 = vld [vmem:[%s116 + $0x7c8] sm:$0x3f]
      %v375 = vld [vmem:[%s116 + $0x7d0] sm:$0xff]
      %v376 = vld [vmem:[%s116 + $0x7d8] sm:$0x3f]
      %v377 = vld [vmem:[%s116 + $0x7e0] sm:$0xff]
      %v378 = vld [vmem:[%s116 + $0x7e8] sm:$0x3f]
      %v379 = vld [vmem:[%s116 + $0x7f0] sm:$0xff]
      %v380 = vld [vmem:[%s116 + $0x7f8] sm:$0x3f]
      %v381 = vld [vmem:[%s116 + $0x800] sm:$0xff]
      %v382 = vld [vmem:[%s116 + $0x808] sm:$0x3f]
      %v383 = vld [vmem:[%s116 + $0x810] sm:$0xff]
      %v384 = vld [vmem:[%s116 + $0x818] sm:$0x3f]
      %v385 = vld [vmem:[%s116 + $0x820] sm:$0xff]
      %v386 = vld [vmem:[%s116 + $0x828] sm:$0x3f]
      %v387 = vld [vmem:[%s116 + $0x830] sm:$0xff]
      %v388 = vld [vmem:[%s116 + $0x838] sm:$0x3f]
      %v389 = vld [vmem:[%s116 + $0x840] sm:$0xff]
      %v390 = vld [vmem:[%s116 + $0x848] sm:$0x3f]
      %v391 = vld [vmem:[%s116 + $0x850] sm:$0xff]
      %v392 = vld [vmem:[%s116 + $0x858] sm:$0x3f]
      %v393 = vld [vmem:[%s116 + $0x860] sm:$0xff]
      %v394 = vld [vmem:[%s116 + $0x868] sm:$0x3f]
      %v395 = vld [vmem:[%s116 + $0x870] sm:$0xff]
      %v396 = vld [vmem:[%s116 + $0x878] sm:$0x3f]
      %v397 = vld [vmem:[%s116 + $0x880] sm:$0xff]
      %v398 = vld [vmem:[%s116 + $0x888] sm:$0x3f]
      %v399 = vld [vmem:[%s116 + $0x890] sm:$0xff]
      %v400 = vld [vmem:[%s116 + $0x898] sm:$0x3f]
      %v401 = vld [vmem:[%s116 + $0x8a0] sm:$0xff]
      %v402 = vld [vmem:[%s116 + $0x8a8] sm:$0x3f]
      %v403 = vld [vmem:[%s116 + $0x8b0] sm:$0xff]
      %v404 = vld [vmem:[%s116 + $0x8b8] sm:$0x3f]
      %v405 = vld [vmem:[%s116 + $0x8c0] sm:$0xff]
      %v406 = vld [vmem:[%s116 + $0x8c8] sm:$0x3f]
      %v407 = vld [vmem:[%s116 + $0x8d0] sm:$0xff]
      %v408 = vld [vmem:[%s116 + $0x8d8] sm:$0x3f]
      %v409 = vld [vmem:[%s116 + $0x8e0] sm:$0xff]
      %v410 = vld [vmem:[%s116 + $0x8e8] sm:$0x3f]
      %v411 = vld [vmem:[%s116 + $0x8f0] sm:$0xff]
      %v412 = vld [vmem:[%s116 + $0x8f8] sm:$0x3f]
      %v413 = vld [vmem:[%s116 + $0x900] sm:$0xff]
      %v414 = vld [vmem:[%s116 + $0x908] sm:$0x3f]
      %v415 = vld [vmem:[%s116 + $0x910] sm:$0xff]
      %v416 = vld [vmem:[%s116 + $0x918] sm:$0x3f]
      %v417 = vld [vmem:[%s116 + $0x920] sm:$0xff]
      %v418 = vld [vmem:[%s116 + $0x928] sm:$0x3f]
      %v419 = vld [vmem:[%s116 + $0x930] sm:$0xff]
      %v420 = vld [vmem:[%s116 + $0x938] sm:$0x3f]
      %v421 = vld [vmem:[%s116 + $0x940] sm:$0xff]
      %v422 = vld [vmem:[%s116 + $0x948] sm:$0x3f]
      %v423 = vld [vmem:[%s116 + $0x950] sm:$0xff]
      %v424 = vld [vmem:[%s116 + $0x958] sm:$0x3f]
      %v425 = vld [vmem:[%s116 + $0x960] sm:$0xff]
      %v426 = vld [vmem:[%s116 + $0x968] sm:$0x3f]
      %v427 = vld [vmem:[%s116 + $0x970] sm:$0xff]
      %v428 = vld [vmem:[%s116 + $0x978] sm:$0x3f]
      %v429 = vld [vmem:[%s116 + $0x980] sm:$0xff]
      %v430 = vld [vmem:[%s116 + $0x988] sm:$0x3f]
      %v431 = vld [vmem:[%s116 + $0x990] sm:$0xff]
      %v432 = vld [vmem:[%s116 + $0x998] sm:$0x3f]
      %v433 = vld [vmem:[%s116 + $0x9a0] sm:$0xff]
      %v434 = vld [vmem:[%s116 + $0x9a8] sm:$0x3f]
      %v435 = vld [vmem:[%s116 + $0x9b0] sm:$0xff]
      %v436 = vld [vmem:[%s116 + $0x9b8] sm:$0x3f]
      %v437 = vld [vmem:[%s116 + $0x9c0] sm:$0xff]
      %v438 = vld [vmem:[%s116 + $0x9c8] sm:$0x3f]
      %v439 = vld [vmem:[%s116 + $0x9d0] sm:$0xff]
      %v440 = vld [vmem:[%s116 + $0x9d8] sm:$0x3f]
      %v441 = vld [vmem:[%s116 + $0x9e0] sm:$0xff]
      %v442 = vld [vmem:[%s116 + $0x9e8] sm:$0x3f]
      %v443 = vld [vmem:[%s116 + $0x9f0] sm:$0xff]
      %v444 = vld [vmem:[%s116 + $0x9f8] sm:$0x3f]
      %v445 = vld [vmem:[%s116 + $0xa00] sm:$0xff]
      %v446 = vld [vmem:[%s116 + $0xa08] sm:$0x3f]
      %v447 = vld [vmem:[%s116 + $0xa10] sm:$0xff]
      %v448 = vld [vmem:[%s116 + $0xa18] sm:$0x3f]
      %v449 = vld [vmem:[%s116 + $0xa20] sm:$0xff]
      %v450 = vld [vmem:[%s116 + $0xa28] sm:$0x3f]
      %v451 = vld [vmem:[%s116 + $0xa30] sm:$0xff]
      %v452 = vld [vmem:[%s116 + $0xa38] sm:$0x3f]
      %v453 = vld [vmem:[%s116 + $0xa40] sm:$0xff]
      %v454 = vld [vmem:[%s116 + $0xa48] sm:$0x3f]
      %v455 = vld [vmem:[%s116 + $0xa50] sm:$0xff]
      %v456 = vld [vmem:[%s116 + $0xa58] sm:$0x3f]
      %v457 = vld [vmem:[%s116 + $0xa60] sm:$0xff]
      %v458 = vld [vmem:[%s116 + $0xa68] sm:$0x3f]
      %v459 = vld [vmem:[%s116 + $0xa70] sm:$0xff]
      %v460 = vld [vmem:[%s116 + $0xa78] sm:$0x3f]
      %v461 = vld [vmem:[%s116 + $0xa80] sm:$0xff]
      %v462 = vld [vmem:[%s116 + $0xa88] sm:$0x3f]
      %v463 = vld [vmem:[%s116 + $0xa90] sm:$0xff]
      %v464 = vld [vmem:[%s116 + $0xa98] sm:$0x3f]
      %v465 = vld [vmem:[%s116 + $0xaa0] sm:$0xff]
      %v466 = vld [vmem:[%s116 + $0xaa8] sm:$0x3f]
      %v467 = vld [vmem:[%s116 + $0xab0] sm:$0xff]
      %v468 = vld [vmem:[%s116 + $0xab8] sm:$0x3f]
      %v469 = vld [vmem:[%s116 + $0xac0] sm:$0xff]
      %v470 = vld [vmem:[%s116 + $0xac8] sm:$0x3f]
      %v471 = vld [vmem:[%s116 + $0xad0] sm:$0xff]
      %v472 = vld [vmem:[%s116 + $0xad8] sm:$0x3f]
      %v473 = vld [vmem:[%s116 + $0xae0] sm:$0xff]
      %v474 = vld [vmem:[%s116 + $0xae8] sm:$0x3f]
      %v475 = vld [vmem:[%s116 + $0xaf0] sm:$0xff]
      %v476 = vld [vmem:[%s116 + $0xaf8] sm:$0x3f]
      %v477 = vld [vmem:[%s116 + $0xb00] sm:$0xff]
      %v478 = vld [vmem:[%s116 + $0xb08] sm:$0x3f]
      %v479 = vld [vmem:[%s116 + $0xb10] sm:$0xff]
      %v480 = vld [vmem:[%s116 + $0xb18] sm:$0x3f]
      %v481 = vld [vmem:[%s116 + $0xb20] sm:$0xff]
      %v482 = vld [vmem:[%s116 + $0xb28] sm:$0x3f]
      %v483 = vld [vmem:[%s116 + $0xb30] sm:$0xff]
      %v484 = vld [vmem:[%s116 + $0xb38] sm:$0x3f]
      %v485 = vld [vmem:[%s116 + $0xb40] sm:$0xff]
      %v486 = vld [vmem:[%s116 + $0xb48] sm:$0x3f]
      %v487 = vld [vmem:[%s116 + $0xb50] sm:$0xff]
      %v488 = vld [vmem:[%s116 + $0xb58] sm:$0x3f]
      %v489 = vld [vmem:[%s116 + $0xb60] sm:$0xff]
      %v490 = vld [vmem:[%s116 + $0xb68] sm:$0x3f]
      %v491 = vld [vmem:[%s116 + $0xb70] sm:$0xff]
      %v492 = vld [vmem:[%s116 + $0xb78] sm:$0x3f]
      %v493 = vld [vmem:[%s116 + $0xb80] sm:$0xff]
      %v494 = vld [vmem:[%s116 + $0xb88] sm:$0x3f]
      %v495 = vld [vmem:[%s116 + $0xb90] sm:$0xff]
      %v496 = vld [vmem:[%s116 + $0xb98] sm:$0x3f]
      %v497 = vld [vmem:[%s116 + $0xba0] sm:$0xff]
      %v498 = vld [vmem:[%s116 + $0xba8] sm:$0x3f]
      %v499 = vld [vmem:[%s116 + $0xbb0] sm:$0xff]
      %v500 = vld [vmem:[%s116 + $0xbb8] sm:$0x3f]
      %v501 = vld [vmem:[%s116 + $0xbc0] sm:$0xff]
      %v502 = vld [vmem:[%s116 + $0xbc8] sm:$0x3f]
      %v503 = vld [vmem:[%s116 + $0xbd0] sm:$0xff]
      %v504 = vld [vmem:[%s116 + $0xbd8] sm:$0x3f]
      %v505 = vld [vmem:[%s116 + $0xbe0] sm:$0xff]
      %v506 = vld [vmem:[%s116 + $0xbe8] sm:$0x3f]
      %v507 = vld [vmem:[%s116 + $0xbf0] sm:$0xff]
      %v508 = vld [vmem:[%s116 + $0xbf8] sm:$0x3f]
      %v509 = vld [vmem:[%s116 + $0xc00] sm:$0xff]
      %v510 = vld [vmem:[%s116 + $0xc08] sm:$0x3f]
      %v511 = vld [vmem:[%s116 + $0xc10] sm:$0xff]
      %v512 = vld [vmem:[%s116 + $0xc18] sm:$0x3f]
      %v513 = vld [vmem:[%s116 + $0xc20] sm:$0xff]
      %v514 = vld [vmem:[%s116 + $0xc28] sm:$0x3f]
      %v515 = vld [vmem:[%s116 + $0xc30] sm:$0xff]
      %v516 = vld [vmem:[%s116 + $0xc38] sm:$0x3f]
      %v517 = vld [vmem:[%s116 + $0xc40] sm:$0xff]
      %v518 = vld [vmem:[%s116 + $0xc48] sm:$0x3f]
      %v519 = vld [vmem:[%s116 + $0xc50] sm:$0xff]
      %v520 = vld [vmem:[%s116 + $0xc58] sm:$0x3f]
      %v521 = vld [vmem:[%s116 + $0xc60] sm:$0xff]
      %v522 = vld [vmem:[%s116 + $0xc68] sm:$0x3f]
      %v523 = vld [vmem:[%s116 + $0xc70] sm:$0xff]
      %v524 = vld [vmem:[%s116 + $0xc78] sm:$0x3f]
      %v525 = vld [vmem:[%s116 + $0xc80] sm:$0xff]
      %v526 = vld [vmem:[%s116 + $0xc88] sm:$0x3f]
      %v527 = vld [vmem:[%s116 + $0xc90] sm:$0xff]
      %v528 = vld [vmem:[%s116 + $0xc98] sm:$0x3f]
      %v529 = vld [vmem:[%s116 + $0xca0] sm:$0xff]
      %v530 = vld [vmem:[%s116 + $0xca8] sm:$0x3f]
      %v531 = vld [vmem:[%s116 + $0xcb0] sm:$0xff]
      %v532 = vld [vmem:[%s116 + $0xcb8] sm:$0x3f]
      %v533 = vld [vmem:[%s116 + $0xcc0] sm:$0xff]
      %v534 = vld [vmem:[%s116 + $0xcc8] sm:$0x3f]
      %v535 = vld [vmem:[%s116 + $0xcd0] sm:$0xff]
      %v536 = vld [vmem:[%s116 + $0xcd8] sm:$0x3f]
      %v537 = vld [vmem:[%s116 + $0xce0] sm:$0xff]
      %v538 = vld [vmem:[%s116 + $0xce8] sm:$0x3f]
      %v539 = vld [vmem:[%s116 + $0xcf0] sm:$0xff]
      %v540 = vld [vmem:[%s116 + $0xcf8] sm:$0x3f]
      %v541 = vld [vmem:[%s116 + $0xd00] sm:$0xff]
      %v542 = vld [vmem:[%s116 + $0xd08] sm:$0x3f]
      %v543 = vld [vmem:[%s116 + $0xd10] sm:$0xff]
      %v544 = vld [vmem:[%s116 + $0xd18] sm:$0x3f]
      %v545 = vld [vmem:[%s116 + $0xd20] sm:$0xff]
      %v546 = vld [vmem:[%s116 + $0xd28] sm:$0x3f]
      %v547 = vld [vmem:[%s116 + $0xd30] sm:$0xff]
      %v548 = vld [vmem:[%s116 + $0xd38] sm:$0x3f]
      %v549 = vld [vmem:[%s116 + $0xd40] sm:$0xff]
      %v550 = vld [vmem:[%s116 + $0xd48] sm:$0x3f]
      %v551 = vld [vmem:[%s116 + $0xd50] sm:$0xff]
      %v552 = vld [vmem:[%s116 + $0xd58] sm:$0x3f]
      %v553 = vld [vmem:[%s116 + $0xd60] sm:$0xff]
      %v554 = vld [vmem:[%s116 + $0xd68] sm:$0x3f]
      %v555 = vld [vmem:[%s116 + $0xd70] sm:$0xff]
      %v556 = vld [vmem:[%s116 + $0xd78] sm:$0x3f]
      %v557 = vld [vmem:[%s116 + $0xd80] sm:$0xff]
      %v558 = vld [vmem:[%s116 + $0xd88] sm:$0x3f]
      %v559 = vld [vmem:[%s116 + $0xd90] sm:$0xff]
      %v560 = vld [vmem:[%s116 + $0xd98] sm:$0x3f]
      %v561 = vld [vmem:[%s116 + $0xda0] sm:$0xff]
      %v562 = vld [vmem:[%s116 + $0xda8] sm:$0x3f]
      %v563 = vld [vmem:[%s116 + $0xdb0] sm:$0xff]
      %v564 = vld [vmem:[%s116 + $0xdb8] sm:$0x3f]
      %v565 = vld [vmem:[%s116 + $0xdc0] sm:$0xff]
      %v566 = vld [vmem:[%s116 + $0xdc8] sm:$0x3f]
      %v567 = vld [vmem:[%s116 + $0xdd0] sm:$0xff]
      %v568 = vld [vmem:[%s116 + $0xdd8] sm:$0x3f]
      %v569 = vld [vmem:[%s116 + $0xde0] sm:$0xff]
      %v570 = vld [vmem:[%s116 + $0xde8] sm:$0x3f]
      %v571 = vld [vmem:[%s116 + $0xdf0] sm:$0xff]
      %v572 = vld [vmem:[%s116 + $0xdf8] sm:$0x3f]
      %1021 = vrot.lane.b32.xlu0 %v125, 122
      %v1022 = vpop.permute.xlu0 %1021
      %1023 = vrot.lane.b32.xlu0 %v126, 122
      %v1024 = vpop.permute.xlu0 %1023
      %1025 = vrot.lane.b32.xlu0 %v127, 122
      %v1026 = vpop.permute.xlu0 %1025
      %1027 = vrot.lane.b32.xlu0 %v128, 122
      %v1028 = vpop.permute.xlu0 %1027
      %1029 = vrot.lane.b32.xlu0 %v129, 122
      %v1030 = vpop.permute.xlu0 %1029
      %1031 = vrot.lane.b32.xlu0 %v130, 122
      %v1032 = vpop.permute.xlu0 %1031
      %1033 = vrot.lane.b32.xlu0 %v131, 122
      %v1034 = vpop.permute.xlu0 %1033
      %1035 = vrot.lane.b32.xlu0 %v132, 122
      %v1036 = vpop.permute.xlu0 %1035
      %1037 = vrot.lane.b32.xlu0 %v133, 122
      %v1038 = vpop.permute.xlu0 %1037
      %1039 = vrot.lane.b32.xlu0 %v134, 122
      %v1040 = vpop.permute.xlu0 %1039
      %1041 = vrot.lane.b32.xlu0 %v135, 122
      %v1042 = vpop.permute.xlu0 %1041
      %1043 = vrot.lane.b32.xlu0 %v136, 122
      %v1044 = vpop.permute.xlu0 %1043
      %1045 = vrot.lane.b32.xlu0 %v137, 122
      %v1046 = vpop.permute.xlu0 %1045
      %1047 = vrot.lane.b32.xlu0 %v138, 122
      %v1048 = vpop.permute.xlu0 %1047
      %1049 = vrot.lane.b32.xlu0 %v139, 122
      %v1050 = vpop.permute.xlu0 %1049
      %1051 = vrot.lane.b32.xlu0 %v140, 122
      %v1052 = vpop.permute.xlu0 %1051
      %1053 = vrot.lane.b32.xlu0 %v141, 122
      %v1054 = vpop.permute.xlu0 %1053
      %1055 = vrot.lane.b32.xlu0 %v142, 122
      %v1056 = vpop.permute.xlu0 %1055
      %1057 = vrot.lane.b32.xlu0 %v143, 122
      %v1058 = vpop.permute.xlu0 %1057
      %1059 = vrot.lane.b32.xlu0 %v144, 122
      %v1060 = vpop.permute.xlu0 %1059
      %1061 = vrot.lane.b32.xlu0 %v145, 122
      %v1062 = vpop.permute.xlu0 %1061
      %1063 = vrot.lane.b32.xlu0 %v146, 122
      %v1064 = vpop.permute.xlu0 %1063
      %1065 = vrot.lane.b32.xlu0 %v147, 122
      %v1066 = vpop.permute.xlu0 %1065
      %1067 = vrot.lane.b32.xlu0 %v148, 122
      %v1068 = vpop.permute.xlu0 %1067
      %1069 = vrot.lane.b32.xlu0 %v149, 122
      %v1070 = vpop.permute.xlu0 %1069
      %1071 = vrot.lane.b32.xlu0 %v150, 122
      %v1072 = vpop.permute.xlu0 %1071
      %1073 = vrot.lane.b32.xlu0 %v151, 122
      %v1074 = vpop.permute.xlu0 %1073
      %1075 = vrot.lane.b32.xlu0 %v152, 122
      %v1076 = vpop.permute.xlu0 %1075
      %1077 = vrot.lane.b32.xlu0 %v153, 122
      %v1078 = vpop.permute.xlu0 %1077
      %1079 = vrot.lane.b32.xlu0 %v154, 122
      %v1080 = vpop.permute.xlu0 %1079
      %1081 = vrot.lane.b32.xlu0 %v155, 122
      %v1082 = vpop.permute.xlu0 %1081
      %1083 = vrot.lane.b32.xlu0 %v156, 122
      %v1084 = vpop.permute.xlu0 %1083
      %1085 = vrot.lane.b32.xlu0 %v157, 122
      %v1086 = vpop.permute.xlu0 %1085
      %1087 = vrot.lane.b32.xlu0 %v158, 122
      %v1088 = vpop.permute.xlu0 %1087
      %1089 = vrot.lane.b32.xlu0 %v159, 122
      %v1090 = vpop.permute.xlu0 %1089
      %1091 = vrot.lane.b32.xlu0 %v160, 122
      %v1092 = vpop.permute.xlu0 %1091
      %1093 = vrot.lane.b32.xlu0 %v161, 122
      %v1094 = vpop.permute.xlu0 %1093
      %1095 = vrot.lane.b32.xlu0 %v162, 122
      %v1096 = vpop.permute.xlu0 %1095
      %1097 = vrot.lane.b32.xlu0 %v163, 122
      %v1098 = vpop.permute.xlu0 %1097
      %1099 = vrot.lane.b32.xlu0 %v164, 122
      %v1100 = vpop.permute.xlu0 %1099
      %1101 = vrot.lane.b32.xlu0 %v165, 122
      %v1102 = vpop.permute.xlu0 %1101
      %1103 = vrot.lane.b32.xlu0 %v166, 122
      %v1104 = vpop.permute.xlu0 %1103
      %1105 = vrot.lane.b32.xlu0 %v167, 122
      %v1106 = vpop.permute.xlu0 %1105
      %1107 = vrot.lane.b32.xlu0 %v168, 122
      %v1108 = vpop.permute.xlu0 %1107
      %1109 = vrot.lane.b32.xlu0 %v169, 122
      %v1110 = vpop.permute.xlu0 %1109
      %1111 = vrot.lane.b32.xlu0 %v170, 122
      %v1112 = vpop.permute.xlu0 %1111
      %1113 = vrot.lane.b32.xlu0 %v171, 122
      %v1114 = vpop.permute.xlu0 %1113
      %1115 = vrot.lane.b32.xlu0 %v172, 122
      %v1116 = vpop.permute.xlu0 %1115
      %1117 = vrot.lane.b32.xlu0 %v173, 122
      %v1118 = vpop.permute.xlu0 %1117
      %1119 = vrot.lane.b32.xlu0 %v174, 122
      %v1120 = vpop.permute.xlu0 %1119
      %1121 = vrot.lane.b32.xlu0 %v175, 122
      %v1122 = vpop.permute.xlu0 %1121
      %1123 = vrot.lane.b32.xlu0 %v176, 122
      %v1124 = vpop.permute.xlu0 %1123
      %1125 = vrot.lane.b32.xlu0 %v177, 122
      %v1126 = vpop.permute.xlu0 %1125
      %1127 = vrot.lane.b32.xlu0 %v178, 122
      %v1128 = vpop.permute.xlu0 %1127
      %1129 = vrot.lane.b32.xlu0 %v179, 122
      %v1130 = vpop.permute.xlu0 %1129
      %1131 = vrot.lane.b32.xlu0 %v180, 122
      %v1132 = vpop.permute.xlu0 %1131
      %1133 = vrot.lane.b32.xlu0 %v181, 122
      %v1134 = vpop.permute.xlu0 %1133
      %1135 = vrot.lane.b32.xlu0 %v182, 122
      %v1136 = vpop.permute.xlu0 %1135
      %1137 = vrot.lane.b32.xlu0 %v183, 122
      %v1138 = vpop.permute.xlu0 %1137
      %1139 = vrot.lane.b32.xlu0 %v184, 122
      %v1140 = vpop.permute.xlu0 %1139
      %1141 = vrot.lane.b32.xlu0 %v185, 122
      %v1142 = vpop.permute.xlu0 %1141
      %1143 = vrot.lane.b32.xlu0 %v186, 122
      %v1144 = vpop.permute.xlu0 %1143
      %1145 = vrot.lane.b32.xlu0 %v187, 122
      %v1146 = vpop.permute.xlu0 %1145
      %1147 = vrot.lane.b32.xlu0 %v188, 122
      %v1148 = vpop.permute.xlu0 %1147
      %1149 = vrot.lane.b32.xlu0 %v189, 122
      %v1150 = vpop.permute.xlu0 %1149
      %1151 = vrot.lane.b32.xlu0 %v190, 122
      %v1152 = vpop.permute.xlu0 %1151
      %1153 = vrot.lane.b32.xlu0 %v191, 122
      %v1154 = vpop.permute.xlu0 %1153
      %1155 = vrot.lane.b32.xlu0 %v192, 122
      %v1156 = vpop.permute.xlu0 %1155
      %1157 = vrot.lane.b32.xlu0 %v193, 122
      %v1158 = vpop.permute.xlu0 %1157
      %1159 = vrot.lane.b32.xlu0 %v194, 122
      %v1160 = vpop.permute.xlu0 %1159
      %1161 = vrot.lane.b32.xlu0 %v195, 122
      %v1162 = vpop.permute.xlu0 %1161
      %1163 = vrot.lane.b32.xlu0 %v196, 122
      %v1164 = vpop.permute.xlu0 %1163
      %1165 = vrot.lane.b32.xlu0 %v197, 122
      %v1166 = vpop.permute.xlu0 %1165
      %1167 = vrot.lane.b32.xlu0 %v198, 122
      %v1168 = vpop.permute.xlu0 %1167
      %1169 = vrot.lane.b32.xlu0 %v199, 122
      %v1170 = vpop.permute.xlu0 %1169
      %1171 = vrot.lane.b32.xlu0 %v200, 122
      %v1172 = vpop.permute.xlu0 %1171
      %1173 = vrot.lane.b32.xlu0 %v201, 122
      %v1174 = vpop.permute.xlu0 %1173
      %1175 = vrot.lane.b32.xlu0 %v202, 122
      %v1176 = vpop.permute.xlu0 %1175
      %1177 = vrot.lane.b32.xlu0 %v203, 122
      %v1178 = vpop.permute.xlu0 %1177
      %1179 = vrot.lane.b32.xlu0 %v204, 122
      %v1180 = vpop.permute.xlu0 %1179
      %1181 = vrot.lane.b32.xlu0 %v205, 122
      %v1182 = vpop.permute.xlu0 %1181
      %1183 = vrot.lane.b32.xlu0 %v206, 122
      %v1184 = vpop.permute.xlu0 %1183
      %1185 = vrot.lane.b32.xlu0 %v207, 122
      %v1186 = vpop.permute.xlu0 %1185
      %1187 = vrot.lane.b32.xlu0 %v208, 122
      %v1188 = vpop.permute.xlu0 %1187
      %1189 = vrot.lane.b32.xlu0 %v209, 122
      %v1190 = vpop.permute.xlu0 %1189
      %1191 = vrot.lane.b32.xlu0 %v210, 122
      %v1192 = vpop.permute.xlu0 %1191
      %1193 = vrot.lane.b32.xlu0 %v211, 122
      %v1194 = vpop.permute.xlu0 %1193
      %1195 = vrot.lane.b32.xlu0 %v212, 122
      %v1196 = vpop.permute.xlu0 %1195
      %1197 = vrot.lane.b32.xlu0 %v213, 122
      %v1198 = vpop.permute.xlu0 %1197
      %1199 = vrot.lane.b32.xlu0 %v214, 122
      %v1200 = vpop.permute.xlu0 %1199
      %1201 = vrot.lane.b32.xlu0 %v215, 122
      %v1202 = vpop.permute.xlu0 %1201
      %1203 = vrot.lane.b32.xlu0 %v216, 122
      %v1204 = vpop.permute.xlu0 %1203
      %1205 = vrot.lane.b32.xlu0 %v217, 122
      %v1206 = vpop.permute.xlu0 %1205
      %1207 = vrot.lane.b32.xlu0 %v218, 122
      %v1208 = vpop.permute.xlu0 %1207
      %1209 = vrot.lane.b32.xlu0 %v219, 122
      %v1210 = vpop.permute.xlu0 %1209
      %1211 = vrot.lane.b32.xlu0 %v220, 122
      %v1212 = vpop.permute.xlu0 %1211
      %1213 = vrot.lane.b32.xlu0 %v221, 122
      %v1214 = vpop.permute.xlu0 %1213
      %1215 = vrot.lane.b32.xlu0 %v222, 122
      %v1216 = vpop.permute.xlu0 %1215
      %1217 = vrot.lane.b32.xlu0 %v223, 122
      %v1218 = vpop.permute.xlu0 %1217
      %1219 = vrot.lane.b32.xlu0 %v224, 122
      %v1220 = vpop.permute.xlu0 %1219
      %1221 = vrot.lane.b32.xlu0 %v225, 122
      %v1222 = vpop.permute.xlu0 %1221
      %1223 = vrot.lane.b32.xlu0 %v226, 122
      %v1224 = vpop.permute.xlu0 %1223
      %1225 = vrot.lane.b32.xlu0 %v227, 122
      %v1226 = vpop.permute.xlu0 %1225
      %1227 = vrot.lane.b32.xlu0 %v228, 122
      %v1228 = vpop.permute.xlu0 %1227
      %1229 = vrot.lane.b32.xlu0 %v229, 122
      %v1230 = vpop.permute.xlu0 %1229
      %1231 = vrot.lane.b32.xlu0 %v230, 122
      %v1232 = vpop.permute.xlu0 %1231
      %1233 = vrot.lane.b32.xlu0 %v231, 122
      %v1234 = vpop.permute.xlu0 %1233
      %1235 = vrot.lane.b32.xlu0 %v232, 122
      %v1236 = vpop.permute.xlu0 %1235
      %1237 = vrot.lane.b32.xlu0 %v233, 122
      %v1238 = vpop.permute.xlu0 %1237
      %1239 = vrot.lane.b32.xlu0 %v234, 122
      %v1240 = vpop.permute.xlu0 %1239
      %1241 = vrot.lane.b32.xlu0 %v235, 122
      %v1242 = vpop.permute.xlu0 %1241
      %1243 = vrot.lane.b32.xlu0 %v236, 122
      %v1244 = vpop.permute.xlu0 %1243
      %1245 = vrot.lane.b32.xlu0 %v237, 122
      %v1246 = vpop.permute.xlu0 %1245
      %1247 = vrot.lane.b32.xlu0 %v238, 122
      %v1248 = vpop.permute.xlu0 %1247
      %1249 = vrot.lane.b32.xlu0 %v239, 122
      %v1250 = vpop.permute.xlu0 %1249
      %1251 = vrot.lane.b32.xlu0 %v240, 122
      %v1252 = vpop.permute.xlu0 %1251
      %1253 = vrot.lane.b32.xlu0 %v241, 122
      %v1254 = vpop.permute.xlu0 %1253
      %1255 = vrot.lane.b32.xlu0 %v242, 122
      %v1256 = vpop.permute.xlu0 %1255
      %1257 = vrot.lane.b32.xlu0 %v243, 122
      %v1258 = vpop.permute.xlu0 %1257
      %1259 = vrot.lane.b32.xlu0 %v244, 122
      %v1260 = vpop.permute.xlu0 %1259
      %1261 = vrot.lane.b32.xlu0 %v245, 122
      %v1262 = vpop.permute.xlu0 %1261
      %1263 = vrot.lane.b32.xlu0 %v246, 122
      %v1264 = vpop.permute.xlu0 %1263
      %1265 = vrot.lane.b32.xlu0 %v247, 122
      %v1266 = vpop.permute.xlu0 %1265
      %1267 = vrot.lane.b32.xlu0 %v248, 122
      %v1268 = vpop.permute.xlu0 %1267
      %1269 = vrot.lane.b32.xlu0 %v249, 122
      %v1270 = vpop.permute.xlu0 %1269
      %1271 = vrot.lane.b32.xlu0 %v250, 122
      %v1272 = vpop.permute.xlu0 %1271
      %1273 = vrot.lane.b32.xlu0 %v251, 122
      %v1274 = vpop.permute.xlu0 %1273
      %1275 = vrot.lane.b32.xlu0 %v252, 122
      %v1276 = vpop.permute.xlu0 %1275
      %1277 = vrot.lane.b32.xlu0 %v253, 122
      %v1278 = vpop.permute.xlu0 %1277
      %1279 = vrot.lane.b32.xlu0 %v254, 122
      %v1280 = vpop.permute.xlu0 %1279
      %1281 = vrot.lane.b32.xlu0 %v255, 122
      %v1282 = vpop.permute.xlu0 %1281
      %1283 = vrot.lane.b32.xlu0 %v256, 122
      %v1284 = vpop.permute.xlu0 %1283
      %1285 = vrot.lane.b32.xlu0 %v257, 122
      %v1286 = vpop.permute.xlu0 %1285
      %1287 = vrot.lane.b32.xlu0 %v258, 122
      %v1288 = vpop.permute.xlu0 %1287
      %1289 = vrot.lane.b32.xlu0 %v259, 122
      %v1290 = vpop.permute.xlu0 %1289
      %1291 = vrot.lane.b32.xlu0 %v260, 122
      %v1292 = vpop.permute.xlu0 %1291
      %1293 = vrot.lane.b32.xlu0 %v261, 122
      %v1294 = vpop.permute.xlu0 %1293
      %1295 = vrot.lane.b32.xlu0 %v262, 122
      %v1296 = vpop.permute.xlu0 %1295
      %1297 = vrot.lane.b32.xlu0 %v263, 122
      %v1298 = vpop.permute.xlu0 %1297
      %1299 = vrot.lane.b32.xlu0 %v264, 122
      %v1300 = vpop.permute.xlu0 %1299
      %1301 = vrot.lane.b32.xlu0 %v265, 122
      %v1302 = vpop.permute.xlu0 %1301
      %1303 = vrot.lane.b32.xlu0 %v266, 122
      %v1304 = vpop.permute.xlu0 %1303
      %1305 = vrot.lane.b32.xlu0 %v267, 122
      %v1306 = vpop.permute.xlu0 %1305
      %1307 = vrot.lane.b32.xlu0 %v268, 122
      %v1308 = vpop.permute.xlu0 %1307
      %1309 = vrot.lane.b32.xlu0 %v269, 122
      %v1310 = vpop.permute.xlu0 %1309
      %1311 = vrot.lane.b32.xlu0 %v270, 122
      %v1312 = vpop.permute.xlu0 %1311
      %1313 = vrot.lane.b32.xlu0 %v271, 122
      %v1314 = vpop.permute.xlu0 %1313
      %1315 = vrot.lane.b32.xlu0 %v272, 122
      %v1316 = vpop.permute.xlu0 %1315
      %1317 = vrot.lane.b32.xlu0 %v273, 122
      %v1318 = vpop.permute.xlu0 %1317
      %1319 = vrot.lane.b32.xlu0 %v274, 122
      %v1320 = vpop.permute.xlu0 %1319
      %1321 = vrot.lane.b32.xlu0 %v275, 122
      %v1322 = vpop.permute.xlu0 %1321
      %1323 = vrot.lane.b32.xlu0 %v276, 122
      %v1324 = vpop.permute.xlu0 %1323
      %1325 = vrot.lane.b32.xlu0 %v277, 122
      %v1326 = vpop.permute.xlu0 %1325
      %1327 = vrot.lane.b32.xlu0 %v278, 122
      %v1328 = vpop.permute.xlu0 %1327
      %1329 = vrot.lane.b32.xlu0 %v279, 122
      %v1330 = vpop.permute.xlu0 %1329
      %1331 = vrot.lane.b32.xlu0 %v280, 122
      %v1332 = vpop.permute.xlu0 %1331
      %1333 = vrot.lane.b32.xlu0 %v281, 122
      %v1334 = vpop.permute.xlu0 %1333
      %1335 = vrot.lane.b32.xlu0 %v282, 122
      %v1336 = vpop.permute.xlu0 %1335
      %1337 = vrot.lane.b32.xlu0 %v283, 122
      %v1338 = vpop.permute.xlu0 %1337
      %1339 = vrot.lane.b32.xlu0 %v284, 122
      %v1340 = vpop.permute.xlu0 %1339
      %1341 = vrot.lane.b32.xlu0 %v285, 122
      %v1342 = vpop.permute.xlu0 %1341
      %1343 = vrot.lane.b32.xlu0 %v286, 122
      %v1344 = vpop.permute.xlu0 %1343
      %1345 = vrot.lane.b32.xlu0 %v287, 122
      %v1346 = vpop.permute.xlu0 %1345
      %1347 = vrot.lane.b32.xlu0 %v288, 122
      %v1348 = vpop.permute.xlu0 %1347
      %1349 = vrot.lane.b32.xlu0 %v289, 122
      %v1350 = vpop.permute.xlu0 %1349
      %1351 = vrot.lane.b32.xlu0 %v290, 122
      %v1352 = vpop.permute.xlu0 %1351
      %1353 = vrot.lane.b32.xlu0 %v291, 122
      %v1354 = vpop.permute.xlu0 %1353
      %1355 = vrot.lane.b32.xlu0 %v292, 122
      %v1356 = vpop.permute.xlu0 %1355
      %1357 = vrot.lane.b32.xlu0 %v293, 122
      %v1358 = vpop.permute.xlu0 %1357
      %1359 = vrot.lane.b32.xlu0 %v294, 122
      %v1360 = vpop.permute.xlu0 %1359
      %1361 = vrot.lane.b32.xlu0 %v295, 122
      %v1362 = vpop.permute.xlu0 %1361
      %1363 = vrot.lane.b32.xlu0 %v296, 122
      %v1364 = vpop.permute.xlu0 %1363
      %1365 = vrot.lane.b32.xlu0 %v297, 122
      %v1366 = vpop.permute.xlu0 %1365
      %1367 = vrot.lane.b32.xlu0 %v298, 122
      %v1368 = vpop.permute.xlu0 %1367
      %1369 = vrot.lane.b32.xlu0 %v299, 122
      %v1370 = vpop.permute.xlu0 %1369
      %1371 = vrot.lane.b32.xlu0 %v300, 122
      %v1372 = vpop.permute.xlu0 %1371
      %1373 = vrot.lane.b32.xlu0 %v301, 122
      %v1374 = vpop.permute.xlu0 %1373
      %1375 = vrot.lane.b32.xlu0 %v302, 122
      %v1376 = vpop.permute.xlu0 %1375
      %1377 = vrot.lane.b32.xlu0 %v303, 122
      %v1378 = vpop.permute.xlu0 %1377
      %1379 = vrot.lane.b32.xlu0 %v304, 122
      %v1380 = vpop.permute.xlu0 %1379
      %1381 = vrot.lane.b32.xlu0 %v305, 122
      %v1382 = vpop.permute.xlu0 %1381
      %1383 = vrot.lane.b32.xlu0 %v306, 122
      %v1384 = vpop.permute.xlu0 %1383
      %1385 = vrot.lane.b32.xlu0 %v307, 122
      %v1386 = vpop.permute.xlu0 %1385
      %1387 = vrot.lane.b32.xlu0 %v308, 122
      %v1388 = vpop.permute.xlu0 %1387
      %1389 = vrot.lane.b32.xlu0 %v309, 122
      %v1390 = vpop.permute.xlu0 %1389
      %1391 = vrot.lane.b32.xlu0 %v310, 122
      %v1392 = vpop.permute.xlu0 %1391
      %1393 = vrot.lane.b32.xlu0 %v311, 122
      %v1394 = vpop.permute.xlu0 %1393
      %1395 = vrot.lane.b32.xlu0 %v312, 122
      %v1396 = vpop.permute.xlu0 %1395
      %1397 = vrot.lane.b32.xlu0 %v313, 122
      %v1398 = vpop.permute.xlu0 %1397
      %1399 = vrot.lane.b32.xlu0 %v314, 122
      %v1400 = vpop.permute.xlu0 %1399
      %1401 = vrot.lane.b32.xlu0 %v315, 122
      %v1402 = vpop.permute.xlu0 %1401
      %1403 = vrot.lane.b32.xlu0 %v316, 122
      %v1404 = vpop.permute.xlu0 %1403
      %1405 = vrot.lane.b32.xlu0 %v317, 122
      %v1406 = vpop.permute.xlu0 %1405
      %1407 = vrot.lane.b32.xlu0 %v318, 122
      %v1408 = vpop.permute.xlu0 %1407
      %1409 = vrot.lane.b32.xlu0 %v319, 122
      %v1410 = vpop.permute.xlu0 %1409
      %1411 = vrot.lane.b32.xlu0 %v320, 122
      %v1412 = vpop.permute.xlu0 %1411
      %1413 = vrot.lane.b32.xlu0 %v321, 122
      %v1414 = vpop.permute.xlu0 %1413
      %1415 = vrot.lane.b32.xlu0 %v322, 122
      %v1416 = vpop.permute.xlu0 %1415
      %1417 = vrot.lane.b32.xlu0 %v323, 122
      %v1418 = vpop.permute.xlu0 %1417
      %1419 = vrot.lane.b32.xlu0 %v324, 122
      %v1420 = vpop.permute.xlu0 %1419
      %1421 = vrot.lane.b32.xlu0 %v325, 122
      %v1422 = vpop.permute.xlu0 %1421
      %1423 = vrot.lane.b32.xlu0 %v326, 122
      %v1424 = vpop.permute.xlu0 %1423
      %1425 = vrot.lane.b32.xlu0 %v327, 122
      %v1426 = vpop.permute.xlu0 %1425
      %1427 = vrot.lane.b32.xlu0 %v328, 122
      %v1428 = vpop.permute.xlu0 %1427
      %1429 = vrot.lane.b32.xlu0 %v329, 122
      %v1430 = vpop.permute.xlu0 %1429
      %1431 = vrot.lane.b32.xlu0 %v330, 122
      %v1432 = vpop.permute.xlu0 %1431
      %1433 = vrot.lane.b32.xlu0 %v331, 122
      %v1434 = vpop.permute.xlu0 %1433
      %1435 = vrot.lane.b32.xlu0 %v332, 122
      %v1436 = vpop.permute.xlu0 %1435
      %1437 = vrot.lane.b32.xlu0 %v333, 122
      %v1438 = vpop.permute.xlu0 %1437
      %1439 = vrot.lane.b32.xlu0 %v334, 122
      %v1440 = vpop.permute.xlu0 %1439
      %1441 = vrot.lane.b32.xlu0 %v335, 122
      %v1442 = vpop.permute.xlu0 %1441
      %1443 = vrot.lane.b32.xlu0 %v336, 122
      %v1444 = vpop.permute.xlu0 %1443
      %1445 = vrot.lane.b32.xlu0 %v337, 122
      %v1446 = vpop.permute.xlu0 %1445
      %1447 = vrot.lane.b32.xlu0 %v338, 122
      %v1448 = vpop.permute.xlu0 %1447
      %1449 = vrot.lane.b32.xlu0 %v339, 122
      %v1450 = vpop.permute.xlu0 %1449
      %1451 = vrot.lane.b32.xlu0 %v340, 122
      %v1452 = vpop.permute.xlu0 %1451
      %1453 = vrot.lane.b32.xlu0 %v341, 122
      %v1454 = vpop.permute.xlu0 %1453
      %1455 = vrot.lane.b32.xlu0 %v342, 122
      %v1456 = vpop.permute.xlu0 %1455
      %1457 = vrot.lane.b32.xlu0 %v343, 122
      %v1458 = vpop.permute.xlu0 %1457
      %1459 = vrot.lane.b32.xlu0 %v344, 122
      %v1460 = vpop.permute.xlu0 %1459
      %1461 = vrot.lane.b32.xlu0 %v345, 122
      %v1462 = vpop.permute.xlu0 %1461
      %1463 = vrot.lane.b32.xlu0 %v346, 122
      %v1464 = vpop.permute.xlu0 %1463
      %1465 = vrot.lane.b32.xlu0 %v347, 122
      %v1466 = vpop.permute.xlu0 %1465
      %1467 = vrot.lane.b32.xlu0 %v348, 122
      %v1468 = vpop.permute.xlu0 %1467
      %1469 = vrot.lane.b32.xlu0 %v349, 122
      %v1470 = vpop.permute.xlu0 %1469
      %1471 = vrot.lane.b32.xlu0 %v350, 122
      %v1472 = vpop.permute.xlu0 %1471
      %1473 = vrot.lane.b32.xlu0 %v351, 122
      %v1474 = vpop.permute.xlu0 %1473
      %1475 = vrot.lane.b32.xlu0 %v352, 122
      %v1476 = vpop.permute.xlu0 %1475
      %1477 = vrot.lane.b32.xlu0 %v353, 122
      %v1478 = vpop.permute.xlu0 %1477
      %1479 = vrot.lane.b32.xlu0 %v354, 122
      %v1480 = vpop.permute.xlu0 %1479
      %1481 = vrot.lane.b32.xlu0 %v355, 122
      %v1482 = vpop.permute.xlu0 %1481
      %1483 = vrot.lane.b32.xlu0 %v356, 122
      %v1484 = vpop.permute.xlu0 %1483
      %1485 = vrot.lane.b32.xlu0 %v357, 122
      %v1486 = vpop.permute.xlu0 %1485
      %1487 = vrot.lane.b32.xlu0 %v358, 122
      %v1488 = vpop.permute.xlu0 %1487
      %1489 = vrot.lane.b32.xlu0 %v359, 122
      %v1490 = vpop.permute.xlu0 %1489
      %1491 = vrot.lane.b32.xlu0 %v360, 122
      %v1492 = vpop.permute.xlu0 %1491
      %1493 = vrot.lane.b32.xlu0 %v361, 122
      %v1494 = vpop.permute.xlu0 %1493
      %1495 = vrot.lane.b32.xlu0 %v362, 122
      %v1496 = vpop.permute.xlu0 %1495
      %1497 = vrot.lane.b32.xlu0 %v363, 122
      %v1498 = vpop.permute.xlu0 %1497
      %1499 = vrot.lane.b32.xlu0 %v364, 122
      %v1500 = vpop.permute.xlu0 %1499
      %1501 = vrot.lane.b32.xlu0 %v365, 122
      %v1502 = vpop.permute.xlu0 %1501
      %1503 = vrot.lane.b32.xlu0 %v366, 122
      %v1504 = vpop.permute.xlu0 %1503
      %1505 = vrot.lane.b32.xlu0 %v367, 122
      %v1506 = vpop.permute.xlu0 %1505
      %1507 = vrot.lane.b32.xlu0 %v368, 122
      %v1508 = vpop.permute.xlu0 %1507
      %1509 = vrot.lane.b32.xlu0 %v369, 122
      %v1510 = vpop.permute.xlu0 %1509
      %1511 = vrot.lane.b32.xlu0 %v370, 122
      %v1512 = vpop.permute.xlu0 %1511
      %1513 = vrot.lane.b32.xlu0 %v371, 122
      %v1514 = vpop.permute.xlu0 %1513
      %1515 = vrot.lane.b32.xlu0 %v372, 122
      %v1516 = vpop.permute.xlu0 %1515
      %1517 = vrot.lane.b32.xlu0 %v373, 122
      %v1518 = vpop.permute.xlu0 %1517
      %1519 = vrot.lane.b32.xlu0 %v374, 122
      %v1520 = vpop.permute.xlu0 %1519
      %1521 = vrot.lane.b32.xlu0 %v375, 122
      %v1522 = vpop.permute.xlu0 %1521
      %1523 = vrot.lane.b32.xlu0 %v376, 122
      %v1524 = vpop.permute.xlu0 %1523
      %1525 = vrot.lane.b32.xlu0 %v377, 122
      %v1526 = vpop.permute.xlu0 %1525
      %1527 = vrot.lane.b32.xlu0 %v378, 122
      %v1528 = vpop.permute.xlu0 %1527
      %1529 = vrot.lane.b32.xlu0 %v379, 122
      %v1530 = vpop.permute.xlu0 %1529
      %1531 = vrot.lane.b32.xlu0 %v380, 122
      %v1532 = vpop.permute.xlu0 %1531
      %1533 = vrot.lane.b32.xlu0 %v381, 122
      %v1534 = vpop.permute.xlu0 %1533
      %1535 = vrot.lane.b32.xlu0 %v382, 122
      %v1536 = vpop.permute.xlu0 %1535
      %1537 = vrot.lane.b32.xlu0 %v383, 122
      %v1538 = vpop.permute.xlu0 %1537
      %1539 = vrot.lane.b32.xlu0 %v384, 122
      %v1540 = vpop.permute.xlu0 %1539
      %1541 = vrot.lane.b32.xlu0 %v385, 122
      %v1542 = vpop.permute.xlu0 %1541
      %1543 = vrot.lane.b32.xlu0 %v386, 122
      %v1544 = vpop.permute.xlu0 %1543
      %1545 = vrot.lane.b32.xlu0 %v387, 122
      %v1546 = vpop.permute.xlu0 %1545
      %1547 = vrot.lane.b32.xlu0 %v388, 122
      %v1548 = vpop.permute.xlu0 %1547
      %1549 = vrot.lane.b32.xlu0 %v389, 122
      %v1550 = vpop.permute.xlu0 %1549
      %1551 = vrot.lane.b32.xlu0 %v390, 122
      %v1552 = vpop.permute.xlu0 %1551
      %1553 = vrot.lane.b32.xlu0 %v391, 122
      %v1554 = vpop.permute.xlu0 %1553
      %1555 = vrot.lane.b32.xlu0 %v392, 122
      %v1556 = vpop.permute.xlu0 %1555
      %1557 = vrot.lane.b32.xlu0 %v393, 122
      %v1558 = vpop.permute.xlu0 %1557
      %1559 = vrot.lane.b32.xlu0 %v394, 122
      %v1560 = vpop.permute.xlu0 %1559
      %1561 = vrot.lane.b32.xlu0 %v395, 122
      %v1562 = vpop.permute.xlu0 %1561
      %1563 = vrot.lane.b32.xlu0 %v396, 122
      %v1564 = vpop.permute.xlu0 %1563
      %1565 = vrot.lane.b32.xlu0 %v397, 122
      %v1566 = vpop.permute.xlu0 %1565
      %1567 = vrot.lane.b32.xlu0 %v398, 122
      %v1568 = vpop.permute.xlu0 %1567
      %1569 = vrot.lane.b32.xlu0 %v399, 122
      %v1570 = vpop.permute.xlu0 %1569
      %1571 = vrot.lane.b32.xlu0 %v400, 122
      %v1572 = vpop.permute.xlu0 %1571
      %1573 = vrot.lane.b32.xlu0 %v401, 122
      %v1574 = vpop.permute.xlu0 %1573
      %1575 = vrot.lane.b32.xlu0 %v402, 122
      %v1576 = vpop.permute.xlu0 %1575
      %1577 = vrot.lane.b32.xlu0 %v403, 122
      %v1578 = vpop.permute.xlu0 %1577
      %1579 = vrot.lane.b32.xlu0 %v404, 122
      %v1580 = vpop.permute.xlu0 %1579
      %1581 = vrot.lane.b32.xlu0 %v405, 122
      %v1582 = vpop.permute.xlu0 %1581
      %1583 = vrot.lane.b32.xlu0 %v406, 122
      %v1584 = vpop.permute.xlu0 %1583
      %1585 = vrot.lane.b32.xlu0 %v407, 122
      %v1586 = vpop.permute.xlu0 %1585
      %1587 = vrot.lane.b32.xlu0 %v408, 122
      %v1588 = vpop.permute.xlu0 %1587
      %1589 = vrot.lane.b32.xlu0 %v409, 122
      %v1590 = vpop.permute.xlu0 %1589
      %1591 = vrot.lane.b32.xlu0 %v410, 122
      %v1592 = vpop.permute.xlu0 %1591
      %1593 = vrot.lane.b32.xlu0 %v411, 122
      %v1594 = vpop.permute.xlu0 %1593
      %1595 = vrot.lane.b32.xlu0 %v412, 122
      %v1596 = vpop.permute.xlu0 %1595
      %1597 = vrot.lane.b32.xlu0 %v413, 122
      %v1598 = vpop.permute.xlu0 %1597
      %1599 = vrot.lane.b32.xlu0 %v414, 122
      %v1600 = vpop.permute.xlu0 %1599
      %1601 = vrot.lane.b32.xlu0 %v415, 122
      %v1602 = vpop.permute.xlu0 %1601
      %1603 = vrot.lane.b32.xlu0 %v416, 122
      %v1604 = vpop.permute.xlu0 %1603
      %1605 = vrot.lane.b32.xlu0 %v417, 122
      %v1606 = vpop.permute.xlu0 %1605
      %1607 = vrot.lane.b32.xlu0 %v418, 122
      %v1608 = vpop.permute.xlu0 %1607
      %1609 = vrot.lane.b32.xlu0 %v419, 122
      %v1610 = vpop.permute.xlu0 %1609
      %1611 = vrot.lane.b32.xlu0 %v420, 122
      %v1612 = vpop.permute.xlu0 %1611
      %1613 = vrot.lane.b32.xlu0 %v421, 122
      %v1614 = vpop.permute.xlu0 %1613
      %1615 = vrot.lane.b32.xlu0 %v422, 122
      %v1616 = vpop.permute.xlu0 %1615
      %1617 = vrot.lane.b32.xlu0 %v423, 122
      %v1618 = vpop.permute.xlu0 %1617
      %1619 = vrot.lane.b32.xlu0 %v424, 122
      %v1620 = vpop.permute.xlu0 %1619
      %1621 = vrot.lane.b32.xlu0 %v425, 122
      %v1622 = vpop.permute.xlu0 %1621
      %1623 = vrot.lane.b32.xlu0 %v426, 122
      %v1624 = vpop.permute.xlu0 %1623
      %1625 = vrot.lane.b32.xlu0 %v427, 122
      %v1626 = vpop.permute.xlu0 %1625
      %1627 = vrot.lane.b32.xlu0 %v428, 122
      %v1628 = vpop.permute.xlu0 %1627
      %1629 = vrot.lane.b32.xlu0 %v429, 122
      %v1630 = vpop.permute.xlu0 %1629
      %1631 = vrot.lane.b32.xlu0 %v430, 122
      %v1632 = vpop.permute.xlu0 %1631
      %1633 = vrot.lane.b32.xlu0 %v431, 122
      %v1634 = vpop.permute.xlu0 %1633
      %1635 = vrot.lane.b32.xlu0 %v432, 122
      %v1636 = vpop.permute.xlu0 %1635
      %1637 = vrot.lane.b32.xlu0 %v433, 122
      %v1638 = vpop.permute.xlu0 %1637
      %1639 = vrot.lane.b32.xlu0 %v434, 122
      %v1640 = vpop.permute.xlu0 %1639
      %1641 = vrot.lane.b32.xlu0 %v435, 122
      %v1642 = vpop.permute.xlu0 %1641
      %1643 = vrot.lane.b32.xlu0 %v436, 122
      %v1644 = vpop.permute.xlu0 %1643
      %1645 = vrot.lane.b32.xlu0 %v437, 122
      %v1646 = vpop.permute.xlu0 %1645
      %1647 = vrot.lane.b32.xlu0 %v438, 122
      %v1648 = vpop.permute.xlu0 %1647
      %1649 = vrot.lane.b32.xlu0 %v439, 122
      %v1650 = vpop.permute.xlu0 %1649
      %1651 = vrot.lane.b32.xlu0 %v440, 122
      %v1652 = vpop.permute.xlu0 %1651
      %1653 = vrot.lane.b32.xlu0 %v441, 122
      %v1654 = vpop.permute.xlu0 %1653
      %1655 = vrot.lane.b32.xlu0 %v442, 122
      %v1656 = vpop.permute.xlu0 %1655
      %1657 = vrot.lane.b32.xlu0 %v443, 122
      %v1658 = vpop.permute.xlu0 %1657
      %1659 = vrot.lane.b32.xlu0 %v444, 122
      %v1660 = vpop.permute.xlu0 %1659
      %1661 = vrot.lane.b32.xlu0 %v445, 122
      %v1662 = vpop.permute.xlu0 %1661
      %1663 = vrot.lane.b32.xlu0 %v446, 122
      %v1664 = vpop.permute.xlu0 %1663
      %1665 = vrot.lane.b32.xlu0 %v447, 122
      %v1666 = vpop.permute.xlu0 %1665
      %1667 = vrot.lane.b32.xlu0 %v448, 122
      %v1668 = vpop.permute.xlu0 %1667
      %1669 = vrot.lane.b32.xlu0 %v449, 122
      %v1670 = vpop.permute.xlu0 %1669
      %1671 = vrot.lane.b32.xlu0 %v450, 122
      %v1672 = vpop.permute.xlu0 %1671
      %1673 = vrot.lane.b32.xlu0 %v451, 122
      %v1674 = vpop.permute.xlu0 %1673
      %1675 = vrot.lane.b32.xlu0 %v452, 122
      %v1676 = vpop.permute.xlu0 %1675
      %1677 = vrot.lane.b32.xlu0 %v453, 122
      %v1678 = vpop.permute.xlu0 %1677
      %1679 = vrot.lane.b32.xlu0 %v454, 122
      %v1680 = vpop.permute.xlu0 %1679
      %1681 = vrot.lane.b32.xlu0 %v455, 122
      %v1682 = vpop.permute.xlu0 %1681
      %1683 = vrot.lane.b32.xlu0 %v456, 122
      %v1684 = vpop.permute.xlu0 %1683
      %1685 = vrot.lane.b32.xlu0 %v457, 122
      %v1686 = vpop.permute.xlu0 %1685
      %1687 = vrot.lane.b32.xlu0 %v458, 122
      %v1688 = vpop.permute.xlu0 %1687
      %1689 = vrot.lane.b32.xlu0 %v459, 122
      %v1690 = vpop.permute.xlu0 %1689
      %1691 = vrot.lane.b32.xlu0 %v460, 122
      %v1692 = vpop.permute.xlu0 %1691
      %1693 = vrot.lane.b32.xlu0 %v461, 122
      %v1694 = vpop.permute.xlu0 %1693
      %1695 = vrot.lane.b32.xlu0 %v462, 122
      %v1696 = vpop.permute.xlu0 %1695
      %1697 = vrot.lane.b32.xlu0 %v463, 122
      %v1698 = vpop.permute.xlu0 %1697
      %1699 = vrot.lane.b32.xlu0 %v464, 122
      %v1700 = vpop.permute.xlu0 %1699
      %1701 = vrot.lane.b32.xlu0 %v465, 122
      %v1702 = vpop.permute.xlu0 %1701
      %1703 = vrot.lane.b32.xlu0 %v466, 122
      %v1704 = vpop.permute.xlu0 %1703
      %1705 = vrot.lane.b32.xlu0 %v467, 122
      %v1706 = vpop.permute.xlu0 %1705
      %1707 = vrot.lane.b32.xlu0 %v468, 122
      %v1708 = vpop.permute.xlu0 %1707
      %1709 = vrot.lane.b32.xlu0 %v469, 122
      %v1710 = vpop.permute.xlu0 %1709
      %1711 = vrot.lane.b32.xlu0 %v470, 122
      %v1712 = vpop.permute.xlu0 %1711
      %1713 = vrot.lane.b32.xlu0 %v471, 122
      %v1714 = vpop.permute.xlu0 %1713
      %1715 = vrot.lane.b32.xlu0 %v472, 122
      %v1716 = vpop.permute.xlu0 %1715
      %1717 = vrot.lane.b32.xlu0 %v473, 122
      %v1718 = vpop.permute.xlu0 %1717
      %1719 = vrot.lane.b32.xlu0 %v474, 122
      %v1720 = vpop.permute.xlu0 %1719
      %1721 = vrot.lane.b32.xlu0 %v475, 122
      %v1722 = vpop.permute.xlu0 %1721
      %1723 = vrot.lane.b32.xlu0 %v476, 122
      %v1724 = vpop.permute.xlu0 %1723
      %1725 = vrot.lane.b32.xlu0 %v477, 122
      %v1726 = vpop.permute.xlu0 %1725
      %1727 = vrot.lane.b32.xlu0 %v478, 122
      %v1728 = vpop.permute.xlu0 %1727
      %1729 = vrot.lane.b32.xlu0 %v479, 122
      %v1730 = vpop.permute.xlu0 %1729
      %1731 = vrot.lane.b32.xlu0 %v480, 122
      %v1732 = vpop.permute.xlu0 %1731
      %1733 = vrot.lane.b32.xlu0 %v481, 122
      %v1734 = vpop.permute.xlu0 %1733
      %1735 = vrot.lane.b32.xlu0 %v482, 122
      %v1736 = vpop.permute.xlu0 %1735
      %1737 = vrot.lane.b32.xlu0 %v483, 122
      %v1738 = vpop.permute.xlu0 %1737
      %1739 = vrot.lane.b32.xlu0 %v484, 122
      %v1740 = vpop.permute.xlu0 %1739
      %1741 = vrot.lane.b32.xlu0 %v485, 122
      %v1742 = vpop.permute.xlu0 %1741
      %1743 = vrot.lane.b32.xlu0 %v486, 122
      %v1744 = vpop.permute.xlu0 %1743
      %1745 = vrot.lane.b32.xlu0 %v487, 122
      %v1746 = vpop.permute.xlu0 %1745
      %1747 = vrot.lane.b32.xlu0 %v488, 122
      %v1748 = vpop.permute.xlu0 %1747
      %1749 = vrot.lane.b32.xlu0 %v489, 122
      %v1750 = vpop.permute.xlu0 %1749
      %1751 = vrot.lane.b32.xlu0 %v490, 122
      %v1752 = vpop.permute.xlu0 %1751
      %1753 = vrot.lane.b32.xlu0 %v491, 122
      %v1754 = vpop.permute.xlu0 %1753
      %1755 = vrot.lane.b32.xlu0 %v492, 122
      %v1756 = vpop.permute.xlu0 %1755
      %1757 = vrot.lane.b32.xlu0 %v493, 122
      %v1758 = vpop.permute.xlu0 %1757
      %1759 = vrot.lane.b32.xlu0 %v494, 122
      %v1760 = vpop.permute.xlu0 %1759
      %1761 = vrot.lane.b32.xlu0 %v495, 122
      %v1762 = vpop.permute.xlu0 %1761
      %1763 = vrot.lane.b32.xlu0 %v496, 122
      %v1764 = vpop.permute.xlu0 %1763
      %1765 = vrot.lane.b32.xlu0 %v497, 122
      %v1766 = vpop.permute.xlu0 %1765
      %1767 = vrot.lane.b32.xlu0 %v498, 122
      %v1768 = vpop.permute.xlu0 %1767
      %1769 = vrot.lane.b32.xlu0 %v499, 122
      %v1770 = vpop.permute.xlu0 %1769
      %1771 = vrot.lane.b32.xlu0 %v500, 122
      %v1772 = vpop.permute.xlu0 %1771
      %1773 = vrot.lane.b32.xlu0 %v501, 122
      %v1774 = vpop.permute.xlu0 %1773
      %1775 = vrot.lane.b32.xlu0 %v502, 122
      %v1776 = vpop.permute.xlu0 %1775
      %1777 = vrot.lane.b32.xlu0 %v503, 122
      %v1778 = vpop.permute.xlu0 %1777
      %1779 = vrot.lane.b32.xlu0 %v504, 122
      %v1780 = vpop.permute.xlu0 %1779
      %1781 = vrot.lane.b32.xlu0 %v505, 122
      %v1782 = vpop.permute.xlu0 %1781
      %1783 = vrot.lane.b32.xlu0 %v506, 122
      %v1784 = vpop.permute.xlu0 %1783
      %1785 = vrot.lane.b32.xlu0 %v507, 122
      %v1786 = vpop.permute.xlu0 %1785
      %1787 = vrot.lane.b32.xlu0 %v508, 122
      %v1788 = vpop.permute.xlu0 %1787
      %1789 = vrot.lane.b32.xlu0 %v509, 122
      %v1790 = vpop.permute.xlu0 %1789
      %1791 = vrot.lane.b32.xlu0 %v510, 122
      %v1792 = vpop.permute.xlu0 %1791
      %1793 = vrot.lane.b32.xlu0 %v511, 122
      %v1794 = vpop.permute.xlu0 %1793
      %1795 = vrot.lane.b32.xlu0 %v512, 122
      %v1796 = vpop.permute.xlu0 %1795
      %1797 = vrot.lane.b32.xlu0 %v513, 122
      %v1798 = vpop.permute.xlu0 %1797
      %1799 = vrot.lane.b32.xlu0 %v514, 122
      %v1800 = vpop.permute.xlu0 %1799
      %1801 = vrot.lane.b32.xlu0 %v515, 122
      %v1802 = vpop.permute.xlu0 %1801
      %1803 = vrot.lane.b32.xlu0 %v516, 122
      %v1804 = vpop.permute.xlu0 %1803
      %1805 = vrot.lane.b32.xlu0 %v517, 122
      %v1806 = vpop.permute.xlu0 %1805
      %1807 = vrot.lane.b32.xlu0 %v518, 122
      %v1808 = vpop.permute.xlu0 %1807
      %1809 = vrot.lane.b32.xlu0 %v519, 122
      %v1810 = vpop.permute.xlu0 %1809
      %1811 = vrot.lane.b32.xlu0 %v520, 122
      %v1812 = vpop.permute.xlu0 %1811
      %1813 = vrot.lane.b32.xlu0 %v521, 122
      %v1814 = vpop.permute.xlu0 %1813
      %1815 = vrot.lane.b32.xlu0 %v522, 122
      %v1816 = vpop.permute.xlu0 %1815
      %1817 = vrot.lane.b32.xlu0 %v523, 122
      %v1818 = vpop.permute.xlu0 %1817
      %1819 = vrot.lane.b32.xlu0 %v524, 122
      %v1820 = vpop.permute.xlu0 %1819
      %1821 = vrot.lane.b32.xlu0 %v525, 122
      %v1822 = vpop.permute.xlu0 %1821
      %1823 = vrot.lane.b32.xlu0 %v526, 122
      %v1824 = vpop.permute.xlu0 %1823
      %1825 = vrot.lane.b32.xlu0 %v527, 122
      %v1826 = vpop.permute.xlu0 %1825
      %1827 = vrot.lane.b32.xlu0 %v528, 122
      %v1828 = vpop.permute.xlu0 %1827
      %1829 = vrot.lane.b32.xlu0 %v529, 122
      %v1830 = vpop.permute.xlu0 %1829
      %1831 = vrot.lane.b32.xlu0 %v530, 122
      %v1832 = vpop.permute.xlu0 %1831
      %1833 = vrot.lane.b32.xlu0 %v531, 122
      %v1834 = vpop.permute.xlu0 %1833
      %1835 = vrot.lane.b32.xlu0 %v532, 122
      %v1836 = vpop.permute.xlu0 %1835
      %1837 = vrot.lane.b32.xlu0 %v533, 122
      %v1838 = vpop.permute.xlu0 %1837
      %1839 = vrot.lane.b32.xlu0 %v534, 122
      %v1840 = vpop.permute.xlu0 %1839
      %1841 = vrot.lane.b32.xlu0 %v535, 122
      %v1842 = vpop.permute.xlu0 %1841
      %1843 = vrot.lane.b32.xlu0 %v536, 122
      %v1844 = vpop.permute.xlu0 %1843
      %1845 = vrot.lane.b32.xlu0 %v537, 122
      %v1846 = vpop.permute.xlu0 %1845
      %1847 = vrot.lane.b32.xlu0 %v538, 122
      %v1848 = vpop.permute.xlu0 %1847
      %1849 = vrot.lane.b32.xlu0 %v539, 122
      %v1850 = vpop.permute.xlu0 %1849
      %1851 = vrot.lane.b32.xlu0 %v540, 122
      %v1852 = vpop.permute.xlu0 %1851
      %1853 = vrot.lane.b32.xlu0 %v541, 122
      %v1854 = vpop.permute.xlu0 %1853
      %1855 = vrot.lane.b32.xlu0 %v542, 122
      %v1856 = vpop.permute.xlu0 %1855
      %1857 = vrot.lane.b32.xlu0 %v543, 122
      %v1858 = vpop.permute.xlu0 %1857
      %1859 = vrot.lane.b32.xlu0 %v544, 122
      %v1860 = vpop.permute.xlu0 %1859
      %1861 = vrot.lane.b32.xlu0 %v545, 122
      %v1862 = vpop.permute.xlu0 %1861
      %1863 = vrot.lane.b32.xlu0 %v546, 122
      %v1864 = vpop.permute.xlu0 %1863
      %1865 = vrot.lane.b32.xlu0 %v547, 122
      %v1866 = vpop.permute.xlu0 %1865
      %1867 = vrot.lane.b32.xlu0 %v548, 122
      %v1868 = vpop.permute.xlu0 %1867
      %1869 = vrot.lane.b32.xlu0 %v549, 122
      %v1870 = vpop.permute.xlu0 %1869
      %1871 = vrot.lane.b32.xlu0 %v550, 122
      %v1872 = vpop.permute.xlu0 %1871
      %1873 = vrot.lane.b32.xlu0 %v551, 122
      %v1874 = vpop.permute.xlu0 %1873
      %1875 = vrot.lane.b32.xlu0 %v552, 122
      %v1876 = vpop.permute.xlu0 %1875
      %1877 = vrot.lane.b32.xlu0 %v553, 122
      %v1878 = vpop.permute.xlu0 %1877
      %1879 = vrot.lane.b32.xlu0 %v554, 122
      %v1880 = vpop.permute.xlu0 %1879
      %1881 = vrot.lane.b32.xlu0 %v555, 122
      %v1882 = vpop.permute.xlu0 %1881
      %1883 = vrot.lane.b32.xlu0 %v556, 122
      %v1884 = vpop.permute.xlu0 %1883
      %1885 = vrot.lane.b32.xlu0 %v557, 122
      %v1886 = vpop.permute.xlu0 %1885
      %1887 = vrot.lane.b32.xlu0 %v558, 122
      %v1888 = vpop.permute.xlu0 %1887
      %1889 = vrot.lane.b32.xlu0 %v559, 122
      %v1890 = vpop.permute.xlu0 %1889
      %1891 = vrot.lane.b32.xlu0 %v560, 122
      %v1892 = vpop.permute.xlu0 %1891
      %1893 = vrot.lane.b32.xlu0 %v561, 122
      %v1894 = vpop.permute.xlu0 %1893
      %1895 = vrot.lane.b32.xlu0 %v562, 122
      %v1896 = vpop.permute.xlu0 %1895
      %1897 = vrot.lane.b32.xlu0 %v563, 122
      %v1898 = vpop.permute.xlu0 %1897
      %1899 = vrot.lane.b32.xlu0 %v564, 122
      %v1900 = vpop.permute.xlu0 %1899
      %1901 = vrot.lane.b32.xlu0 %v565, 122
      %v1902 = vpop.permute.xlu0 %1901
      %1903 = vrot.lane.b32.xlu0 %v566, 122
      %v1904 = vpop.permute.xlu0 %1903
      %1905 = vrot.lane.b32.xlu0 %v567, 122
      %v1906 = vpop.permute.xlu0 %1905
      %1907 = vrot.lane.b32.xlu0 %v568, 122
      %v1908 = vpop.permute.xlu0 %1907
      %1909 = vrot.lane.b32.xlu0 %v569, 122
      %v1910 = vpop.permute.xlu0 %1909
      %1911 = vrot.lane.b32.xlu0 %v570, 122
      %v1912 = vpop.permute.xlu0 %1911
      %1913 = vrot.lane.b32.xlu0 %v571, 122
      %v1914 = vpop.permute.xlu0 %1913
      %1915 = vrot.lane.b32.xlu0 %v572, 122
      %v1916 = vpop.permute.xlu0 %1915
      %v2365 = vmax.f32 %v125, %v1022
      %v2366 = vmax.f32 %v126, %v1024
      %v2367 = vmax.f32 %v127, %v1026
      %v2368 = vmax.f32 %v128, %v1028
      %v2369 = vmax.f32 %v129, %v1030
      %v2370 = vmax.f32 %v130, %v1032
      %v2371 = vmax.f32 %v131, %v1034
      %v2372 = vmax.f32 %v132, %v1036
      %v2373 = vmax.f32 %v133, %v1038
      %v2374 = vmax.f32 %v134, %v1040
      %v2375 = vmax.f32 %v135, %v1042
      %v2376 = vmax.f32 %v136, %v1044
      %v2377 = vmax.f32 %v137, %v1046
      %v2378 = vmax.f32 %v138, %v1048
      %v2379 = vmax.f32 %v139, %v1050
      %v2380 = vmax.f32 %v140, %v1052
      %v2381 = vmax.f32 %v141, %v1054
      %v2382 = vmax.f32 %v142, %v1056
      %v2383 = vmax.f32 %v143, %v1058
      %v2384 = vmax.f32 %v144, %v1060
      %v2385 = vmax.f32 %v145, %v1062
      %v2386 = vmax.f32 %v146, %v1064
      %v2387 = vmax.f32 %v147, %v1066
      %v2388 = vmax.f32 %v148, %v1068
      %v2389 = vmax.f32 %v149, %v1070
      %v2390 = vmax.f32 %v150, %v1072
      %v2391 = vmax.f32 %v151, %v1074
      %v2392 = vmax.f32 %v152, %v1076
      %v2393 = vmax.f32 %v153, %v1078
      %v2394 = vmax.f32 %v154, %v1080
      %v2395 = vmax.f32 %v155, %v1082
      %v2396 = vmax.f32 %v156, %v1084
      %v2397 = vmax.f32 %v157, %v1086
      %v2398 = vmax.f32 %v158, %v1088
      %v2399 = vmax.f32 %v159, %v1090
      %v2400 = vmax.f32 %v160, %v1092
      %v2401 = vmax.f32 %v161, %v1094
      %v2402 = vmax.f32 %v162, %v1096
      %v2403 = vmax.f32 %v163, %v1098
      %v2404 = vmax.f32 %v164, %v1100
      %v2405 = vmax.f32 %v165, %v1102
      %v2406 = vmax.f32 %v166, %v1104
      %v2407 = vmax.f32 %v167, %v1106
      %v2408 = vmax.f32 %v168, %v1108
      %v2409 = vmax.f32 %v169, %v1110
      %v2410 = vmax.f32 %v170, %v1112
      %v2411 = vmax.f32 %v171, %v1114
      %v2412 = vmax.f32 %v172, %v1116
      %v2413 = vmax.f32 %v173, %v1118
      %v2414 = vmax.f32 %v174, %v1120
      %v2415 = vmax.f32 %v175, %v1122
      %v2416 = vmax.f32 %v176, %v1124
      %v2417 = vmax.f32 %v177, %v1126
      %v2418 = vmax.f32 %v178, %v1128
      %v2419 = vmax.f32 %v179, %v1130
      %v2420 = vmax.f32 %v180, %v1132
      %v2421 = vmax.f32 %v181, %v1134
      %v2422 = vmax.f32 %v182, %v1136
      %v2423 = vmax.f32 %v183, %v1138
      %v2424 = vmax.f32 %v184, %v1140
      %v2425 = vmax.f32 %v185, %v1142
      %v2426 = vmax.f32 %v186, %v1144
      %v2427 = vmax.f32 %v187, %v1146
      %v2428 = vmax.f32 %v188, %v1148
      %v2429 = vmax.f32 %v189, %v1150
      %v2430 = vmax.f32 %v190, %v1152
      %v2431 = vmax.f32 %v191, %v1154
      %v2432 = vmax.f32 %v192, %v1156
      %v2433 = vmax.f32 %v193, %v1158
      %v2434 = vmax.f32 %v194, %v1160
      %v2435 = vmax.f32 %v195, %v1162
      %v2436 = vmax.f32 %v196, %v1164
      %v2437 = vmax.f32 %v197, %v1166
      %v2438 = vmax.f32 %v198, %v1168
      %v2439 = vmax.f32 %v199, %v1170
      %v2440 = vmax.f32 %v200, %v1172
      %v2441 = vmax.f32 %v201, %v1174
      %v2442 = vmax.f32 %v202, %v1176
      %v2443 = vmax.f32 %v203, %v1178
      %v2444 = vmax.f32 %v204, %v1180
      %v2445 = vmax.f32 %v205, %v1182
      %v2446 = vmax.f32 %v206, %v1184
      %v2447 = vmax.f32 %v207, %v1186
      %v2448 = vmax.f32 %v208, %v1188
      %v2449 = vmax.f32 %v209, %v1190
      %v2450 = vmax.f32 %v210, %v1192
      %v2451 = vmax.f32 %v211, %v1194
      %v2452 = vmax.f32 %v212, %v1196
      %v2453 = vmax.f32 %v213, %v1198
      %v2454 = vmax.f32 %v214, %v1200
      %v2455 = vmax.f32 %v215, %v1202
      %v2456 = vmax.f32 %v216, %v1204
      %v2457 = vmax.f32 %v217, %v1206
      %v2458 = vmax.f32 %v218, %v1208
      %v2459 = vmax.f32 %v219, %v1210
      %v2460 = vmax.f32 %v220, %v1212
      %v2461 = vmax.f32 %v221, %v1214
      %v2462 = vmax.f32 %v222, %v1216
      %v2463 = vmax.f32 %v223, %v1218
      %v2464 = vmax.f32 %v224, %v1220
      %v2465 = vmax.f32 %v225, %v1222
      %v2466 = vmax.f32 %v226, %v1224
      %v2467 = vmax.f32 %v227, %v1226
      %v2468 = vmax.f32 %v228, %v1228
      %v2469 = vmax.f32 %v229, %v1230
      %v2470 = vmax.f32 %v230, %v1232
      %v2471 = vmax.f32 %v231, %v1234
      %v2472 = vmax.f32 %v232, %v1236
      %v2473 = vmax.f32 %v233, %v1238
      %v2474 = vmax.f32 %v234, %v1240
      %v2475 = vmax.f32 %v235, %v1242
      %v2476 = vmax.f32 %v236, %v1244
      %v2477 = vmax.f32 %v237, %v1246
      %v2478 = vmax.f32 %v238, %v1248
      %v2479 = vmax.f32 %v239, %v1250
      %v2480 = vmax.f32 %v240, %v1252
      %v2481 = vmax.f32 %v241, %v1254
      %v2482 = vmax.f32 %v242, %v1256
      %v2483 = vmax.f32 %v243, %v1258
      %v2484 = vmax.f32 %v244, %v1260
      %v2485 = vmax.f32 %v245, %v1262
      %v2486 = vmax.f32 %v246, %v1264
      %v2487 = vmax.f32 %v247, %v1266
      %v2488 = vmax.f32 %v248, %v1268
      %v2489 = vmax.f32 %v249, %v1270
      %v2490 = vmax.f32 %v250, %v1272
      %v2491 = vmax.f32 %v251, %v1274
      %v2492 = vmax.f32 %v252, %v1276
      %v2493 = vmax.f32 %v253, %v1278
      %v2494 = vmax.f32 %v254, %v1280
      %v2495 = vmax.f32 %v255, %v1282
      %v2496 = vmax.f32 %v256, %v1284
      %v2497 = vmax.f32 %v257, %v1286
      %v2498 = vmax.f32 %v258, %v1288
      %v2499 = vmax.f32 %v259, %v1290
      %v2500 = vmax.f32 %v260, %v1292
      %v2501 = vmax.f32 %v261, %v1294
      %v2502 = vmax.f32 %v262, %v1296
      %v2503 = vmax.f32 %v263, %v1298
      %v2504 = vmax.f32 %v264, %v1300
      %v2505 = vmax.f32 %v265, %v1302
      %v2506 = vmax.f32 %v266, %v1304
      %v2507 = vmax.f32 %v267, %v1306
      %v2508 = vmax.f32 %v268, %v1308
      %v2509 = vmax.f32 %v269, %v1310
      %v2510 = vmax.f32 %v270, %v1312
      %v2511 = vmax.f32 %v271, %v1314
      %v2512 = vmax.f32 %v272, %v1316
      %v2513 = vmax.f32 %v273, %v1318
      %v2514 = vmax.f32 %v274, %v1320
      %v2515 = vmax.f32 %v275, %v1322
      %v2516 = vmax.f32 %v276, %v1324
      %v2517 = vmax.f32 %v277, %v1326
      %v2518 = vmax.f32 %v278, %v1328
      %v2519 = vmax.f32 %v279, %v1330
      %v2520 = vmax.f32 %v280, %v1332
      %v2521 = vmax.f32 %v281, %v1334
      %v2522 = vmax.f32 %v282, %v1336
      %v2523 = vmax.f32 %v283, %v1338
      %v2524 = vmax.f32 %v284, %v1340
      %v2525 = vmax.f32 %v285, %v1342
      %v2526 = vmax.f32 %v286, %v1344
      %v2527 = vmax.f32 %v287, %v1346
      %v2528 = vmax.f32 %v288, %v1348
      %v2529 = vmax.f32 %v289, %v1350
      %v2530 = vmax.f32 %v290, %v1352
      %v2531 = vmax.f32 %v291, %v1354
      %v2532 = vmax.f32 %v292, %v1356
      %v2533 = vmax.f32 %v293, %v1358
      %v2534 = vmax.f32 %v294, %v1360
      %v2535 = vmax.f32 %v295, %v1362
      %v2536 = vmax.f32 %v296, %v1364
      %v2537 = vmax.f32 %v297, %v1366
      %v2538 = vmax.f32 %v298, %v1368
      %v2539 = vmax.f32 %v299, %v1370
      %v2540 = vmax.f32 %v300, %v1372
      %v2541 = vmax.f32 %v301, %v1374
      %v2542 = vmax.f32 %v302, %v1376
      %v2543 = vmax.f32 %v303, %v1378
      %v2544 = vmax.f32 %v304, %v1380
      %v2545 = vmax.f32 %v305, %v1382
      %v2546 = vmax.f32 %v306, %v1384
      %v2547 = vmax.f32 %v307, %v1386
      %v2548 = vmax.f32 %v308, %v1388
      %v2549 = vmax.f32 %v309, %v1390
      %v2550 = vmax.f32 %v310, %v1392
      %v2551 = vmax.f32 %v311, %v1394
      %v2552 = vmax.f32 %v312, %v1396
      %v2553 = vmax.f32 %v313, %v1398
      %v2554 = vmax.f32 %v314, %v1400
      %v2555 = vmax.f32 %v315, %v1402
      %v2556 = vmax.f32 %v316, %v1404
      %v2557 = vmax.f32 %v317, %v1406
      %v2558 = vmax.f32 %v318, %v1408
      %v2559 = vmax.f32 %v319, %v1410
      %v2560 = vmax.f32 %v320, %v1412
      %v2561 = vmax.f32 %v321, %v1414
      %v2562 = vmax.f32 %v322, %v1416
      %v2563 = vmax.f32 %v323, %v1418
      %v2564 = vmax.f32 %v324, %v1420
      %v2565 = vmax.f32 %v325, %v1422
      %v2566 = vmax.f32 %v326, %v1424
      %v2567 = vmax.f32 %v327, %v1426
      %v2568 = vmax.f32 %v328, %v1428
      %v2569 = vmax.f32 %v329, %v1430
      %v2570 = vmax.f32 %v330, %v1432
      %v2571 = vmax.f32 %v331, %v1434
      %v2572 = vmax.f32 %v332, %v1436
      %v2573 = vmax.f32 %v333, %v1438
      %v2574 = vmax.f32 %v334, %v1440
      %v2575 = vmax.f32 %v335, %v1442
      %v2576 = vmax.f32 %v336, %v1444
      %v2577 = vmax.f32 %v337, %v1446
      %v2578 = vmax.f32 %v338, %v1448
      %v2579 = vmax.f32 %v339, %v1450
      %v2580 = vmax.f32 %v340, %v1452
      %v2581 = vmax.f32 %v341, %v1454
      %v2582 = vmax.f32 %v342, %v1456
      %v2583 = vmax.f32 %v343, %v1458
      %v2584 = vmax.f32 %v344, %v1460
      %v2585 = vmax.f32 %v345, %v1462
      %v2586 = vmax.f32 %v346, %v1464
      %v2587 = vmax.f32 %v347, %v1466
      %v2588 = vmax.f32 %v348, %v1468
      %v2589 = vmax.f32 %v349, %v1470
      %v2590 = vmax.f32 %v350, %v1472
      %v2591 = vmax.f32 %v351, %v1474
      %v2592 = vmax.f32 %v352, %v1476
      %v2593 = vmax.f32 %v353, %v1478
      %v2594 = vmax.f32 %v354, %v1480
      %v2595 = vmax.f32 %v355, %v1482
      %v2596 = vmax.f32 %v356, %v1484
      %v2597 = vmax.f32 %v357, %v1486
      %v2598 = vmax.f32 %v358, %v1488
      %v2599 = vmax.f32 %v359, %v1490
      %v2600 = vmax.f32 %v360, %v1492
      %v2601 = vmax.f32 %v361, %v1494
      %v2602 = vmax.f32 %v362, %v1496
      %v2603 = vmax.f32 %v363, %v1498
      %v2604 = vmax.f32 %v364, %v1500
      %v2605 = vmax.f32 %v365, %v1502
      %v2606 = vmax.f32 %v366, %v1504
      %v2607 = vmax.f32 %v367, %v1506
      %v2608 = vmax.f32 %v368, %v1508
      %v2609 = vmax.f32 %v369, %v1510
      %v2610 = vmax.f32 %v370, %v1512
      %v2611 = vmax.f32 %v371, %v1514
      %v2612 = vmax.f32 %v372, %v1516
      %v2613 = vmax.f32 %v373, %v1518
      %v2614 = vmax.f32 %v374, %v1520
      %v2615 = vmax.f32 %v375, %v1522
      %v2616 = vmax.f32 %v376, %v1524
      %v2617 = vmax.f32 %v377, %v1526
      %v2618 = vmax.f32 %v378, %v1528
      %v2619 = vmax.f32 %v379, %v1530
      %v2620 = vmax.f32 %v380, %v1532
      %v2621 = vmax.f32 %v381, %v1534
      %v2622 = vmax.f32 %v382, %v1536
      %v2623 = vmax.f32 %v383, %v1538
      %v2624 = vmax.f32 %v384, %v1540
      %v2625 = vmax.f32 %v385, %v1542
      %v2626 = vmax.f32 %v386, %v1544
      %v2627 = vmax.f32 %v387, %v1546
      %v2628 = vmax.f32 %v388, %v1548
      %v2629 = vmax.f32 %v389, %v1550
      %v2630 = vmax.f32 %v390, %v1552
      %v2631 = vmax.f32 %v391, %v1554
      %v2632 = vmax.f32 %v392, %v1556
      %v2633 = vmax.f32 %v393, %v1558
      %v2634 = vmax.f32 %v394, %v1560
      %v2635 = vmax.f32 %v395, %v1562
      %v2636 = vmax.f32 %v396, %v1564
      %v2637 = vmax.f32 %v397, %v1566
      %v2638 = vmax.f32 %v398, %v1568
      %v2639 = vmax.f32 %v399, %v1570
      %v2640 = vmax.f32 %v400, %v1572
      %v2641 = vmax.f32 %v401, %v1574
      %v2642 = vmax.f32 %v402, %v1576
      %v2643 = vmax.f32 %v403, %v1578
      %v2644 = vmax.f32 %v404, %v1580
      %v2645 = vmax.f32 %v405, %v1582
      %v2646 = vmax.f32 %v406, %v1584
      %v2647 = vmax.f32 %v407, %v1586
      %v2648 = vmax.f32 %v408, %v1588
      %v2649 = vmax.f32 %v409, %v1590
      %v2650 = vmax.f32 %v410, %v1592
      %v2651 = vmax.f32 %v411, %v1594
      %v2652 = vmax.f32 %v412, %v1596
      %v2653 = vmax.f32 %v413, %v1598
      %v2654 = vmax.f32 %v414, %v1600
      %v2655 = vmax.f32 %v415, %v1602
      %v2656 = vmax.f32 %v416, %v1604
      %v2657 = vmax.f32 %v417, %v1606
      %v2658 = vmax.f32 %v418, %v1608
      %v2659 = vmax.f32 %v419, %v1610
      %v2660 = vmax.f32 %v420, %v1612
      %v2661 = vmax.f32 %v421, %v1614
      %v2662 = vmax.f32 %v422, %v1616
      %v2663 = vmax.f32 %v423, %v1618
      %v2664 = vmax.f32 %v424, %v1620
      %v2665 = vmax.f32 %v425, %v1622
      %v2666 = vmax.f32 %v426, %v1624
      %v2667 = vmax.f32 %v427, %v1626
      %v2668 = vmax.f32 %v428, %v1628
      %v2669 = vmax.f32 %v429, %v1630
      %v2670 = vmax.f32 %v430, %v1632
      %v2671 = vmax.f32 %v431, %v1634
      %v2672 = vmax.f32 %v432, %v1636
      %v2673 = vmax.f32 %v433, %v1638
      %v2674 = vmax.f32 %v434, %v1640
      %v2675 = vmax.f32 %v435, %v1642
      %v2676 = vmax.f32 %v436, %v1644
      %v2677 = vmax.f32 %v437, %v1646
      %v2678 = vmax.f32 %v438, %v1648
      %v2679 = vmax.f32 %v439, %v1650
      %v2680 = vmax.f32 %v440, %v1652
      %v2681 = vmax.f32 %v441, %v1654
      %v2682 = vmax.f32 %v442, %v1656
      %v2683 = vmax.f32 %v443, %v1658
      %v2684 = vmax.f32 %v444, %v1660
      %v2685 = vmax.f32 %v445, %v1662
      %v2686 = vmax.f32 %v446, %v1664
      %v2687 = vmax.f32 %v447, %v1666
      %v2688 = vmax.f32 %v448, %v1668
      %v2689 = vmax.f32 %v449, %v1670
      %v2690 = vmax.f32 %v450, %v1672
      %v2691 = vmax.f32 %v451, %v1674
      %v2692 = vmax.f32 %v452, %v1676
      %v2693 = vmax.f32 %v453, %v1678
      %v2694 = vmax.f32 %v454, %v1680
      %v2695 = vmax.f32 %v455, %v1682
      %v2696 = vmax.f32 %v456, %v1684
      %v2697 = vmax.f32 %v457, %v1686
      %v2698 = vmax.f32 %v458, %v1688
      %v2699 = vmax.f32 %v459, %v1690
      %v2700 = vmax.f32 %v460, %v1692
      %v2701 = vmax.f32 %v461, %v1694
      %v2702 = vmax.f32 %v462, %v1696
      %v2703 = vmax.f32 %v463, %v1698
      %v2704 = vmax.f32 %v464, %v1700
      %v2705 = vmax.f32 %v465, %v1702
      %v2706 = vmax.f32 %v466, %v1704
      %v2707 = vmax.f32 %v467, %v1706
      %v2708 = vmax.f32 %v468, %v1708
      %v2709 = vmax.f32 %v469, %v1710
      %v2710 = vmax.f32 %v470, %v1712
      %v2711 = vmax.f32 %v471, %v1714
      %v2712 = vmax.f32 %v472, %v1716
      %v2713 = vmax.f32 %v473, %v1718
      %v2714 = vmax.f32 %v474, %v1720
      %v2715 = vmax.f32 %v475, %v1722
      %v2716 = vmax.f32 %v476, %v1724
      %v2717 = vmax.f32 %v477, %v1726
      %v2718 = vmax.f32 %v478, %v1728
      %v2719 = vmax.f32 %v479, %v1730
      %v2720 = vmax.f32 %v480, %v1732
      %v2721 = vmax.f32 %v481, %v1734
      %v2722 = vmax.f32 %v482, %v1736
      %v2723 = vmax.f32 %v483, %v1738
      %v2724 = vmax.f32 %v484, %v1740
      %v2725 = vmax.f32 %v485, %v1742
      %v2726 = vmax.f32 %v486, %v1744
      %v2727 = vmax.f32 %v487, %v1746
      %v2728 = vmax.f32 %v488, %v1748
      %v2729 = vmax.f32 %v489, %v1750
      %v2730 = vmax.f32 %v490, %v1752
      %v2731 = vmax.f32 %v491, %v1754
      %v2732 = vmax.f32 %v492, %v1756
      %v2733 = vmax.f32 %v493, %v1758
      %v2734 = vmax.f32 %v494, %v1760
      %v2735 = vmax.f32 %v495, %v1762
      %v2736 = vmax.f32 %v496, %v1764
      %v2737 = vmax.f32 %v497, %v1766
      %v2738 = vmax.f32 %v498, %v1768
      %v2739 = vmax.f32 %v499, %v1770
      %v2740 = vmax.f32 %v500, %v1772
      %v2741 = vmax.f32 %v501, %v1774
      %v2742 = vmax.f32 %v502, %v1776
      %v2743 = vmax.f32 %v503, %v1778
      %v2744 = vmax.f32 %v504, %v1780
      %v2745 = vmax.f32 %v505, %v1782
      %v2746 = vmax.f32 %v506, %v1784
      %v2747 = vmax.f32 %v507, %v1786
      %v2748 = vmax.f32 %v508, %v1788
      %v2749 = vmax.f32 %v509, %v1790
      %v2750 = vmax.f32 %v510, %v1792
      %v2751 = vmax.f32 %v511, %v1794
      %v2752 = vmax.f32 %v512, %v1796
      %v2753 = vmax.f32 %v513, %v1798
      %v2754 = vmax.f32 %v514, %v1800
      %v2755 = vmax.f32 %v515, %v1802
      %v2756 = vmax.f32 %v516, %v1804
      %v2757 = vmax.f32 %v517, %v1806
      %v2758 = vmax.f32 %v518, %v1808
      %v2759 = vmax.f32 %v519, %v1810
      %v2760 = vmax.f32 %v520, %v1812
      %v2761 = vmax.f32 %v521, %v1814
      %v2762 = vmax.f32 %v522, %v1816
      %v2763 = vmax.f32 %v523, %v1818
      %v2764 = vmax.f32 %v524, %v1820
      %v2765 = vmax.f32 %v525, %v1822
      %v2766 = vmax.f32 %v526, %v1824
      %v2767 = vmax.f32 %v527, %v1826
      %v2768 = vmax.f32 %v528, %v1828
      %v2769 = vmax.f32 %v529, %v1830
      %v2770 = vmax.f32 %v530, %v1832
      %v2771 = vmax.f32 %v531, %v1834
      %v2772 = vmax.f32 %v532, %v1836
      %v2773 = vmax.f32 %v533, %v1838
      %v2774 = vmax.f32 %v534, %v1840
      %v2775 = vmax.f32 %v535, %v1842
      %v2776 = vmax.f32 %v536, %v1844
      %v2777 = vmax.f32 %v537, %v1846
      %v2778 = vmax.f32 %v538, %v1848
      %v2779 = vmax.f32 %v539, %v1850
      %v2780 = vmax.f32 %v540, %v1852
      %v2781 = vmax.f32 %v541, %v1854
      %v2782 = vmax.f32 %v542, %v1856
      %v2783 = vmax.f32 %v543, %v1858
      %v2784 = vmax.f32 %v544, %v1860
      %v2785 = vmax.f32 %v545, %v1862
      %v2786 = vmax.f32 %v546, %v1864
      %v2787 = vmax.f32 %v547, %v1866
      %v2788 = vmax.f32 %v548, %v1868
      %v2789 = vmax.f32 %v549, %v1870
      %v2790 = vmax.f32 %v550, %v1872
      %v2791 = vmax.f32 %v551, %v1874
      %v2792 = vmax.f32 %v552, %v1876
      %v2793 = vmax.f32 %v553, %v1878
      %v2794 = vmax.f32 %v554, %v1880
      %v2795 = vmax.f32 %v555, %v1882
      %v2796 = vmax.f32 %v556, %v1884
      %v2797 = vmax.f32 %v557, %v1886
      %v2798 = vmax.f32 %v558, %v1888
      %v2799 = vmax.f32 %v559, %v1890
      %v2800 = vmax.f32 %v560, %v1892
      %v2801 = vmax.f32 %v561, %v1894
      %v2802 = vmax.f32 %v562, %v1896
      %v2803 = vmax.f32 %v563, %v1898
      %v2804 = vmax.f32 %v564, %v1900
      %v2805 = vmax.f32 %v565, %v1902
      %v2806 = vmax.f32 %v566, %v1904
      %v2807 = vmax.f32 %v567, %v1906
      %v2808 = vmax.f32 %v568, %v1908
      %v2809 = vmax.f32 %v569, %v1910
      %v2810 = vmax.f32 %v570, %v1912
      %v2811 = vmax.f32 %v571, %v1914
      %v2812 = vmax.f32 %v572, %v1916
      %v2813 = vmax.f32 %v2365, %v2367
      %v2814 = vmax.f32 %v2366, %v2368
      %v2815 = vmax.f32 %v2369, %v2371
      %v2816 = vmax.f32 %v2370, %v2372
      %v2817 = vmax.f32 %v2373, %v2375
      %v2818 = vmax.f32 %v2374, %v2376
      %v2819 = vmax.f32 %v2377, %v2379
      %v2820 = vmax.f32 %v2378, %v2380
      %v2821 = vmax.f32 %v2381, %v2383
      %v2822 = vmax.f32 %v2382, %v2384
      %v2823 = vmax.f32 %v2385, %v2387
      %v2824 = vmax.f32 %v2386, %v2388
      %v2825 = vmax.f32 %v2389, %v2391
      %v2826 = vmax.f32 %v2390, %v2392
      %v2827 = vmax.f32 %v2393, %v2395
      %v2828 = vmax.f32 %v2394, %v2396
      %v2829 = vmax.f32 %v2397, %v2399
      %v2830 = vmax.f32 %v2398, %v2400
      %v2831 = vmax.f32 %v2401, %v2403
      %v2832 = vmax.f32 %v2402, %v2404
      %v2833 = vmax.f32 %v2405, %v2407
      %v2834 = vmax.f32 %v2406, %v2408
      %v2835 = vmax.f32 %v2409, %v2411
      %v2836 = vmax.f32 %v2410, %v2412
      %v2837 = vmax.f32 %v2413, %v2415
      %v2838 = vmax.f32 %v2414, %v2416
      %v2839 = vmax.f32 %v2417, %v2419
      %v2840 = vmax.f32 %v2418, %v2420
      %v2841 = vmax.f32 %v2421, %v2423
      %v2842 = vmax.f32 %v2422, %v2424
      %v2843 = vmax.f32 %v2425, %v2427
      %v2844 = vmax.f32 %v2426, %v2428
      %v2845 = vmax.f32 %v2429, %v2431
      %v2846 = vmax.f32 %v2430, %v2432
      %v2847 = vmax.f32 %v2433, %v2435
      %v2848 = vmax.f32 %v2434, %v2436
      %v2849 = vmax.f32 %v2437, %v2439
      %v2850 = vmax.f32 %v2438, %v2440
      %v2851 = vmax.f32 %v2441, %v2443
      %v2852 = vmax.f32 %v2442, %v2444
      %v2853 = vmax.f32 %v2445, %v2447
      %v2854 = vmax.f32 %v2446, %v2448
      %v2855 = vmax.f32 %v2449, %v2451
      %v2856 = vmax.f32 %v2450, %v2452
      %v2857 = vmax.f32 %v2453, %v2455
      %v2858 = vmax.f32 %v2454, %v2456
      %v2859 = vmax.f32 %v2457, %v2459
      %v2860 = vmax.f32 %v2458, %v2460
      %v2861 = vmax.f32 %v2461, %v2463
      %v2862 = vmax.f32 %v2462, %v2464
      %v2863 = vmax.f32 %v2465, %v2467
      %v2864 = vmax.f32 %v2466, %v2468
      %v2865 = vmax.f32 %v2469, %v2471
      %v2866 = vmax.f32 %v2470, %v2472
      %v2867 = vmax.f32 %v2473, %v2475
      %v2868 = vmax.f32 %v2474, %v2476
      %v2869 = vmax.f32 %v2477, %v2479
      %v2870 = vmax.f32 %v2478, %v2480
      %v2871 = vmax.f32 %v2481, %v2483
      %v2872 = vmax.f32 %v2482, %v2484
      %v2873 = vmax.f32 %v2485, %v2487
      %v2874 = vmax.f32 %v2486, %v2488
      %v2875 = vmax.f32 %v2489, %v2491
      %v2876 = vmax.f32 %v2490, %v2492
      %v2877 = vmax.f32 %v2493, %v2495
      %v2878 = vmax.f32 %v2494, %v2496
      %v2879 = vmax.f32 %v2497, %v2499
      %v2880 = vmax.f32 %v2498, %v2500
      %v2881 = vmax.f32 %v2501, %v2503
      %v2882 = vmax.f32 %v2502, %v2504
      %v2883 = vmax.f32 %v2505, %v2507
      %v2884 = vmax.f32 %v2506, %v2508
      %v2885 = vmax.f32 %v2509, %v2511
      %v2886 = vmax.f32 %v2510, %v2512
      %v2887 = vmax.f32 %v2513, %v2515
      %v2888 = vmax.f32 %v2514, %v2516
      %v2889 = vmax.f32 %v2517, %v2519
      %v2890 = vmax.f32 %v2518, %v2520
      %v2891 = vmax.f32 %v2521, %v2523
      %v2892 = vmax.f32 %v2522, %v2524
      %v2893 = vmax.f32 %v2525, %v2527
      %v2894 = vmax.f32 %v2526, %v2528
      %v2895 = vmax.f32 %v2529, %v2531
      %v2896 = vmax.f32 %v2530, %v2532
      %v2897 = vmax.f32 %v2533, %v2535
      %v2898 = vmax.f32 %v2534, %v2536
      %v2899 = vmax.f32 %v2537, %v2539
      %v2900 = vmax.f32 %v2538, %v2540
      %v2901 = vmax.f32 %v2541, %v2543
      %v2902 = vmax.f32 %v2542, %v2544
      %v2903 = vmax.f32 %v2545, %v2547
      %v2904 = vmax.f32 %v2546, %v2548
      %v2905 = vmax.f32 %v2549, %v2551
      %v2906 = vmax.f32 %v2550, %v2552
      %v2907 = vmax.f32 %v2553, %v2555
      %v2908 = vmax.f32 %v2554, %v2556
      %v2909 = vmax.f32 %v2557, %v2559
      %v2910 = vmax.f32 %v2558, %v2560
      %v2911 = vmax.f32 %v2561, %v2563
      %v2912 = vmax.f32 %v2562, %v2564
      %v2913 = vmax.f32 %v2565, %v2567
      %v2914 = vmax.f32 %v2566, %v2568
      %v2915 = vmax.f32 %v2569, %v2571
      %v2916 = vmax.f32 %v2570, %v2572
      %v2917 = vmax.f32 %v2573, %v2575
      %v2918 = vmax.f32 %v2574, %v2576
      %v2919 = vmax.f32 %v2577, %v2579
      %v2920 = vmax.f32 %v2578, %v2580
      %v2921 = vmax.f32 %v2581, %v2583
      %v2922 = vmax.f32 %v2582, %v2584
      %v2923 = vmax.f32 %v2585, %v2587
      %v2924 = vmax.f32 %v2586, %v2588
      %v2925 = vmax.f32 %v2589, %v2591
      %v2926 = vmax.f32 %v2590, %v2592
      %v2927 = vmax.f32 %v2593, %v2595
      %v2928 = vmax.f32 %v2594, %v2596
      %v2929 = vmax.f32 %v2597, %v2599
      %v2930 = vmax.f32 %v2598, %v2600
      %v2931 = vmax.f32 %v2601, %v2603
      %v2932 = vmax.f32 %v2602, %v2604
      %v2933 = vmax.f32 %v2605, %v2607
      %v2934 = vmax.f32 %v2606, %v2608
      %v2935 = vmax.f32 %v2609, %v2611
      %v2936 = vmax.f32 %v2610, %v2612
      %v2937 = vmax.f32 %v2613, %v2615
      %v2938 = vmax.f32 %v2614, %v2616
      %v2939 = vmax.f32 %v2617, %v2619
      %v2940 = vmax.f32 %v2618, %v2620
      %v2941 = vmax.f32 %v2621, %v2623
      %v2942 = vmax.f32 %v2622, %v2624
      %v2943 = vmax.f32 %v2625, %v2627
      %v2944 = vmax.f32 %v2626, %v2628
      %v2945 = vmax.f32 %v2629, %v2631
      %v2946 = vmax.f32 %v2630, %v2632
      %v2947 = vmax.f32 %v2633, %v2635
      %v2948 = vmax.f32 %v2634, %v2636
      %v2949 = vmax.f32 %v2637, %v2639
      %v2950 = vmax.f32 %v2638, %v2640
      %v2951 = vmax.f32 %v2641, %v2643
      %v2952 = vmax.f32 %v2642, %v2644
      %v2953 = vmax.f32 %v2645, %v2647
      %v2954 = vmax.f32 %v2646, %v2648
      %v2955 = vmax.f32 %v2649, %v2651
      %v2956 = vmax.f32 %v2650, %v2652
      %v2957 = vmax.f32 %v2653, %v2655
      %v2958 = vmax.f32 %v2654, %v2656
      %v2959 = vmax.f32 %v2657, %v2659
      %v2960 = vmax.f32 %v2658, %v2660
      %v2961 = vmax.f32 %v2661, %v2663
      %v2962 = vmax.f32 %v2662, %v2664
      %v2963 = vmax.f32 %v2665, %v2667
      %v2964 = vmax.f32 %v2666, %v2668
      %v2965 = vmax.f32 %v2669, %v2671
      %v2966 = vmax.f32 %v2670, %v2672
      %v2967 = vmax.f32 %v2673, %v2675
      %v2968 = vmax.f32 %v2674, %v2676
      %v2969 = vmax.f32 %v2677, %v2679
      %v2970 = vmax.f32 %v2678, %v2680
      %v2971 = vmax.f32 %v2681, %v2683
      %v2972 = vmax.f32 %v2682, %v2684
      %v2973 = vmax.f32 %v2685, %v2687
      %v2974 = vmax.f32 %v2686, %v2688
      %v2975 = vmax.f32 %v2689, %v2691
      %v2976 = vmax.f32 %v2690, %v2692
      %v2977 = vmax.f32 %v2693, %v2695
      %v2978 = vmax.f32 %v2694, %v2696
      %v2979 = vmax.f32 %v2697, %v2699
      %v2980 = vmax.f32 %v2698, %v2700
      %v2981 = vmax.f32 %v2701, %v2703
      %v2982 = vmax.f32 %v2702, %v2704
      %v2983 = vmax.f32 %v2705, %v2707
      %v2984 = vmax.f32 %v2706, %v2708
      %v2985 = vmax.f32 %v2709, %v2711
      %v2986 = vmax.f32 %v2710, %v2712
      %v2987 = vmax.f32 %v2713, %v2715
      %v2988 = vmax.f32 %v2714, %v2716
      %v2989 = vmax.f32 %v2717, %v2719
      %v2990 = vmax.f32 %v2718, %v2720
      %v2991 = vmax.f32 %v2721, %v2723
      %v2992 = vmax.f32 %v2722, %v2724
      %v2993 = vmax.f32 %v2725, %v2727
      %v2994 = vmax.f32 %v2726, %v2728
      %v2995 = vmax.f32 %v2729, %v2731
      %v2996 = vmax.f32 %v2730, %v2732
      %v2997 = vmax.f32 %v2733, %v2735
      %v2998 = vmax.f32 %v2734, %v2736
      %v2999 = vmax.f32 %v2737, %v2739
      %v3000 = vmax.f32 %v2738, %v2740
      %v3001 = vmax.f32 %v2741, %v2743
      %v3002 = vmax.f32 %v2742, %v2744
      %v3003 = vmax.f32 %v2745, %v2747
      %v3004 = vmax.f32 %v2746, %v2748
      %v3005 = vmax.f32 %v2749, %v2751
      %v3006 = vmax.f32 %v2750, %v2752
      %v3007 = vmax.f32 %v2753, %v2755
      %v3008 = vmax.f32 %v2754, %v2756
      %v3009 = vmax.f32 %v2757, %v2759
      %v3010 = vmax.f32 %v2758, %v2760
      %v3011 = vmax.f32 %v2761, %v2763
      %v3012 = vmax.f32 %v2762, %v2764
      %v3013 = vmax.f32 %v2765, %v2767
      %v3014 = vmax.f32 %v2766, %v2768
      %v3015 = vmax.f32 %v2769, %v2771
      %v3016 = vmax.f32 %v2770, %v2772
      %v3017 = vmax.f32 %v2773, %v2775
      %v3018 = vmax.f32 %v2774, %v2776
      %v3019 = vmax.f32 %v2777, %v2779
      %v3020 = vmax.f32 %v2778, %v2780
      %v3021 = vmax.f32 %v2781, %v2783
      %v3022 = vmax.f32 %v2782, %v2784
      %v3023 = vmax.f32 %v2785, %v2787
      %v3024 = vmax.f32 %v2786, %v2788
      %v3025 = vmax.f32 %v2789, %v2791
      %v3026 = vmax.f32 %v2790, %v2792
      %v3027 = vmax.f32 %v2793, %v2795
      %v3028 = vmax.f32 %v2794, %v2796
      %v3029 = vmax.f32 %v2797, %v2799
      %v3030 = vmax.f32 %v2798, %v2800
      %v3031 = vmax.f32 %v2801, %v2803
      %v3032 = vmax.f32 %v2802, %v2804
      %v3033 = vmax.f32 %v2805, %v2807
      %v3034 = vmax.f32 %v2806, %v2808
      %v3035 = vmax.f32 %v2809, %v2811
      %v3036 = vmax.f32 %v2810, %v2812
      %vm3037 = vcmask 48128
      %3038 = vst.msk [vmem:[%s123] sm:$0xff] %vm3037, %v2813
      %vm3039 = vcmask 46080
      %3040 = vst.msk [vmem:[%s123 + $0x8] sm:$0x3f] %vm3039, %v2814
      %3041 = vst.msk [vmem:[%s123 + $0x10] sm:$0xff] %vm3037, %v2815
      %3042 = vst.msk [vmem:[%s123 + $0x18] sm:$0x3f] %vm3039, %v2816
      %3043 = vst.msk [vmem:[%s123 + $0x20] sm:$0xff] %vm3037, %v2817
      %3044 = vst.msk [vmem:[%s123 + $0x28] sm:$0x3f] %vm3039, %v2818
      %3045 = vst.msk [vmem:[%s123 + $0x30] sm:$0xff] %vm3037, %v2819
      %3046 = vst.msk [vmem:[%s123 + $0x38] sm:$0x3f] %vm3039, %v2820
      %3047 = vst.msk [vmem:[%s123 + $0x40] sm:$0xff] %vm3037, %v2821
      %3048 = vst.msk [vmem:[%s123 + $0x48] sm:$0x3f] %vm3039, %v2822
      %3049 = vst.msk [vmem:[%s123 + $0x50] sm:$0xff] %vm3037, %v2823
      %3050 = vst.msk [vmem:[%s123 + $0x58] sm:$0x3f] %vm3039, %v2824
      %3051 = vst.msk [vmem:[%s123 + $0x60] sm:$0xff] %vm3037, %v2825
      %3052 = vst.msk [vmem:[%s123 + $0x68] sm:$0x3f] %vm3039, %v2826
      %3053 = vst.msk [vmem:[%s123 + $0x70] sm:$0xff] %vm3037, %v2827
      %3054 = vst.msk [vmem:[%s123 + $0x78] sm:$0x3f] %vm3039, %v2828
      %3055 = vst.msk [vmem:[%s123 + $0x80] sm:$0xff] %vm3037, %v2829
      %3056 = vst.msk [vmem:[%s123 + $0x88] sm:$0x3f] %vm3039, %v2830
      %3057 = vst.msk [vmem:[%s123 + $0x90] sm:$0xff] %vm3037, %v2831
      %3058 = vst.msk [vmem:[%s123 + $0x98] sm:$0x3f] %vm3039, %v2832
      %3059 = vst.msk [vmem:[%s123 + $0xa0] sm:$0xff] %vm3037, %v2833
      %3060 = vst.msk [vmem:[%s123 + $0xa8] sm:$0x3f] %vm3039, %v2834
      %3061 = vst.msk [vmem:[%s123 + $0xb0] sm:$0xff] %vm3037, %v2835
      %3062 = vst.msk [vmem:[%s123 + $0xb8] sm:$0x3f] %vm3039, %v2836
      %3063 = vst.msk [vmem:[%s123 + $0xc0] sm:$0xff] %vm3037, %v2837
      %3064 = vst.msk [vmem:[%s123 + $0xc8] sm:$0x3f] %vm3039, %v2838
      %3065 = vst.msk [vmem:[%s123 + $0xd0] sm:$0xff] %vm3037, %v2839
      %3066 = vst.msk [vmem:[%s123 + $0xd8] sm:$0x3f] %vm3039, %v2840
      %3067 = vst.msk [vmem:[%s123 + $0xe0] sm:$0xff] %vm3037, %v2841
      %3068 = vst.msk [vmem:[%s123 + $0xe8] sm:$0x3f] %vm3039, %v2842
      %3069 = vst.msk [vmem:[%s123 + $0xf0] sm:$0xff] %vm3037, %v2843
      %3070 = vst.msk [vmem:[%s123 + $0xf8] sm:$0x3f] %vm3039, %v2844
      %3071 = vst.msk [vmem:[%s123 + $0x100] sm:$0xff] %vm3037, %v2845
      %3072 = vst.msk [vmem:[%s123 + $0x108] sm:$0x3f] %vm3039, %v2846
      %3073 = vst.msk [vmem:[%s123 + $0x110] sm:$0xff] %vm3037, %v2847
      %3074 = vst.msk [vmem:[%s123 + $0x118] sm:$0x3f] %vm3039, %v2848
      %3075 = vst.msk [vmem:[%s123 + $0x120] sm:$0xff] %vm3037, %v2849
      %3076 = vst.msk [vmem:[%s123 + $0x128] sm:$0x3f] %vm3039, %v2850
      %3077 = vst.msk [vmem:[%s123 + $0x130] sm:$0xff] %vm3037, %v2851
      %3078 = vst.msk [vmem:[%s123 + $0x138] sm:$0x3f] %vm3039, %v2852
      %3079 = vst.msk [vmem:[%s123 + $0x140] sm:$0xff] %vm3037, %v2853
      %3080 = vst.msk [vmem:[%s123 + $0x148] sm:$0x3f] %vm3039, %v2854
      %3081 = vst.msk [vmem:[%s123 + $0x150] sm:$0xff] %vm3037, %v2855
      %3082 = vst.msk [vmem:[%s123 + $0x158] sm:$0x3f] %vm3039, %v2856
      %3083 = vst.msk [vmem:[%s123 + $0x160] sm:$0xff] %vm3037, %v2857
      %3084 = vst.msk [vmem:[%s123 + $0x168] sm:$0x3f] %vm3039, %v2858
      %3085 = vst.msk [vmem:[%s123 + $0x170] sm:$0xff] %vm3037, %v2859
      %3086 = vst.msk [vmem:[%s123 + $0x178] sm:$0x3f] %vm3039, %v2860
      %3087 = vst.msk [vmem:[%s123 + $0x180] sm:$0xff] %vm3037, %v2861
      %3088 = vst.msk [vmem:[%s123 + $0x188] sm:$0x3f] %vm3039, %v2862
      %3089 = vst.msk [vmem:[%s123 + $0x190] sm:$0xff] %vm3037, %v2863
      %3090 = vst.msk [vmem:[%s123 + $0x198] sm:$0x3f] %vm3039, %v2864
      %3091 = vst.msk [vmem:[%s123 + $0x1a0] sm:$0xff] %vm3037, %v2865
      %3092 = vst.msk [vmem:[%s123 + $0x1a8] sm:$0x3f] %vm3039, %v2866
      %3093 = vst.msk [vmem:[%s123 + $0x1b0] sm:$0xff] %vm3037, %v2867
      %3094 = vst.msk [vmem:[%s123 + $0x1b8] sm:$0x3f] %vm3039, %v2868
      %3095 = vst.msk [vmem:[%s123 + $0x1c0] sm:$0xff] %vm3037, %v2869
      %3096 = vst.msk [vmem:[%s123 + $0x1c8] sm:$0x3f] %vm3039, %v2870
      %3097 = vst.msk [vmem:[%s123 + $0x1d0] sm:$0xff] %vm3037, %v2871
      %3098 = vst.msk [vmem:[%s123 + $0x1d8] sm:$0x3f] %vm3039, %v2872
      %3099 = vst.msk [vmem:[%s123 + $0x1e0] sm:$0xff] %vm3037, %v2873
      %3100 = vst.msk [vmem:[%s123 + $0x1e8] sm:$0x3f] %vm3039, %v2874
      %3101 = vst.msk [vmem:[%s123 + $0x1f0] sm:$0xff] %vm3037, %v2875
      %3102 = vst.msk [vmem:[%s123 + $0x1f8] sm:$0x3f] %vm3039, %v2876
      %3103 = vst.msk [vmem:[%s123 + $0x200] sm:$0xff] %vm3037, %v2877
      %3104 = vst.msk [vmem:[%s123 + $0x208] sm:$0x3f] %vm3039, %v2878
      %3105 = vst.msk [vmem:[%s123 + $0x210] sm:$0xff] %vm3037, %v2879
      %3106 = vst.msk [vmem:[%s123 + $0x218] sm:$0x3f] %vm3039, %v2880
      %3107 = vst.msk [vmem:[%s123 + $0x220] sm:$0xff] %vm3037, %v2881
      %3108 = vst.msk [vmem:[%s123 + $0x228] sm:$0x3f] %vm3039, %v2882
      %3109 = vst.msk [vmem:[%s123 + $0x230] sm:$0xff] %vm3037, %v2883
      %3110 = vst.msk [vmem:[%s123 + $0x238] sm:$0x3f] %vm3039, %v2884
      %3111 = vst.msk [vmem:[%s123 + $0x240] sm:$0xff] %vm3037, %v2885
      %3112 = vst.msk [vmem:[%s123 + $0x248] sm:$0x3f] %vm3039, %v2886
      %3113 = vst.msk [vmem:[%s123 + $0x250] sm:$0xff] %vm3037, %v2887
      %3114 = vst.msk [vmem:[%s123 + $0x258] sm:$0x3f] %vm3039, %v2888
      %3115 = vst.msk [vmem:[%s123 + $0x260] sm:$0xff] %vm3037, %v2889
      %3116 = vst.msk [vmem:[%s123 + $0x268] sm:$0x3f] %vm3039, %v2890
      %3117 = vst.msk [vmem:[%s123 + $0x270] sm:$0xff] %vm3037, %v2891
      %3118 = vst.msk [vmem:[%s123 + $0x278] sm:$0x3f] %vm3039, %v2892
      %3119 = vst.msk [vmem:[%s123 + $0x280] sm:$0xff] %vm3037, %v2893
      %3120 = vst.msk [vmem:[%s123 + $0x288] sm:$0x3f] %vm3039, %v2894
      %3121 = vst.msk [vmem:[%s123 + $0x290] sm:$0xff] %vm3037, %v2895
      %3122 = vst.msk [vmem:[%s123 + $0x298] sm:$0x3f] %vm3039, %v2896
      %3123 = vst.msk [vmem:[%s123 + $0x2a0] sm:$0xff] %vm3037, %v2897
      %3124 = vst.msk [vmem:[%s123 + $0x2a8] sm:$0x3f] %vm3039, %v2898
      %3125 = vst.msk [vmem:[%s123 + $0x2b0] sm:$0xff] %vm3037, %v2899
      %3126 = vst.msk [vmem:[%s123 + $0x2b8] sm:$0x3f] %vm3039, %v2900
      %3127 = vst.msk [vmem:[%s123 + $0x2c0] sm:$0xff] %vm3037, %v2901
      %3128 = vst.msk [vmem:[%s123 + $0x2c8] sm:$0x3f] %vm3039, %v2902
      %3129 = vst.msk [vmem:[%s123 + $0x2d0] sm:$0xff] %vm3037, %v2903
      %3130 = vst.msk [vmem:[%s123 + $0x2d8] sm:$0x3f] %vm3039, %v2904
      %3131 = vst.msk [vmem:[%s123 + $0x2e0] sm:$0xff] %vm3037, %v2905
      %3132 = vst.msk [vmem:[%s123 + $0x2e8] sm:$0x3f] %vm3039, %v2906
      %3133 = vst.msk [vmem:[%s123 + $0x2f0] sm:$0xff] %vm3037, %v2907
      %3134 = vst.msk [vmem:[%s123 + $0x2f8] sm:$0x3f] %vm3039, %v2908
      %3135 = vst.msk [vmem:[%s123 + $0x300] sm:$0xff] %vm3037, %v2909
      %3136 = vst.msk [vmem:[%s123 + $0x308] sm:$0x3f] %vm3039, %v2910
      %3137 = vst.msk [vmem:[%s123 + $0x310] sm:$0xff] %vm3037, %v2911
      %3138 = vst.msk [vmem:[%s123 + $0x318] sm:$0x3f] %vm3039, %v2912
      %3139 = vst.msk [vmem:[%s123 + $0x320] sm:$0xff] %vm3037, %v2913
      %3140 = vst.msk [vmem:[%s123 + $0x328] sm:$0x3f] %vm3039, %v2914
      %3141 = vst.msk [vmem:[%s123 + $0x330] sm:$0xff] %vm3037, %v2915
      %3142 = vst.msk [vmem:[%s123 + $0x338] sm:$0x3f] %vm3039, %v2916
      %3143 = vst.msk [vmem:[%s123 + $0x340] sm:$0xff] %vm3037, %v2917
      %3144 = vst.msk [vmem:[%s123 + $0x348] sm:$0x3f] %vm3039, %v2918
      %3145 = vst.msk [vmem:[%s123 + $0x350] sm:$0xff] %vm3037, %v2919
      %3146 = vst.msk [vmem:[%s123 + $0x358] sm:$0x3f] %vm3039, %v2920
      %3147 = vst.msk [vmem:[%s123 + $0x360] sm:$0xff] %vm3037, %v2921
      %3148 = vst.msk [vmem:[%s123 + $0x368] sm:$0x3f] %vm3039, %v2922
      %3149 = vst.msk [vmem:[%s123 + $0x370] sm:$0xff] %vm3037, %v2923
      %3150 = vst.msk [vmem:[%s123 + $0x378] sm:$0x3f] %vm3039, %v2924
      %3151 = vst.msk [vmem:[%s123 + $0x380] sm:$0xff] %vm3037, %v2925
      %3152 = vst.msk [vmem:[%s123 + $0x388] sm:$0x3f] %vm3039, %v2926
      %3153 = vst.msk [vmem:[%s123 + $0x390] sm:$0xff] %vm3037, %v2927
      %3154 = vst.msk [vmem:[%s123 + $0x398] sm:$0x3f] %vm3039, %v2928
      %3155 = vst.msk [vmem:[%s123 + $0x3a0] sm:$0xff] %vm3037, %v2929
      %3156 = vst.msk [vmem:[%s123 + $0x3a8] sm:$0x3f] %vm3039, %v2930
      %3157 = vst.msk [vmem:[%s123 + $0x3b0] sm:$0xff] %vm3037, %v2931
      %3158 = vst.msk [vmem:[%s123 + $0x3b8] sm:$0x3f] %vm3039, %v2932
      %3159 = vst.msk [vmem:[%s123 + $0x3c0] sm:$0xff] %vm3037, %v2933
      %3160 = vst.msk [vmem:[%s123 + $0x3c8] sm:$0x3f] %vm3039, %v2934
      %3161 = vst.msk [vmem:[%s123 + $0x3d0] sm:$0xff] %vm3037, %v2935
      %3162 = vst.msk [vmem:[%s123 + $0x3d8] sm:$0x3f] %vm3039, %v2936
      %3163 = vst.msk [vmem:[%s123 + $0x3e0] sm:$0xff] %vm3037, %v2937
      %3164 = vst.msk [vmem:[%s123 + $0x3e8] sm:$0x3f] %vm3039, %v2938
      %3165 = vst.msk [vmem:[%s123 + $0x3f0] sm:$0xff] %vm3037, %v2939
      %3166 = vst.msk [vmem:[%s123 + $0x3f8] sm:$0x3f] %vm3039, %v2940
      %3167 = vst.msk [vmem:[%s123 + $0x400] sm:$0xff] %vm3037, %v2941
      %3168 = vst.msk [vmem:[%s123 + $0x408] sm:$0x3f] %vm3039, %v2942
      %3169 = vst.msk [vmem:[%s123 + $0x410] sm:$0xff] %vm3037, %v2943
      %3170 = vst.msk [vmem:[%s123 + $0x418] sm:$0x3f] %vm3039, %v2944
      %3171 = vst.msk [vmem:[%s123 + $0x420] sm:$0xff] %vm3037, %v2945
      %3172 = vst.msk [vmem:[%s123 + $0x428] sm:$0x3f] %vm3039, %v2946
      %3173 = vst.msk [vmem:[%s123 + $0x430] sm:$0xff] %vm3037, %v2947
      %3174 = vst.msk [vmem:[%s123 + $0x438] sm:$0x3f] %vm3039, %v2948
      %3175 = vst.msk [vmem:[%s123 + $0x440] sm:$0xff] %vm3037, %v2949
      %3176 = vst.msk [vmem:[%s123 + $0x448] sm:$0x3f] %vm3039, %v2950
      %3177 = vst.msk [vmem:[%s123 + $0x450] sm:$0xff] %vm3037, %v2951
      %3178 = vst.msk [vmem:[%s123 + $0x458] sm:$0x3f] %vm3039, %v2952
      %3179 = vst.msk [vmem:[%s123 + $0x460] sm:$0xff] %vm3037, %v2953
      %3180 = vst.msk [vmem:[%s123 + $0x468] sm:$0x3f] %vm3039, %v2954
      %3181 = vst.msk [vmem:[%s123 + $0x470] sm:$0xff] %vm3037, %v2955
      %3182 = vst.msk [vmem:[%s123 + $0x478] sm:$0x3f] %vm3039, %v2956
      %3183 = vst.msk [vmem:[%s123 + $0x480] sm:$0xff] %vm3037, %v2957
      %3184 = vst.msk [vmem:[%s123 + $0x488] sm:$0x3f] %vm3039, %v2958
      %3185 = vst.msk [vmem:[%s123 + $0x490] sm:$0xff] %vm3037, %v2959
      %3186 = vst.msk [vmem:[%s123 + $0x498] sm:$0x3f] %vm3039, %v2960
      %3187 = vst.msk [vmem:[%s123 + $0x4a0] sm:$0xff] %vm3037, %v2961
      %3188 = vst.msk [vmem:[%s123 + $0x4a8] sm:$0x3f] %vm3039, %v2962
      %3189 = vst.msk [vmem:[%s123 + $0x4b0] sm:$0xff] %vm3037, %v2963
      %3190 = vst.msk [vmem:[%s123 + $0x4b8] sm:$0x3f] %vm3039, %v2964
      %3191 = vst.msk [vmem:[%s123 + $0x4c0] sm:$0xff] %vm3037, %v2965
      %3192 = vst.msk [vmem:[%s123 + $0x4c8] sm:$0x3f] %vm3039, %v2966
      %3193 = vst.msk [vmem:[%s123 + $0x4d0] sm:$0xff] %vm3037, %v2967
      %3194 = vst.msk [vmem:[%s123 + $0x4d8] sm:$0x3f] %vm3039, %v2968
      %3195 = vst.msk [vmem:[%s123 + $0x4e0] sm:$0xff] %vm3037, %v2969
      %3196 = vst.msk [vmem:[%s123 + $0x4e8] sm:$0x3f] %vm3039, %v2970
      %3197 = vst.msk [vmem:[%s123 + $0x4f0] sm:$0xff] %vm3037, %v2971
      %3198 = vst.msk [vmem:[%s123 + $0x4f8] sm:$0x3f] %vm3039, %v2972
      %3199 = vst.msk [vmem:[%s123 + $0x500] sm:$0xff] %vm3037, %v2973
      %3200 = vst.msk [vmem:[%s123 + $0x508] sm:$0x3f] %vm3039, %v2974
      %3201 = vst.msk [vmem:[%s123 + $0x510] sm:$0xff] %vm3037, %v2975
      %3202 = vst.msk [vmem:[%s123 + $0x518] sm:$0x3f] %vm3039, %v2976
      %3203 = vst.msk [vmem:[%s123 + $0x520] sm:$0xff] %vm3037, %v2977
      %3204 = vst.msk [vmem:[%s123 + $0x528] sm:$0x3f] %vm3039, %v2978
      %3205 = vst.msk [vmem:[%s123 + $0x530] sm:$0xff] %vm3037, %v2979
      %3206 = vst.msk [vmem:[%s123 + $0x538] sm:$0x3f] %vm3039, %v2980
      %3207 = vst.msk [vmem:[%s123 + $0x540] sm:$0xff] %vm3037, %v2981
      %3208 = vst.msk [vmem:[%s123 + $0x548] sm:$0x3f] %vm3039, %v2982
      %3209 = vst.msk [vmem:[%s123 + $0x550] sm:$0xff] %vm3037, %v2983
      %3210 = vst.msk [vmem:[%s123 + $0x558] sm:$0x3f] %vm3039, %v2984
      %3211 = vst.msk [vmem:[%s123 + $0x560] sm:$0xff] %vm3037, %v2985
      %3212 = vst.msk [vmem:[%s123 + $0x568] sm:$0x3f] %vm3039, %v2986
      %3213 = vst.msk [vmem:[%s123 + $0x570] sm:$0xff] %vm3037, %v2987
      %3214 = vst.msk [vmem:[%s123 + $0x578] sm:$0x3f] %vm3039, %v2988
      %3215 = vst.msk [vmem:[%s123 + $0x580] sm:$0xff] %vm3037, %v2989
      %3216 = vst.msk [vmem:[%s123 + $0x588] sm:$0x3f] %vm3039, %v2990
      %3217 = vst.msk [vmem:[%s123 + $0x590] sm:$0xff] %vm3037, %v2991
      %3218 = vst.msk [vmem:[%s123 + $0x598] sm:$0x3f] %vm3039, %v2992
      %3219 = vst.msk [vmem:[%s123 + $0x5a0] sm:$0xff] %vm3037, %v2993
      %3220 = vst.msk [vmem:[%s123 + $0x5a8] sm:$0x3f] %vm3039, %v2994
      %3221 = vst.msk [vmem:[%s123 + $0x5b0] sm:$0xff] %vm3037, %v2995
      %3222 = vst.msk [vmem:[%s123 + $0x5b8] sm:$0x3f] %vm3039, %v2996
      %3223 = vst.msk [vmem:[%s123 + $0x5c0] sm:$0xff] %vm3037, %v2997
      %3224 = vst.msk [vmem:[%s123 + $0x5c8] sm:$0x3f] %vm3039, %v2998
      %3225 = vst.msk [vmem:[%s123 + $0x5d0] sm:$0xff] %vm3037, %v2999
      %3226 = vst.msk [vmem:[%s123 + $0x5d8] sm:$0x3f] %vm3039, %v3000
      %3227 = vst.msk [vmem:[%s123 + $0x5e0] sm:$0xff] %vm3037, %v3001
      %3228 = vst.msk [vmem:[%s123 + $0x5e8] sm:$0x3f] %vm3039, %v3002
      %3229 = vst.msk [vmem:[%s123 + $0x5f0] sm:$0xff] %vm3037, %v3003
      %3230 = vst.msk [vmem:[%s123 + $0x5f8] sm:$0x3f] %vm3039, %v3004
      %3231 = vst.msk [vmem:[%s123 + $0x600] sm:$0xff] %vm3037, %v3005
      %3232 = vst.msk [vmem:[%s123 + $0x608] sm:$0x3f] %vm3039, %v3006
      %3233 = vst.msk [vmem:[%s123 + $0x610] sm:$0xff] %vm3037, %v3007
      %3234 = vst.msk [vmem:[%s123 + $0x618] sm:$0x3f] %vm3039, %v3008
      %3235 = vst.msk [vmem:[%s123 + $0x620] sm:$0xff] %vm3037, %v3009
      %3236 = vst.msk [vmem:[%s123 + $0x628] sm:$0x3f] %vm3039, %v3010
      %3237 = vst.msk [vmem:[%s123 + $0x630] sm:$0xff] %vm3037, %v3011
      %3238 = vst.msk [vmem:[%s123 + $0x638] sm:$0x3f] %vm3039, %v3012
      %3239 = vst.msk [vmem:[%s123 + $0x640] sm:$0xff] %vm3037, %v3013
      %3240 = vst.msk [vmem:[%s123 + $0x648] sm:$0x3f] %vm3039, %v3014
      %3241 = vst.msk [vmem:[%s123 + $0x650] sm:$0xff] %vm3037, %v3015
      %3242 = vst.msk [vmem:[%s123 + $0x658] sm:$0x3f] %vm3039, %v3016
      %3243 = vst.msk [vmem:[%s123 + $0x660] sm:$0xff] %vm3037, %v3017
      %3244 = vst.msk [vmem:[%s123 + $0x668] sm:$0x3f] %vm3039, %v3018
      %3245 = vst.msk [vmem:[%s123 + $0x670] sm:$0xff] %vm3037, %v3019
      %3246 = vst.msk [vmem:[%s123 + $0x678] sm:$0x3f] %vm3039, %v3020
      %3247 = vst.msk [vmem:[%s123 + $0x680] sm:$0xff] %vm3037, %v3021
      %3248 = vst.msk [vmem:[%s123 + $0x688] sm:$0x3f] %vm3039, %v3022
      %3249 = vst.msk [vmem:[%s123 + $0x690] sm:$0xff] %vm3037, %v3023
      %3250 = vst.msk [vmem:[%s123 + $0x698] sm:$0x3f] %vm3039, %v3024
      %3251 = vst.msk [vmem:[%s123 + $0x6a0] sm:$0xff] %vm3037, %v3025
      %3252 = vst.msk [vmem:[%s123 + $0x6a8] sm:$0x3f] %vm3039, %v3026
      %3253 = vst.msk [vmem:[%s123 + $0x6b0] sm:$0xff] %vm3037, %v3027
      %3254 = vst.msk [vmem:[%s123 + $0x6b8] sm:$0x3f] %vm3039, %v3028
      %3255 = vst.msk [vmem:[%s123 + $0x6c0] sm:$0xff] %vm3037, %v3029
      %3256 = vst.msk [vmem:[%s123 + $0x6c8] sm:$0x3f] %vm3039, %v3030
      %3257 = vst.msk [vmem:[%s123 + $0x6d0] sm:$0xff] %vm3037, %v3031
      %3258 = vst.msk [vmem:[%s123 + $0x6d8] sm:$0x3f] %vm3039, %v3032
      %3259 = vst.msk [vmem:[%s123 + $0x6e0] sm:$0xff] %vm3037, %v3033
      %3260 = vst.msk [vmem:[%s123 + $0x6e8] sm:$0x3f] %vm3039, %v3034
      %3261 = vst.msk [vmem:[%s123 + $0x6f0] sm:$0xff] %vm3037, %v3035
      %3262 = vst.msk [vmem:[%s123 + $0x6f8] sm:$0x3f] %vm3039, %v3036
      %s3263 = smul.u32 112, %s12
      %p3264 = scmp.lt.s32.totalorder %s3263, 223
      %s3265 = scalar_select %p3264, %s3263, 223
      %s3266 = smul.addr %s3265, 2
      %s3267 = smul.addr %s3266, 8
      %s3268 = scalar_lea.vmem %s1, %s3267
      // Predicated region
      $region25: #{encoder_lstm_forward.15} parent=23 // pred_check
        %p3269 = pneg %p56
      $region26: #{encoder_lstm_forward.15} parent=23 // pred_check_branch
        %3271 = sbr.rel (%p3269) target = $region28
      $region27: #{encoder_lstm_forward.15} parent=23 // pred_region
        %s3272 = smul.u32 112, %s12
      $region28: #{encoder_lstm_forward.15} parent=23 // pred_fallthru
        _
    $region24: #{encoder_lstm_forward.15} parent=5 // pred_fallthru
      _
    %p3273 = scmp.le.s32.totalorder 2, %s7
    // Predicated region
    $region29: #{encoder_lstm_forward.15} parent=5 // pred_check
      %p3274 = pneg %p3273
    $region30: #{encoder_lstm_forward.15} parent=5 // pred_check_branch
      %3276 = sbr.rel (%p3274) target = $region32
    $region31: #{encoder_lstm_forward.15} parent=5 // pred_region
      %s3277 = ssub.s32 %s7, 2
      // Predicated region
      $region33: #{encoder_lstm_forward.15} parent=31 // pred_check
        %p3278 = pneg %p62
      $region34: #{encoder_lstm_forward.15} parent=31 // pred_check_branch
        %3280 = sbr.rel (%p3278) target = $region36
      $region35: #{encoder_lstm_forward.15} parent=31 // pred_region
        %s3281 = smul.u32 112, %s13
        %p3282 = scmp.lt.s32.totalorder %s3281, 223
        %s3283 = scalar_select %p3282, %s3281, 223
        %s3284 = smul.addr %s3283, 2
        %s3285 = smul.addr %s3284, 8
        %s3286 = scalar_lea.vmem %s1, %s3285
      $region36: #{encoder_lstm_forward.15} parent=31 // pred_fallthru
        _
    $region32: #{encoder_lstm_forward.15} parent=5 // pred_fallthru
      _
  $region6: #{encoder_lstm_forward.15} parent=0 // loop_footer
    %s11 = sadd.s32 1, %s7
  $region7: #{encoder_lstm_forward.15} parent=0 // loop_footer_branch
    %6 = sbr.rel target = $region3
  $region8: #{encoder_lstm_forward.15} parent=0 // loop_exit
    _

// kernel: encoder_lstm_forward.16
$region0: #{encoder_lstm_forward.16}
  #allocation0 [shape = 'u32[]', space=smem, size = 0x4, offset = 0x4, fixed_abs, tag = 'smem constant byte address 0x4 - core index']
  #allocation1 [shape = 'u32[144,128]{1,0:T(1,128)}', space=vmem, size = 0x12000, scoped, tag = 'internal scratch']
  #allocation2 [shape = 'f32[256,128]{1,0:T(8,128)}', space=vmem, size = 0x20000, scoped, tag = 'scratch operand']
  %s0 = inlined_call_operand.vmem [shape: bf16[1792,256], index: 0, kind: input, shape index: {}]
  %s1 = inlined_call_operand.vmem [shape: bf16[256,128], index: 1, kind: input, shape index: {}]
  %s2 = inlined_call_operand.vmem [shape: f32[1,128], index: 2, kind: input, shape index: {}]
  %s3 = inlined_call_operand.vmem [shape: f32[1792,128], index: 3, kind: output, shape index: {}]
  %s4 = sld [smem:[#allocation0]]
  $region53: #{encoder_lstm_forward.16} parent=0
    _
  %s6 = ssub.s32 1, %s4
  %s7 = scalar_select 0, %s6, %s4
  loop: start=0, step=1, limit=9
  $region2: #{encoder_lstm_forward.16} parent=0 // loop_pre_header
    _
  $region3: #{encoder_lstm_forward.16} parent=0 // loop_header
    %s9 = sphi 0, %s13
    %p10 = scmp.ge.s32.totalorder %s9, 9
    %s16 = sphi 0, %s35
    %s17 = sphi 0, %s31
    %s18 = sphi 0, %s27
    %s19 = sphi 0, %s16
    %s20 = sphi 0, %s17
    %s21 = sphi 0, %s18
    %s22 = sphi 0, %s19
    %s23 = sphi 0, %s20
    %s24 = sphi 0, %s21
    %s40 = sphi 0, %s42
    %s43 = sphi 0, %s40
    %s44 = sphi 0, %s43
    %s60 = sphi 0, %s44
    %s68 = sphi 0, %s70
    %s71 = sphi 0, %s68
    %s72 = sphi 0, %s71
    %s88 = sphi 0, %s72
    %s94 = sphi 0, %s96
    %s97 = sphi 0, %s94
    %s98 = sphi 0, %s97
    %s114 = sphi 0, %s98
    %s122 = sphi 0, %s124
    %s125 = sphi 0, %s122
    %s126 = sphi 0, %s125
    %s142 = sphi 0, %s126
  $region4: #{encoder_lstm_forward.16} parent=0 // loop_header_branch
    %12 = sbr.rel (%p10) target = $region8
  $region5: #{encoder_lstm_forward.16} parent=0 // loop_body
    %s14 = ssub.s32 %s9, 1
    %s15 = ssub.s32 %s9, 2
    %s25 = sadd.s32 1, %s18
    %p26 = scmp.ge.s32.totalorder %s25, 1
    %s27 = scalar_select %p26, 0, %s25
    %s28 = sadd.s32 1, %s17
    %s29 = scalar_select %p26, %s28, %s17
    %p30 = scmp.ge.s32.totalorder %s29, 1
    %s31 = scalar_select %p30, 0, %s29
    %s32 = sadd.s32 1, %s16
    %s33 = scalar_select %p30, %s32, %s16
    %p34 = scmp.ge.s32.totalorder %s33, 7
    %s35 = scalar_select %p34, 0, %s33
    %s36 = ssub.s32 %s16, %s35
    %s37 = ssub.s32 %s18, %s27
    %s38 = sor.u32 %s36, %s37
    %p39 = scmp.eq.s32.totalorder %s38, 0
    %s41 = sadd.s32 %s40, 1
    %s42 = scalar_select %p39, %s40, %s41
    %p45 = pneg %p39
    %p46 = scmp.eq.s32.totalorder %s9, 6
    %p47 = por %p45, %p46
    %p48 = scmp.ne.s32.totalorder %s40, %s43
    %p49 = scmp.eq.s32.totalorder %s9, 0
    %p50 = por %p48, %p49
    %p51 = scmp.ne.s32.totalorder %s40, %s43
    %p52 = scmp.eq.s32.totalorder %s14, 6
    %p53 = por %p51, %p52
    %p54 = scmp.ne.s32.totalorder %s43, %s44
    %p55 = scmp.eq.s32.totalorder %s14, 0
    %p56 = por %p54, %p55
    %p57 = scmp.ne.s32.totalorder %s43, %s44
    %p58 = scmp.eq.s32.totalorder %s15, 6
    %p59 = por %p57, %p58
    %p61 = scmp.ne.s32.totalorder %s44, %s60
    %p62 = scmp.eq.s32.totalorder %s15, 0
    %p63 = por %p61, %p62
    %s64 = ssub.s32 %s18, %s27
    %s65 = ssub.s32 %s17, %s31
    %s66 = sor.u32 %s64, %s65
    %p67 = scmp.eq.s32.totalorder %s66, 0
    %s69 = sadd.s32 %s68, 1
    %s70 = scalar_select %p67, %s68, %s69
    %p73 = pneg %p67
    %p74 = scmp.eq.s32.totalorder %s9, 6
    %p75 = por %p73, %p74
    %p76 = scmp.ne.s32.totalorder %s68, %s71
    %p77 = scmp.eq.s32.totalorder %s9, 0
    %p78 = por %p76, %p77
    %p79 = scmp.ne.s32.totalorder %s68, %s71
    %p80 = scmp.eq.s32.totalorder %s14, 6
    %p81 = por %p79, %p80
    %p82 = scmp.ne.s32.totalorder %s71, %s72
    %p83 = scmp.eq.s32.totalorder %s14, 0
    %p84 = por %p82, %p83
    %p85 = scmp.ne.s32.totalorder %s71, %s72
    %p86 = scmp.eq.s32.totalorder %s15, 6
    %p87 = por %p85, %p86
    %p89 = scmp.ne.s32.totalorder %s72, %s88
    %p90 = scmp.eq.s32.totalorder %s15, 0
    %p91 = por %p89, %p90
    %s92 = ssub.s32 %s17, %s31
    %p93 = scmp.eq.s32.totalorder %s92, 0
    %s95 = sadd.s32 %s94, 1
    %s96 = scalar_select %p93, %s94, %s95
    %p99 = pneg %p93
    %p100 = scmp.eq.s32.totalorder %s9, 6
    %p101 = por %p99, %p100
    %p102 = scmp.ne.s32.totalorder %s94, %s97
    %p103 = scmp.eq.s32.totalorder %s9, 0
    %p104 = por %p102, %p103
    %p105 = scmp.ne.s32.totalorder %s94, %s97
    %p106 = scmp.eq.s32.totalorder %s14, 6
    %p107 = por %p105, %p106
    %p108 = scmp.ne.s32.totalorder %s97, %s98
    %p109 = scmp.eq.s32.totalorder %s14, 0
    %p110 = por %p108, %p109
    %p111 = scmp.ne.s32.totalorder %s97, %s98
    %p112 = scmp.eq.s32.totalorder %s15, 6
    %p113 = por %p111, %p112
    %p115 = scmp.ne.s32.totalorder %s98, %s114
    %p116 = scmp.eq.s32.totalorder %s15, 0
    %p117 = por %p115, %p116
    %s118 = ssub.s32 %s16, %s35
    %s119 = ssub.s32 %s17, %s31
    %s120 = sor.u32 %s118, %s119
    %p121 = scmp.eq.s32.totalorder %s120, 0
    %s123 = sadd.s32 %s122, 1
    %s124 = scalar_select %p121, %s122, %s123
    %p127 = pneg %p121
    %p128 = scmp.eq.s32.totalorder %s9, 6
    %p129 = por %p127, %p128
    %p130 = scmp.ne.s32.totalorder %s122, %s125
    %p131 = scmp.eq.s32.totalorder %s9, 0
    %p132 = por %p130, %p131
    %p133 = scmp.ne.s32.totalorder %s122, %s125
    %p134 = scmp.eq.s32.totalorder %s14, 6
    %p135 = por %p133, %p134
    %p136 = scmp.ne.s32.totalorder %s125, %s126
    %p137 = scmp.eq.s32.totalorder %s14, 0
    %p138 = por %p136, %p137
    %p139 = scmp.ne.s32.totalorder %s125, %s126
    %p140 = scmp.eq.s32.totalorder %s15, 6
    %p141 = por %p139, %p140
    %p143 = scmp.ne.s32.totalorder %s126, %s142
    %p144 = scmp.eq.s32.totalorder %s15, 0
    %p145 = por %p143, %p144
    %p146 = scmp.le.s32.totalorder 1, %s9
    %p147 = scmp.lt.s32.totalorder %s9, 8
    %p148 = pnand %p146, %p147
    %p149 = pneg %p148
    // Predicated region
    $region9: #{encoder_lstm_forward.16} parent=5 // pred_check
      _
    $region10: #{encoder_lstm_forward.16} parent=5 // pred_check_branch
      %151 = sbr.rel (%p148) target = $region12
    $region11: #{encoder_lstm_forward.16} parent=5 // pred_region
      %s152 = ssub.s32 %s9, 1
      // Predicated region
      $region13: #{encoder_lstm_forward.16} parent=11 // pred_check
        %p153 = pneg %p84
      $region14: #{encoder_lstm_forward.16} parent=11 // pred_check_branch
        %155 = sbr.rel (%p153) target = $region16
      $region15: #{encoder_lstm_forward.16} parent=11 // pred_region
        %s156 = smul.u32 32, %s21
        %p157 = scmp.lt.s32.totalorder %s156, 31
        %s158 = scalar_select %p157, %s156, 31
        %p159 = scmp.lt.s32.totalorder %s20, 0
        %s160 = scalar_select %p159, %s20, 0
        %s161 = sadd.s32 %s160, %s158
        %s162 = smul.addr %s161, 4
        %s163 = scalar_lea.vmem %s1, %s162
        %s164 = smul.u32 32, %s21
      $region16: #{encoder_lstm_forward.16} parent=11 // pred_fallthru
        _
      // Predicated region
      $region17: #{encoder_lstm_forward.16} parent=11 // pred_check
        %p165 = pneg %p110
      $region18: #{encoder_lstm_forward.16} parent=11 // pred_check_branch
        %167 = sbr.rel (%p165) target = $region20
      $region19: #{encoder_lstm_forward.16} parent=11 // pred_region
        %p168 = scmp.lt.s32.totalorder %s20, 0
        %s169 = scalar_select %p168, %s20, 0
        %s170 = scalar_lea.vmem %s2, %s169
      $region20: #{encoder_lstm_forward.16} parent=11 // pred_fallthru
        _
    $region12: #{encoder_lstm_forward.16} parent=5 // pred_fallthru
      _
    %p171 = scmp.lt.s32.totalorder %s9, 7
    // Predicated region
    $region21: #{encoder_lstm_forward.16} parent=5 // pred_check
      %p172 = pneg %p171
    $region22: #{encoder_lstm_forward.16} parent=5 // pred_check_branch
      %174 = sbr.rel (%p172) target = $region24
    $region23: #{encoder_lstm_forward.16} parent=5 // pred_region
      // Predicated region
      $region25: #{encoder_lstm_forward.16} parent=23 // pred_check
        %p175 = pneg %p50
      $region26: #{encoder_lstm_forward.16} parent=23 // pred_check_branch
        %177 = sbr.rel (%p175) target = $region28
      $region27: #{encoder_lstm_forward.16} parent=23 // pred_region
        %s178 = smul.u32 32, %s16
        %s179 = smul.u32 2, %s18
        %p180 = scmp.lt.s32.totalorder %s178, 223
        %s181 = scalar_select %p180, %s178, 223
        %p182 = scmp.lt.s32.totalorder %s179, 1
        %s183 = scalar_select %p182, %s179, 1
        %s184 = smul.addr %s181, 2
        %s185 = sadd.s32 %s183, %s184
        %s186 = smul.addr %s185, 4
        %s187 = scalar_lea.vmem %s0, %s186
        %s188 = smul.u32 32, %s16
        %s189 = smul.u32 2, %s18
      $region28: #{encoder_lstm_forward.16} parent=23 // pred_fallthru
        _
    $region24: #{encoder_lstm_forward.16} parent=5 // pred_fallthru
      _
    %p190 = scmp.le.s32.totalorder 1, %s9
    %p191 = scmp.lt.s32.totalorder %s9, 8
    %p192 = pnand %p190, %p191
    %p193 = pneg %p192
    // Predicated region
    $region29: #{encoder_lstm_forward.16} parent=5 // pred_check
      _
    $region30: #{encoder_lstm_forward.16} parent=5 // pred_check_branch
      %195 = sbr.rel (%p192) target = $region32
    $region31: #{encoder_lstm_forward.16} parent=5 // pred_region
      %s196 = ssub.s32 %s9, 1
      %s197 = smul.u32 32, %s19
      %s198 = smul.u32 2, %s21
      %p199 = scmp.lt.s32.totalorder %s197, 223
      %s200 = scalar_select %p199, %s197, 223
      %p201 = scmp.lt.s32.totalorder %s198, 1
      %s202 = scalar_select %p201, %s198, 1
      %s203 = smul.addr %s200, 2
      %s204 = sadd.s32 %s202, %s203
      %s205 = smul.addr %s204, 4
      %s206 = scalar_lea.vmem %s0, %s205
      %p207 = pneg %p56
      %p208 = pneg %p53
      %s209 = smul.u32 32, %s21
      %p210 = scmp.lt.s32.totalorder %s209, 31
      %s211 = scalar_select %p210, %s209, 31
      %p212 = scmp.lt.s32.totalorder %s20, 0
      %s213 = scalar_select %p212, %s20, 0
      %s214 = sadd.s32 %s213, %s211
      %s215 = smul.addr %s214, 4
      %s216 = scalar_lea.vmem %s1, %s215
      %p217 = pneg %p84
      %p218 = pneg %p81
      %p219 = scmp.lt.s32.totalorder %s20, 0
      %s220 = scalar_select %p219, %s20, 0
      %s221 = scalar_lea.vmem %s2, %s220
      %p222 = pneg %p110
      %p223 = pneg %p107
      %p224 = pneg %p138
      %p225 = pneg %p135
      %s226 = smul.u32 32, %s19
      %p227 = scmp.lt.s32.totalorder %s226, 223
      %s228 = scalar_select %p227, %s226, 223
      %p229 = scmp.lt.s32.totalorder %s20, 0
      %s230 = scalar_select %p229, %s20, 0
      %s231 = sadd.s32 %s230, %s228
      %s232 = smul.addr %s231, 8
      %s233 = scalar_lea.vmem %s3, %s232
      %s234 = smul.u32 32, %s19
      %s235 = smul.u32 2, %s21
      %p236 = scmp.lt.s32.totalorder %s234, 223
      %s237 = scalar_select %p236, %s234, 223
      %p238 = scmp.lt.s32.totalorder %s235, 1
      %s239 = scalar_select %p238, %s235, 1
      %s240 = smul.addr %s237, 2
      %s241 = sadd.s32 %s239, %s240
      %s242 = smul.addr %s241, 4
      %s243 = scalar_lea.vmem %s0, %s242
      %s244 = smul.u32 32, %s19
      %s245 = smul.u32 2, %s21
      %s246 = smul.u32 32, %s21
      %p247 = scmp.lt.s32.totalorder %s246, 31
      %s248 = scalar_select %p247, %s246, 31
      %p249 = scmp.lt.s32.totalorder %s20, 0
      %s250 = scalar_select %p249, %s20, 0
      %s251 = sadd.s32 %s250, %s248
      %s252 = smul.addr %s251, 4
      %s253 = scalar_lea.vmem %s1, %s252
      %s254 = smul.u32 32, %s21
      %p255 = scmp.lt.s32.totalorder %s20, 0
      %s256 = scalar_select %p255, %s20, 0
      %s257 = scalar_lea.vmem %s2, %s256
      %s258 = smul.u32 32, %s19
      %p259 = scmp.lt.s32.totalorder %s258, 223
      %s260 = scalar_select %p259, %s258, 223
      %p261 = scmp.lt.s32.totalorder %s20, 0
      %s262 = scalar_select %p261, %s20, 0
      %s263 = sadd.s32 %s262, %s260
      %s264 = smul.addr %s263, 8
      %s265 = scalar_lea.vmem %s3, %s264
      %s266 = smul.u32 32, %s19
      %p268 = scmp.eq.s32.totalorder %s21, 0
      // Predicated region
      $region33: #{encoder_lstm_forward.16} parent=31 // pred_check
        %p269 = pneg %p268
      $region34: #{encoder_lstm_forward.16} parent=31 // pred_check_branch
        %271 = sbr.rel (%p269) target = $region36
      $region35: #{encoder_lstm_forward.16} parent=31 // pred_region
        %272 = vst [vmem:[#allocation2] sm:$0xff] 0.0
        %273 = vst [vmem:[#allocation2 + $0x8] sm:$0xff] 0.0
        %274 = vst [vmem:[#allocation2 + $0x10] sm:$0xff] 0.0
        %275 = vst [vmem:[#allocation2 + $0x18] sm:$0xff] 0.0
        %276 = vst [vmem:[#allocation2 + $0x20] sm:$0xff] 0.0
        %277 = vst [vmem:[#allocation2 + $0x28] sm:$0xff] 0.0
        %278 = vst [vmem:[#allocation2 + $0x30] sm:$0xff] 0.0
        %279 = vst [vmem:[#allocation2 + $0x38] sm:$0xff] 0.0
        %280 = vst [vmem:[#allocation2 + $0x40] sm:$0xff] 0.0
        %281 = vst [vmem:[#allocation2 + $0x48] sm:$0xff] 0.0
        %282 = vst [vmem:[#allocation2 + $0x50] sm:$0xff] 0.0
        %283 = vst [vmem:[#allocation2 + $0x58] sm:$0xff] 0.0
        %284 = vst [vmem:[#allocation2 + $0x60] sm:$0xff] 0.0
        %285 = vst [vmem:[#allocation2 + $0x68] sm:$0xff] 0.0
        %286 = vst [vmem:[#allocation2 + $0x70] sm:$0xff] 0.0
        %287 = vst [vmem:[#allocation2 + $0x78] sm:$0xff] 0.0
        %288 = vst [vmem:[#allocation2 + $0x80] sm:$0xff] 0.0
        %289 = vst [vmem:[#allocation2 + $0x88] sm:$0xff] 0.0
        %290 = vst [vmem:[#allocation2 + $0x90] sm:$0xff] 0.0
        %291 = vst [vmem:[#allocation2 + $0x98] sm:$0xff] 0.0
        %292 = vst [vmem:[#allocation2 + $0xa0] sm:$0xff] 0.0
        %293 = vst [vmem:[#allocation2 + $0xa8] sm:$0xff] 0.0
        %294 = vst [vmem:[#allocation2 + $0xb0] sm:$0xff] 0.0
        %295 = vst [vmem:[#allocation2 + $0xb8] sm:$0xff] 0.0
        %296 = vst [vmem:[#allocation2 + $0xc0] sm:$0xff] 0.0
        %297 = vst [vmem:[#allocation2 + $0xc8] sm:$0xff] 0.0
        %298 = vst [vmem:[#allocation2 + $0xd0] sm:$0xff] 0.0
        %299 = vst [vmem:[#allocation2 + $0xd8] sm:$0xff] 0.0
        %300 = vst [vmem:[#allocation2 + $0xe0] sm:$0xff] 0.0
        %301 = vst [vmem:[#allocation2 + $0xe8] sm:$0xff] 0.0
        %302 = vst [vmem:[#allocation2 + $0xf0] sm:$0xff] 0.0
        %303 = vst [vmem:[#allocation2 + $0xf8] sm:$0xff] 0.0
      $region36: #{encoder_lstm_forward.16} parent=31 // pred_fallthru
        _
      %v304 = vld [vmem:[#allocation2] sm:$0xff]
      %v305 = vld [vmem:[#allocation2 + $0x8] sm:$0xff]
      %v306 = vld [vmem:[#allocation2 + $0x10] sm:$0xff]
      %v307 = vld [vmem:[#allocation2 + $0x18] sm:$0xff]
      %v308 = vld [vmem:[#allocation2 + $0x20] sm:$0xff]
      %v309 = vld [vmem:[#allocation2 + $0x28] sm:$0xff]
      %v310 = vld [vmem:[#allocation2 + $0x30] sm:$0xff]
      %v311 = vld [vmem:[#allocation2 + $0x38] sm:$0xff]
      %v312 = vld [vmem:[#allocation2 + $0x40] sm:$0xff]
      %v313 = vld [vmem:[#allocation2 + $0x48] sm:$0xff]
      %v314 = vld [vmem:[#allocation2 + $0x50] sm:$0xff]
      %v315 = vld [vmem:[#allocation2 + $0x58] sm:$0xff]
      %v316 = vld [vmem:[#allocation2 + $0x60] sm:$0xff]
      %v317 = vld [vmem:[#allocation2 + $0x68] sm:$0xff]
      %v318 = vld [vmem:[#allocation2 + $0x70] sm:$0xff]
      %v319 = vld [vmem:[#allocation2 + $0x78] sm:$0xff]
      %v320 = vld [vmem:[#allocation2 + $0x80] sm:$0xff]
      %v321 = vld [vmem:[#allocation2 + $0x88] sm:$0xff]
      %v322 = vld [vmem:[#allocation2 + $0x90] sm:$0xff]
      %v323 = vld [vmem:[#allocation2 + $0x98] sm:$0xff]
      %v324 = vld [vmem:[#allocation2 + $0xa0] sm:$0xff]
      %v325 = vld [vmem:[#allocation2 + $0xa8] sm:$0xff]
      %v326 = vld [vmem:[#allocation2 + $0xb0] sm:$0xff]
      %v327 = vld [vmem:[#allocation2 + $0xb8] sm:$0xff]
      %v328 = vld [vmem:[#allocation2 + $0xc0] sm:$0xff]
      %v329 = vld [vmem:[#allocation2 + $0xc8] sm:$0xff]
      %v330 = vld [vmem:[#allocation2 + $0xd0] sm:$0xff]
      %v331 = vld [vmem:[#allocation2 + $0xd8] sm:$0xff]
      %v332 = vld [vmem:[#allocation2 + $0xe0] sm:$0xff]
      %v333 = vld [vmem:[#allocation2 + $0xe8] sm:$0xff]
      %v334 = vld [vmem:[#allocation2 + $0xf0] sm:$0xff]
      %v335 = vld [vmem:[#allocation2 + $0xf8] sm:$0xff]
      %v336 = vld [vmem:[%s243] sm:$0xff]
      %v337 = vld [vmem:[%s243 + $0x8] sm:$0xff]
      %v338 = vld [vmem:[%s243 + $0x10] sm:$0xff]
      %v339 = vld [vmem:[%s243 + $0x18] sm:$0xff]
      %v340 = vld [vmem:[%s243 + $0x20] sm:$0xff]
      %v341 = vld [vmem:[%s243 + $0x28] sm:$0xff]
      %v342 = vld [vmem:[%s243 + $0x30] sm:$0xff]
      %v343 = vld [vmem:[%s243 + $0x38] sm:$0xff]
      %v344 = vld [vmem:[%s243 + $0x40] sm:$0xff]
      %v345 = vld [vmem:[%s243 + $0x48] sm:$0xff]
      %v346 = vld [vmem:[%s243 + $0x50] sm:$0xff]
      %v347 = vld [vmem:[%s243 + $0x58] sm:$0xff]
      %v348 = vld [vmem:[%s243 + $0x60] sm:$0xff]
      %v349 = vld [vmem:[%s243 + $0x68] sm:$0xff]
      %v350 = vld [vmem:[%s243 + $0x70] sm:$0xff]
      %v351 = vld [vmem:[%s243 + $0x78] sm:$0xff]
      %v352 = vld [vmem:[%s243 + $0x80] sm:$0xff]
      %v353 = vld [vmem:[%s243 + $0x88] sm:$0xff]
      %v354 = vld [vmem:[%s243 + $0x90] sm:$0xff]
      %v355 = vld [vmem:[%s243 + $0x98] sm:$0xff]
      %v356 = vld [vmem:[%s243 + $0xa0] sm:$0xff]
      %v357 = vld [vmem:[%s243 + $0xa8] sm:$0xff]
      %v358 = vld [vmem:[%s243 + $0xb0] sm:$0xff]
      %v359 = vld [vmem:[%s243 + $0xb8] sm:$0xff]
      %v360 = vld [vmem:[%s243 + $0xc0] sm:$0xff]
      %v361 = vld [vmem:[%s243 + $0xc8] sm:$0xff]
      %v362 = vld [vmem:[%s243 + $0xd0] sm:$0xff]
      %v363 = vld [vmem:[%s243 + $0xd8] sm:$0xff]
      %v364 = vld [vmem:[%s243 + $0xe0] sm:$0xff]
      %v365 = vld [vmem:[%s243 + $0xe8] sm:$0xff]
      %v366 = vld [vmem:[%s243 + $0xf0] sm:$0xff]
      %v367 = vld [vmem:[%s243 + $0xf8] sm:$0xff]
      %v368 = vld [vmem:[%s253] sm:$0xf]
      %v369 = vld [vmem:[%s253 + $0x4] sm:$0xf]
      %v370 = vld [vmem:[%s253 + $0x8] sm:$0xf]
      %v371 = vld [vmem:[%s253 + $0xc] sm:$0xf]
      %v372 = vld [vmem:[%s253 + $0x10] sm:$0xf]
      %v373 = vld [vmem:[%s253 + $0x14] sm:$0xf]
      %v374 = vld [vmem:[%s253 + $0x18] sm:$0xf]
      %v375 = vld [vmem:[%s253 + $0x1c] sm:$0xf]
      %v376 = vld [vmem:[%s253 + $0x20] sm:$0xf]
      %v377 = vld [vmem:[%s253 + $0x24] sm:$0xf]
      %v378 = vld [vmem:[%s253 + $0x28] sm:$0xf]
      %v379 = vld [vmem:[%s253 + $0x2c] sm:$0xf]
      %v380 = vld [vmem:[%s253 + $0x30] sm:$0xf]
      %v381 = vld [vmem:[%s253 + $0x34] sm:$0xf]
      %v382 = vld [vmem:[%s253 + $0x38] sm:$0xf]
      %v383 = vld [vmem:[%s253 + $0x3c] sm:$0xf]
      %v384 = vld [vmem:[%s253 + $0x40] sm:$0xf]
      %v385 = vld [vmem:[%s253 + $0x44] sm:$0xf]
      %v386 = vld [vmem:[%s253 + $0x48] sm:$0xf]
      %v387 = vld [vmem:[%s253 + $0x4c] sm:$0xf]
      %v388 = vld [vmem:[%s253 + $0x50] sm:$0xf]
      %v389 = vld [vmem:[%s253 + $0x54] sm:$0xf]
      %v390 = vld [vmem:[%s253 + $0x58] sm:$0xf]
      %v391 = vld [vmem:[%s253 + $0x5c] sm:$0xf]
      %v392 = vld [vmem:[%s253 + $0x60] sm:$0xf]
      %v393 = vld [vmem:[%s253 + $0x64] sm:$0xf]
      %v394 = vld [vmem:[%s253 + $0x68] sm:$0xf]
      %v395 = vld [vmem:[%s253 + $0x6c] sm:$0xf]
      %v396 = vld [vmem:[%s253 + $0x70] sm:$0xf]
      %v397 = vld [vmem:[%s253 + $0x74] sm:$0xf]
      %v398 = vld [vmem:[%s253 + $0x78] sm:$0xf]
      %v399 = vld [vmem:[%s253 + $0x7c] sm:$0xf]
      %v432 = vunpack.c.l.b16 %v336
      %v433 = vunpack.c.h.b16 %v336
      %v434 = vunpack.c.l.b16 %v337
      %v435 = vunpack.c.h.b16 %v337
      %v436 = vunpack.c.l.b16 %v338
      %v437 = vunpack.c.h.b16 %v338
      %v438 = vunpack.c.l.b16 %v339
      %v439 = vunpack.c.h.b16 %v339
      %v440 = vunpack.c.l.b16 %v340
      %v441 = vunpack.c.h.b16 %v340
      %v442 = vunpack.c.l.b16 %v341
      %v443 = vunpack.c.h.b16 %v341
      %v444 = vunpack.c.l.b16 %v342
      %v445 = vunpack.c.h.b16 %v342
      %v446 = vunpack.c.l.b16 %v343
      %v447 = vunpack.c.h.b16 %v343
      %v448 = vunpack.c.l.b16 %v344
      %v449 = vunpack.c.h.b16 %v344
      %v450 = vunpack.c.l.b16 %v345
      %v451 = vunpack.c.h.b16 %v345
      %v452 = vunpack.c.l.b16 %v346
      %v453 = vunpack.c.h.b16 %v346
      %v454 = vunpack.c.l.b16 %v347
      %v455 = vunpack.c.h.b16 %v347
      %v456 = vunpack.c.l.b16 %v348
      %v457 = vunpack.c.h.b16 %v348
      %v458 = vunpack.c.l.b16 %v349
      %v459 = vunpack.c.h.b16 %v349
      %v460 = vunpack.c.l.b16 %v350
      %v461 = vunpack.c.h.b16 %v350
      %v462 = vunpack.c.l.b16 %v351
      %v463 = vunpack.c.h.b16 %v351
      %v464 = vunpack.c.l.b16 %v352
      %v465 = vunpack.c.h.b16 %v352
      %v466 = vunpack.c.l.b16 %v353
      %v467 = vunpack.c.h.b16 %v353
      %v468 = vunpack.c.l.b16 %v354
      %v469 = vunpack.c.h.b16 %v354
      %v470 = vunpack.c.l.b16 %v355
      %v471 = vunpack.c.h.b16 %v355
      %v472 = vunpack.c.l.b16 %v356
      %v473 = vunpack.c.h.b16 %v356
      %v474 = vunpack.c.l.b16 %v357
      %v475 = vunpack.c.h.b16 %v357
      %v476 = vunpack.c.l.b16 %v358
      %v477 = vunpack.c.h.b16 %v358
      %v478 = vunpack.c.l.b16 %v359
      %v479 = vunpack.c.h.b16 %v359
      %v480 = vunpack.c.l.b16 %v360
      %v481 = vunpack.c.h.b16 %v360
      %v482 = vunpack.c.l.b16 %v361
      %v483 = vunpack.c.h.b16 %v361
      %v484 = vunpack.c.l.b16 %v362
      %v485 = vunpack.c.h.b16 %v362
      %v486 = vunpack.c.l.b16 %v363
      %v487 = vunpack.c.h.b16 %v363
      %v488 = vunpack.c.l.b16 %v364
      %v489 = vunpack.c.h.b16 %v364
      %v490 = vunpack.c.l.b16 %v365
      %v491 = vunpack.c.h.b16 %v365
      %v492 = vunpack.c.l.b16 %v366
      %v493 = vunpack.c.h.b16 %v366
      %v494 = vunpack.c.l.b16 %v367
      %v495 = vunpack.c.h.b16 %v367
      %v496 = vpack.c.b16 %v434, %v432
      %v497 = vpack.c.b16 %v435, %v433
      %v498 = vpack.c.b16 %v438, %v436
      %v499 = vpack.c.b16 %v439, %v437
      %v500 = vpack.c.b16 %v442, %v440
      %v501 = vpack.c.b16 %v443, %v441
      %v502 = vpack.c.b16 %v446, %v444
      %v503 = vpack.c.b16 %v447, %v445
      %v504 = vpack.c.b16 %v450, %v448
      %v505 = vpack.c.b16 %v451, %v449
      %v506 = vpack.c.b16 %v454, %v452
      %v507 = vpack.c.b16 %v455, %v453
      %v508 = vpack.c.b16 %v458, %v456
      %v509 = vpack.c.b16 %v459, %v457
      %v510 = vpack.c.b16 %v462, %v460
      %v511 = vpack.c.b16 %v463, %v461
      %v512 = vpack.c.b16 %v466, %v464
      %v513 = vpack.c.b16 %v467, %v465
      %v514 = vpack.c.b16 %v470, %v468
      %v515 = vpack.c.b16 %v471, %v469
      %v516 = vpack.c.b16 %v474, %v472
      %v517 = vpack.c.b16 %v475, %v473
      %v518 = vpack.c.b16 %v478, %v476
      %v519 = vpack.c.b16 %v479, %v477
      %v520 = vpack.c.b16 %v482, %v480
      %v521 = vpack.c.b16 %v483, %v481
      %v522 = vpack.c.b16 %v486, %v484
      %v523 = vpack.c.b16 %v487, %v485
      %v524 = vpack.c.b16 %v490, %v488
      %v525 = vpack.c.b16 %v491, %v489
      %v526 = vpack.c.b16 %v494, %v492
      %v527 = vpack.c.b16 %v495, %v493
      %v592 = vunpack.c.l.b16 %v368
      %v593 = vunpack.c.l.b16 %v369
      %v594 = vunpack.c.l.b16 %v370
      %v595 = vunpack.c.l.b16 %v371
      %v596 = vunpack.c.l.b16 %v372
      %v597 = vunpack.c.l.b16 %v373
      %v598 = vunpack.c.l.b16 %v374
      %v599 = vunpack.c.l.b16 %v375
      %v600 = vunpack.c.l.b16 %v376
      %v601 = vunpack.c.l.b16 %v377
      %v602 = vunpack.c.l.b16 %v378
      %v603 = vunpack.c.l.b16 %v379
      %v604 = vunpack.c.l.b16 %v380
      %v605 = vunpack.c.l.b16 %v381
      %v606 = vunpack.c.l.b16 %v382
      %v607 = vunpack.c.l.b16 %v383
      %v608 = vunpack.c.l.b16 %v384
      %v609 = vunpack.c.l.b16 %v385
      %v610 = vunpack.c.l.b16 %v386
      %v611 = vunpack.c.l.b16 %v387
      %v612 = vunpack.c.l.b16 %v388
      %v613 = vunpack.c.l.b16 %v389
      %v614 = vunpack.c.l.b16 %v390
      %v615 = vunpack.c.l.b16 %v391
      %v616 = vunpack.c.l.b16 %v392
      %v617 = vunpack.c.l.b16 %v393
      %v618 = vunpack.c.l.b16 %v394
      %v619 = vunpack.c.l.b16 %v395
      %v620 = vunpack.c.l.b16 %v396
      %v621 = vunpack.c.l.b16 %v397
      %v622 = vunpack.c.l.b16 %v398
      %v623 = vunpack.c.l.b16 %v399
      %v624 = vpack.c.b16 %v593, %v592
      %v625 = vpack.c.b16 %v595, %v594
      %v626 = vpack.c.b16 %v597, %v596
      %v627 = vpack.c.b16 %v599, %v598
      %v628 = vpack.c.b16 %v601, %v600
      %v629 = vpack.c.b16 %v603, %v602
      %v630 = vpack.c.b16 %v605, %v604
      %v631 = vpack.c.b16 %v607, %v606
      %v632 = vpack.c.b16 %v609, %v608
      %v633 = vpack.c.b16 %v611, %v610
      %v634 = vpack.c.b16 %v613, %v612
      %v635 = vpack.c.b16 %v615, %v614
      %v636 = vpack.c.b16 %v617, %v616
      %v637 = vpack.c.b16 %v619, %v618
      %v638 = vpack.c.b16 %v621, %v620
      %v639 = vpack.c.b16 %v623, %v622
      %656 = vmatprep.subr.bf16.mxu0 0
      %657 = vmatpush1.bf16.msra.mxu0 %v624
      %658 = vmatprep.subr.bf16.mxu0 0
      %659 = vmatpush1.bf16.msra.mxu0 %v625
      %660 = vmatprep.subr.bf16.mxu0 0
      %661 = vmatpush1.bf16.msra.mxu0 %v626
      %662 = vmatprep.subr.bf16.mxu0 0
      %663 = vmatpush1.bf16.msra.mxu0 %v627
      %664 = vmatprep.subr.bf16.mxu0 0
      %665 = vmatpush1.bf16.msra.mxu0 %v628
      %666 = vmatprep.subr.bf16.mxu0 0
      %667 = vmatpush1.bf16.msra.mxu0 %v629
      %668 = vmatprep.subr.bf16.mxu0 0
      %669 = vmatpush1.bf16.msra.mxu0 %v630
      %670 = vmatprep.subr.bf16.mxu0 0
      %671 = vmatpush1.bf16.msra.mxu0 %v631
      %672 = vmatprep.subr.bf16.mxu0 0
      %673 = vmatpush1.bf16.msra.mxu0 %v632
      %674 = vmatprep.subr.bf16.mxu0 0
      %675 = vmatpush1.bf16.msra.mxu0 %v633
      %676 = vmatprep.subr.bf16.mxu0 0
      %677 = vmatpush1.bf16.msra.mxu0 %v634
      %678 = vmatprep.subr.bf16.mxu0 0
      %679 = vmatpush1.bf16.msra.mxu0 %v635
      %680 = vmatprep.subr.bf16.mxu0 0
      %681 = vmatpush1.bf16.msra.mxu0 %v636
      %682 = vmatprep.subr.bf16.mxu0 0
      %683 = vmatpush1.bf16.msra.mxu0 %v637
      %684 = vmatprep.subr.bf16.mxu0 0
      %685 = vmatpush1.bf16.msra.mxu0 %v638
      %686 = vmatprep.subr.bf16.mxu0 0
      %687 = vmatpush1.bf16.msra.mxu0 %v639
      %688 = vmatprep.mubr.bf16.mxu0 %v497
      %689 = vmatmul.mubr.bf16.gmra.mrb[0].mxu0 %v496
      %v690 = vpop.f32.mrb[0].mxu0
      %v691 = vadd.f32 0.0, %v690
      %v692 = vpop.f32.mrb[0].mxu0
      %v693 = vpop.f32.mrb[0].mxu0
      %v694 = vadd.f32 0.0, %v693
      %v695 = vpop.f32.mrb[0].mxu0
      %696 = vmatprep.mubr.bf16.mxu0 %v499
      %697 = vmatmul.mubr.bf16.gmra.mrb[0].mxu0 %v498
      %v698 = vpop.f32.mrb[0].mxu0
      %v699 = vadd.f32 0.0, %v698
      %v700 = vpop.f32.mrb[0].mxu0
      %v701 = vpop.f32.mrb[0].mxu0
      %v702 = vadd.f32 0.0, %v701
      %v703 = vpop.f32.mrb[0].mxu0
      %704 = vmatprep.mubr.bf16.mxu0 %v501
      %705 = vmatmul.mubr.bf16.gmra.mrb[0].mxu0 %v500
      %v706 = vpop.f32.mrb[0].mxu0
      %v707 = vadd.f32 0.0, %v706
      %v708 = vpop.f32.mrb[0].mxu0
      %v709 = vpop.f32.mrb[0].mxu0
      %v710 = vadd.f32 0.0, %v709
      %v711 = vpop.f32.mrb[0].mxu0
      %712 = vmatprep.mubr.bf16.mxu0 %v503
      %713 = vmatmul.mubr.bf16.gmra.mrb[0].mxu0 %v502
      %v714 = vpop.f32.mrb[0].mxu0
      %v715 = vadd.f32 0.0, %v714
      %v716 = vpop.f32.mrb[0].mxu0
      %v717 = vpop.f32.mrb[0].mxu0
      %v718 = vadd.f32 0.0, %v717
      %v719 = vpop.f32.mrb[0].mxu0
      %720 = vmatprep.mubr.bf16.mxu0 %v505
      %721 = vmatmul.mubr.bf16.gmra.mrb[0].mxu0 %v504
      %v722 = vpop.f32.mrb[0].mxu0
      %v723 = vadd.f32 0.0, %v722
      %v724 = vpop.f32.mrb[0].mxu0
      %v725 = vpop.f32.mrb[0].mxu0
      %v726 = vadd.f32 0.0, %v725
      %v727 = vpop.f32.mrb[0].mxu0
      %728 = vmatprep.mubr.bf16.mxu0 %v507
      %729 = vmatmul.mubr.bf16.gmra.mrb[0].mxu0 %v506
      %v730 = vpop.f32.mrb[0].mxu0
      %v731 = vadd.f32 0.0, %v730
      %v732 = vpop.f32.mrb[0].mxu0
      %v733 = vpop.f32.mrb[0].mxu0
      %v734 = vadd.f32 0.0, %v733
      %v735 = vpop.f32.mrb[0].mxu0
      %736 = vmatprep.mubr.bf16.mxu0 %v509
      %737 = vmatmul.mubr.bf16.gmra.mrb[0].mxu0 %v508
      %v738 = vpop.f32.mrb[0].mxu0
      %v739 = vadd.f32 0.0, %v738
      %v740 = vpop.f32.mrb[0].mxu0
      %v741 = vpop.f32.mrb[0].mxu0
      %v742 = vadd.f32 0.0, %v741
      %v743 = vpop.f32.mrb[0].mxu0
      %744 = vmatprep.mubr.bf16.mxu0 %v511
      %745 = vmatmul.mubr.bf16.gmra.mrb[0].mxu0 %v510
      %v746 = vpop.f32.mrb[0].mxu0
      %v747 = vadd.f32 0.0, %v746
      %v748 = vpop.f32.mrb[0].mxu0
      %v749 = vpop.f32.mrb[0].mxu0
      %v750 = vadd.f32 0.0, %v749
      %v751 = vpop.f32.mrb[0].mxu0
      %752 = vmatprep.mubr.bf16.mxu0 %v513
      %753 = vmatmul.mubr.bf16.gmra.mrb[0].mxu0 %v512
      %v754 = vpop.f32.mrb[0].mxu0
      %v755 = vadd.f32 0.0, %v754
      %v756 = vpop.f32.mrb[0].mxu0
      %v757 = vpop.f32.mrb[0].mxu0
      %v758 = vadd.f32 0.0, %v757
      %v759 = vpop.f32.mrb[0].mxu0
      %760 = vmatprep.mubr.bf16.mxu0 %v515
      %761 = vmatmul.mubr.bf16.gmra.mrb[0].mxu0 %v514
      %v762 = vpop.f32.mrb[0].mxu0
      %v763 = vadd.f32 0.0, %v762
      %v764 = vpop.f32.mrb[0].mxu0
      %v765 = vpop.f32.mrb[0].mxu0
      %v766 = vadd.f32 0.0, %v765
      %v767 = vpop.f32.mrb[0].mxu0
      %768 = vmatprep.mubr.bf16.mxu0 %v517
      %769 = vmatmul.mubr.bf16.gmra.mrb[0].mxu0 %v516
      %v770 = vpop.f32.mrb[0].mxu0
      %v771 = vadd.f32 0.0, %v770
      %v772 = vpop.f32.mrb[0].mxu0
      %v773 = vpop.f32.mrb[0].mxu0
      %v774 = vadd.f32 0.0, %v773
      %v775 = vpop.f32.mrb[0].mxu0
      %776 = vmatprep.mubr.bf16.mxu0 %v519
      %777 = vmatmul.mubr.bf16.gmra.mrb[0].mxu0 %v518
      %v778 = vpop.f32.mrb[0].mxu0
      %v779 = vadd.f32 0.0, %v778
      %v780 = vpop.f32.mrb[0].mxu0
      %v781 = vpop.f32.mrb[0].mxu0
      %v782 = vadd.f32 0.0, %v781
      %v783 = vpop.f32.mrb[0].mxu0
      %784 = vmatprep.mubr.bf16.mxu0 %v521
      %785 = vmatmul.mubr.bf16.gmra.mrb[0].mxu0 %v520
      %v786 = vpop.f32.mrb[0].mxu0
      %v787 = vadd.f32 0.0, %v786
      %v788 = vpop.f32.mrb[0].mxu0
      %v789 = vpop.f32.mrb[0].mxu0
      %v790 = vadd.f32 0.0, %v789
      %v791 = vpop.f32.mrb[0].mxu0
      %792 = vmatprep.mubr.bf16.mxu0 %v523
      %793 = vmatmul.mubr.bf16.gmra.mrb[0].mxu0 %v522
      %v794 = vpop.f32.mrb[0].mxu0
      %v795 = vadd.f32 0.0, %v794
      %v796 = vpop.f32.mrb[0].mxu0
      %v797 = vpop.f32.mrb[0].mxu0
      %v798 = vadd.f32 0.0, %v797
      %v799 = vpop.f32.mrb[0].mxu0
      %800 = vmatprep.mubr.bf16.mxu0 %v525
      %801 = vmatmul.mubr.bf16.gmra.mrb[0].mxu0 %v524
      %v802 = vpop.f32.mrb[0].mxu0
      %v803 = vadd.f32 0.0, %v802
      %v804 = vpop.f32.mrb[0].mxu0
      %v805 = vpop.f32.mrb[0].mxu0
      %v806 = vadd.f32 0.0, %v805
      %v807 = vpop.f32.mrb[0].mxu0
      %808 = vmatprep.mubr.bf16.mxu0 %v527
      %809 = vmatmul.mubr.bf16.gmra.mrb[0].mxu0 %v526
      %v810 = vpop.f32.mrb[0].mxu0
      %v811 = vadd.f32 0.0, %v810
      %v812 = vpop.f32.mrb[0].mxu0
      %v813 = vpop.f32.mrb[0].mxu0
      %v814 = vadd.f32 0.0, %v813
      %v815 = vpop.f32.mrb[0].mxu0
      %816 = vdwg.mxu0
      %v817 = vadd.f32 %v304, %v691
      %v818 = vadd.f32 %v305, %v694
      %v819 = vadd.f32 %v306, %v699
      %v820 = vadd.f32 %v307, %v702
      %v821 = vadd.f32 %v308, %v707
      %v822 = vadd.f32 %v309, %v710
      %v823 = vadd.f32 %v310, %v715
      %v824 = vadd.f32 %v311, %v718
      %v825 = vadd.f32 %v312, %v723
      %v826 = vadd.f32 %v313, %v726
      %v827 = vadd.f32 %v314, %v731
      %v828 = vadd.f32 %v315, %v734
      %v829 = vadd.f32 %v316, %v739
      %v830 = vadd.f32 %v317, %v742
      %v831 = vadd.f32 %v318, %v747
      %v832 = vadd.f32 %v319, %v750
      %v833 = vadd.f32 %v320, %v755
      %v834 = vadd.f32 %v321, %v758
      %v835 = vadd.f32 %v322, %v763
      %v836 = vadd.f32 %v323, %v766
      %v837 = vadd.f32 %v324, %v771
      %v838 = vadd.f32 %v325, %v774
      %v839 = vadd.f32 %v326, %v779
      %v840 = vadd.f32 %v327, %v782
      %v841 = vadd.f32 %v328, %v787
      %v842 = vadd.f32 %v329, %v790
      %v843 = vadd.f32 %v330, %v795
      %v844 = vadd.f32 %v331, %v798
      %v845 = vadd.f32 %v332, %v803
      %v846 = vadd.f32 %v333, %v806
      %v847 = vadd.f32 %v334, %v811
      %v848 = vadd.f32 %v335, %v814
      %849 = vst [vmem:[#allocation2] sm:$0xff] %v817
      %850 = vst [vmem:[#allocation2 + $0x8] sm:$0xff] %v818
      %851 = vst [vmem:[#allocation2 + $0x10] sm:$0xff] %v819
      %852 = vst [vmem:[#allocation2 + $0x18] sm:$0xff] %v820
      %853 = vst [vmem:[#allocation2 + $0x20] sm:$0xff] %v821
      %854 = vst [vmem:[#allocation2 + $0x28] sm:$0xff] %v822
      %855 = vst [vmem:[#allocation2 + $0x30] sm:$0xff] %v823
      %856 = vst [vmem:[#allocation2 + $0x38] sm:$0xff] %v824
      %857 = vst [vmem:[#allocation2 + $0x40] sm:$0xff] %v825
      %858 = vst [vmem:[#allocation2 + $0x48] sm:$0xff] %v826
      %859 = vst [vmem:[#allocation2 + $0x50] sm:$0xff] %v827
      %860 = vst [vmem:[#allocation2 + $0x58] sm:$0xff] %v828
      %861 = vst [vmem:[#allocation2 + $0x60] sm:$0xff] %v829
      %862 = vst [vmem:[#allocation2 + $0x68] sm:$0xff] %v830
      %863 = vst [vmem:[#allocation2 + $0x70] sm:$0xff] %v831
      %864 = vst [vmem:[#allocation2 + $0x78] sm:$0xff] %v832
      %865 = vst [vmem:[#allocation2 + $0x80] sm:$0xff] %v833
      %866 = vst [vmem:[#allocation2 + $0x88] sm:$0xff] %v834
      %867 = vst [vmem:[#allocation2 + $0x90] sm:$0xff] %v835
      %868 = vst [vmem:[#allocation2 + $0x98] sm:$0xff] %v836
      %869 = vst [vmem:[#allocation2 + $0xa0] sm:$0xff] %v837
      %870 = vst [vmem:[#allocation2 + $0xa8] sm:$0xff] %v838
      %871 = vst [vmem:[#allocation2 + $0xb0] sm:$0xff] %v839
      %872 = vst [vmem:[#allocation2 + $0xb8] sm:$0xff] %v840
      %873 = vst [vmem:[#allocation2 + $0xc0] sm:$0xff] %v841
      %874 = vst [vmem:[#allocation2 + $0xc8] sm:$0xff] %v842
      %875 = vst [vmem:[#allocation2 + $0xd0] sm:$0xff] %v843
      %876 = vst [vmem:[#allocation2 + $0xd8] sm:$0xff] %v844
      %877 = vst [vmem:[#allocation2 + $0xe0] sm:$0xff] %v845
      %878 = vst [vmem:[#allocation2 + $0xe8] sm:$0xff] %v846
      %879 = vst [vmem:[#allocation2 + $0xf0] sm:$0xff] %v847
      %880 = vst [vmem:[#allocation2 + $0xf8] sm:$0xff] %v848
      // Predicated region
      $region37: #{encoder_lstm_forward.16} parent=31 // pred_check
        %p881 = pneg %p268
      $region38: #{encoder_lstm_forward.16} parent=31 // pred_check_branch
        %883 = sbr.rel (%p881) target = $region40
      $region39: #{encoder_lstm_forward.16} parent=31 // pred_region
        %v884 = vld [vmem:[#allocation2] sm:$0xff]
        %v885 = vld [vmem:[#allocation2 + $0x8] sm:$0xff]
        %v886 = vld [vmem:[#allocation2 + $0x10] sm:$0xff]
        %v887 = vld [vmem:[#allocation2 + $0x18] sm:$0xff]
        %v888 = vld [vmem:[#allocation2 + $0x20] sm:$0xff]
        %v889 = vld [vmem:[#allocation2 + $0x28] sm:$0xff]
        %v890 = vld [vmem:[#allocation2 + $0x30] sm:$0xff]
        %v891 = vld [vmem:[#allocation2 + $0x38] sm:$0xff]
        %v892 = vld [vmem:[#allocation2 + $0x40] sm:$0xff]
        %v893 = vld [vmem:[#allocation2 + $0x48] sm:$0xff]
        %v894 = vld [vmem:[#allocation2 + $0x50] sm:$0xff]
        %v895 = vld [vmem:[#allocation2 + $0x58] sm:$0xff]
        %v896 = vld [vmem:[#allocation2 + $0x60] sm:$0xff]
        %v897 = vld [vmem:[#allocation2 + $0x68] sm:$0xff]
        %v898 = vld [vmem:[#allocation2 + $0x70] sm:$0xff]
        %v899 = vld [vmem:[#allocation2 + $0x78] sm:$0xff]
        %v900 = vld [vmem:[#allocation2 + $0x80] sm:$0xff]
        %v901 = vld [vmem:[#allocation2 + $0x88] sm:$0xff]
        %v902 = vld [vmem:[#allocation2 + $0x90] sm:$0xff]
        %v903 = vld [vmem:[#allocation2 + $0x98] sm:$0xff]
        %v904 = vld [vmem:[#allocation2 + $0xa0] sm:$0xff]
        %v905 = vld [vmem:[#allocation2 + $0xa8] sm:$0xff]
        %v906 = vld [vmem:[#allocation2 + $0xb0] sm:$0xff]
        %v907 = vld [vmem:[#allocation2 + $0xb8] sm:$0xff]
        %v908 = vld [vmem:[#allocation2 + $0xc0] sm:$0xff]
        %v909 = vld [vmem:[#allocation2 + $0xc8] sm:$0xff]
        %v910 = vld [vmem:[#allocation2 + $0xd0] sm:$0xff]
        %v911 = vld [vmem:[#allocation2 + $0xd8] sm:$0xff]
        %v912 = vld [vmem:[#allocation2 + $0xe0] sm:$0xff]
        %v913 = vld [vmem:[#allocation2 + $0xe8] sm:$0xff]
        %v914 = vld [vmem:[#allocation2 + $0xf0] sm:$0xff]
        %v915 = vld [vmem:[#allocation2 + $0xf8] sm:$0xff]
        %v916 = vld [vmem:[%s257] sm:$0x1]
        %v918 = vlaneseq
        %v919 = vshrl.u32 %v918, 7
        %v920 = vsub.s32 0, %v919
        %v921 = vrot.slane %v916, %v920
        %v923 = vadd.f32 %v884, %v921
        %v924 = vadd.f32 %v885, %v921
        %v925 = vadd.f32 %v886, %v921
        %v926 = vadd.f32 %v887, %v921
        %v927 = vadd.f32 %v888, %v921
        %v928 = vadd.f32 %v889, %v921
        %v929 = vadd.f32 %v890, %v921
        %v930 = vadd.f32 %v891, %v921
        %v931 = vadd.f32 %v892, %v921
        %v932 = vadd.f32 %v893, %v921
        %v933 = vadd.f32 %v894, %v921
        %v934 = vadd.f32 %v895, %v921
        %v935 = vadd.f32 %v896, %v921
        %v936 = vadd.f32 %v897, %v921
        %v937 = vadd.f32 %v898, %v921
        %v938 = vadd.f32 %v899, %v921
        %v939 = vadd.f32 %v900, %v921
        %v940 = vadd.f32 %v901, %v921
        %v941 = vadd.f32 %v902, %v921
        %v942 = vadd.f32 %v903, %v921
        %v943 = vadd.f32 %v904, %v921
        %v944 = vadd.f32 %v905, %v921
        %v945 = vadd.f32 %v906, %v921
        %v946 = vadd.f32 %v907, %v921
        %v947 = vadd.f32 %v908, %v921
        %v948 = vadd.f32 %v909, %v921
        %v949 = vadd.f32 %v910, %v921
        %v950 = vadd.f32 %v911, %v921
        %v951 = vadd.f32 %v912, %v921
        %v952 = vadd.f32 %v913, %v921
        %v953 = vadd.f32 %v914, %v921
        %v954 = vadd.f32 %v915, %v921
        %v955 = vmax.f32 %v923, 0.0
        %v956 = vmax.f32 %v924, 0.0
        %v957 = vmax.f32 %v925, 0.0
        %v958 = vmax.f32 %v926, 0.0
        %v959 = vmax.f32 %v927, 0.0
        %v960 = vmax.f32 %v928, 0.0
        %v961 = vmax.f32 %v929, 0.0
        %v962 = vmax.f32 %v930, 0.0
        %v963 = vmax.f32 %v931, 0.0
        %v964 = vmax.f32 %v932, 0.0
        %v965 = vmax.f32 %v933, 0.0
        %v966 = vmax.f32 %v934, 0.0
        %v967 = vmax.f32 %v935, 0.0
        %v968 = vmax.f32 %v936, 0.0
        %v969 = vmax.f32 %v937, 0.0
        %v970 = vmax.f32 %v938, 0.0
        %v971 = vmax.f32 %v939, 0.0
        %v972 = vmax.f32 %v940, 0.0
        %v973 = vmax.f32 %v941, 0.0
        %v974 = vmax.f32 %v942, 0.0
        %v975 = vmax.f32 %v943, 0.0
        %v976 = vmax.f32 %v944, 0.0
        %v977 = vmax.f32 %v945, 0.0
        %v978 = vmax.f32 %v946, 0.0
        %v979 = vmax.f32 %v947, 0.0
        %v980 = vmax.f32 %v948, 0.0
        %v981 = vmax.f32 %v949, 0.0
        %v982 = vmax.f32 %v950, 0.0
        %v983 = vmax.f32 %v951, 0.0
        %v984 = vmax.f32 %v952, 0.0
        %v985 = vmax.f32 %v953, 0.0
        %v986 = vmax.f32 %v954, 0.0
        %987 = vst [vmem:[%s265] sm:$0xff] %v955
        %988 = vst [vmem:[%s265 + $0x8] sm:$0xff] %v956
        %989 = vst [vmem:[%s265 + $0x10] sm:$0xff] %v957
        %990 = vst [vmem:[%s265 + $0x18] sm:$0xff] %v958
        %991 = vst [vmem:[%s265 + $0x20] sm:$0xff] %v959
        %992 = vst [vmem:[%s265 + $0x28] sm:$0xff] %v960
        %993 = vst [vmem:[%s265 + $0x30] sm:$0xff] %v961
        %994 = vst [vmem:[%s265 + $0x38] sm:$0xff] %v962
        %995 = vst [vmem:[%s265 + $0x40] sm:$0xff] %v963
        %996 = vst [vmem:[%s265 + $0x48] sm:$0xff] %v964
        %997 = vst [vmem:[%s265 + $0x50] sm:$0xff] %v965
        %998 = vst [vmem:[%s265 + $0x58] sm:$0xff] %v966
        %999 = vst [vmem:[%s265 + $0x60] sm:$0xff] %v967
        %1000 = vst [vmem:[%s265 + $0x68] sm:$0xff] %v968
        %1001 = vst [vmem:[%s265 + $0x70] sm:$0xff] %v969
        %1002 = vst [vmem:[%s265 + $0x78] sm:$0xff] %v970
        %1003 = vst [vmem:[%s265 + $0x80] sm:$0xff] %v971
        %1004 = vst [vmem:[%s265 + $0x88] sm:$0xff] %v972
        %1005 = vst [vmem:[%s265 + $0x90] sm:$0xff] %v973
        %1006 = vst [vmem:[%s265 + $0x98] sm:$0xff] %v974
        %1007 = vst [vmem:[%s265 + $0xa0] sm:$0xff] %v975
        %1008 = vst [vmem:[%s265 + $0xa8] sm:$0xff] %v976
        %1009 = vst [vmem:[%s265 + $0xb0] sm:$0xff] %v977
        %1010 = vst [vmem:[%s265 + $0xb8] sm:$0xff] %v978
        %1011 = vst [vmem:[%s265 + $0xc0] sm:$0xff] %v979
        %1012 = vst [vmem:[%s265 + $0xc8] sm:$0xff] %v980
        %1013 = vst [vmem:[%s265 + $0xd0] sm:$0xff] %v981
        %1014 = vst [vmem:[%s265 + $0xd8] sm:$0xff] %v982
        %1015 = vst [vmem:[%s265 + $0xe0] sm:$0xff] %v983
        %1016 = vst [vmem:[%s265 + $0xe8] sm:$0xff] %v984
        %1017 = vst [vmem:[%s265 + $0xf0] sm:$0xff] %v985
        %1018 = vst [vmem:[%s265 + $0xf8] sm:$0xff] %v986
      $region40: #{encoder_lstm_forward.16} parent=31 // pred_fallthru
        _
      %s1019 = smul.u32 32, %s19
      %p1020 = scmp.lt.s32.totalorder %s1019, 223
      %s1021 = scalar_select %p1020, %s1019, 223
      %p1022 = scmp.lt.s32.totalorder %s20, 0
      %s1023 = scalar_select %p1022, %s20, 0
      %s1024 = sadd.s32 %s1023, %s1021
      %s1025 = smul.addr %s1024, 8
      %s1026 = scalar_lea.vmem %s3, %s1025
      // Predicated region
      $region41: #{encoder_lstm_forward.16} parent=31 // pred_check
        %p1027 = pneg %p135
      $region42: #{encoder_lstm_forward.16} parent=31 // pred_check_branch
        %1029 = sbr.rel (%p1027) target = $region44
      $region43: #{encoder_lstm_forward.16} parent=31 // pred_region
        %s1030 = smul.u32 32, %s19
      $region44: #{encoder_lstm_forward.16} parent=31 // pred_fallthru
        _
    $region32: #{encoder_lstm_forward.16} parent=5 // pred_fallthru
      _
    %p1031 = scmp.le.s32.totalorder 2, %s9
    // Predicated region
    $region45: #{encoder_lstm_forward.16} parent=5 // pred_check
      %p1032 = pneg %p1031
    $region46: #{encoder_lstm_forward.16} parent=5 // pred_check_branch
      %1034 = sbr.rel (%p1032) target = $region48
    $region47: #{encoder_lstm_forward.16} parent=5 // pred_region
      %s1035 = ssub.s32 %s9, 2
      // Predicated region
      $region49: #{encoder_lstm_forward.16} parent=47 // pred_check
        %p1036 = pneg %p141
      $region50: #{encoder_lstm_forward.16} parent=47 // pred_check_branch
        %1038 = sbr.rel (%p1036) target = $region52
      $region51: #{encoder_lstm_forward.16} parent=47 // pred_region
        %s1039 = smul.u32 32, %s22
        %p1040 = scmp.lt.s32.totalorder %s1039, 223
        %s1041 = scalar_select %p1040, %s1039, 223
        %p1042 = scmp.lt.s32.totalorder %s23, 0
        %s1043 = scalar_select %p1042, %s23, 0
        %s1044 = sadd.s32 %s1043, %s1041
        %s1045 = smul.addr %s1044, 8
        %s1046 = scalar_lea.vmem %s3, %s1045
      $region52: #{encoder_lstm_forward.16} parent=47 // pred_fallthru
        _
    $region48: #{encoder_lstm_forward.16} parent=5 // pred_fallthru
      _
  $region6: #{encoder_lstm_forward.16} parent=0 // loop_footer
    %s13 = sadd.s32 1, %s9
  $region7: #{encoder_lstm_forward.16} parent=0 // loop_footer_branch
    %8 = sbr.rel target = $region3
  $region8: #{encoder_lstm_forward.16} parent=0 // loop_exit
    _

// kernel: encoder_lstm_forward.17
$region0: #{encoder_lstm_forward.17}
  #allocation0 [shape = 'u32[]', space=smem, size = 0x4, offset = 0x4, fixed_abs, tag = 'smem constant byte address 0x4 - core index']
  #allocation1 [shape = 'u32[144,128]{1,0:T(1,128)}', space=vmem, size = 0x12000, scoped, tag = 'internal scratch']
  %s0 = inlined_call_operand.vmem [shape: f32[160,5,32], index: 0, kind: input, shape index: {}]
  %s1 = inlined_call_operand.vmem [shape: f32[80,5,16], index: 1, kind: output, shape index: {}]
  %s2 = sld [smem:[#allocation0]]
  $region37: #{encoder_lstm_forward.17} parent=0
    _
  %s4 = ssub.s32 1, %s2
  %s5 = scalar_select 0, %s4, %s2
  loop: start=0, step=1, limit=4
  $region2: #{encoder_lstm_forward.17} parent=0 // loop_pre_header
    _
  $region3: #{encoder_lstm_forward.17} parent=0 // loop_header
    %s7 = sphi 0, %s11
    %p8 = scmp.ge.s32.totalorder %s7, 4
    %s17 = sphi 0, %s19
    %s20 = sphi 0, %s17
    %s21 = sphi 0, %s20
    %s37 = sphi 0, %s21
    %s43 = sphi 0, %s45
    %s46 = sphi 0, %s43
    %s47 = sphi 0, %s46
    %s63 = sphi 0, %s47
  $region4: #{encoder_lstm_forward.17} parent=0 // loop_header_branch
    %10 = sbr.rel (%p8) target = $region8
  $region5: #{encoder_lstm_forward.17} parent=0 // loop_body
    %s12 = ssub.s32 %s7, 1
    %s13 = ssub.s32 %s7, 2
    %s14 = sadd.s32 %s7, 1
    %s15 = ssub.s32 %s7, %s14
    %p16 = scmp.eq.s32.totalorder %s15, 0
    %s18 = sadd.s32 %s17, 1
    %s19 = scalar_select %p16, %s17, %s18
    %p22 = pneg %p16
    %p23 = scmp.eq.s32.totalorder %s7, 1
    %p24 = por %p22, %p23
    %p25 = scmp.ne.s32.totalorder %s17, %s20
    %p26 = scmp.eq.s32.totalorder %s7, 0
    %p27 = por %p25, %p26
    %p28 = scmp.ne.s32.totalorder %s17, %s20
    %p29 = scmp.eq.s32.totalorder %s12, 1
    %p30 = por %p28, %p29
    %p31 = scmp.ne.s32.totalorder %s20, %s21
    %p32 = scmp.eq.s32.totalorder %s12, 0
    %p33 = por %p31, %p32
    %p34 = scmp.ne.s32.totalorder %s20, %s21
    %p35 = scmp.eq.s32.totalorder %s13, 1
    %p36 = por %p34, %p35
    %p38 = scmp.ne.s32.totalorder %s21, %s37
    %p39 = scmp.eq.s32.totalorder %s13, 0
    %p40 = por %p38, %p39
    %s41 = ssub.s32 %s7, %s14
    %p42 = scmp.eq.s32.totalorder %s41, 0
    %s44 = sadd.s32 %s43, 1
    %s45 = scalar_select %p42, %s43, %s44
    %p48 = pneg %p42
    %p49 = scmp.eq.s32.totalorder %s7, 1
    %p50 = por %p48, %p49
    %p51 = scmp.ne.s32.totalorder %s43, %s46
    %p52 = scmp.eq.s32.totalorder %s7, 0
    %p53 = por %p51, %p52
    %p54 = scmp.ne.s32.totalorder %s43, %s46
    %p55 = scmp.eq.s32.totalorder %s12, 1
    %p56 = por %p54, %p55
    %p57 = scmp.ne.s32.totalorder %s46, %s47
    %p58 = scmp.eq.s32.totalorder %s12, 0
    %p59 = por %p57, %p58
    %p60 = scmp.ne.s32.totalorder %s46, %s47
    %p61 = scmp.eq.s32.totalorder %s13, 1
    %p62 = por %p60, %p61
    %p64 = scmp.ne.s32.totalorder %s47, %s63
    %p65 = scmp.eq.s32.totalorder %s13, 0
    %p66 = por %p64, %p65
    %p67 = scmp.le.s32.totalorder 1, %s7
    %p68 = scmp.lt.s32.totalorder %s7, 3
    %p69 = pnand %p67, %p68
    %p70 = pneg %p69
    // Predicated region
    $region9: #{encoder_lstm_forward.17} parent=5 // pred_check
      _
    $region10: #{encoder_lstm_forward.17} parent=5 // pred_check_branch
      %72 = sbr.rel (%p69) target = $region12
    $region11: #{encoder_lstm_forward.17} parent=5 // pred_region
      %s73 = ssub.s32 %s7, 1
    $region12: #{encoder_lstm_forward.17} parent=5 // pred_fallthru
      _
    %p74 = scmp.lt.s32.totalorder %s7, 2
    // Predicated region
    $region13: #{encoder_lstm_forward.17} parent=5 // pred_check
      %p75 = pneg %p74
    $region14: #{encoder_lstm_forward.17} parent=5 // pred_check_branch
      %77 = sbr.rel (%p75) target = $region16
    $region15: #{encoder_lstm_forward.17} parent=5 // pred_region
      // Predicated region
      $region17: #{encoder_lstm_forward.17} parent=15 // pred_check
        %p78 = pneg %p27
      $region18: #{encoder_lstm_forward.17} parent=15 // pred_check_branch
        %80 = sbr.rel (%p78) target = $region20
      $region19: #{encoder_lstm_forward.17} parent=15 // pred_region
        %s81 = smul.u32 80, %s7
        %p82 = scmp.lt.s32.totalorder %s81, 159
        %s83 = scalar_select %p82, %s81, 159
        %s84 = smul.addr %s83, 8
        %s85 = scalar_lea.vmem %s0, %s84
        %s86 = smul.u32 80, %s7
      $region20: #{encoder_lstm_forward.17} parent=15 // pred_fallthru
        _
    $region16: #{encoder_lstm_forward.17} parent=5 // pred_fallthru
      _
    %p87 = scmp.le.s32.totalorder 1, %s7
    %p88 = scmp.lt.s32.totalorder %s7, 3
    %p89 = pnand %p87, %p88
    %p90 = pneg %p89
    // Predicated region
    $region21: #{encoder_lstm_forward.17} parent=5 // pred_check
      _
    $region22: #{encoder_lstm_forward.17} parent=5 // pred_check_branch
      %92 = sbr.rel (%p89) target = $region24
    $region23: #{encoder_lstm_forward.17} parent=5 // pred_region
      %s93 = ssub.s32 %s7, 1
      %s94 = smul.u32 80, %s12
      %p95 = scmp.lt.s32.totalorder %s94, 159
      %s96 = scalar_select %p95, %s94, 159
      %s97 = smul.addr %s96, 8
      %s98 = scalar_lea.vmem %s0, %s97
      %p99 = pneg %p33
      %p100 = pneg %p30
      %p101 = pneg %p59
      %p102 = pneg %p56
      %s103 = smul.u32 40, %s12
      %p104 = scmp.lt.s32.totalorder %s103, 79
      %s105 = scalar_select %p104, %s103, 79
      %s106 = smul.addr %s105, 8
      %s107 = scalar_lea.vmem %s1, %s106
      %s108 = smul.u32 80, %s12
      %p109 = scmp.lt.s32.totalorder %s108, 159
      %s110 = scalar_select %p109, %s108, 159
      %s111 = smul.addr %s110, 8
      %s112 = scalar_lea.vmem %s0, %s111
      %s113 = smul.u32 80, %s12
      %s114 = smul.u32 40, %s12
      %p115 = scmp.lt.s32.totalorder %s114, 79
      %s116 = scalar_select %p115, %s114, 79
      %s117 = smul.addr %s116, 8
      %s118 = scalar_lea.vmem %s1, %s117
      %s119 = smul.u32 40, %s12
      %v120 = vld [vmem:[%s112] sm:$0x1f]
      %v121 = vld [vmem:[%s112 + $0x8] sm:$0x1f]
      %v122 = vld [vmem:[%s112 + $0x10] sm:$0x1f]
      %v123 = vld [vmem:[%s112 + $0x18] sm:$0x1f]
      %v124 = vld [vmem:[%s112 + $0x20] sm:$0x1f]
      %v125 = vld [vmem:[%s112 + $0x28] sm:$0x1f]
      %v126 = vld [vmem:[%s112 + $0x30] sm:$0x1f]
      %v127 = vld [vmem:[%s112 + $0x38] sm:$0x1f]
      %v128 = vld [vmem:[%s112 + $0x40] sm:$0x1f]
      %v129 = vld [vmem:[%s112 + $0x48] sm:$0x1f]
      %v130 = vld [vmem:[%s112 + $0x50] sm:$0x1f]
      %v131 = vld [vmem:[%s112 + $0x58] sm:$0x1f]
      %v132 = vld [vmem:[%s112 + $0x60] sm:$0x1f]
      %v133 = vld [vmem:[%s112 + $0x68] sm:$0x1f]
      %v134 = vld [vmem:[%s112 + $0x70] sm:$0x1f]
      %v135 = vld [vmem:[%s112 + $0x78] sm:$0x1f]
      %v136 = vld [vmem:[%s112 + $0x80] sm:$0x1f]
      %v137 = vld [vmem:[%s112 + $0x88] sm:$0x1f]
      %v138 = vld [vmem:[%s112 + $0x90] sm:$0x1f]
      %v139 = vld [vmem:[%s112 + $0x98] sm:$0x1f]
      %v140 = vld [vmem:[%s112 + $0xa0] sm:$0x1f]
      %v141 = vld [vmem:[%s112 + $0xa8] sm:$0x1f]
      %v142 = vld [vmem:[%s112 + $0xb0] sm:$0x1f]
      %v143 = vld [vmem:[%s112 + $0xb8] sm:$0x1f]
      %v144 = vld [vmem:[%s112 + $0xc0] sm:$0x1f]
      %v145 = vld [vmem:[%s112 + $0xc8] sm:$0x1f]
      %v146 = vld [vmem:[%s112 + $0xd0] sm:$0x1f]
      %v147 = vld [vmem:[%s112 + $0xd8] sm:$0x1f]
      %v148 = vld [vmem:[%s112 + $0xe0] sm:$0x1f]
      %v149 = vld [vmem:[%s112 + $0xe8] sm:$0x1f]
      %v150 = vld [vmem:[%s112 + $0xf0] sm:$0x1f]
      %v151 = vld [vmem:[%s112 + $0xf8] sm:$0x1f]
      %v152 = vld [vmem:[%s112 + $0x100] sm:$0x1f]
      %v153 = vld [vmem:[%s112 + $0x108] sm:$0x1f]
      %v154 = vld [vmem:[%s112 + $0x110] sm:$0x1f]
      %v155 = vld [vmem:[%s112 + $0x118] sm:$0x1f]
      %v156 = vld [vmem:[%s112 + $0x120] sm:$0x1f]
      %v157 = vld [vmem:[%s112 + $0x128] sm:$0x1f]
      %v158 = vld [vmem:[%s112 + $0x130] sm:$0x1f]
      %v159 = vld [vmem:[%s112 + $0x138] sm:$0x1f]
      %v160 = vld [vmem:[%s112 + $0x140] sm:$0x1f]
      %v161 = vld [vmem:[%s112 + $0x148] sm:$0x1f]
      %v162 = vld [vmem:[%s112 + $0x150] sm:$0x1f]
      %v163 = vld [vmem:[%s112 + $0x158] sm:$0x1f]
      %v164 = vld [vmem:[%s112 + $0x160] sm:$0x1f]
      %v165 = vld [vmem:[%s112 + $0x168] sm:$0x1f]
      %v166 = vld [vmem:[%s112 + $0x170] sm:$0x1f]
      %v167 = vld [vmem:[%s112 + $0x178] sm:$0x1f]
      %v168 = vld [vmem:[%s112 + $0x180] sm:$0x1f]
      %v169 = vld [vmem:[%s112 + $0x188] sm:$0x1f]
      %v170 = vld [vmem:[%s112 + $0x190] sm:$0x1f]
      %v171 = vld [vmem:[%s112 + $0x198] sm:$0x1f]
      %v172 = vld [vmem:[%s112 + $0x1a0] sm:$0x1f]
      %v173 = vld [vmem:[%s112 + $0x1a8] sm:$0x1f]
      %v174 = vld [vmem:[%s112 + $0x1b0] sm:$0x1f]
      %v175 = vld [vmem:[%s112 + $0x1b8] sm:$0x1f]
      %v176 = vld [vmem:[%s112 + $0x1c0] sm:$0x1f]
      %v177 = vld [vmem:[%s112 + $0x1c8] sm:$0x1f]
      %v178 = vld [vmem:[%s112 + $0x1d0] sm:$0x1f]
      %v179 = vld [vmem:[%s112 + $0x1d8] sm:$0x1f]
      %v180 = vld [vmem:[%s112 + $0x1e0] sm:$0x1f]
      %v181 = vld [vmem:[%s112 + $0x1e8] sm:$0x1f]
      %v182 = vld [vmem:[%s112 + $0x1f0] sm:$0x1f]
      %v183 = vld [vmem:[%s112 + $0x1f8] sm:$0x1f]
      %v184 = vld [vmem:[%s112 + $0x200] sm:$0x1f]
      %v185 = vld [vmem:[%s112 + $0x208] sm:$0x1f]
      %v186 = vld [vmem:[%s112 + $0x210] sm:$0x1f]
      %v187 = vld [vmem:[%s112 + $0x218] sm:$0x1f]
      %v188 = vld [vmem:[%s112 + $0x220] sm:$0x1f]
      %v189 = vld [vmem:[%s112 + $0x228] sm:$0x1f]
      %v190 = vld [vmem:[%s112 + $0x230] sm:$0x1f]
      %v191 = vld [vmem:[%s112 + $0x238] sm:$0x1f]
      %v192 = vld [vmem:[%s112 + $0x240] sm:$0x1f]
      %v193 = vld [vmem:[%s112 + $0x248] sm:$0x1f]
      %v194 = vld [vmem:[%s112 + $0x250] sm:$0x1f]
      %v195 = vld [vmem:[%s112 + $0x258] sm:$0x1f]
      %v196 = vld [vmem:[%s112 + $0x260] sm:$0x1f]
      %v197 = vld [vmem:[%s112 + $0x268] sm:$0x1f]
      %v198 = vld [vmem:[%s112 + $0x270] sm:$0x1f]
      %v199 = vld [vmem:[%s112 + $0x278] sm:$0x1f]
      %280 = vrot.lane.b32.xlu0 %v120, 112
      %v281 = vpop.permute.xlu0 %280
      %282 = vrot.lane.b32.xlu0 %v121, 112
      %v283 = vpop.permute.xlu0 %282
      %284 = vrot.lane.b32.xlu0 %v122, 112
      %v285 = vpop.permute.xlu0 %284
      %286 = vrot.lane.b32.xlu0 %v123, 112
      %v287 = vpop.permute.xlu0 %286
      %288 = vrot.lane.b32.xlu0 %v124, 112
      %v289 = vpop.permute.xlu0 %288
      %290 = vrot.lane.b32.xlu0 %v125, 112
      %v291 = vpop.permute.xlu0 %290
      %292 = vrot.lane.b32.xlu0 %v126, 112
      %v293 = vpop.permute.xlu0 %292
      %294 = vrot.lane.b32.xlu0 %v127, 112
      %v295 = vpop.permute.xlu0 %294
      %296 = vrot.lane.b32.xlu0 %v128, 112
      %v297 = vpop.permute.xlu0 %296
      %298 = vrot.lane.b32.xlu0 %v129, 112
      %v299 = vpop.permute.xlu0 %298
      %300 = vrot.lane.b32.xlu0 %v130, 112
      %v301 = vpop.permute.xlu0 %300
      %302 = vrot.lane.b32.xlu0 %v131, 112
      %v303 = vpop.permute.xlu0 %302
      %304 = vrot.lane.b32.xlu0 %v132, 112
      %v305 = vpop.permute.xlu0 %304
      %306 = vrot.lane.b32.xlu0 %v133, 112
      %v307 = vpop.permute.xlu0 %306
      %308 = vrot.lane.b32.xlu0 %v134, 112
      %v309 = vpop.permute.xlu0 %308
      %310 = vrot.lane.b32.xlu0 %v135, 112
      %v311 = vpop.permute.xlu0 %310
      %312 = vrot.lane.b32.xlu0 %v136, 112
      %v313 = vpop.permute.xlu0 %312
      %314 = vrot.lane.b32.xlu0 %v137, 112
      %v315 = vpop.permute.xlu0 %314
      %316 = vrot.lane.b32.xlu0 %v138, 112
      %v317 = vpop.permute.xlu0 %316
      %318 = vrot.lane.b32.xlu0 %v139, 112
      %v319 = vpop.permute.xlu0 %318
      %320 = vrot.lane.b32.xlu0 %v140, 112
      %v321 = vpop.permute.xlu0 %320
      %322 = vrot.lane.b32.xlu0 %v141, 112
      %v323 = vpop.permute.xlu0 %322
      %324 = vrot.lane.b32.xlu0 %v142, 112
      %v325 = vpop.permute.xlu0 %324
      %326 = vrot.lane.b32.xlu0 %v143, 112
      %v327 = vpop.permute.xlu0 %326
      %328 = vrot.lane.b32.xlu0 %v144, 112
      %v329 = vpop.permute.xlu0 %328
      %330 = vrot.lane.b32.xlu0 %v145, 112
      %v331 = vpop.permute.xlu0 %330
      %332 = vrot.lane.b32.xlu0 %v146, 112
      %v333 = vpop.permute.xlu0 %332
      %334 = vrot.lane.b32.xlu0 %v147, 112
      %v335 = vpop.permute.xlu0 %334
      %336 = vrot.lane.b32.xlu0 %v148, 112
      %v337 = vpop.permute.xlu0 %336
      %338 = vrot.lane.b32.xlu0 %v149, 112
      %v339 = vpop.permute.xlu0 %338
      %340 = vrot.lane.b32.xlu0 %v150, 112
      %v341 = vpop.permute.xlu0 %340
      %342 = vrot.lane.b32.xlu0 %v151, 112
      %v343 = vpop.permute.xlu0 %342
      %344 = vrot.lane.b32.xlu0 %v152, 112
      %v345 = vpop.permute.xlu0 %344
      %346 = vrot.lane.b32.xlu0 %v153, 112
      %v347 = vpop.permute.xlu0 %346
      %348 = vrot.lane.b32.xlu0 %v154, 112
      %v349 = vpop.permute.xlu0 %348
      %350 = vrot.lane.b32.xlu0 %v155, 112
      %v351 = vpop.permute.xlu0 %350
      %352 = vrot.lane.b32.xlu0 %v156, 112
      %v353 = vpop.permute.xlu0 %352
      %354 = vrot.lane.b32.xlu0 %v157, 112
      %v355 = vpop.permute.xlu0 %354
      %356 = vrot.lane.b32.xlu0 %v158, 112
      %v357 = vpop.permute.xlu0 %356
      %358 = vrot.lane.b32.xlu0 %v159, 112
      %v359 = vpop.permute.xlu0 %358
      %360 = vrot.lane.b32.xlu0 %v160, 112
      %v361 = vpop.permute.xlu0 %360
      %362 = vrot.lane.b32.xlu0 %v161, 112
      %v363 = vpop.permute.xlu0 %362
      %364 = vrot.lane.b32.xlu0 %v162, 112
      %v365 = vpop.permute.xlu0 %364
      %366 = vrot.lane.b32.xlu0 %v163, 112
      %v367 = vpop.permute.xlu0 %366
      %368 = vrot.lane.b32.xlu0 %v164, 112
      %v369 = vpop.permute.xlu0 %368
      %370 = vrot.lane.b32.xlu0 %v165, 112
      %v371 = vpop.permute.xlu0 %370
      %372 = vrot.lane.b32.xlu0 %v166, 112
      %v373 = vpop.permute.xlu0 %372
      %374 = vrot.lane.b32.xlu0 %v167, 112
      %v375 = vpop.permute.xlu0 %374
      %376 = vrot.lane.b32.xlu0 %v168, 112
      %v377 = vpop.permute.xlu0 %376
      %378 = vrot.lane.b32.xlu0 %v169, 112
      %v379 = vpop.permute.xlu0 %378
      %380 = vrot.lane.b32.xlu0 %v170, 112
      %v381 = vpop.permute.xlu0 %380
      %382 = vrot.lane.b32.xlu0 %v171, 112
      %v383 = vpop.permute.xlu0 %382
      %384 = vrot.lane.b32.xlu0 %v172, 112
      %v385 = vpop.permute.xlu0 %384
      %386 = vrot.lane.b32.xlu0 %v173, 112
      %v387 = vpop.permute.xlu0 %386
      %388 = vrot.lane.b32.xlu0 %v174, 112
      %v389 = vpop.permute.xlu0 %388
      %390 = vrot.lane.b32.xlu0 %v175, 112
      %v391 = vpop.permute.xlu0 %390
      %392 = vrot.lane.b32.xlu0 %v176, 112
      %v393 = vpop.permute.xlu0 %392
      %394 = vrot.lane.b32.xlu0 %v177, 112
      %v395 = vpop.permute.xlu0 %394
      %396 = vrot.lane.b32.xlu0 %v178, 112
      %v397 = vpop.permute.xlu0 %396
      %398 = vrot.lane.b32.xlu0 %v179, 112
      %v399 = vpop.permute.xlu0 %398
      %400 = vrot.lane.b32.xlu0 %v180, 112
      %v401 = vpop.permute.xlu0 %400
      %402 = vrot.lane.b32.xlu0 %v181, 112
      %v403 = vpop.permute.xlu0 %402
      %404 = vrot.lane.b32.xlu0 %v182, 112
      %v405 = vpop.permute.xlu0 %404
      %406 = vrot.lane.b32.xlu0 %v183, 112
      %v407 = vpop.permute.xlu0 %406
      %408 = vrot.lane.b32.xlu0 %v184, 112
      %v409 = vpop.permute.xlu0 %408
      %410 = vrot.lane.b32.xlu0 %v185, 112
      %v411 = vpop.permute.xlu0 %410
      %412 = vrot.lane.b32.xlu0 %v186, 112
      %v413 = vpop.permute.xlu0 %412
      %414 = vrot.lane.b32.xlu0 %v187, 112
      %v415 = vpop.permute.xlu0 %414
      %416 = vrot.lane.b32.xlu0 %v188, 112
      %v417 = vpop.permute.xlu0 %416
      %418 = vrot.lane.b32.xlu0 %v189, 112
      %v419 = vpop.permute.xlu0 %418
      %420 = vrot.lane.b32.xlu0 %v190, 112
      %v421 = vpop.permute.xlu0 %420
      %422 = vrot.lane.b32.xlu0 %v191, 112
      %v423 = vpop.permute.xlu0 %422
      %424 = vrot.lane.b32.xlu0 %v192, 112
      %v425 = vpop.permute.xlu0 %424
      %426 = vrot.lane.b32.xlu0 %v193, 112
      %v427 = vpop.permute.xlu0 %426
      %428 = vrot.lane.b32.xlu0 %v194, 112
      %v429 = vpop.permute.xlu0 %428
      %430 = vrot.lane.b32.xlu0 %v195, 112
      %v431 = vpop.permute.xlu0 %430
      %432 = vrot.lane.b32.xlu0 %v196, 112
      %v433 = vpop.permute.xlu0 %432
      %434 = vrot.lane.b32.xlu0 %v197, 112
      %v435 = vpop.permute.xlu0 %434
      %436 = vrot.lane.b32.xlu0 %v198, 112
      %v437 = vpop.permute.xlu0 %436
      %438 = vrot.lane.b32.xlu0 %v199, 112
      %v439 = vpop.permute.xlu0 %438
      %v520 = vmax.f32 %v120, %v281
      %v521 = vmax.f32 %v121, %v283
      %v522 = vmax.f32 %v122, %v285
      %v523 = vmax.f32 %v123, %v287
      %v524 = vmax.f32 %v124, %v289
      %v525 = vmax.f32 %v125, %v291
      %v526 = vmax.f32 %v126, %v293
      %v527 = vmax.f32 %v127, %v295
      %v528 = vmax.f32 %v128, %v297
      %v529 = vmax.f32 %v129, %v299
      %v530 = vmax.f32 %v130, %v301
      %v531 = vmax.f32 %v131, %v303
      %v532 = vmax.f32 %v132, %v305
      %v533 = vmax.f32 %v133, %v307
      %v534 = vmax.f32 %v134, %v309
      %v535 = vmax.f32 %v135, %v311
      %v536 = vmax.f32 %v136, %v313
      %v537 = vmax.f32 %v137, %v315
      %v538 = vmax.f32 %v138, %v317
      %v539 = vmax.f32 %v139, %v319
      %v540 = vmax.f32 %v140, %v321
      %v541 = vmax.f32 %v141, %v323
      %v542 = vmax.f32 %v142, %v325
      %v543 = vmax.f32 %v143, %v327
      %v544 = vmax.f32 %v144, %v329
      %v545 = vmax.f32 %v145, %v331
      %v546 = vmax.f32 %v146, %v333
      %v547 = vmax.f32 %v147, %v335
      %v548 = vmax.f32 %v148, %v337
      %v549 = vmax.f32 %v149, %v339
      %v550 = vmax.f32 %v150, %v341
      %v551 = vmax.f32 %v151, %v343
      %v552 = vmax.f32 %v152, %v345
      %v553 = vmax.f32 %v153, %v347
      %v554 = vmax.f32 %v154, %v349
      %v555 = vmax.f32 %v155, %v351
      %v556 = vmax.f32 %v156, %v353
      %v557 = vmax.f32 %v157, %v355
      %v558 = vmax.f32 %v158, %v357
      %v559 = vmax.f32 %v159, %v359
      %v560 = vmax.f32 %v160, %v361
      %v561 = vmax.f32 %v161, %v363
      %v562 = vmax.f32 %v162, %v365
      %v563 = vmax.f32 %v163, %v367
      %v564 = vmax.f32 %v164, %v369
      %v565 = vmax.f32 %v165, %v371
      %v566 = vmax.f32 %v166, %v373
      %v567 = vmax.f32 %v167, %v375
      %v568 = vmax.f32 %v168, %v377
      %v569 = vmax.f32 %v169, %v379
      %v570 = vmax.f32 %v170, %v381
      %v571 = vmax.f32 %v171, %v383
      %v572 = vmax.f32 %v172, %v385
      %v573 = vmax.f32 %v173, %v387
      %v574 = vmax.f32 %v174, %v389
      %v575 = vmax.f32 %v175, %v391
      %v576 = vmax.f32 %v176, %v393
      %v577 = vmax.f32 %v177, %v395
      %v578 = vmax.f32 %v178, %v397
      %v579 = vmax.f32 %v179, %v399
      %v580 = vmax.f32 %v180, %v401
      %v581 = vmax.f32 %v181, %v403
      %v582 = vmax.f32 %v182, %v405
      %v583 = vmax.f32 %v183, %v407
      %v584 = vmax.f32 %v184, %v409
      %v585 = vmax.f32 %v185, %v411
      %v586 = vmax.f32 %v186, %v413
      %v587 = vmax.f32 %v187, %v415
      %v588 = vmax.f32 %v188, %v417
      %v589 = vmax.f32 %v189, %v419
      %v590 = vmax.f32 %v190, %v421
      %v591 = vmax.f32 %v191, %v423
      %v592 = vmax.f32 %v192, %v425
      %v593 = vmax.f32 %v193, %v427
      %v594 = vmax.f32 %v194, %v429
      %v595 = vmax.f32 %v195, %v431
      %v596 = vmax.f32 %v196, %v433
      %v597 = vmax.f32 %v197, %v435
      %v598 = vmax.f32 %v198, %v437
      %v599 = vmax.f32 %v199, %v439
      %v600 = vmax.f32 %v520, %v521
      %v601 = vmax.f32 %v522, %v523
      %v602 = vmax.f32 %v524, %v525
      %v603 = vmax.f32 %v526, %v527
      %v604 = vmax.f32 %v528, %v529
      %v605 = vmax.f32 %v530, %v531
      %v606 = vmax.f32 %v532, %v533
      %v607 = vmax.f32 %v534, %v535
      %v608 = vmax.f32 %v536, %v537
      %v609 = vmax.f32 %v538, %v539
      %v610 = vmax.f32 %v540, %v541
      %v611 = vmax.f32 %v542, %v543
      %v612 = vmax.f32 %v544, %v545
      %v613 = vmax.f32 %v546, %v547
      %v614 = vmax.f32 %v548, %v549
      %v615 = vmax.f32 %v550, %v551
      %v616 = vmax.f32 %v552, %v553
      %v617 = vmax.f32 %v554, %v555
      %v618 = vmax.f32 %v556, %v557
      %v619 = vmax.f32 %v558, %v559
      %v620 = vmax.f32 %v560, %v561
      %v621 = vmax.f32 %v562, %v563
      %v622 = vmax.f32 %v564, %v565
      %v623 = vmax.f32 %v566, %v567
      %v624 = vmax.f32 %v568, %v569
      %v625 = vmax.f32 %v570, %v571
      %v626 = vmax.f32 %v572, %v573
      %v627 = vmax.f32 %v574, %v575
      %v628 = vmax.f32 %v576, %v577
      %v629 = vmax.f32 %v578, %v579
      %v630 = vmax.f32 %v580, %v581
      %v631 = vmax.f32 %v582, %v583
      %v632 = vmax.f32 %v584, %v585
      %v633 = vmax.f32 %v586, %v587
      %v634 = vmax.f32 %v588, %v589
      %v635 = vmax.f32 %v590, %v591
      %v636 = vmax.f32 %v592, %v593
      %v637 = vmax.f32 %v594, %v595
      %v638 = vmax.f32 %v596, %v597
      %v639 = vmax.f32 %v598, %v599
      %vm640 = vcmask 126976
      %641 = vst.msk [vmem:[%s118] sm:$0x1f] %vm640, %v600
      %642 = vst.msk [vmem:[%s118 + $0x8] sm:$0x1f] %vm640, %v601
      %643 = vst.msk [vmem:[%s118 + $0x10] sm:$0x1f] %vm640, %v602
      %644 = vst.msk [vmem:[%s118 + $0x18] sm:$0x1f] %vm640, %v603
      %645 = vst.msk [vmem:[%s118 + $0x20] sm:$0x1f] %vm640, %v604
      %646 = vst.msk [vmem:[%s118 + $0x28] sm:$0x1f] %vm640, %v605
      %647 = vst.msk [vmem:[%s118 + $0x30] sm:$0x1f] %vm640, %v606
      %648 = vst.msk [vmem:[%s118 + $0x38] sm:$0x1f] %vm640, %v607
      %649 = vst.msk [vmem:[%s118 + $0x40] sm:$0x1f] %vm640, %v608
      %650 = vst.msk [vmem:[%s118 + $0x48] sm:$0x1f] %vm640, %v609
      %651 = vst.msk [vmem:[%s118 + $0x50] sm:$0x1f] %vm640, %v610
      %652 = vst.msk [vmem:[%s118 + $0x58] sm:$0x1f] %vm640, %v611
      %653 = vst.msk [vmem:[%s118 + $0x60] sm:$0x1f] %vm640, %v612
      %654 = vst.msk [vmem:[%s118 + $0x68] sm:$0x1f] %vm640, %v613
      %655 = vst.msk [vmem:[%s118 + $0x70] sm:$0x1f] %vm640, %v614
      %656 = vst.msk [vmem:[%s118 + $0x78] sm:$0x1f] %vm640, %v615
      %657 = vst.msk [vmem:[%s118 + $0x80] sm:$0x1f] %vm640, %v616
      %658 = vst.msk [vmem:[%s118 + $0x88] sm:$0x1f] %vm640, %v617
      %659 = vst.msk [vmem:[%s118 + $0x90] sm:$0x1f] %vm640, %v618
      %660 = vst.msk [vmem:[%s118 + $0x98] sm:$0x1f] %vm640, %v619
      %661 = vst.msk [vmem:[%s118 + $0xa0] sm:$0x1f] %vm640, %v620
      %662 = vst.msk [vmem:[%s118 + $0xa8] sm:$0x1f] %vm640, %v621
      %663 = vst.msk [vmem:[%s118 + $0xb0] sm:$0x1f] %vm640, %v622
      %664 = vst.msk [vmem:[%s118 + $0xb8] sm:$0x1f] %vm640, %v623
      %665 = vst.msk [vmem:[%s118 + $0xc0] sm:$0x1f] %vm640, %v624
      %666 = vst.msk [vmem:[%s118 + $0xc8] sm:$0x1f] %vm640, %v625
      %667 = vst.msk [vmem:[%s118 + $0xd0] sm:$0x1f] %vm640, %v626
      %668 = vst.msk [vmem:[%s118 + $0xd8] sm:$0x1f] %vm640, %v627
      %669 = vst.msk [vmem:[%s118 + $0xe0] sm:$0x1f] %vm640, %v628
      %670 = vst.msk [vmem:[%s118 + $0xe8] sm:$0x1f] %vm640, %v629
      %671 = vst.msk [vmem:[%s118 + $0xf0] sm:$0x1f] %vm640, %v630
      %672 = vst.msk [vmem:[%s118 + $0xf8] sm:$0x1f] %vm640, %v631
      %673 = vst.msk [vmem:[%s118 + $0x100] sm:$0x1f] %vm640, %v632
      %674 = vst.msk [vmem:[%s118 + $0x108] sm:$0x1f] %vm640, %v633
      %675 = vst.msk [vmem:[%s118 + $0x110] sm:$0x1f] %vm640, %v634
      %676 = vst.msk [vmem:[%s118 + $0x118] sm:$0x1f] %vm640, %v635
      %677 = vst.msk [vmem:[%s118 + $0x120] sm:$0x1f] %vm640, %v636
      %678 = vst.msk [vmem:[%s118 + $0x128] sm:$0x1f] %vm640, %v637
      %679 = vst.msk [vmem:[%s118 + $0x130] sm:$0x1f] %vm640, %v638
      %680 = vst.msk [vmem:[%s118 + $0x138] sm:$0x1f] %vm640, %v639
      %s681 = smul.u32 40, %s12
      %p682 = scmp.lt.s32.totalorder %s681, 79
      %s683 = scalar_select %p682, %s681, 79
      %s684 = smul.addr %s683, 8
      %s685 = scalar_lea.vmem %s1, %s684
      // Predicated region
      $region25: #{encoder_lstm_forward.17} parent=23 // pred_check
        %p686 = pneg %p56
      $region26: #{encoder_lstm_forward.17} parent=23 // pred_check_branch
        %688 = sbr.rel (%p686) target = $region28
      $region27: #{encoder_lstm_forward.17} parent=23 // pred_region
        %s689 = smul.u32 40, %s12
      $region28: #{encoder_lstm_forward.17} parent=23 // pred_fallthru
        _
    $region24: #{encoder_lstm_forward.17} parent=5 // pred_fallthru
      _
    %p690 = scmp.le.s32.totalorder 2, %s7
    // Predicated region
    $region29: #{encoder_lstm_forward.17} parent=5 // pred_check
      %p691 = pneg %p690
    $region30: #{encoder_lstm_forward.17} parent=5 // pred_check_branch
      %693 = sbr.rel (%p691) target = $region32
    $region31: #{encoder_lstm_forward.17} parent=5 // pred_region
      %s694 = ssub.s32 %s7, 2
      // Predicated region
      $region33: #{encoder_lstm_forward.17} parent=31 // pred_check
        %p695 = pneg %p62
      $region34: #{encoder_lstm_forward.17} parent=31 // pred_check_branch
        %697 = sbr.rel (%p695) target = $region36
      $region35: #{encoder_lstm_forward.17} parent=31 // pred_region
        %s698 = smul.u32 40, %s13
        %p699 = scmp.lt.s32.totalorder %s698, 79
        %s700 = scalar_select %p699, %s698, 79
        %s701 = smul.addr %s700, 8
        %s702 = scalar_lea.vmem %s1, %s701
      $region36: #{encoder_lstm_forward.17} parent=31 // pred_fallthru
        _
    $region32: #{encoder_lstm_forward.17} parent=5 // pred_fallthru
      _
  $region6: #{encoder_lstm_forward.17} parent=0 // loop_footer
    %s11 = sadd.s32 1, %s7
  $region7: #{encoder_lstm_forward.17} parent=0 // loop_footer_branch
    %6 = sbr.rel target = $region3
  $region8: #{encoder_lstm_forward.17} parent=0 // loop_exit
    _

// kernel: encoder_lstm_forward.18
$region0: #{encoder_lstm_forward.18}
  #allocation0 [shape = 'u32[]', space=smem, size = 0x4, offset = 0x4, fixed_abs, tag = 'smem constant byte address 0x4 - core index']
  #allocation1 [shape = 'u32[144,128]{1,0:T(1,128)}', space=vmem, size = 0x12000, scoped, tag = 'internal scratch']
  #allocation2 [shape = 'f32[16,128]{1,0:T(8,128)}', space=vmem, size = 0x2000, scoped, tag = 'scratch operand']
  %s0 = inlined_call_operand.vmem [shape: bf16[16,512], index: 0, kind: input, shape index: {}]
  %s1 = inlined_call_operand.vmem [shape: bf16[512,128], index: 1, kind: input, shape index: {}]
  %s2 = inlined_call_operand.vmem [shape: f32[1,128], index: 2, kind: input, shape index: {}]
  %s3 = inlined_call_operand.vmem [shape: f32[16,128], index: 3, kind: output, shape index: {}]
  %s4 = sld [smem:[#allocation0]]
  $region30: #{encoder_lstm_forward.18} parent=0
    _
  %s6 = ssub.s32 1, %s4
  %s7 = scalar_select 0, %s6, %s4
  // Predicated region
  $region2: #{encoder_lstm_forward.18} parent=0 // pred_check
    _
  $region3: #{encoder_lstm_forward.18} parent=0 // pred_check_branch
    %9 = sbr.rel (0) target = $region5
  $region4: #{encoder_lstm_forward.18} parent=0 // pred_region
    _
  $region5: #{encoder_lstm_forward.18} parent=0 // pred_fallthru
    _
  // Predicated region
  $region6: #{encoder_lstm_forward.18} parent=0 // pred_check
    _
  $region7: #{encoder_lstm_forward.18} parent=0 // pred_check_branch
    %11 = sbr.rel (0) target = $region9
  $region8: #{encoder_lstm_forward.18} parent=0 // pred_region
    _
  $region9: #{encoder_lstm_forward.18} parent=0 // pred_fallthru
    _
  // Predicated region
  $region10: #{encoder_lstm_forward.18} parent=0 // pred_check
    _
  $region11: #{encoder_lstm_forward.18} parent=0 // pred_check_branch
    %13 = sbr.rel (0) target = $region13
  $region12: #{encoder_lstm_forward.18} parent=0 // pred_region
    _
  $region13: #{encoder_lstm_forward.18} parent=0 // pred_fallthru
    _
  %p15 = scmp.eq.s32.totalorder 0, 0
  // Predicated region
  $region14: #{encoder_lstm_forward.18} parent=0 // pred_check
    %p16 = pneg %p15
  $region15: #{encoder_lstm_forward.18} parent=0 // pred_check_branch
    %18 = sbr.rel (%p16) target = $region17
  $region16: #{encoder_lstm_forward.18} parent=0 // pred_region
    %19 = vst [vmem:[#allocation2] sm:$0xff] 0.0
    %20 = vst [vmem:[#allocation2 + $0x8] sm:$0xff] 0.0
  $region17: #{encoder_lstm_forward.18} parent=0 // pred_fallthru
    _
  %v21 = vld [vmem:[#allocation2] sm:$0xff]
  %v22 = vld [vmem:[#allocation2 + $0x8] sm:$0xff]
  %v23 = vld [vmem:[%s0] sm:$0xff]
  %v24 = vld [vmem:[%s0 + $0x8] sm:$0xff]
  %v25 = vld [vmem:[%s0 + $0x10] sm:$0xff]
  %v26 = vld [vmem:[%s0 + $0x18] sm:$0xff]
  %v27 = vld [vmem:[%s1] sm:$0xf]
  %v28 = vld [vmem:[%s1 + $0x4] sm:$0xf]
  %v29 = vld [vmem:[%s1 + $0x8] sm:$0xf]
  %v30 = vld [vmem:[%s1 + $0xc] sm:$0xf]
  %v31 = vld [vmem:[%s1 + $0x10] sm:$0xf]
  %v32 = vld [vmem:[%s1 + $0x14] sm:$0xf]
  %v33 = vld [vmem:[%s1 + $0x18] sm:$0xf]
  %v34 = vld [vmem:[%s1 + $0x1c] sm:$0xf]
  %v35 = vld [vmem:[%s1 + $0x20] sm:$0xf]
  %v36 = vld [vmem:[%s1 + $0x24] sm:$0xf]
  %v37 = vld [vmem:[%s1 + $0x28] sm:$0xf]
  %v38 = vld [vmem:[%s1 + $0x2c] sm:$0xf]
  %v39 = vld [vmem:[%s1 + $0x30] sm:$0xf]
  %v40 = vld [vmem:[%s1 + $0x34] sm:$0xf]
  %v41 = vld [vmem:[%s1 + $0x38] sm:$0xf]
  %v42 = vld [vmem:[%s1 + $0x3c] sm:$0xf]
  %v43 = vld [vmem:[%s1 + $0x40] sm:$0xf]
  %v44 = vld [vmem:[%s1 + $0x44] sm:$0xf]
  %v45 = vld [vmem:[%s1 + $0x48] sm:$0xf]
  %v46 = vld [vmem:[%s1 + $0x4c] sm:$0xf]
  %v47 = vld [vmem:[%s1 + $0x50] sm:$0xf]
  %v48 = vld [vmem:[%s1 + $0x54] sm:$0xf]
  %v49 = vld [vmem:[%s1 + $0x58] sm:$0xf]
  %v50 = vld [vmem:[%s1 + $0x5c] sm:$0xf]
  %v51 = vld [vmem:[%s1 + $0x60] sm:$0xf]
  %v52 = vld [vmem:[%s1 + $0x64] sm:$0xf]
  %v53 = vld [vmem:[%s1 + $0x68] sm:$0xf]
  %v54 = vld [vmem:[%s1 + $0x6c] sm:$0xf]
  %v55 = vld [vmem:[%s1 + $0x70] sm:$0xf]
  %v56 = vld [vmem:[%s1 + $0x74] sm:$0xf]
  %v57 = vld [vmem:[%s1 + $0x78] sm:$0xf]
  %v58 = vld [vmem:[%s1 + $0x7c] sm:$0xf]
  %v59 = vld [vmem:[%s1 + $0x80] sm:$0xf]
  %v60 = vld [vmem:[%s1 + $0x84] sm:$0xf]
  %v61 = vld [vmem:[%s1 + $0x88] sm:$0xf]
  %v62 = vld [vmem:[%s1 + $0x8c] sm:$0xf]
  %v63 = vld [vmem:[%s1 + $0x90] sm:$0xf]
  %v64 = vld [vmem:[%s1 + $0x94] sm:$0xf]
  %v65 = vld [vmem:[%s1 + $0x98] sm:$0xf]
  %v66 = vld [vmem:[%s1 + $0x9c] sm:$0xf]
  %v67 = vld [vmem:[%s1 + $0xa0] sm:$0xf]
  %v68 = vld [vmem:[%s1 + $0xa4] sm:$0xf]
  %v69 = vld [vmem:[%s1 + $0xa8] sm:$0xf]
  %v70 = vld [vmem:[%s1 + $0xac] sm:$0xf]
  %v71 = vld [vmem:[%s1 + $0xb0] sm:$0xf]
  %v72 = vld [vmem:[%s1 + $0xb4] sm:$0xf]
  %v73 = vld [vmem:[%s1 + $0xb8] sm:$0xf]
  %v74 = vld [vmem:[%s1 + $0xbc] sm:$0xf]
  %v75 = vld [vmem:[%s1 + $0xc0] sm:$0xf]
  %v76 = vld [vmem:[%s1 + $0xc4] sm:$0xf]
  %v77 = vld [vmem:[%s1 + $0xc8] sm:$0xf]
  %v78 = vld [vmem:[%s1 + $0xcc] sm:$0xf]
  %v79 = vld [vmem:[%s1 + $0xd0] sm:$0xf]
  %v80 = vld [vmem:[%s1 + $0xd4] sm:$0xf]
  %v81 = vld [vmem:[%s1 + $0xd8] sm:$0xf]
  %v82 = vld [vmem:[%s1 + $0xdc] sm:$0xf]
  %v83 = vld [vmem:[%s1 + $0xe0] sm:$0xf]
  %v84 = vld [vmem:[%s1 + $0xe4] sm:$0xf]
  %v85 = vld [vmem:[%s1 + $0xe8] sm:$0xf]
  %v86 = vld [vmem:[%s1 + $0xec] sm:$0xf]
  %v87 = vld [vmem:[%s1 + $0xf0] sm:$0xf]
  %v88 = vld [vmem:[%s1 + $0xf4] sm:$0xf]
  %v89 = vld [vmem:[%s1 + $0xf8] sm:$0xf]
  %v90 = vld [vmem:[%s1 + $0xfc] sm:$0xf]
  %v95 = vunpack.c.l.b16 %v23
  %v96 = vunpack.c.h.b16 %v23
  %v97 = vunpack.c.l.b16 %v24
  %v98 = vunpack.c.h.b16 %v24
  %v99 = vunpack.c.l.b16 %v25
  %v100 = vunpack.c.h.b16 %v25
  %v101 = vunpack.c.l.b16 %v26
  %v102 = vunpack.c.h.b16 %v26
  %v103 = vpack.c.b16 %v99, %v95
  %v104 = vpack.c.b16 %v100, %v96
  %v105 = vpack.c.b16 %v101, %v97
  %v106 = vpack.c.b16 %v102, %v98
  %v175 = vunpack.c.l.b16 %v27
  %v176 = vunpack.c.l.b16 %v28
  %v177 = vunpack.c.l.b16 %v29
  %v178 = vunpack.c.l.b16 %v30
  %v179 = vunpack.c.l.b16 %v31
  %v180 = vunpack.c.l.b16 %v32
  %v181 = vunpack.c.l.b16 %v33
  %v182 = vunpack.c.l.b16 %v34
  %v183 = vunpack.c.l.b16 %v35
  %v184 = vunpack.c.l.b16 %v36
  %v185 = vunpack.c.l.b16 %v37
  %v186 = vunpack.c.l.b16 %v38
  %v187 = vunpack.c.l.b16 %v39
  %v188 = vunpack.c.l.b16 %v40
  %v189 = vunpack.c.l.b16 %v41
  %v190 = vunpack.c.l.b16 %v42
  %v191 = vunpack.c.l.b16 %v43
  %v192 = vunpack.c.l.b16 %v44
  %v193 = vunpack.c.l.b16 %v45
  %v194 = vunpack.c.l.b16 %v46
  %v195 = vunpack.c.l.b16 %v47
  %v196 = vunpack.c.l.b16 %v48
  %v197 = vunpack.c.l.b16 %v49
  %v198 = vunpack.c.l.b16 %v50
  %v199 = vunpack.c.l.b16 %v51
  %v200 = vunpack.c.l.b16 %v52
  %v201 = vunpack.c.l.b16 %v53
  %v202 = vunpack.c.l.b16 %v54
  %v203 = vunpack.c.l.b16 %v55
  %v204 = vunpack.c.l.b16 %v56
  %v205 = vunpack.c.l.b16 %v57
  %v206 = vunpack.c.l.b16 %v58
  %v207 = vunpack.c.l.b16 %v59
  %v208 = vunpack.c.l.b16 %v60
  %v209 = vunpack.c.l.b16 %v61
  %v210 = vunpack.c.l.b16 %v62
  %v211 = vunpack.c.l.b16 %v63
  %v212 = vunpack.c.l.b16 %v64
  %v213 = vunpack.c.l.b16 %v65
  %v214 = vunpack.c.l.b16 %v66
  %v215 = vunpack.c.l.b16 %v67
  %v216 = vunpack.c.l.b16 %v68
  %v217 = vunpack.c.l.b16 %v69
  %v218 = vunpack.c.l.b16 %v70
  %v219 = vunpack.c.l.b16 %v71
  %v220 = vunpack.c.l.b16 %v72
  %v221 = vunpack.c.l.b16 %v73
  %v222 = vunpack.c.l.b16 %v74
  %v223 = vunpack.c.l.b16 %v75
  %v224 = vunpack.c.l.b16 %v76
  %v225 = vunpack.c.l.b16 %v77
  %v226 = vunpack.c.l.b16 %v78
  %v227 = vunpack.c.l.b16 %v79
  %v228 = vunpack.c.l.b16 %v80
  %v229 = vunpack.c.l.b16 %v81
  %v230 = vunpack.c.l.b16 %v82
  %v231 = vunpack.c.l.b16 %v83
  %v232 = vunpack.c.l.b16 %v84
  %v233 = vunpack.c.l.b16 %v85
  %v234 = vunpack.c.l.b16 %v86
  %v235 = vunpack.c.l.b16 %v87
  %v236 = vunpack.c.l.b16 %v88
  %v237 = vunpack.c.l.b16 %v89
  %v238 = vunpack.c.l.b16 %v90
  %v239 = vpack.c.b16 %v176, %v175
  %v240 = vpack.c.b16 %v178, %v177
  %v241 = vpack.c.b16 %v180, %v179
  %v242 = vpack.c.b16 %v182, %v181
  %v243 = vpack.c.b16 %v184, %v183
  %v244 = vpack.c.b16 %v186, %v185
  %v245 = vpack.c.b16 %v188, %v187
  %v246 = vpack.c.b16 %v190, %v189
  %v247 = vpack.c.b16 %v192, %v191
  %v248 = vpack.c.b16 %v194, %v193
  %v249 = vpack.c.b16 %v196, %v195
  %v250 = vpack.c.b16 %v198, %v197
  %v251 = vpack.c.b16 %v200, %v199
  %v252 = vpack.c.b16 %v202, %v201
  %v253 = vpack.c.b16 %v204, %v203
  %v254 = vpack.c.b16 %v206, %v205
  %v255 = vpack.c.b16 %v208, %v207
  %v256 = vpack.c.b16 %v210, %v209
  %v257 = vpack.c.b16 %v212, %v211
  %v258 = vpack.c.b16 %v214, %v213
  %v259 = vpack.c.b16 %v216, %v215
  %v260 = vpack.c.b16 %v218, %v217
  %v261 = vpack.c.b16 %v220, %v219
  %v262 = vpack.c.b16 %v222, %v221
  %v263 = vpack.c.b16 %v224, %v223
  %v264 = vpack.c.b16 %v226, %v225
  %v265 = vpack.c.b16 %v228, %v227
  %v266 = vpack.c.b16 %v230, %v229
  %v267 = vpack.c.b16 %v232, %v231
  %v268 = vpack.c.b16 %v234, %v233
  %v269 = vpack.c.b16 %v236, %v235
  %v270 = vpack.c.b16 %v238, %v237
  %303 = vmatprep.subr.bf16.mxu0 0
  %304 = vmatpush1.bf16.msra.mxu0 %v239
  %305 = vmatprep.subr.bf16.mxu0 0
  %306 = vmatpush1.bf16.msra.mxu0 %v240
  %307 = vmatprep.subr.bf16.mxu0 0
  %308 = vmatpush1.bf16.msra.mxu0 %v241
  %309 = vmatprep.subr.bf16.mxu0 0
  %310 = vmatpush1.bf16.msra.mxu0 %v242
  %311 = vmatprep.subr.bf16.mxu0 0
  %312 = vmatpush1.bf16.msra.mxu0 %v243
  %313 = vmatprep.subr.bf16.mxu0 0
  %314 = vmatpush1.bf16.msra.mxu0 %v244
  %315 = vmatprep.subr.bf16.mxu0 0
  %316 = vmatpush1.bf16.msra.mxu0 %v245
  %317 = vmatprep.subr.bf16.mxu0 0
  %318 = vmatpush1.bf16.msra.mxu0 %v246
  %319 = vmatprep.subr.bf16.mxu0 0
  %320 = vmatpush1.bf16.msra.mxu0 %v247
  %321 = vmatprep.subr.bf16.mxu0 0
  %322 = vmatpush1.bf16.msra.mxu0 %v248
  %323 = vmatprep.subr.bf16.mxu0 0
  %324 = vmatpush1.bf16.msra.mxu0 %v249
  %325 = vmatprep.subr.bf16.mxu0 0
  %326 = vmatpush1.bf16.msra.mxu0 %v250
  %327 = vmatprep.subr.bf16.mxu0 0
  %328 = vmatpush1.bf16.msra.mxu0 %v251
  %329 = vmatprep.subr.bf16.mxu0 0
  %330 = vmatpush1.bf16.msra.mxu0 %v252
  %331 = vmatprep.subr.bf16.mxu0 0
  %332 = vmatpush1.bf16.msra.mxu0 %v253
  %333 = vmatprep.subr.bf16.mxu0 0
  %334 = vmatpush1.bf16.msra.mxu0 %v254
  %335 = vmatprep.mubr.bf16.mxu0 %v104
  %336 = vmatmul.mubr.bf16.gmra.mrb[0].mxu0 %v103
  %v337 = vpop.f32.mrb[0].mxu0
  %v338 = vadd.f32 0.0, %v337
  %v339 = vpop.f32.mrb[0].mxu0
  %v340 = vpop.f32.mrb[0].mxu0
  %v341 = vadd.f32 0.0, %v340
  %v342 = vpop.f32.mrb[0].mxu0
  %343 = vdwg.mxu0
  %344 = vmatprep.subr.bf16.mxu0 0
  %345 = vmatpush1.bf16.msra.mxu0 %v255
  %346 = vmatprep.subr.bf16.mxu0 0
  %347 = vmatpush1.bf16.msra.mxu0 %v256
  %348 = vmatprep.subr.bf16.mxu0 0
  %349 = vmatpush1.bf16.msra.mxu0 %v257
  %350 = vmatprep.subr.bf16.mxu0 0
  %351 = vmatpush1.bf16.msra.mxu0 %v258
  %352 = vmatprep.subr.bf16.mxu0 0
  %353 = vmatpush1.bf16.msra.mxu0 %v259
  %354 = vmatprep.subr.bf16.mxu0 0
  %355 = vmatpush1.bf16.msra.mxu0 %v260
  %356 = vmatprep.subr.bf16.mxu0 0
  %357 = vmatpush1.bf16.msra.mxu0 %v261
  %358 = vmatprep.subr.bf16.mxu0 0
  %359 = vmatpush1.bf16.msra.mxu0 %v262
  %360 = vmatprep.subr.bf16.mxu0 0
  %361 = vmatpush1.bf16.msra.mxu0 %v263
  %362 = vmatprep.subr.bf16.mxu0 0
  %363 = vmatpush1.bf16.msra.mxu0 %v264
  %364 = vmatprep.subr.bf16.mxu0 0
  %365 = vmatpush1.bf16.msra.mxu0 %v265
  %366 = vmatprep.subr.bf16.mxu0 0
  %367 = vmatpush1.bf16.msra.mxu0 %v266
  %368 = vmatprep.subr.bf16.mxu0 0
  %369 = vmatpush1.bf16.msra.mxu0 %v267
  %370 = vmatprep.subr.bf16.mxu0 0
  %371 = vmatpush1.bf16.msra.mxu0 %v268
  %372 = vmatprep.subr.bf16.mxu0 0
  %373 = vmatpush1.bf16.msra.mxu0 %v269
  %374 = vmatprep.subr.bf16.mxu0 0
  %375 = vmatpush1.bf16.msra.mxu0 %v270
  %376 = vmatprep.mubr.bf16.mxu0 %v106
  %377 = vmatmul.mubr.bf16.gmra.mrb[0].mxu0 %v105
  %v378 = vpop.f32.mrb[0].mxu0
  %v379 = vadd.f32 %v338, %v378
  %v380 = vpop.f32.mrb[0].mxu0
  %v381 = vpop.f32.mrb[0].mxu0
  %v382 = vadd.f32 %v341, %v381
  %v383 = vpop.f32.mrb[0].mxu0
  %384 = vdwg.mxu0
  %v385 = vadd.f32 %v21, %v379
  %v386 = vadd.f32 %v22, %v382
  %387 = vst [vmem:[#allocation2] sm:$0xff] %v385
  %388 = vst [vmem:[#allocation2 + $0x8] sm:$0xff] %v386
  // Predicated region
  $region18: #{encoder_lstm_forward.18} parent=0 // pred_check
    %p389 = pneg %p15
  $region19: #{encoder_lstm_forward.18} parent=0 // pred_check_branch
    %391 = sbr.rel (%p389) target = $region21
  $region20: #{encoder_lstm_forward.18} parent=0 // pred_region
    %v392 = vld [vmem:[#allocation2] sm:$0xff]
    %v393 = vld [vmem:[#allocation2 + $0x8] sm:$0xff]
    %v394 = vld [vmem:[%s2] sm:$0x1]
    %v396 = vlaneseq
    %v397 = vshrl.u32 %v396, 7
    %v398 = vsub.s32 0, %v397
    %v399 = vrot.slane %v394, %v398
    %v401 = vadd.f32 %v392, %v399
    %v402 = vadd.f32 %v393, %v399
    %v403 = vmax.f32 %v401, 0.0
    %v404 = vmax.f32 %v402, 0.0
    %405 = vst [vmem:[%s3] sm:$0xff] %v403
    %406 = vst [vmem:[%s3 + $0x8] sm:$0xff] %v404
  $region21: #{encoder_lstm_forward.18} parent=0 // pred_fallthru
    _
  // Predicated region
  $region22: #{encoder_lstm_forward.18} parent=0 // pred_check
    _
  $region23: #{encoder_lstm_forward.18} parent=0 // pred_check_branch
    %408 = sbr.rel (0) target = $region25
  $region24: #{encoder_lstm_forward.18} parent=0 // pred_region
    _
  $region25: #{encoder_lstm_forward.18} parent=0 // pred_fallthru
    _
  // Predicated region
  $region26: #{encoder_lstm_forward.18} parent=0 // pred_check
    _
  $region27: #{encoder_lstm_forward.18} parent=0 // pred_check_branch
    %410 = sbr.rel (0) target = $region29
  $region28: #{encoder_lstm_forward.18} parent=0 // pred_region
    _
  $region29: #{encoder_lstm_forward.18} parent=0 // pred_fallthru
    _

// kernel: encoder_lstm_forward.19
$region0: #{encoder_lstm_forward.19}
  #allocation0 [shape = 'u32[]', space=smem, size = 0x4, offset = 0x4, fixed_abs, tag = 'smem constant byte address 0x4 - core index']
  #allocation1 [shape = 'u32[144,128]{1,0:T(1,128)}', space=vmem, size = 0x12000, scoped, tag = 'internal scratch']
  #allocation2 [shape = 'f32[16,128]{1,0:T(8,128)}', space=vmem, size = 0x2000, scoped, tag = 'scratch operand']
  %s0 = inlined_call_operand.vmem [shape: bf16[16,128], index: 0, kind: input, shape index: {}]
  %s1 = inlined_call_operand.vmem [shape: bf16[128,128], index: 1, kind: input, shape index: {}]
  %s2 = inlined_call_operand.vmem [shape: f32[1,128], index: 2, kind: input, shape index: {}]
  %s3 = inlined_call_operand.vmem [shape: f32[16,128], index: 3, kind: output, shape index: {}]
  %s4 = sld [smem:[#allocation0]]
  $region30: #{encoder_lstm_forward.19} parent=0
    _
  %s6 = ssub.s32 1, %s4
  %s7 = scalar_select 0, %s6, %s4
  // Predicated region
  $region2: #{encoder_lstm_forward.19} parent=0 // pred_check
    _
  $region3: #{encoder_lstm_forward.19} parent=0 // pred_check_branch
    %9 = sbr.rel (0) target = $region5
  $region4: #{encoder_lstm_forward.19} parent=0 // pred_region
    _
  $region5: #{encoder_lstm_forward.19} parent=0 // pred_fallthru
    _
  // Predicated region
  $region6: #{encoder_lstm_forward.19} parent=0 // pred_check
    _
  $region7: #{encoder_lstm_forward.19} parent=0 // pred_check_branch
    %11 = sbr.rel (0) target = $region9
  $region8: #{encoder_lstm_forward.19} parent=0 // pred_region
    _
  $region9: #{encoder_lstm_forward.19} parent=0 // pred_fallthru
    _
  // Predicated region
  $region10: #{encoder_lstm_forward.19} parent=0 // pred_check
    _
  $region11: #{encoder_lstm_forward.19} parent=0 // pred_check_branch
    %13 = sbr.rel (0) target = $region13
  $region12: #{encoder_lstm_forward.19} parent=0 // pred_region
    _
  $region13: #{encoder_lstm_forward.19} parent=0 // pred_fallthru
    _
  %p15 = scmp.eq.s32.totalorder 0, 0
  // Predicated region
  $region14: #{encoder_lstm_forward.19} parent=0 // pred_check
    %p16 = pneg %p15
  $region15: #{encoder_lstm_forward.19} parent=0 // pred_check_branch
    %18 = sbr.rel (%p16) target = $region17
  $region16: #{encoder_lstm_forward.19} parent=0 // pred_region
    %19 = vst [vmem:[#allocation2] sm:$0xff] 0.0
    %20 = vst [vmem:[#allocation2 + $0x8] sm:$0xff] 0.0
  $region17: #{encoder_lstm_forward.19} parent=0 // pred_fallthru
    _
  %v21 = vld [vmem:[#allocation2] sm:$0xff]
  %v22 = vld [vmem:[#allocation2 + $0x8] sm:$0xff]
  %v23 = vld [vmem:[%s0] sm:$0xf]
  %v24 = vld [vmem:[%s0 + $0x4] sm:$0xf]
  %v25 = vld [vmem:[%s1] sm:$0xf]
  %v26 = vld [vmem:[%s1 + $0x4] sm:$0xf]
  %v27 = vld [vmem:[%s1 + $0x8] sm:$0xf]
  %v28 = vld [vmem:[%s1 + $0xc] sm:$0xf]
  %v29 = vld [vmem:[%s1 + $0x10] sm:$0xf]
  %v30 = vld [vmem:[%s1 + $0x14] sm:$0xf]
  %v31 = vld [vmem:[%s1 + $0x18] sm:$0xf]
  %v32 = vld [vmem:[%s1 + $0x1c] sm:$0xf]
  %v33 = vld [vmem:[%s1 + $0x20] sm:$0xf]
  %v34 = vld [vmem:[%s1 + $0x24] sm:$0xf]
  %v35 = vld [vmem:[%s1 + $0x28] sm:$0xf]
  %v36 = vld [vmem:[%s1 + $0x2c] sm:$0xf]
  %v37 = vld [vmem:[%s1 + $0x30] sm:$0xf]
  %v38 = vld [vmem:[%s1 + $0x34] sm:$0xf]
  %v39 = vld [vmem:[%s1 + $0x38] sm:$0xf]
  %v40 = vld [vmem:[%s1 + $0x3c] sm:$0xf]
  %v43 = vunpack.c.l.b16 %v23
  %v44 = vunpack.c.l.b16 %v24
  %v45 = vpack.c.b16 %v44, %v43
  %v63 = vunpack.c.l.b16 %v25
  %v64 = vunpack.c.l.b16 %v26
  %v65 = vunpack.c.l.b16 %v27
  %v66 = vunpack.c.l.b16 %v28
  %v67 = vunpack.c.l.b16 %v29
  %v68 = vunpack.c.l.b16 %v30
  %v69 = vunpack.c.l.b16 %v31
  %v70 = vunpack.c.l.b16 %v32
  %v71 = vunpack.c.l.b16 %v33
  %v72 = vunpack.c.l.b16 %v34
  %v73 = vunpack.c.l.b16 %v35
  %v74 = vunpack.c.l.b16 %v36
  %v75 = vunpack.c.l.b16 %v37
  %v76 = vunpack.c.l.b16 %v38
  %v77 = vunpack.c.l.b16 %v39
  %v78 = vunpack.c.l.b16 %v40
  %v79 = vpack.c.b16 %v64, %v63
  %v80 = vpack.c.b16 %v66, %v65
  %v81 = vpack.c.b16 %v68, %v67
  %v82 = vpack.c.b16 %v70, %v69
  %v83 = vpack.c.b16 %v72, %v71
  %v84 = vpack.c.b16 %v74, %v73
  %v85 = vpack.c.b16 %v76, %v75
  %v86 = vpack.c.b16 %v78, %v77
  %95 = vmatprep.subr.bf16.mxu0 0
  %96 = vmatpush1.bf16.msra.mxu0 %v79
  %97 = vmatprep.subr.bf16.mxu0 0
  %98 = vmatpush1.bf16.msra.mxu0 %v80
  %99 = vmatprep.subr.bf16.mxu0 0
  %100 = vmatpush1.bf16.msra.mxu0 %v81
  %101 = vmatprep.subr.bf16.mxu0 0
  %102 = vmatpush1.bf16.msra.mxu0 %v82
  %103 = vmatprep.subr.bf16.mxu0 0
  %104 = vmatpush1.bf16.msra.mxu0 %v83
  %105 = vmatprep.subr.bf16.mxu0 0
  %106 = vmatpush1.bf16.msra.mxu0 %v84
  %107 = vmatprep.subr.bf16.mxu0 0
  %108 = vmatpush1.bf16.msra.mxu0 %v85
  %109 = vmatprep.subr.bf16.mxu0 0
  %110 = vmatpush1.bf16.msra.mxu0 %v86
  %111 = vmatprep.subr.bf16.mxu0 0
  %112 = vmatpush1.bf16.msra.mxu0 0
  %113 = vmatprep.subr.bf16.mxu0 0
  %114 = vmatpush1.bf16.msra.mxu0 0
  %115 = vmatprep.subr.bf16.mxu0 0
  %116 = vmatpush1.bf16.msra.mxu0 0
  %117 = vmatprep.subr.bf16.mxu0 0
  %118 = vmatpush1.bf16.msra.mxu0 0
  %119 = vmatprep.subr.bf16.mxu0 0
  %120 = vmatpush1.bf16.msra.mxu0 0
  %121 = vmatprep.subr.bf16.mxu0 0
  %122 = vmatpush1.bf16.msra.mxu0 0
  %123 = vmatprep.subr.bf16.mxu0 0
  %124 = vmatpush1.bf16.msra.mxu0 0
  %125 = vmatprep.subr.bf16.mxu0 0
  %126 = vmatpush1.bf16.msra.mxu0 0
  %127 = vmatprep.mubr.bf16.mxu0 0
  %128 = vmatmul.mubr.bf16.gmra.mrb[0].mxu0 %v45
  %v129 = vpop.f32.mrb[0].mxu0
  %v130 = vadd.f32 0.0, %v129
  %v131 = vpop.f32.mrb[0].mxu0
  %v132 = vpop.f32.mrb[0].mxu0
  %v133 = vadd.f32 0.0, %v132
  %v134 = vpop.f32.mrb[0].mxu0
  %135 = vdwg.mxu0
  %v136 = vadd.f32 %v21, %v130
  %v137 = vadd.f32 %v22, %v133
  %138 = vst [vmem:[#allocation2] sm:$0xff] %v136
  %139 = vst [vmem:[#allocation2 + $0x8] sm:$0xff] %v137
  // Predicated region
  $region18: #{encoder_lstm_forward.19} parent=0 // pred_check
    %p140 = pneg %p15
  $region19: #{encoder_lstm_forward.19} parent=0 // pred_check_branch
    %142 = sbr.rel (%p140) target = $region21
  $region20: #{encoder_lstm_forward.19} parent=0 // pred_region
    %v143 = vld [vmem:[#allocation2] sm:$0xff]
    %v144 = vld [vmem:[#allocation2 + $0x8] sm:$0xff]
    %v145 = vld [vmem:[%s2] sm:$0x1]
    %v147 = vlaneseq
    %v148 = vshrl.u32 %v147, 7
    %v149 = vsub.s32 0, %v148
    %v150 = vrot.slane %v145, %v149
    %v152 = vadd.f32 %v143, %v150
    %v153 = vadd.f32 %v144, %v150
    %v154 = vmax.f32 %v152, 0.0
    %v155 = vmax.f32 %v153, 0.0
    %156 = vst [vmem:[%s3] sm:$0xff] %v154
    %157 = vst [vmem:[%s3 + $0x8] sm:$0xff] %v155
  $region21: #{encoder_lstm_forward.19} parent=0 // pred_fallthru
    _
  // Predicated region
  $region22: #{encoder_lstm_forward.19} parent=0 // pred_check
    _
  $region23: #{encoder_lstm_forward.19} parent=0 // pred_check_branch
    %159 = sbr.rel (0) target = $region25
  $region24: #{encoder_lstm_forward.19} parent=0 // pred_region
    _
  $region25: #{encoder_lstm_forward.19} parent=0 // pred_fallthru
    _
  // Predicated region
  $region26: #{encoder_lstm_forward.19} parent=0 // pred_check
    _
  $region27: #{encoder_lstm_forward.19} parent=0 // pred_check_branch
    %161 = sbr.rel (0) target = $region29
  $region28: #{encoder_lstm_forward.19} parent=0 // pred_region
    _
  $region29: #{encoder_lstm_forward.19} parent=0 // pred_fallthru
    _

// kernel: encoder_lstm_forward.20
$region0: #{encoder_lstm_forward.20}
  #allocation0 [shape = 'u32[]', space=smem, size = 0x4, offset = 0x4, fixed_abs, tag = 'smem constant byte address 0x4 - core index']
  #allocation1 [shape = 'u32[144,128]{1,0:T(1,128)}', space=vmem, size = 0x12000, scoped, tag = 'internal scratch']
  #allocation2 [shape = 'f32[16,128]{1,0:T(8,128)}', space=vmem, size = 0x2000, scoped, tag = 'scratch operand']
  %s0 = inlined_call_operand.vmem [shape: bf16[16,128], index: 0, kind: input, shape index: {}]
  %s1 = inlined_call_operand.vmem [shape: bf16[128,128], index: 1, kind: input, shape index: {}]
  %s2 = inlined_call_operand.vmem [shape: f32[1,128], index: 2, kind: input, shape index: {}]
  %s3 = inlined_call_operand.vmem [shape: f32[16,128], index: 3, kind: output, shape index: {}]
  %s4 = sld [smem:[#allocation0]]
  $region30: #{encoder_lstm_forward.20} parent=0
    _
  %s6 = ssub.s32 1, %s4
  %s7 = scalar_select 0, %s6, %s4
  // Predicated region
  $region2: #{encoder_lstm_forward.20} parent=0 // pred_check
    _
  $region3: #{encoder_lstm_forward.20} parent=0 // pred_check_branch
    %9 = sbr.rel (0) target = $region5
  $region4: #{encoder_lstm_forward.20} parent=0 // pred_region
    _
  $region5: #{encoder_lstm_forward.20} parent=0 // pred_fallthru
    _
  // Predicated region
  $region6: #{encoder_lstm_forward.20} parent=0 // pred_check
    _
  $region7: #{encoder_lstm_forward.20} parent=0 // pred_check_branch
    %11 = sbr.rel (0) target = $region9
  $region8: #{encoder_lstm_forward.20} parent=0 // pred_region
    _
  $region9: #{encoder_lstm_forward.20} parent=0 // pred_fallthru
    _
  // Predicated region
  $region10: #{encoder_lstm_forward.20} parent=0 // pred_check
    _
  $region11: #{encoder_lstm_forward.20} parent=0 // pred_check_branch
    %13 = sbr.rel (0) target = $region13
  $region12: #{encoder_lstm_forward.20} parent=0 // pred_region
    _
  $region13: #{encoder_lstm_forward.20} parent=0 // pred_fallthru
    _
  %p15 = scmp.eq.s32.totalorder 0, 0
  // Predicated region
  $region14: #{encoder_lstm_forward.20} parent=0 // pred_check
    %p16 = pneg %p15
  $region15: #{encoder_lstm_forward.20} parent=0 // pred_check_branch
    %18 = sbr.rel (%p16) target = $region17
  $region16: #{encoder_lstm_forward.20} parent=0 // pred_region
    %19 = vst [vmem:[#allocation2] sm:$0xff] 0.0
    %20 = vst [vmem:[#allocation2 + $0x8] sm:$0xff] 0.0
  $region17: #{encoder_lstm_forward.20} parent=0 // pred_fallthru
    _
  %v21 = vld [vmem:[#allocation2] sm:$0xff]
  %v22 = vld [vmem:[#allocation2 + $0x8] sm:$0xff]
  %v23 = vld [vmem:[%s0] sm:$0xf]
  %v24 = vld [vmem:[%s0 + $0x4] sm:$0xf]
  %v25 = vld [vmem:[%s1] sm:$0xf]
  %v26 = vld [vmem:[%s1 + $0x4] sm:$0xf]
  %v27 = vld [vmem:[%s1 + $0x8] sm:$0xf]
  %v28 = vld [vmem:[%s1 + $0xc] sm:$0xf]
  %v29 = vld [vmem:[%s1 + $0x10] sm:$0xf]
  %v30 = vld [vmem:[%s1 + $0x14] sm:$0xf]
  %v31 = vld [vmem:[%s1 + $0x18] sm:$0xf]
  %v32 = vld [vmem:[%s1 + $0x1c] sm:$0xf]
  %v33 = vld [vmem:[%s1 + $0x20] sm:$0xf]
  %v34 = vld [vmem:[%s1 + $0x24] sm:$0xf]
  %v35 = vld [vmem:[%s1 + $0x28] sm:$0xf]
  %v36 = vld [vmem:[%s1 + $0x2c] sm:$0xf]
  %v37 = vld [vmem:[%s1 + $0x30] sm:$0xf]
  %v38 = vld [vmem:[%s1 + $0x34] sm:$0xf]
  %v39 = vld [vmem:[%s1 + $0x38] sm:$0xf]
  %v40 = vld [vmem:[%s1 + $0x3c] sm:$0xf]
  %v43 = vunpack.c.l.b16 %v23
  %v44 = vunpack.c.l.b16 %v24
  %v45 = vpack.c.b16 %v44, %v43
  %v63 = vunpack.c.l.b16 %v25
  %v64 = vunpack.c.l.b16 %v26
  %v65 = vunpack.c.l.b16 %v27
  %v66 = vunpack.c.l.b16 %v28
  %v67 = vunpack.c.l.b16 %v29
  %v68 = vunpack.c.l.b16 %v30
  %v69 = vunpack.c.l.b16 %v31
  %v70 = vunpack.c.l.b16 %v32
  %v71 = vunpack.c.l.b16 %v33
  %v72 = vunpack.c.l.b16 %v34
  %v73 = vunpack.c.l.b16 %v35
  %v74 = vunpack.c.l.b16 %v36
  %v75 = vunpack.c.l.b16 %v37
  %v76 = vunpack.c.l.b16 %v38
  %v77 = vunpack.c.l.b16 %v39
  %v78 = vunpack.c.l.b16 %v40
  %v79 = vpack.c.b16 %v64, %v63
  %v80 = vpack.c.b16 %v66, %v65
  %v81 = vpack.c.b16 %v68, %v67
  %v82 = vpack.c.b16 %v70, %v69
  %v83 = vpack.c.b16 %v72, %v71
  %v84 = vpack.c.b16 %v74, %v73
  %v85 = vpack.c.b16 %v76, %v75
  %v86 = vpack.c.b16 %v78, %v77
  %95 = vmatprep.subr.bf16.mxu0 0
  %96 = vmatpush1.bf16.msra.mxu0 %v79
  %97 = vmatprep.subr.bf16.mxu0 0
  %98 = vmatpush1.bf16.msra.mxu0 %v80
  %99 = vmatprep.subr.bf16.mxu0 0
  %100 = vmatpush1.bf16.msra.mxu0 %v81
  %101 = vmatprep.subr.bf16.mxu0 0
  %102 = vmatpush1.bf16.msra.mxu0 %v82
  %103 = vmatprep.subr.bf16.mxu0 0
  %104 = vmatpush1.bf16.msra.mxu0 %v83
  %105 = vmatprep.subr.bf16.mxu0 0
  %106 = vmatpush1.bf16.msra.mxu0 %v84
  %107 = vmatprep.subr.bf16.mxu0 0
  %108 = vmatpush1.bf16.msra.mxu0 %v85
  %109 = vmatprep.subr.bf16.mxu0 0
  %110 = vmatpush1.bf16.msra.mxu0 %v86
  %111 = vmatprep.subr.bf16.mxu0 0
  %112 = vmatpush1.bf16.msra.mxu0 0
  %113 = vmatprep.subr.bf16.mxu0 0
  %114 = vmatpush1.bf16.msra.mxu0 0
  %115 = vmatprep.subr.bf16.mxu0 0
  %116 = vmatpush1.bf16.msra.mxu0 0
  %117 = vmatprep.subr.bf16.mxu0 0
  %118 = vmatpush1.bf16.msra.mxu0 0
  %119 = vmatprep.subr.bf16.mxu0 0
  %120 = vmatpush1.bf16.msra.mxu0 0
  %121 = vmatprep.subr.bf16.mxu0 0
  %122 = vmatpush1.bf16.msra.mxu0 0
  %123 = vmatprep.subr.bf16.mxu0 0
  %124 = vmatpush1.bf16.msra.mxu0 0
  %125 = vmatprep.subr.bf16.mxu0 0
  %126 = vmatpush1.bf16.msra.mxu0 0
  %127 = vmatprep.mubr.bf16.mxu0 0
  %128 = vmatmul.mubr.bf16.gmra.mrb[0].mxu0 %v45
  %v129 = vpop.f32.mrb[0].mxu0
  %v130 = vadd.f32 0.0, %v129
  %v131 = vpop.f32.mrb[0].mxu0
  %v132 = vpop.f32.mrb[0].mxu0
  %v133 = vadd.f32 0.0, %v132
  %v134 = vpop.f32.mrb[0].mxu0
  %135 = vdwg.mxu0
  %v136 = vadd.f32 %v21, %v130
  %v137 = vadd.f32 %v22, %v133
  %138 = vst [vmem:[#allocation2] sm:$0xff] %v136
  %139 = vst [vmem:[#allocation2 + $0x8] sm:$0xff] %v137
  // Predicated region
  $region18: #{encoder_lstm_forward.20} parent=0 // pred_check
    %p140 = pneg %p15
  $region19: #{encoder_lstm_forward.20} parent=0 // pred_check_branch
    %142 = sbr.rel (%p140) target = $region21
  $region20: #{encoder_lstm_forward.20} parent=0 // pred_region
    %v143 = vld [vmem:[#allocation2] sm:$0xff]
    %v144 = vld [vmem:[#allocation2 + $0x8] sm:$0xff]
    %v145 = vld [vmem:[%s2] sm:$0x1]
    %v147 = vlaneseq
    %v148 = vshrl.u32 %v147, 7
    %v149 = vsub.s32 0, %v148
    %v150 = vrot.slane %v145, %v149
    %v152 = vadd.f32 %v143, %v150
    %v153 = vadd.f32 %v144, %v150
    %154 = vst [vmem:[%s3] sm:$0xff] %v152
    %155 = vst [vmem:[%s3 + $0x8] sm:$0xff] %v153
  $region21: #{encoder_lstm_forward.20} parent=0 // pred_fallthru
    _
  // Predicated region
  $region22: #{encoder_lstm_forward.20} parent=0 // pred_check
    _
  $region23: #{encoder_lstm_forward.20} parent=0 // pred_check_branch
    %157 = sbr.rel (0) target = $region25
  $region24: #{encoder_lstm_forward.20} parent=0 // pred_region
    _
  $region25: #{encoder_lstm_forward.20} parent=0 // pred_fallthru
    _
  // Predicated region
  $region26: #{encoder_lstm_forward.20} parent=0 // pred_check
    _
  $region27: #{encoder_lstm_forward.20} parent=0 // pred_check_branch
    %159 = sbr.rel (0) target = $region29
  $region28: #{encoder_lstm_forward.20} parent=0 // pred_region
    _
  $region29: #{encoder_lstm_forward.20} parent=0 // pred_fallthru
    _

// kernel: encoder_lstm_forward.22
$region0: #{encoder_lstm_forward.22}
  #allocation0 [shape = 'u32[]', space=smem, size = 0x4, offset = 0x4, fixed_abs, tag = 'smem constant byte address 0x4 - core index']
  #allocation1 [shape = 'u32[144,128]{1,0:T(1,128)}', space=vmem, size = 0x12000, scoped, tag = 'internal scratch']
  #allocation2 [shape = 'f32[16,256]{1,0:T(8,128)}', space=vmem, size = 0x4000, scoped, tag = 'scratch operand']
  %s0 = inlined_call_operand.vmem [shape: bf16[16,128], index: 0, kind: input, shape index: {}]
  %s1 = inlined_call_operand.vmem [shape: bf16[128,256], index: 1, kind: input, shape index: {}]
  %s2 = inlined_call_operand.vmem [shape: f32[1,256], index: 2, kind: input, shape index: {}]
  %s3 = inlined_call_operand.vmem [shape: bf16[16,256], index: 3, kind: output, shape index: {}]
  %s4 = sld [smem:[#allocation0]]
  $region30: #{encoder_lstm_forward.22} parent=0
    _
  %s6 = ssub.s32 1, %s4
  %s7 = scalar_select 0, %s6, %s4
  // Predicated region
  $region2: #{encoder_lstm_forward.22} parent=0 // pred_check
    _
  $region3: #{encoder_lstm_forward.22} parent=0 // pred_check_branch
    %9 = sbr.rel (0) target = $region5
  $region4: #{encoder_lstm_forward.22} parent=0 // pred_region
    _
  $region5: #{encoder_lstm_forward.22} parent=0 // pred_fallthru
    _
  // Predicated region
  $region6: #{encoder_lstm_forward.22} parent=0 // pred_check
    _
  $region7: #{encoder_lstm_forward.22} parent=0 // pred_check_branch
    %11 = sbr.rel (0) target = $region9
  $region8: #{encoder_lstm_forward.22} parent=0 // pred_region
    _
  $region9: #{encoder_lstm_forward.22} parent=0 // pred_fallthru
    _
  // Predicated region
  $region10: #{encoder_lstm_forward.22} parent=0 // pred_check
    _
  $region11: #{encoder_lstm_forward.22} parent=0 // pred_check_branch
    %13 = sbr.rel (0) target = $region13
  $region12: #{encoder_lstm_forward.22} parent=0 // pred_region
    _
  $region13: #{encoder_lstm_forward.22} parent=0 // pred_fallthru
    _
  %p15 = scmp.eq.s32.totalorder 0, 0
  // Predicated region
  $region14: #{encoder_lstm_forward.22} parent=0 // pred_check
    %p16 = pneg %p15
  $region15: #{encoder_lstm_forward.22} parent=0 // pred_check_branch
    %18 = sbr.rel (%p16) target = $region17
  $region16: #{encoder_lstm_forward.22} parent=0 // pred_region
    %19 = vst [vmem:[#allocation2] sm:$0xff] 0.0
    %20 = vst [vmem:[#allocation2 + $0x8] sm:$0xff] 0.0
    %21 = vst [vmem:[#allocation2 + $0x10] sm:$0xff] 0.0
    %22 = vst [vmem:[#allocation2 + $0x18] sm:$0xff] 0.0
  $region17: #{encoder_lstm_forward.22} parent=0 // pred_fallthru
    _
  %v23 = vld [vmem:[#allocation2] sm:$0xff]
  %v24 = vld [vmem:[#allocation2 + $0x8] sm:$0xff]
  %v25 = vld [vmem:[#allocation2 + $0x10] sm:$0xff]
  %v26 = vld [vmem:[#allocation2 + $0x18] sm:$0xff]
  %v27 = vld [vmem:[%s0] sm:$0xf]
  %v28 = vld [vmem:[%s0 + $0x4] sm:$0xf]
  %v29 = vld [vmem:[%s1] sm:$0xff]
  %v30 = vld [vmem:[%s1 + $0x8] sm:$0xff]
  %v31 = vld [vmem:[%s1 + $0x10] sm:$0xff]
  %v32 = vld [vmem:[%s1 + $0x18] sm:$0xff]
  %v33 = vld [vmem:[%s1 + $0x20] sm:$0xff]
  %v34 = vld [vmem:[%s1 + $0x28] sm:$0xff]
  %v35 = vld [vmem:[%s1 + $0x30] sm:$0xff]
  %v36 = vld [vmem:[%s1 + $0x38] sm:$0xff]
  %v37 = vld [vmem:[%s1 + $0x40] sm:$0xff]
  %v38 = vld [vmem:[%s1 + $0x48] sm:$0xff]
  %v39 = vld [vmem:[%s1 + $0x50] sm:$0xff]
  %v40 = vld [vmem:[%s1 + $0x58] sm:$0xff]
  %v41 = vld [vmem:[%s1 + $0x60] sm:$0xff]
  %v42 = vld [vmem:[%s1 + $0x68] sm:$0xff]
  %v43 = vld [vmem:[%s1 + $0x70] sm:$0xff]
  %v44 = vld [vmem:[%s1 + $0x78] sm:$0xff]
  %v47 = vunpack.c.l.b16 %v27
  %v48 = vunpack.c.l.b16 %v28
  %v49 = vpack.c.b16 %v48, %v47
  %v67 = vunpack.c.l.b16 %v29
  %v68 = vunpack.c.h.b16 %v29
  %v69 = vunpack.c.l.b16 %v30
  %v70 = vunpack.c.h.b16 %v30
  %v71 = vunpack.c.l.b16 %v31
  %v72 = vunpack.c.h.b16 %v31
  %v73 = vunpack.c.l.b16 %v32
  %v74 = vunpack.c.h.b16 %v32
  %v75 = vunpack.c.l.b16 %v33
  %v76 = vunpack.c.h.b16 %v33
  %v77 = vunpack.c.l.b16 %v34
  %v78 = vunpack.c.h.b16 %v34
  %v79 = vunpack.c.l.b16 %v35
  %v80 = vunpack.c.h.b16 %v35
  %v81 = vunpack.c.l.b16 %v36
  %v82 = vunpack.c.h.b16 %v36
  %v83 = vunpack.c.l.b16 %v37
  %v84 = vunpack.c.h.b16 %v37
  %v85 = vunpack.c.l.b16 %v38
  %v86 = vunpack.c.h.b16 %v38
  %v87 = vunpack.c.l.b16 %v39
  %v88 = vunpack.c.h.b16 %v39
  %v89 = vunpack.c.l.b16 %v40
  %v90 = vunpack.c.h.b16 %v40
  %v91 = vunpack.c.l.b16 %v41
  %v92 = vunpack.c.h.b16 %v41
  %v93 = vunpack.c.l.b16 %v42
  %v94 = vunpack.c.h.b16 %v42
  %v95 = vunpack.c.l.b16 %v43
  %v96 = vunpack.c.h.b16 %v43
  %v97 = vunpack.c.l.b16 %v44
  %v98 = vunpack.c.h.b16 %v44
  %v99 = vpack.c.b16 %v69, %v67
  %v100 = vpack.c.b16 %v70, %v68
  %v101 = vpack.c.b16 %v73, %v71
  %v102 = vpack.c.b16 %v74, %v72
  %v103 = vpack.c.b16 %v77, %v75
  %v104 = vpack.c.b16 %v78, %v76
  %v105 = vpack.c.b16 %v81, %v79
  %v106 = vpack.c.b16 %v82, %v80
  %v107 = vpack.c.b16 %v85, %v83
  %v108 = vpack.c.b16 %v86, %v84
  %v109 = vpack.c.b16 %v89, %v87
  %v110 = vpack.c.b16 %v90, %v88
  %v111 = vpack.c.b16 %v93, %v91
  %v112 = vpack.c.b16 %v94, %v92
  %v113 = vpack.c.b16 %v97, %v95
  %v114 = vpack.c.b16 %v98, %v96
  %131 = vmatprep.subr.bf16.mxu0 %v100
  %132 = vmatpush1.bf16.msra.mxu0 %v99
  %133 = vmatprep.subr.bf16.mxu0 %v102
  %134 = vmatpush1.bf16.msra.mxu0 %v101
  %135 = vmatprep.subr.bf16.mxu0 %v104
  %136 = vmatpush1.bf16.msra.mxu0 %v103
  %137 = vmatprep.subr.bf16.mxu0 %v106
  %138 = vmatpush1.bf16.msra.mxu0 %v105
  %139 = vmatprep.subr.bf16.mxu0 %v108
  %140 = vmatpush1.bf16.msra.mxu0 %v107
  %141 = vmatprep.subr.bf16.mxu0 %v110
  %142 = vmatpush1.bf16.msra.mxu0 %v109
  %143 = vmatprep.subr.bf16.mxu0 %v112
  %144 = vmatpush1.bf16.msra.mxu0 %v111
  %145 = vmatprep.subr.bf16.mxu0 %v114
  %146 = vmatpush1.bf16.msra.mxu0 %v113
  %147 = vmatprep.subr.bf16.mxu0 0
  %148 = vmatpush1.bf16.msra.mxu0 0
  %149 = vmatprep.subr.bf16.mxu0 0
  %150 = vmatpush1.bf16.msra.mxu0 0
  %151 = vmatprep.subr.bf16.mxu0 0
  %152 = vmatpush1.bf16.msra.mxu0 0
  %153 = vmatprep.subr.bf16.mxu0 0
  %154 = vmatpush1.bf16.msra.mxu0 0
  %155 = vmatprep.subr.bf16.mxu0 0
  %156 = vmatpush1.bf16.msra.mxu0 0
  %157 = vmatprep.subr.bf16.mxu0 0
  %158 = vmatpush1.bf16.msra.mxu0 0
  %159 = vmatprep.subr.bf16.mxu0 0
  %160 = vmatpush1.bf16.msra.mxu0 0
  %161 = vmatprep.subr.bf16.mxu0 0
  %162 = vmatpush1.bf16.msra.mxu0 0
  %163 = vmatprep.mubr.bf16.mxu0 0
  %164 = vmatmul.mubr.bf16.gmra.mrb[0].mxu0 %v49
  %v165 = vpop.f32.mrb[0].mxu0
  %v166 = vadd.f32 0.0, %v165
  %v167 = vpop.f32.mrb[0].mxu0
  %v168 = vadd.f32 0.0, %v167
  %v169 = vpop.f32.mrb[0].mxu0
  %v170 = vadd.f32 0.0, %v169
  %v171 = vpop.f32.mrb[0].mxu0
  %v172 = vadd.f32 0.0, %v171
  %173 = vdwg.mxu0
  %v174 = vadd.f32 %v23, %v166
  %v175 = vadd.f32 %v24, %v168
  %v176 = vadd.f32 %v25, %v170
  %v177 = vadd.f32 %v26, %v172
  %178 = vst [vmem:[#allocation2] sm:$0xff] %v174
  %179 = vst [vmem:[#allocation2 + $0x8] sm:$0xff] %v175
  %180 = vst [vmem:[#allocation2 + $0x10] sm:$0xff] %v176
  %181 = vst [vmem:[#allocation2 + $0x18] sm:$0xff] %v177
  // Predicated region
  $region18: #{encoder_lstm_forward.22} parent=0 // pred_check
    %p182 = pneg %p15
  $region19: #{encoder_lstm_forward.22} parent=0 // pred_check_branch
    %184 = sbr.rel (%p182) target = $region21
  $region20: #{encoder_lstm_forward.22} parent=0 // pred_region
    %v185 = vld [vmem:[#allocation2] sm:$0xff]
    %v186 = vld [vmem:[#allocation2 + $0x8] sm:$0xff]
    %v187 = vld [vmem:[#allocation2 + $0x10] sm:$0xff]
    %v188 = vld [vmem:[#allocation2 + $0x18] sm:$0xff]
    %v189 = vld [vmem:[%s2] sm:$0x3]
    %v191 = vlaneseq
    %v192 = vshrl.u32 %v191, 7
    %v193 = vsub.s32 0, %v192
    %v194 = vrot.slane %v189, %v193
    %v195 = vlaneseq
    %v196 = vshrl.u32 %v195, 7
    %v197 = vsub.s32 1, %v196
    %v198 = vrot.slane %v189, %v197
    %v201 = vadd.f32 %v185, %v194
    %v202 = vadd.f32 %v186, %v198
    %v203 = vadd.f32 %v187, %v194
    %v204 = vadd.f32 %v188, %v198
    %v205 = vpack.c.bf16 %v203, %v201
    %v206 = vpack.c.bf16 %v204, %v202
    %v209 = vunpack.c.l.b16 %v205
    %v210 = vunpack.c.l.b16 %v206
    %v211 = vunpack.c.h.b16 %v205
    %v212 = vunpack.c.h.b16 %v206
    %v213 = vpack.c.b16 %v210, %v209
    %v214 = vpack.c.b16 %v212, %v211
    %217 = vst [vmem:[%s3] sm:$0xff] %v213
    %218 = vst [vmem:[%s3 + $0x8] sm:$0xff] %v214
  $region21: #{encoder_lstm_forward.22} parent=0 // pred_fallthru
    _
  // Predicated region
  $region22: #{encoder_lstm_forward.22} parent=0 // pred_check
    _
  $region23: #{encoder_lstm_forward.22} parent=0 // pred_check_branch
    %220 = sbr.rel (0) target = $region25
  $region24: #{encoder_lstm_forward.22} parent=0 // pred_region
    _
  $region25: #{encoder_lstm_forward.22} parent=0 // pred_fallthru
    _
  // Predicated region
  $region26: #{encoder_lstm_forward.22} parent=0 // pred_check
    _
  $region27: #{encoder_lstm_forward.22} parent=0 // pred_check_branch
    %222 = sbr.rel (0) target = $region29
  $region28: #{encoder_lstm_forward.22} parent=0 // pred_region
    _
  $region29: #{encoder_lstm_forward.22} parent=0 // pred_fallthru
    _

// kernel: encoder_lstm_forward.23
$region0: #{encoder_lstm_forward.23}
  #allocation0 [shape = 'u32[]', space=smem, size = 0x4, offset = 0x4, fixed_abs, tag = 'smem constant byte address 0x4 - core index']
  #allocation1 [shape = 'u32[144,128]{1,0:T(1,128)}', space=vmem, size = 0x12000, scoped, tag = 'internal scratch']
  #allocation2 [shape = 'f32[2,64]{1,0:T(2,128)}', space=vmem, size = 0x400, scoped, tag = 'scratch operand']
  #allocation3 [shape = 'f32[2,64]{1,0:T(2,128)}', space=vmem, size = 0x400, scoped, tag = 'scratch operand']
  %s0 = inlined_call_operand.vmem [shape: bf16[2,2,8,256], index: 0, kind: input, shape index: {}]
  %s1 = inlined_call_operand.vmem [shape: f32[2,8,1], index: 1, kind: input, shape index: {}]
  %s2 = inlined_call_operand.vmem [shape: bf16[2,64,256], index: 2, kind: input, shape index: {}]
  %s3 = inlined_call_operand.vmem [shape: f32[2,2,8,64], index: 3, kind: output, shape index: {0}]
  %s4 = inlined_call_operand.vmem [shape: f32[2,2,64], index: 4, kind: output, shape index: {1}]
  %s5 = inlined_call_operand.vmem [shape: f32[2,2,64], index: 5, kind: output, shape index: {2}]
  %6 = xla_tuple %s3, %s4, %s5
  %s7 = sld [smem:[#allocation0]]
  $region69: #{encoder_lstm_forward.23} parent=0
    _
  %s9 = ssub.s32 1, %s7
  %s10 = scalar_select 0, %s9, %s7
  loop: start=0, step=1, limit=4
  $region2: #{encoder_lstm_forward.23} parent=0 // loop_pre_header
    _
  $region3: #{encoder_lstm_forward.23} parent=0 // loop_header
    %s12 = sphi 0, %s16
    %p13 = scmp.ge.s32.totalorder %s12, 4
    %s19 = sphi 0, %s31
    %s20 = sphi 0, %s27
    %s21 = sphi 0, %s19
    %s22 = sphi 0, %s20
    %s23 = sphi 0, %s21
    %s24 = sphi 0, %s22
    %s36 = sphi 0, %s38
    %s39 = sphi 0, %s36
    %s40 = sphi 0, %s39
    %s56 = sphi 0, %s40
    %s62 = sphi 0, %s64
    %s65 = sphi 0, %s62
    %s66 = sphi 0, %s65
    %s82 = sphi 0, %s66
    %s88 = sphi 0, %s90
    %s91 = sphi 0, %s88
    %s92 = sphi 0, %s91
    %s108 = sphi 0, %s92
    %s116 = sphi 0, %s118
    %s119 = sphi 0, %s116
    %s120 = sphi 0, %s119
    %s136 = sphi 0, %s120
    %s142 = sphi 0, %s144
    %s145 = sphi 0, %s142
    %s146 = sphi 0, %s145
    %s162 = sphi 0, %s146
    %s168 = sphi 0, %s170
    %s171 = sphi 0, %s168
    %s172 = sphi 0, %s171
    %s188 = sphi 0, %s172
  $region4: #{encoder_lstm_forward.23} parent=0 // loop_header_branch
    %15 = sbr.rel (%p13) target = $region8
  $region5: #{encoder_lstm_forward.23} parent=0 // loop_body
    %s17 = ssub.s32 %s12, 1
    %s18 = ssub.s32 %s12, 2
    %s25 = sadd.s32 1, %s20
    %p26 = scmp.ge.s32.totalorder %s25, 1
    %s27 = scalar_select %p26, 0, %s25
    %s28 = sadd.s32 1, %s19
    %s29 = scalar_select %p26, %s28, %s19
    %p30 = scmp.ge.s32.totalorder %s29, 2
    %s31 = scalar_select %p30, 0, %s29
    %s32 = ssub.s32 %s19, %s31
    %s33 = ssub.s32 %s20, %s27
    %s34 = sor.u32 %s32, %s33
    %p35 = scmp.eq.s32.totalorder %s34, 0
    %s37 = sadd.s32 %s36, 1
    %s38 = scalar_select %p35, %s36, %s37
    %p41 = pneg %p35
    %p42 = scmp.eq.s32.totalorder %s12, 1
    %p43 = por %p41, %p42
    %p44 = scmp.ne.s32.totalorder %s36, %s39
    %p45 = scmp.eq.s32.totalorder %s12, 0
    %p46 = por %p44, %p45
    %p47 = scmp.ne.s32.totalorder %s36, %s39
    %p48 = scmp.eq.s32.totalorder %s17, 1
    %p49 = por %p47, %p48
    %p50 = scmp.ne.s32.totalorder %s39, %s40
    %p51 = scmp.eq.s32.totalorder %s17, 0
    %p52 = por %p50, %p51
    %p53 = scmp.ne.s32.totalorder %s39, %s40
    %p54 = scmp.eq.s32.totalorder %s18, 1
    %p55 = por %p53, %p54
    %p57 = scmp.ne.s32.totalorder %s40, %s56
    %p58 = scmp.eq.s32.totalorder %s18, 0
    %p59 = por %p57, %p58
    %s60 = ssub.s32 %s20, %s27
    %p61 = scmp.eq.s32.totalorder %s60, 0
    %s63 = sadd.s32 %s62, 1
    %s64 = scalar_select %p61, %s62, %s63
    %p67 = pneg %p61
    %p68 = scmp.eq.s32.totalorder %s12, 1
    %p69 = por %p67, %p68
    %p70 = scmp.ne.s32.totalorder %s62, %s65
    %p71 = scmp.eq.s32.totalorder %s12, 0
    %p72 = por %p70, %p71
    %p73 = scmp.ne.s32.totalorder %s62, %s65
    %p74 = scmp.eq.s32.totalorder %s17, 1
    %p75 = por %p73, %p74
    %p76 = scmp.ne.s32.totalorder %s65, %s66
    %p77 = scmp.eq.s32.totalorder %s17, 0
    %p78 = por %p76, %p77
    %p79 = scmp.ne.s32.totalorder %s65, %s66
    %p80 = scmp.eq.s32.totalorder %s18, 1
    %p81 = por %p79, %p80
    %p83 = scmp.ne.s32.totalorder %s66, %s82
    %p84 = scmp.eq.s32.totalorder %s18, 0
    %p85 = por %p83, %p84
    %s86 = ssub.s32 %s19, %s31
    %p87 = scmp.eq.s32.totalorder %s86, 0
    %s89 = sadd.s32 %s88, 1
    %s90 = scalar_select %p87, %s88, %s89
    %p93 = pneg %p87
    %p94 = scmp.eq.s32.totalorder %s12, 1
    %p95 = por %p93, %p94
    %p96 = scmp.ne.s32.totalorder %s88, %s91
    %p97 = scmp.eq.s32.totalorder %s12, 0
    %p98 = por %p96, %p97
    %p99 = scmp.ne.s32.totalorder %s88, %s91
    %p100 = scmp.eq.s32.totalorder %s17, 1
    %p101 = por %p99, %p100
    %p102 = scmp.ne.s32.totalorder %s91, %s92
    %p103 = scmp.eq.s32.totalorder %s17, 0
    %p104 = por %p102, %p103
    %p105 = scmp.ne.s32.totalorder %s91, %s92
    %p106 = scmp.eq.s32.totalorder %s18, 1
    %p107 = por %p105, %p106
    %p109 = scmp.ne.s32.totalorder %s92, %s108
    %p110 = scmp.eq.s32.totalorder %s18, 0
    %p111 = por %p109, %p110
    %s112 = ssub.s32 %s19, %s31
    %s113 = ssub.s32 %s20, %s27
    %s114 = sor.u32 %s112, %s113
    %p115 = scmp.eq.s32.totalorder %s114, 0
    %s117 = sadd.s32 %s116, 1
    %s118 = scalar_select %p115, %s116, %s117
    %p121 = pneg %p115
    %p122 = scmp.eq.s32.totalorder %s12, 1
    %p123 = por %p121, %p122
    %p124 = scmp.ne.s32.totalorder %s116, %s119
    %p125 = scmp.eq.s32.totalorder %s12, 0
    %p126 = por %p124, %p125
    %p127 = scmp.ne.s32.totalorder %s116, %s119
    %p128 = scmp.eq.s32.totalorder %s17, 1
    %p129 = por %p127, %p128
    %p130 = scmp.ne.s32.totalorder %s119, %s120
    %p131 = scmp.eq.s32.totalorder %s17, 0
    %p132 = por %p130, %p131
    %p133 = scmp.ne.s32.totalorder %s119, %s120
    %p134 = scmp.eq.s32.totalorder %s18, 1
    %p135 = por %p133, %p134
    %p137 = scmp.ne.s32.totalorder %s120, %s136
    %p138 = scmp.eq.s32.totalorder %s18, 0
    %p139 = por %p137, %p138
    %s140 = ssub.s32 %s19, %s31
    %p141 = scmp.eq.s32.totalorder %s140, 0
    %s143 = sadd.s32 %s142, 1
    %s144 = scalar_select %p141, %s142, %s143
    %p147 = pneg %p141
    %p148 = scmp.eq.s32.totalorder %s12, 1
    %p149 = por %p147, %p148
    %p150 = scmp.ne.s32.totalorder %s142, %s145
    %p151 = scmp.eq.s32.totalorder %s12, 0
    %p152 = por %p150, %p151
    %p153 = scmp.ne.s32.totalorder %s142, %s145
    %p154 = scmp.eq.s32.totalorder %s17, 1
    %p155 = por %p153, %p154
    %p156 = scmp.ne.s32.totalorder %s145, %s146
    %p157 = scmp.eq.s32.totalorder %s17, 0
    %p158 = por %p156, %p157
    %p159 = scmp.ne.s32.totalorder %s145, %s146
    %p160 = scmp.eq.s32.totalorder %s18, 1
    %p161 = por %p159, %p160
    %p163 = scmp.ne.s32.totalorder %s146, %s162
    %p164 = scmp.eq.s32.totalorder %s18, 0
    %p165 = por %p163, %p164
    %s166 = ssub.s32 %s19, %s31
    %p167 = scmp.eq.s32.totalorder %s166, 0
    %s169 = sadd.s32 %s168, 1
    %s170 = scalar_select %p167, %s168, %s169
    %p173 = pneg %p167
    %p174 = scmp.eq.s32.totalorder %s12, 1
    %p175 = por %p173, %p174
    %p176 = scmp.ne.s32.totalorder %s168, %s171
    %p177 = scmp.eq.s32.totalorder %s12, 0
    %p178 = por %p176, %p177
    %p179 = scmp.ne.s32.totalorder %s168, %s171
    %p180 = scmp.eq.s32.totalorder %s17, 1
    %p181 = por %p179, %p180
    %p182 = scmp.ne.s32.totalorder %s171, %s172
    %p183 = scmp.eq.s32.totalorder %s17, 0
    %p184 = por %p182, %p183
    %p185 = scmp.ne.s32.totalorder %s171, %s172
    %p186 = scmp.eq.s32.totalorder %s18, 1
    %p187 = por %p185, %p186
    %p189 = scmp.ne.s32.totalorder %s172, %s188
    %p190 = scmp.eq.s32.totalorder %s18, 0
    %p191 = por %p189, %p190
    %p192 = scmp.le.s32.totalorder 1, %s12
    %p193 = scmp.lt.s32.totalorder %s12, 3
    %p194 = pnand %p192, %p193
    %p195 = pneg %p194
    // Predicated region
    $region9: #{encoder_lstm_forward.23} parent=5 // pred_check
      _
    $region10: #{encoder_lstm_forward.23} parent=5 // pred_check_branch
      %197 = sbr.rel (%p194) target = $region12
    $region11: #{encoder_lstm_forward.23} parent=5 // pred_region
      %s198 = ssub.s32 %s12, 1
      // Predicated region
      $region13: #{encoder_lstm_forward.23} parent=11 // pred_check
        %p199 = pneg %p78
      $region14: #{encoder_lstm_forward.23} parent=11 // pred_check_branch
        %201 = sbr.rel (%p199) target = $region16
      $region15: #{encoder_lstm_forward.23} parent=11 // pred_region
        %p202 = scmp.lt.s32.totalorder %s22, 0
        %s203 = scalar_select %p202, %s22, 0
        %s204 = smul.addr %s203, 8
        %s205 = scalar_lea.vmem %s1, %s204
      $region16: #{encoder_lstm_forward.23} parent=11 // pred_fallthru
        _
    $region12: #{encoder_lstm_forward.23} parent=5 // pred_fallthru
      _
    %p206 = scmp.lt.s32.totalorder %s12, 2
    // Predicated region
    $region17: #{encoder_lstm_forward.23} parent=5 // pred_check
      %p207 = pneg %p206
    $region18: #{encoder_lstm_forward.23} parent=5 // pred_check_branch
      %209 = sbr.rel (%p207) target = $region20
    $region19: #{encoder_lstm_forward.23} parent=5 // pred_region
      // Predicated region
      $region21: #{encoder_lstm_forward.23} parent=19 // pred_check
        %p210 = pneg %p46
      $region22: #{encoder_lstm_forward.23} parent=19 // pred_check_branch
        %212 = sbr.rel (%p210) target = $region24
      $region23: #{encoder_lstm_forward.23} parent=19 // pred_region
        %p213 = scmp.lt.s32.totalorder %s19, 1
        %s214 = scalar_select %p213, %s19, 1
        %p215 = scmp.lt.s32.totalorder %s20, 0
        %s216 = scalar_select %p215, %s20, 0
        %s217 = smul.addr %s216, 2
        %s218 = smul.addr %s214, 4
        %s219 = sadd.s32 %s217, %s218
        %s220 = smul.addr %s219, 4
        %s221 = scalar_lea.vmem %s0, %s220
      $region24: #{encoder_lstm_forward.23} parent=19 // pred_fallthru
        _
      // Predicated region
      $region25: #{encoder_lstm_forward.23} parent=19 // pred_check
        %p222 = pneg %p98
      $region26: #{encoder_lstm_forward.23} parent=19 // pred_check_branch
        %224 = sbr.rel (%p222) target = $region28
      $region27: #{encoder_lstm_forward.23} parent=19 // pred_region
        %p225 = scmp.lt.s32.totalorder %s19, 1
        %s226 = scalar_select %p225, %s19, 1
        %s227 = smul.addr %s226, 16
        %s228 = smul.addr %s227, 4
        %s229 = scalar_lea.vmem %s2, %s228
      $region28: #{encoder_lstm_forward.23} parent=19 // pred_fallthru
        _
    $region20: #{encoder_lstm_forward.23} parent=5 // pred_fallthru
      _
    %p230 = scmp.le.s32.totalorder 1, %s12
    %p231 = scmp.lt.s32.totalorder %s12, 3
    %p232 = pnand %p230, %p231
    %p233 = pneg %p232
    // Predicated region
    $region29: #{encoder_lstm_forward.23} parent=5 // pred_check
      _
    $region30: #{encoder_lstm_forward.23} parent=5 // pred_check_branch
      %235 = sbr.rel (%p232) target = $region32
    $region31: #{encoder_lstm_forward.23} parent=5 // pred_region
      %s236 = ssub.s32 %s12, 1
      %p237 = scmp.lt.s32.totalorder %s21, 1
      %s238 = scalar_select %p237, %s21, 1
      %p239 = scmp.lt.s32.totalorder %s22, 0
      %s240 = scalar_select %p239, %s22, 0
      %s241 = smul.addr %s240, 2
      %s242 = smul.addr %s238, 4
      %s243 = sadd.s32 %s241, %s242
      %s244 = smul.addr %s243, 4
      %s245 = scalar_lea.vmem %s0, %s244
      %p246 = pneg %p52
      %p247 = pneg %p49
      %p248 = scmp.lt.s32.totalorder %s22, 0
      %s249 = scalar_select %p248, %s22, 0
      %s250 = smul.addr %s249, 8
      %s251 = scalar_lea.vmem %s1, %s250
      %p252 = pneg %p78
      %p253 = pneg %p75
      %p254 = scmp.lt.s32.totalorder %s21, 1
      %s255 = scalar_select %p254, %s21, 1
      %s256 = smul.addr %s255, 16
      %s257 = smul.addr %s256, 4
      %s258 = scalar_lea.vmem %s2, %s257
      %p259 = pneg %p104
      %p260 = pneg %p101
      %p261 = pneg %p132
      %p262 = pneg %p129
      %p263 = scmp.lt.s32.totalorder %s21, 1
      %s264 = scalar_select %p263, %s21, 1
      %p265 = scmp.lt.s32.totalorder %s22, 0
      %s266 = scalar_select %p265, %s22, 0
      %s267 = smul.addr %s264, 2
      %s268 = sadd.s32 %s266, %s267
      %s269 = smul.addr %s268, 8
      %s270 = scalar_lea.vmem %s3, %s269
      %p271 = pneg %p158
      %p272 = pneg %p155
      %p273 = scmp.lt.s32.totalorder %s21, 1
      %s274 = scalar_select %p273, %s21, 1
      %s275 = smul.addr %s274, 2
      %s276 = scalar_lea.vmem %s4, %s275
      %p277 = pneg %p184
      %p278 = pneg %p181
      %p279 = scmp.lt.s32.totalorder %s21, 1
      %s280 = scalar_select %p279, %s21, 1
      %s281 = smul.addr %s280, 2
      %s282 = scalar_lea.vmem %s5, %s281
      %p283 = scmp.lt.s32.totalorder %s21, 1
      %s284 = scalar_select %p283, %s21, 1
      %p285 = scmp.lt.s32.totalorder %s22, 0
      %s286 = scalar_select %p285, %s22, 0
      %s287 = smul.addr %s286, 2
      %s288 = smul.addr %s284, 4
      %s289 = sadd.s32 %s287, %s288
      %s290 = smul.addr %s289, 4
      %s291 = scalar_lea.vmem %s0, %s290
      %p292 = scmp.lt.s32.totalorder %s22, 0
      %s293 = scalar_select %p292, %s22, 0
      %s294 = smul.addr %s293, 8
      %s295 = scalar_lea.vmem %s1, %s294
      %p296 = scmp.lt.s32.totalorder %s21, 1
      %s297 = scalar_select %p296, %s21, 1
      %s298 = smul.addr %s297, 16
      %s299 = smul.addr %s298, 4
      %s300 = scalar_lea.vmem %s2, %s299
      %p301 = scmp.lt.s32.totalorder %s21, 1
      %s302 = scalar_select %p301, %s21, 1
      %p303 = scmp.lt.s32.totalorder %s22, 0
      %s304 = scalar_select %p303, %s22, 0
      %s305 = smul.addr %s302, 2
      %s306 = sadd.s32 %s304, %s305
      %s307 = smul.addr %s306, 8
      %s308 = scalar_lea.vmem %s3, %s307
      %p309 = scmp.lt.s32.totalorder %s21, 1
      %s310 = scalar_select %p309, %s21, 1
      %s311 = smul.addr %s310, 2
      %s312 = scalar_lea.vmem %s4, %s311
      %p313 = scmp.lt.s32.totalorder %s21, 1
      %s314 = scalar_select %p313, %s21, 1
      %s315 = smul.addr %s314, 2
      %s316 = scalar_lea.vmem %s5, %s315
      %p318 = scmp.eq.s32.totalorder %s22, 0
      // Predicated region
      $region33: #{encoder_lstm_forward.23} parent=31 // pred_check
        %p319 = pneg %p318
      $region34: #{encoder_lstm_forward.23} parent=31 // pred_check_branch
        %321 = sbr.rel (%p319) target = $region36
      $region35: #{encoder_lstm_forward.23} parent=31 // pred_region
        %vm322 = vcmask 517120
        %323 = vst.msk [vmem:[#allocation2] sm:$0x3] %vm322, 0.0
        %324 = vst.msk [vmem:[#allocation3] sm:$0x3] %vm322, 0.0
      $region36: #{encoder_lstm_forward.23} parent=31 // pred_fallthru
        _
      %v325 = vld [vmem:[%s291] sm:$0xff]
      %v326 = vld [vmem:[%s291 + $0x8] sm:$0xff]
      %v327 = vld [vmem:[%s295] sm:$0xff]
      %v328 = vld [vmem:[%s295 + $0x8] sm:$0xff]
      %v329 = vld [vmem:[%s300] sm:$0xff]
      %v330 = vld [vmem:[%s300 + $0x8] sm:$0xff]
      %v331 = vld [vmem:[%s300 + $0x10] sm:$0xff]
      %v332 = vld [vmem:[%s300 + $0x18] sm:$0xff]
      %v333 = vld [vmem:[%s300 + $0x20] sm:$0xff]
      %v334 = vld [vmem:[%s300 + $0x28] sm:$0xff]
      %v335 = vld [vmem:[%s300 + $0x30] sm:$0xff]
      %v336 = vld [vmem:[%s300 + $0x38] sm:$0xff]
      %v337 = vld [vmem:[#allocation2] sm:$0x3]
      %v338 = vld [vmem:[#allocation3] sm:$0x3]
      %v339 = vunpack.c.l.bf16 %v325
      %v340 = vunpack.c.h.bf16 %v325
      %v341 = vunpack.c.l.bf16 %v326
      %v342 = vunpack.c.h.bf16 %v326
      %v343 = vpack.c.bf16 %v337, %v337
      %v352 = vunpack.c.l.b16 %v329
      %v353 = vunpack.c.h.b16 %v329
      %v354 = vunpack.c.l.b16 %v330
      %v355 = vunpack.c.h.b16 %v330
      %v356 = vunpack.c.l.b16 %v331
      %v357 = vunpack.c.h.b16 %v331
      %v358 = vunpack.c.l.b16 %v332
      %v359 = vunpack.c.h.b16 %v332
      %v360 = vunpack.c.l.b16 %v333
      %v361 = vunpack.c.h.b16 %v333
      %v362 = vunpack.c.l.b16 %v334
      %v363 = vunpack.c.h.b16 %v334
      %v364 = vunpack.c.l.b16 %v335
      %v365 = vunpack.c.h.b16 %v335
      %v366 = vunpack.c.l.b16 %v336
      %v367 = vunpack.c.h.b16 %v336
      %v368 = vpack.c.b16 %v354, %v352
      %v369 = vpack.c.b16 %v355, %v353
      %v370 = vpack.c.b16 %v358, %v356
      %v371 = vpack.c.b16 %v359, %v357
      %v372 = vpack.c.b16 %v362, %v360
      %v373 = vpack.c.b16 %v363, %v361
      %v374 = vpack.c.b16 %v366, %v364
      %v375 = vpack.c.b16 %v367, %v365
      %vm384 = vcmask 523264
      %v386 = vsel %vm384, %v343, 0
      %388 = vmatprep.subr.bf16.mxu0 %v369
      %389 = vmatpush1.bf16.msra.mxu0 %v368
      %390 = vmatprep.subr.bf16.mxu0 %v371
      %391 = vmatpush1.bf16.msra.mxu0 %v370
      %392 = vmatprep.subr.bf16.mxu0 %v373
      %393 = vmatpush1.bf16.msra.mxu0 %v372
      %394 = vmatprep.subr.bf16.mxu0 %v375
      %395 = vmatpush1.bf16.msra.mxu0 %v374
      %396 = vmatprep.subr.bf16.mxu0 0
      %397 = vmatpush1.bf16.msra.mxu0 0
      %398 = vmatprep.subr.bf16.mxu0 0
      %399 = vmatpush1.bf16.msra.mxu0 0
      %400 = vmatprep.subr.bf16.mxu0 0
      %401 = vmatpush1.bf16.msra.mxu0 0
      %402 = vmatprep.subr.bf16.mxu0 0
      %403 = vmatpush1.bf16.msra.mxu0 0
      %404 = vmatprep.subr.bf16.mxu0 0
      %405 = vmatpush1.bf16.msra.mxu0 0
      %406 = vmatprep.subr.bf16.mxu0 0
      %407 = vmatpush1.bf16.msra.mxu0 0
      %408 = vmatprep.subr.bf16.mxu0 0
      %409 = vmatpush1.bf16.msra.mxu0 0
      %410 = vmatprep.subr.bf16.mxu0 0
      %411 = vmatpush1.bf16.msra.mxu0 0
      %412 = vmatprep.subr.bf16.mxu0 0
      %413 = vmatpush1.bf16.msra.mxu0 0
      %414 = vmatprep.subr.bf16.mxu0 0
      %415 = vmatpush1.bf16.msra.mxu0 0
      %416 = vmatprep.subr.bf16.mxu0 0
      %417 = vmatpush1.bf16.msra.mxu0 0
      %418 = vmatprep.subr.bf16.mxu0 0
      %419 = vmatpush1.bf16.msra.mxu0 0
      %420 = vmatprep.mubr.bf16.mxu0 0
      %421 = vmatmul.mubr.bf16.gmra.mrb[0].mxu0 %v386
      %v422 = vpop.f32.mrb[0].mxu0
      %v423 = vadd.f32 0.0, %v422
      %v424 = vpop.f32.mrb[0].mxu0
      %v425 = vadd.f32 0.0, %v424
      %v426 = vpop.f32.mrb[0].mxu0
      %v427 = vpop.f32.mrb[0].mxu0
      %428 = vdwg.mxu0
      %v431 = vrot.slane %v423, 1
      %v432 = vrot.slane %v425, 1
      %v437 = vadd.f32 %v339, %v423
      %v438 = vadd.f32 %v340, %v425
      %v439 = vadd.f32 %v341, %v431
      %v440 = vadd.f32 %v342, %v432
      %v441 = vsub.f32 0.0, %v437
      %v442 = vsub.f32 0.0, %v438
      %v443 = vsub.f32 0.0, %v439
      %v444 = vsub.f32 0.0, %v440
      %v445 = vmul.f32 %v441, 1.442695
      %v446 = vpow.pop %v445
      %v447 = vmul.f32 %v442, 1.442695
      %v448 = vpow.pop %v447
      %v449 = vmul.f32 %v443, 1.442695
      %v450 = vpow.pop %v449
      %v451 = vmul.f32 %v444, 1.442695
      %v452 = vpow.pop %v451
      %v453 = vadd.f32 %v446, 1.0
      %v454 = vadd.f32 %v448, 1.0
      %v455 = vadd.f32 %v450, 1.0
      %v456 = vadd.f32 %v452, 1.0
      %v457 = vrcp.pop %v453
      %v458 = vrcp.pop %v454
      %v459 = vrcp.pop %v455
      %v460 = vrcp.pop %v456
      %v461 = vtanh.pop %v438
      %v462 = vtanh.pop %v440
      %v464 = vrot.slane %v338, 1
      %465 = vrot.lane.b32.xlu0 %v338, 64
      %v466 = vpop.permute.xlu0 %465
      %467 = vrot.lane.b32.xlu0 %v464, 64
      %v468 = vpop.permute.xlu0 %467
      %v471 = vmul.f32 %v457, %v466
      %v472 = vmul.f32 %v459, %v468
      %475 = vrot.lane.b32.xlu0 %v461, 64
      %v476 = vpop.permute.xlu0 %475
      %477 = vrot.lane.b32.xlu0 %v462, 64
      %v478 = vpop.permute.xlu0 %477
      %v481 = vmul.f32 %v457, %v476
      %v482 = vmul.f32 %v459, %v478
      %485 = vrot.lane.b32.xlu0 %v481, 64
      %v486 = vpop.permute.xlu0 %485
      %487 = vrot.lane.b32.xlu0 %v482, 64
      %v488 = vpop.permute.xlu0 %487
      %v491 = vadd.f32 %v471, %v486
      %v492 = vadd.f32 %v472, %v488
      %v493 = vtanh.pop %v491
      %v494 = vtanh.pop %v492
      %497 = vrot.lane.b32.xlu0 %v493, 64
      %v498 = vpop.permute.xlu0 %497
      %499 = vrot.lane.b32.xlu0 %v494, 64
      %v500 = vpop.permute.xlu0 %499
      %v503 = vmul.f32 %v458, %v498
      %v504 = vmul.f32 %v460, %v500
      %506 = vset.pattern.permute.xlu0 0
      %507 = vperm.xlu0 %506, %v327
      %v508 = vpop.permute.xlu0 %507
      %511 = vset.pattern.permute.xlu0 0
      %512 = vperm.xlu0 %511, %v328
      %v513 = vpop.permute.xlu0 %512
      %v515 = vmul.f32 %v508, %v491
      %v516 = vmul.f32 %v513, %v492
      %v517 = vsub.f32 1.0, %v327
      %v518 = vsub.f32 1.0, %v328
      %520 = vset.pattern.permute.xlu0 0
      %521 = vperm.xlu0 %520, %v517
      %v522 = vpop.permute.xlu0 %521
      %525 = vset.pattern.permute.xlu0 0
      %526 = vperm.xlu0 %525, %v518
      %v527 = vpop.permute.xlu0 %526
      %v531 = vmul.f32 %v522, %v338
      %v532 = vmul.f32 %v527, %v464
      %535 = vrot.lane.b32.xlu0 %v531, 64
      %v536 = vpop.permute.xlu0 %535
      %537 = vrot.lane.b32.xlu0 %v532, 64
      %v538 = vpop.permute.xlu0 %537
      %v541 = vadd.f32 %v515, %v536
      %v542 = vadd.f32 %v516, %v538
      %v543 = vmul.f32 %v508, %v503
      %v544 = vmul.f32 %v513, %v504
      %v546 = vrot.slane %v337, 1
      %v549 = vmul.f32 %v522, %v337
      %v550 = vmul.f32 %v527, %v546
      %v551 = vadd.f32 %v543, %v549
      %v552 = vadd.f32 %v544, %v550
      %vm553 = vcmask 516096
      %554 = vst.msk [vmem:[%s308] sm:$0x1] %vm553, %v543
      %555 = vst.msk [vmem:[%s308 + $0x8] sm:$0x1] %vm553, %v544
      %v556 = vpack.c.bf16 %v551, %v551
      %v557 = vpack.c.bf16 %v552, %v552
      %v560 = vunpack.c.l.b16 %v556
      %v561 = vunpack.c.l.b16 %v557
      %v562 = vrot.slane %v561, 7
      %vm563 = vcmask 1041409
      %v564 = vsel %vm563, %v562, %v560
      %v565 = vpack.c.b16 %v564, %v564
      %v567 = vsel %vm384, %v565, 0
      %569 = vmatprep.subr.bf16.mxu0 %v369
      %570 = vmatpush1.bf16.msra.mxu0 %v368
      %571 = vmatprep.subr.bf16.mxu0 %v371
      %572 = vmatpush1.bf16.msra.mxu0 %v370
      %573 = vmatprep.subr.bf16.mxu0 %v373
      %574 = vmatpush1.bf16.msra.mxu0 %v372
      %575 = vmatprep.subr.bf16.mxu0 %v375
      %576 = vmatpush1.bf16.msra.mxu0 %v374
      %577 = vmatprep.subr.bf16.mxu0 0
      %578 = vmatpush1.bf16.msra.mxu0 0
      %579 = vmatprep.subr.bf16.mxu0 0
      %580 = vmatpush1.bf16.msra.mxu0 0
      %581 = vmatprep.subr.bf16.mxu0 0
      %582 = vmatpush1.bf16.msra.mxu0 0
      %583 = vmatprep.subr.bf16.mxu0 0
      %584 = vmatpush1.bf16.msra.mxu0 0
      %585 = vmatprep.subr.bf16.mxu0 0
      %586 = vmatpush1.bf16.msra.mxu0 0
      %587 = vmatprep.subr.bf16.mxu0 0
      %588 = vmatpush1.bf16.msra.mxu0 0
      %589 = vmatprep.subr.bf16.mxu0 0
      %590 = vmatpush1.bf16.msra.mxu0 0
      %591 = vmatprep.subr.bf16.mxu0 0
      %592 = vmatpush1.bf16.msra.mxu0 0
      %593 = vmatprep.subr.bf16.mxu0 0
      %594 = vmatpush1.bf16.msra.mxu0 0
      %595 = vmatprep.subr.bf16.mxu0 0
      %596 = vmatpush1.bf16.msra.mxu0 0
      %597 = vmatprep.subr.bf16.mxu0 0
      %598 = vmatpush1.bf16.msra.mxu0 0
      %599 = vmatprep.subr.bf16.mxu0 0
      %600 = vmatpush1.bf16.msra.mxu0 0
      %601 = vmatprep.mubr.bf16.mxu0 0
      %602 = vmatmul.mubr.bf16.gmra.mrb[0].mxu0 %v567
      %v603 = vpop.f32.mrb[0].mxu0
      %v604 = vadd.f32 0.0, %v603
      %v605 = vpop.f32.mrb[0].mxu0
      %v606 = vadd.f32 0.0, %v605
      %v607 = vpop.f32.mrb[0].mxu0
      %v608 = vpop.f32.mrb[0].mxu0
      %609 = vdwg.mxu0
      %v612 = vrot.slane %v604, 7
      %v613 = vrot.slane %v606, 7
      %v618 = vadd.f32 %v339, %v612
      %v619 = vadd.f32 %v340, %v613
      %v620 = vadd.f32 %v341, %v604
      %v621 = vadd.f32 %v342, %v606
      %v622 = vsub.f32 0.0, %v618
      %v623 = vsub.f32 0.0, %v619
      %v624 = vsub.f32 0.0, %v620
      %v625 = vsub.f32 0.0, %v621
      %v626 = vmul.f32 %v622, 1.442695
      %v627 = vpow.pop %v626
      %v628 = vmul.f32 %v623, 1.442695
      %v629 = vpow.pop %v628
      %v630 = vmul.f32 %v624, 1.442695
      %v631 = vpow.pop %v630
      %v632 = vmul.f32 %v625, 1.442695
      %v633 = vpow.pop %v632
      %v634 = vadd.f32 %v627, 1.0
      %v635 = vadd.f32 %v629, 1.0
      %v636 = vadd.f32 %v631, 1.0
      %v637 = vadd.f32 %v633, 1.0
      %v638 = vrcp.pop %v634
      %v639 = vrcp.pop %v635
      %v640 = vrcp.pop %v636
      %v641 = vrcp.pop %v637
      %v642 = vtanh.pop %v619
      %v643 = vtanh.pop %v621
      %v646 = vrot.slane %v541, 7
      %v647 = vrot.slane %v542, 7
      %v650 = vmul.f32 %v638, %v646
      %v651 = vmul.f32 %v640, %v647
      %654 = vrot.lane.b32.xlu0 %v642, 64
      %v655 = vpop.permute.xlu0 %654
      %656 = vrot.lane.b32.xlu0 %v643, 64
      %v657 = vpop.permute.xlu0 %656
      %v660 = vmul.f32 %v638, %v655
      %v661 = vmul.f32 %v640, %v657
      %664 = vrot.lane.b32.xlu0 %v660, 64
      %v665 = vpop.permute.xlu0 %664
      %666 = vrot.lane.b32.xlu0 %v661, 64
      %v667 = vpop.permute.xlu0 %666
      %v670 = vadd.f32 %v650, %v665
      %v671 = vadd.f32 %v651, %v667
      %v672 = vtanh.pop %v670
      %v673 = vtanh.pop %v671
      %676 = vrot.lane.b32.xlu0 %v672, 64
      %v677 = vpop.permute.xlu0 %676
      %678 = vrot.lane.b32.xlu0 %v673, 64
      %v679 = vpop.permute.xlu0 %678
      %v682 = vmul.f32 %v639, %v677
      %v683 = vmul.f32 %v641, %v679
      %v684 = vmul.f32 %v508, %v670
      %v685 = vmul.f32 %v513, %v671
      %686 = vrot.lane.b32.xlu0 %v646, 64
      %v687 = vpop.permute.xlu0 %686
      %688 = vrot.lane.b32.xlu0 %v647, 64
      %v689 = vpop.permute.xlu0 %688
      %v692 = vmul.f32 %v522, %v687
      %v693 = vmul.f32 %v527, %v689
      %696 = vrot.lane.b32.xlu0 %v692, 64
      %v697 = vpop.permute.xlu0 %696
      %698 = vrot.lane.b32.xlu0 %v693, 64
      %v699 = vpop.permute.xlu0 %698
      %v702 = vadd.f32 %v684, %v697
      %v703 = vadd.f32 %v685, %v699
      %v704 = vmul.f32 %v508, %v682
      %v705 = vmul.f32 %v513, %v683
      %v708 = vrot.slane %v551, 7
      %v709 = vrot.slane %v552, 7
      %v712 = vmul.f32 %v522, %v708
      %v713 = vmul.f32 %v527, %v709
      %v714 = vadd.f32 %v704, %v712
      %v715 = vadd.f32 %v705, %v713
      %vm716 = vcmask 517121
      %717 = vst.msk [vmem:[%s308] sm:$0x2] %vm716, %v704
      %718 = vst.msk [vmem:[%s308 + $0x8] sm:$0x2] %vm716, %v705
      %v719 = vpack.c.bf16 %v714, %v714
      %v720 = vpack.c.bf16 %v715, %v715
      %v723 = vunpack.c.l.b16 %v719
      %v724 = vunpack.c.l.b16 %v720
      %v725 = vrot.slane %v723, 1
      %v726 = vsel %vm563, %v724, %v725
      %v727 = vpack.c.b16 %v726, %v726
      %v729 = vsel %vm384, %v727, 0
      %731 = vmatprep.subr.bf16.mxu0 %v369
      %732 = vmatpush1.bf16.msra.mxu0 %v368
      %733 = vmatprep.subr.bf16.mxu0 %v371
      %734 = vmatpush1.bf16.msra.mxu0 %v370
      %735 = vmatprep.subr.bf16.mxu0 %v373
      %736 = vmatpush1.bf16.msra.mxu0 %v372
      %737 = vmatprep.subr.bf16.mxu0 %v375
      %738 = vmatpush1.bf16.msra.mxu0 %v374
      %739 = vmatprep.subr.bf16.mxu0 0
      %740 = vmatpush1.bf16.msra.mxu0 0
      %741 = vmatprep.subr.bf16.mxu0 0
      %742 = vmatpush1.bf16.msra.mxu0 0
      %743 = vmatprep.subr.bf16.mxu0 0
      %744 = vmatpush1.bf16.msra.mxu0 0
      %745 = vmatprep.subr.bf16.mxu0 0
      %746 = vmatpush1.bf16.msra.mxu0 0
      %747 = vmatprep.subr.bf16.mxu0 0
      %748 = vmatpush1.bf16.msra.mxu0 0
      %749 = vmatprep.subr.bf16.mxu0 0
      %750 = vmatpush1.bf16.msra.mxu0 0
      %751 = vmatprep.subr.bf16.mxu0 0
      %752 = vmatpush1.bf16.msra.mxu0 0
      %753 = vmatprep.subr.bf16.mxu0 0
      %754 = vmatpush1.bf16.msra.mxu0 0
      %755 = vmatprep.subr.bf16.mxu0 0
      %756 = vmatpush1.bf16.msra.mxu0 0
      %757 = vmatprep.subr.bf16.mxu0 0
      %758 = vmatpush1.bf16.msra.mxu0 0
      %759 = vmatprep.subr.bf16.mxu0 0
      %760 = vmatpush1.bf16.msra.mxu0 0
      %761 = vmatprep.subr.bf16.mxu0 0
      %762 = vmatpush1.bf16.msra.mxu0 0
      %763 = vmatprep.mubr.bf16.mxu0 0
      %764 = vmatmul.mubr.bf16.gmra.mrb[0].mxu0 %v729
      %v765 = vpop.f32.mrb[0].mxu0
      %v766 = vadd.f32 0.0, %v765
      %v767 = vpop.f32.mrb[0].mxu0
      %v768 = vadd.f32 0.0, %v767
      %v769 = vpop.f32.mrb[0].mxu0
      %v770 = vpop.f32.mrb[0].mxu0
      %771 = vdwg.mxu0
      %v774 = vrot.slane %v766, 6
      %v775 = vrot.slane %v768, 6
      %v776 = vrot.slane %v766, 7
      %v777 = vrot.slane %v768, 7
      %v782 = vadd.f32 %v339, %v774
      %v783 = vadd.f32 %v340, %v775
      %v784 = vadd.f32 %v341, %v776
      %v785 = vadd.f32 %v342, %v777
      %v786 = vsub.f32 0.0, %v782
      %v787 = vsub.f32 0.0, %v783
      %v788 = vsub.f32 0.0, %v784
      %v789 = vsub.f32 0.0, %v785
      %v790 = vmul.f32 %v786, 1.442695
      %v791 = vpow.pop %v790
      %v792 = vmul.f32 %v787, 1.442695
      %v793 = vpow.pop %v792
      %v794 = vmul.f32 %v788, 1.442695
      %v795 = vpow.pop %v794
      %v796 = vmul.f32 %v789, 1.442695
      %v797 = vpow.pop %v796
      %v798 = vadd.f32 %v791, 1.0
      %v799 = vadd.f32 %v793, 1.0
      %v800 = vadd.f32 %v795, 1.0
      %v801 = vadd.f32 %v797, 1.0
      %v802 = vrcp.pop %v798
      %v803 = vrcp.pop %v799
      %v804 = vrcp.pop %v800
      %v805 = vrcp.pop %v801
      %v806 = vtanh.pop %v783
      %v807 = vtanh.pop %v785
      %v810 = vrot.slane %v702, 7
      %v811 = vrot.slane %v703, 7
      %v814 = vmul.f32 %v802, %v810
      %v815 = vmul.f32 %v804, %v811
      %818 = vrot.lane.b32.xlu0 %v806, 64
      %v819 = vpop.permute.xlu0 %818
      %820 = vrot.lane.b32.xlu0 %v807, 64
      %v821 = vpop.permute.xlu0 %820
      %v824 = vmul.f32 %v802, %v819
      %v825 = vmul.f32 %v804, %v821
      %828 = vrot.lane.b32.xlu0 %v824, 64
      %v829 = vpop.permute.xlu0 %828
      %830 = vrot.lane.b32.xlu0 %v825, 64
      %v831 = vpop.permute.xlu0 %830
      %v834 = vadd.f32 %v814, %v829
      %v835 = vadd.f32 %v815, %v831
      %v836 = vtanh.pop %v834
      %v837 = vtanh.pop %v835
      %840 = vrot.lane.b32.xlu0 %v836, 64
      %v841 = vpop.permute.xlu0 %840
      %842 = vrot.lane.b32.xlu0 %v837, 64
      %v843 = vpop.permute.xlu0 %842
      %v846 = vmul.f32 %v803, %v841
      %v847 = vmul.f32 %v805, %v843
      %v848 = vmul.f32 %v508, %v834
      %v849 = vmul.f32 %v513, %v835
      %850 = vrot.lane.b32.xlu0 %v810, 64
      %v851 = vpop.permute.xlu0 %850
      %852 = vrot.lane.b32.xlu0 %v811, 64
      %v853 = vpop.permute.xlu0 %852
      %v856 = vmul.f32 %v522, %v851
      %v857 = vmul.f32 %v527, %v853
      %860 = vrot.lane.b32.xlu0 %v856, 64
      %v861 = vpop.permute.xlu0 %860
      %862 = vrot.lane.b32.xlu0 %v857, 64
      %v863 = vpop.permute.xlu0 %862
      %v866 = vadd.f32 %v848, %v861
      %v867 = vadd.f32 %v849, %v863
      %v868 = vmul.f32 %v508, %v846
      %v869 = vmul.f32 %v513, %v847
      %v872 = vrot.slane %v714, 7
      %v873 = vrot.slane %v715, 7
      %v876 = vmul.f32 %v522, %v872
      %v877 = vmul.f32 %v527, %v873
      %v878 = vadd.f32 %v868, %v876
      %v879 = vadd.f32 %v869, %v877
      %vm880 = vcmask 518146
      %881 = vst.msk [vmem:[%s308] sm:$0x4] %vm880, %v868
      %882 = vst.msk [vmem:[%s308 + $0x8] sm:$0x4] %vm880, %v869
      %v883 = vpack.c.bf16 %v878, %v878
      %v884 = vpack.c.bf16 %v879, %v879
      %v887 = vunpack.c.l.b16 %v883
      %v888 = vunpack.c.l.b16 %v884
      %v889 = vrot.slane %v887, 2
      %v890 = vrot.slane %v888, 1
      %v891 = vsel %vm563, %v890, %v889
      %v892 = vpack.c.b16 %v891, %v891
      %v894 = vsel %vm384, %v892, 0
      %896 = vmatprep.subr.bf16.mxu0 %v369
      %897 = vmatpush1.bf16.msra.mxu0 %v368
      %898 = vmatprep.subr.bf16.mxu0 %v371
      %899 = vmatpush1.bf16.msra.mxu0 %v370
      %900 = vmatprep.subr.bf16.mxu0 %v373
      %901 = vmatpush1.bf16.msra.mxu0 %v372
      %902 = vmatprep.subr.bf16.mxu0 %v375
      %903 = vmatpush1.bf16.msra.mxu0 %v374
      %904 = vmatprep.subr.bf16.mxu0 0
      %905 = vmatpush1.bf16.msra.mxu0 0
      %906 = vmatprep.subr.bf16.mxu0 0
      %907 = vmatpush1.bf16.msra.mxu0 0
      %908 = vmatprep.subr.bf16.mxu0 0
      %909 = vmatpush1.bf16.msra.mxu0 0
      %910 = vmatprep.subr.bf16.mxu0 0
      %911 = vmatpush1.bf16.msra.mxu0 0
      %912 = vmatprep.subr.bf16.mxu0 0
      %913 = vmatpush1.bf16.msra.mxu0 0
      %914 = vmatprep.subr.bf16.mxu0 0
      %915 = vmatpush1.bf16.msra.mxu0 0
      %916 = vmatprep.subr.bf16.mxu0 0
      %917 = vmatpush1.bf16.msra.mxu0 0
      %918 = vmatprep.subr.bf16.mxu0 0
      %919 = vmatpush1.bf16.msra.mxu0 0
      %920 = vmatprep.subr.bf16.mxu0 0
      %921 = vmatpush1.bf16.msra.mxu0 0
      %922 = vmatprep.subr.bf16.mxu0 0
      %923 = vmatpush1.bf16.msra.mxu0 0
      %924 = vmatprep.subr.bf16.mxu0 0
      %925 = vmatpush1.bf16.msra.mxu0 0
      %926 = vmatprep.subr.bf16.mxu0 0
      %927 = vmatpush1.bf16.msra.mxu0 0
      %928 = vmatprep.mubr.bf16.mxu0 0
      %929 = vmatmul.mubr.bf16.gmra.mrb[0].mxu0 %v894
      %v930 = vpop.f32.mrb[0].mxu0
      %v931 = vadd.f32 0.0, %v930
      %v932 = vpop.f32.mrb[0].mxu0
      %v933 = vadd.f32 0.0, %v932
      %v934 = vpop.f32.mrb[0].mxu0
      %v935 = vpop.f32.mrb[0].mxu0
      %936 = vdwg.mxu0
      %v939 = vrot.slane %v931, 5
      %v940 = vrot.slane %v933, 5
      %v941 = vrot.slane %v931, 6
      %v942 = vrot.slane %v933, 6
      %v947 = vadd.f32 %v339, %v939
      %v948 = vadd.f32 %v340, %v940
      %v949 = vadd.f32 %v341, %v941
      %v950 = vadd.f32 %v342, %v942
      %v951 = vsub.f32 0.0, %v947
      %v952 = vsub.f32 0.0, %v948
      %v953 = vsub.f32 0.0, %v949
      %v954 = vsub.f32 0.0, %v950
      %v955 = vmul.f32 %v951, 1.442695
      %v956 = vpow.pop %v955
      %v957 = vmul.f32 %v952, 1.442695
      %v958 = vpow.pop %v957
      %v959 = vmul.f32 %v953, 1.442695
      %v960 = vpow.pop %v959
      %v961 = vmul.f32 %v954, 1.442695
      %v962 = vpow.pop %v961
      %v963 = vadd.f32 %v956, 1.0
      %v964 = vadd.f32 %v958, 1.0
      %v965 = vadd.f32 %v960, 1.0
      %v966 = vadd.f32 %v962, 1.0
      %v967 = vrcp.pop %v963
      %v968 = vrcp.pop %v964
      %v969 = vrcp.pop %v965
      %v970 = vrcp.pop %v966
      %v971 = vtanh.pop %v948
      %v972 = vtanh.pop %v950
      %v975 = vrot.slane %v866, 7
      %v976 = vrot.slane %v867, 7
      %v979 = vmul.f32 %v967, %v975
      %v980 = vmul.f32 %v969, %v976
      %983 = vrot.lane.b32.xlu0 %v971, 64
      %v984 = vpop.permute.xlu0 %983
      %985 = vrot.lane.b32.xlu0 %v972, 64
      %v986 = vpop.permute.xlu0 %985
      %v989 = vmul.f32 %v967, %v984
      %v990 = vmul.f32 %v969, %v986
      %993 = vrot.lane.b32.xlu0 %v989, 64
      %v994 = vpop.permute.xlu0 %993
      %995 = vrot.lane.b32.xlu0 %v990, 64
      %v996 = vpop.permute.xlu0 %995
      %v999 = vadd.f32 %v979, %v994
      %v1000 = vadd.f32 %v980, %v996
      %v1001 = vtanh.pop %v999
      %v1002 = vtanh.pop %v1000
      %1005 = vrot.lane.b32.xlu0 %v1001, 64
      %v1006 = vpop.permute.xlu0 %1005
      %1007 = vrot.lane.b32.xlu0 %v1002, 64
      %v1008 = vpop.permute.xlu0 %1007
      %v1011 = vmul.f32 %v968, %v1006
      %v1012 = vmul.f32 %v970, %v1008
      %v1013 = vmul.f32 %v508, %v999
      %v1014 = vmul.f32 %v513, %v1000
      %1015 = vrot.lane.b32.xlu0 %v975, 64
      %v1016 = vpop.permute.xlu0 %1015
      %1017 = vrot.lane.b32.xlu0 %v976, 64
      %v1018 = vpop.permute.xlu0 %1017
      %v1021 = vmul.f32 %v522, %v1016
      %v1022 = vmul.f32 %v527, %v1018
      %1025 = vrot.lane.b32.xlu0 %v1021, 64
      %v1026 = vpop.permute.xlu0 %1025
      %1027 = vrot.lane.b32.xlu0 %v1022, 64
      %v1028 = vpop.permute.xlu0 %1027
      %v1031 = vadd.f32 %v1013, %v1026
      %v1032 = vadd.f32 %v1014, %v1028
      %v1033 = vmul.f32 %v508, %v1011
      %v1034 = vmul.f32 %v513, %v1012
      %v1037 = vrot.slane %v878, 7
      %v1038 = vrot.slane %v879, 7
      %v1041 = vmul.f32 %v522, %v1037
      %v1042 = vmul.f32 %v527, %v1038
      %v1043 = vadd.f32 %v1033, %v1041
      %v1044 = vadd.f32 %v1034, %v1042
      %vm1045 = vcmask 519171
      %1046 = vst.msk [vmem:[%s308] sm:$0x8] %vm1045, %v1033
      %1047 = vst.msk [vmem:[%s308 + $0x8] sm:$0x8] %vm1045, %v1034
      %v1048 = vpack.c.bf16 %v1043, %v1043
      %v1049 = vpack.c.bf16 %v1044, %v1044
      %v1052 = vunpack.c.l.b16 %v1048
      %v1053 = vunpack.c.l.b16 %v1049
      %v1054 = vrot.slane %v1052, 3
      %v1055 = vrot.slane %v1053, 2
      %v1056 = vsel %vm563, %v1055, %v1054
      %v1057 = vpack.c.b16 %v1056, %v1056
      %v1059 = vsel %vm384, %v1057, 0
      %1061 = vmatprep.subr.bf16.mxu0 %v369
      %1062 = vmatpush1.bf16.msra.mxu0 %v368
      %1063 = vmatprep.subr.bf16.mxu0 %v371
      %1064 = vmatpush1.bf16.msra.mxu0 %v370
      %1065 = vmatprep.subr.bf16.mxu0 %v373
      %1066 = vmatpush1.bf16.msra.mxu0 %v372
      %1067 = vmatprep.subr.bf16.mxu0 %v375
      %1068 = vmatpush1.bf16.msra.mxu0 %v374
      %1069 = vmatprep.subr.bf16.mxu0 0
      %1070 = vmatpush1.bf16.msra.mxu0 0
      %1071 = vmatprep.subr.bf16.mxu0 0
      %1072 = vmatpush1.bf16.msra.mxu0 0
      %1073 = vmatprep.subr.bf16.mxu0 0
      %1074 = vmatpush1.bf16.msra.mxu0 0
      %1075 = vmatprep.subr.bf16.mxu0 0
      %1076 = vmatpush1.bf16.msra.mxu0 0
      %1077 = vmatprep.subr.bf16.mxu0 0
      %1078 = vmatpush1.bf16.msra.mxu0 0
      %1079 = vmatprep.subr.bf16.mxu0 0
      %1080 = vmatpush1.bf16.msra.mxu0 0
      %1081 = vmatprep.subr.bf16.mxu0 0
      %1082 = vmatpush1.bf16.msra.mxu0 0
      %1083 = vmatprep.subr.bf16.mxu0 0
      %1084 = vmatpush1.bf16.msra.mxu0 0
      %1085 = vmatprep.subr.bf16.mxu0 0
      %1086 = vmatpush1.bf16.msra.mxu0 0
      %1087 = vmatprep.subr.bf16.mxu0 0
      %1088 = vmatpush1.bf16.msra.mxu0 0
      %1089 = vmatprep.subr.bf16.mxu0 0
      %1090 = vmatpush1.bf16.msra.mxu0 0
      %1091 = vmatprep.subr.bf16.mxu0 0
      %1092 = vmatpush1.bf16.msra.mxu0 0
      %1093 = vmatprep.mubr.bf16.mxu0 0
      %1094 = vmatmul.mubr.bf16.gmra.mrb[0].mxu0 %v1059
      %v1095 = vpop.f32.mrb[0].mxu0
      %v1096 = vadd.f32 0.0, %v1095
      %v1097 = vpop.f32.mrb[0].mxu0
      %v1098 = vadd.f32 0.0, %v1097
      %v1099 = vpop.f32.mrb[0].mxu0
      %v1100 = vpop.f32.mrb[0].mxu0
      %1101 = vdwg.mxu0
      %v1104 = vrot.slane %v1096, 4
      %v1105 = vrot.slane %v1098, 4
      %v1106 = vrot.slane %v1096, 5
      %v1107 = vrot.slane %v1098, 5
      %v1112 = vadd.f32 %v339, %v1104
      %v1113 = vadd.f32 %v340, %v1105
      %v1114 = vadd.f32 %v341, %v1106
      %v1115 = vadd.f32 %v342, %v1107
      %v1116 = vsub.f32 0.0, %v1112
      %v1117 = vsub.f32 0.0, %v1113
      %v1118 = vsub.f32 0.0, %v1114
      %v1119 = vsub.f32 0.0, %v1115
      %v1120 = vmul.f32 %v1116, 1.442695
      %v1121 = vpow.pop %v1120
      %v1122 = vmul.f32 %v1117, 1.442695
      %v1123 = vpow.pop %v1122
      %v1124 = vmul.f32 %v1118, 1.442695
      %v1125 = vpow.pop %v1124
      %v1126 = vmul.f32 %v1119, 1.442695
      %v1127 = vpow.pop %v1126
      %v1128 = vadd.f32 %v1121, 1.0
      %v1129 = vadd.f32 %v1123, 1.0
      %v1130 = vadd.f32 %v1125, 1.0
      %v1131 = vadd.f32 %v1127, 1.0
      %v1132 = vrcp.pop %v1128
      %v1133 = vrcp.pop %v1129
      %v1134 = vrcp.pop %v1130
      %v1135 = vrcp.pop %v1131
      %v1136 = vtanh.pop %v1113
      %v1137 = vtanh.pop %v1115
      %v1140 = vrot.slane %v1031, 7
      %v1141 = vrot.slane %v1032, 7
      %v1144 = vmul.f32 %v1132, %v1140
      %v1145 = vmul.f32 %v1134, %v1141
      %1148 = vrot.lane.b32.xlu0 %v1136, 64
      %v1149 = vpop.permute.xlu0 %1148
      %1150 = vrot.lane.b32.xlu0 %v1137, 64
      %v1151 = vpop.permute.xlu0 %1150
      %v1154 = vmul.f32 %v1132, %v1149
      %v1155 = vmul.f32 %v1134, %v1151
      %1158 = vrot.lane.b32.xlu0 %v1154, 64
      %v1159 = vpop.permute.xlu0 %1158
      %1160 = vrot.lane.b32.xlu0 %v1155, 64
      %v1161 = vpop.permute.xlu0 %1160
      %v1164 = vadd.f32 %v1144, %v1159
      %v1165 = vadd.f32 %v1145, %v1161
      %v1166 = vtanh.pop %v1164
      %v1167 = vtanh.pop %v1165
      %1170 = vrot.lane.b32.xlu0 %v1166, 64
      %v1171 = vpop.permute.xlu0 %1170
      %1172 = vrot.lane.b32.xlu0 %v1167, 64
      %v1173 = vpop.permute.xlu0 %1172
      %v1176 = vmul.f32 %v1133, %v1171
      %v1177 = vmul.f32 %v1135, %v1173
      %v1178 = vmul.f32 %v508, %v1164
      %v1179 = vmul.f32 %v513, %v1165
      %1180 = vrot.lane.b32.xlu0 %v1140, 64
      %v1181 = vpop.permute.xlu0 %1180
      %1182 = vrot.lane.b32.xlu0 %v1141, 64
      %v1183 = vpop.permute.xlu0 %1182
      %v1186 = vmul.f32 %v522, %v1181
      %v1187 = vmul.f32 %v527, %v1183
      %1190 = vrot.lane.b32.xlu0 %v1186, 64
      %v1191 = vpop.permute.xlu0 %1190
      %1192 = vrot.lane.b32.xlu0 %v1187, 64
      %v1193 = vpop.permute.xlu0 %1192
      %v1196 = vadd.f32 %v1178, %v1191
      %v1197 = vadd.f32 %v1179, %v1193
      %v1198 = vmul.f32 %v508, %v1176
      %v1199 = vmul.f32 %v513, %v1177
      %v1202 = vrot.slane %v1043, 7
      %v1203 = vrot.slane %v1044, 7
      %v1206 = vmul.f32 %v522, %v1202
      %v1207 = vmul.f32 %v527, %v1203
      %v1208 = vadd.f32 %v1198, %v1206
      %v1209 = vadd.f32 %v1199, %v1207
      %vm1210 = vcmask 520196
      %1211 = vst.msk [vmem:[%s308] sm:$0x10] %vm1210, %v1198
      %1212 = vst.msk [vmem:[%s308 + $0x8] sm:$0x10] %vm1210, %v1199
      %v1213 = vpack.c.bf16 %v1208, %v1208
      %v1214 = vpack.c.bf16 %v1209, %v1209
      %v1217 = vunpack.c.l.b16 %v1213
      %v1218 = vunpack.c.l.b16 %v1214
      %v1219 = vrot.slane %v1217, 4
      %v1220 = vrot.slane %v1218, 3
      %v1221 = vsel %vm563, %v1220, %v1219
      %v1222 = vpack.c.b16 %v1221, %v1221
      %v1224 = vsel %vm384, %v1222, 0
      %1226 = vmatprep.subr.bf16.mxu0 %v369
      %1227 = vmatpush1.bf16.msra.mxu0 %v368
      %1228 = vmatprep.subr.bf16.mxu0 %v371
      %1229 = vmatpush1.bf16.msra.mxu0 %v370
      %1230 = vmatprep.subr.bf16.mxu0 %v373
      %1231 = vmatpush1.bf16.msra.mxu0 %v372
      %1232 = vmatprep.subr.bf16.mxu0 %v375
      %1233 = vmatpush1.bf16.msra.mxu0 %v374
      %1234 = vmatprep.subr.bf16.mxu0 0
      %1235 = vmatpush1.bf16.msra.mxu0 0
      %1236 = vmatprep.subr.bf16.mxu0 0
      %1237 = vmatpush1.bf16.msra.mxu0 0
      %1238 = vmatprep.subr.bf16.mxu0 0
      %1239 = vmatpush1.bf16.msra.mxu0 0
      %1240 = vmatprep.subr.bf16.mxu0 0
      %1241 = vmatpush1.bf16.msra.mxu0 0
      %1242 = vmatprep.subr.bf16.mxu0 0
      %1243 = vmatpush1.bf16.msra.mxu0 0
      %1244 = vmatprep.subr.bf16.mxu0 0
      %1245 = vmatpush1.bf16.msra.mxu0 0
      %1246 = vmatprep.subr.bf16.mxu0 0
      %1247 = vmatpush1.bf16.msra.mxu0 0
      %1248 = vmatprep.subr.bf16.mxu0 0
      %1249 = vmatpush1.bf16.msra.mxu0 0
      %1250 = vmatprep.subr.bf16.mxu0 0
      %1251 = vmatpush1.bf16.msra.mxu0 0
      %1252 = vmatprep.subr.bf16.mxu0 0
      %1253 = vmatpush1.bf16.msra.mxu0 0
      %1254 = vmatprep.subr.bf16.mxu0 0
      %1255 = vmatpush1.bf16.msra.mxu0 0
      %1256 = vmatprep.subr.bf16.mxu0 0
      %1257 = vmatpush1.bf16.msra.mxu0 0
      %1258 = vmatprep.mubr.bf16.mxu0 0
      %1259 = vmatmul.mubr.bf16.gmra.mrb[0].mxu0 %v1224
      %v1260 = vpop.f32.mrb[0].mxu0
      %v1261 = vadd.f32 0.0, %v1260
      %v1262 = vpop.f32.mrb[0].mxu0
      %v1263 = vadd.f32 0.0, %v1262
      %v1264 = vpop.f32.mrb[0].mxu0
      %v1265 = vpop.f32.mrb[0].mxu0
      %1266 = vdwg.mxu0
      %v1269 = vrot.slane %v1261, 3
      %v1270 = vrot.slane %v1263, 3
      %v1271 = vrot.slane %v1261, 4
      %v1272 = vrot.slane %v1263, 4
      %v1277 = vadd.f32 %v339, %v1269
      %v1278 = vadd.f32 %v340, %v1270
      %v1279 = vadd.f32 %v341, %v1271
      %v1280 = vadd.f32 %v342, %v1272
      %v1281 = vsub.f32 0.0, %v1277
      %v1282 = vsub.f32 0.0, %v1278
      %v1283 = vsub.f32 0.0, %v1279
      %v1284 = vsub.f32 0.0, %v1280
      %v1285 = vmul.f32 %v1281, 1.442695
      %v1286 = vpow.pop %v1285
      %v1287 = vmul.f32 %v1282, 1.442695
      %v1288 = vpow.pop %v1287
      %v1289 = vmul.f32 %v1283, 1.442695
      %v1290 = vpow.pop %v1289
      %v1291 = vmul.f32 %v1284, 1.442695
      %v1292 = vpow.pop %v1291
      %v1293 = vadd.f32 %v1286, 1.0
      %v1294 = vadd.f32 %v1288, 1.0
      %v1295 = vadd.f32 %v1290, 1.0
      %v1296 = vadd.f32 %v1292, 1.0
      %v1297 = vrcp.pop %v1293
      %v1298 = vrcp.pop %v1294
      %v1299 = vrcp.pop %v1295
      %v1300 = vrcp.pop %v1296
      %v1301 = vtanh.pop %v1278
      %v1302 = vtanh.pop %v1280
      %v1305 = vrot.slane %v1196, 7
      %v1306 = vrot.slane %v1197, 7
      %v1309 = vmul.f32 %v1297, %v1305
      %v1310 = vmul.f32 %v1299, %v1306
      %1313 = vrot.lane.b32.xlu0 %v1301, 64
      %v1314 = vpop.permute.xlu0 %1313
      %1315 = vrot.lane.b32.xlu0 %v1302, 64
      %v1316 = vpop.permute.xlu0 %1315
      %v1319 = vmul.f32 %v1297, %v1314
      %v1320 = vmul.f32 %v1299, %v1316
      %1323 = vrot.lane.b32.xlu0 %v1319, 64
      %v1324 = vpop.permute.xlu0 %1323
      %1325 = vrot.lane.b32.xlu0 %v1320, 64
      %v1326 = vpop.permute.xlu0 %1325
      %v1329 = vadd.f32 %v1309, %v1324
      %v1330 = vadd.f32 %v1310, %v1326
      %v1331 = vtanh.pop %v1329
      %v1332 = vtanh.pop %v1330
      %1335 = vrot.lane.b32.xlu0 %v1331, 64
      %v1336 = vpop.permute.xlu0 %1335
      %1337 = vrot.lane.b32.xlu0 %v1332, 64
      %v1338 = vpop.permute.xlu0 %1337
      %v1341 = vmul.f32 %v1298, %v1336
      %v1342 = vmul.f32 %v1300, %v1338
      %v1343 = vmul.f32 %v508, %v1329
      %v1344 = vmul.f32 %v513, %v1330
      %1345 = vrot.lane.b32.xlu0 %v1305, 64
      %v1346 = vpop.permute.xlu0 %1345
      %1347 = vrot.lane.b32.xlu0 %v1306, 64
      %v1348 = vpop.permute.xlu0 %1347
      %v1351 = vmul.f32 %v522, %v1346
      %v1352 = vmul.f32 %v527, %v1348
      %1355 = vrot.lane.b32.xlu0 %v1351, 64
      %v1356 = vpop.permute.xlu0 %1355
      %1357 = vrot.lane.b32.xlu0 %v1352, 64
      %v1358 = vpop.permute.xlu0 %1357
      %v1361 = vadd.f32 %v1343, %v1356
      %v1362 = vadd.f32 %v1344, %v1358
      %v1363 = vmul.f32 %v508, %v1341
      %v1364 = vmul.f32 %v513, %v1342
      %v1367 = vrot.slane %v1208, 7
      %v1368 = vrot.slane %v1209, 7
      %v1371 = vmul.f32 %v522, %v1367
      %v1372 = vmul.f32 %v527, %v1368
      %v1373 = vadd.f32 %v1363, %v1371
      %v1374 = vadd.f32 %v1364, %v1372
      %vm1375 = vcmask 521221
      %1376 = vst.msk [vmem:[%s308] sm:$0x20] %vm1375, %v1363
      %1377 = vst.msk [vmem:[%s308 + $0x8] sm:$0x20] %vm1375, %v1364
      %v1378 = vpack.c.bf16 %v1373, %v1373
      %v1379 = vpack.c.bf16 %v1374, %v1374
      %v1382 = vunpack.c.l.b16 %v1378
      %v1383 = vunpack.c.l.b16 %v1379
      %v1384 = vrot.slane %v1382, 5
      %v1385 = vrot.slane %v1383, 4
      %v1386 = vsel %vm563, %v1385, %v1384
      %v1387 = vpack.c.b16 %v1386, %v1386
      %v1389 = vsel %vm384, %v1387, 0
      %1391 = vmatprep.subr.bf16.mxu0 %v369
      %1392 = vmatpush1.bf16.msra.mxu0 %v368
      %1393 = vmatprep.subr.bf16.mxu0 %v371
      %1394 = vmatpush1.bf16.msra.mxu0 %v370
      %1395 = vmatprep.subr.bf16.mxu0 %v373
      %1396 = vmatpush1.bf16.msra.mxu0 %v372
      %1397 = vmatprep.subr.bf16.mxu0 %v375
      %1398 = vmatpush1.bf16.msra.mxu0 %v374
      %1399 = vmatprep.subr.bf16.mxu0 0
      %1400 = vmatpush1.bf16.msra.mxu0 0
      %1401 = vmatprep.subr.bf16.mxu0 0
      %1402 = vmatpush1.bf16.msra.mxu0 0
      %1403 = vmatprep.subr.bf16.mxu0 0
      %1404 = vmatpush1.bf16.msra.mxu0 0
      %1405 = vmatprep.subr.bf16.mxu0 0
      %1406 = vmatpush1.bf16.msra.mxu0 0
      %1407 = vmatprep.subr.bf16.mxu0 0
      %1408 = vmatpush1.bf16.msra.mxu0 0
      %1409 = vmatprep.subr.bf16.mxu0 0
      %1410 = vmatpush1.bf16.msra.mxu0 0
      %1411 = vmatprep.subr.bf16.mxu0 0
      %1412 = vmatpush1.bf16.msra.mxu0 0
      %1413 = vmatprep.subr.bf16.mxu0 0
      %1414 = vmatpush1.bf16.msra.mxu0 0
      %1415 = vmatprep.subr.bf16.mxu0 0
      %1416 = vmatpush1.bf16.msra.mxu0 0
      %1417 = vmatprep.subr.bf16.mxu0 0
      %1418 = vmatpush1.bf16.msra.mxu0 0
      %1419 = vmatprep.subr.bf16.mxu0 0
      %1420 = vmatpush1.bf16.msra.mxu0 0
      %1421 = vmatprep.subr.bf16.mxu0 0
      %1422 = vmatpush1.bf16.msra.mxu0 0
      %1423 = vmatprep.mubr.bf16.mxu0 0
      %1424 = vmatmul.mubr.bf16.gmra.mrb[0].mxu0 %v1389
      %v1425 = vpop.f32.mrb[0].mxu0
      %v1426 = vadd.f32 0.0, %v1425
      %v1427 = vpop.f32.mrb[0].mxu0
      %v1428 = vadd.f32 0.0, %v1427
      %v1429 = vpop.f32.mrb[0].mxu0
      %v1430 = vpop.f32.mrb[0].mxu0
      %1431 = vdwg.mxu0
      %v1434 = vrot.slane %v1426, 2
      %v1435 = vrot.slane %v1428, 2
      %v1436 = vrot.slane %v1426, 3
      %v1437 = vrot.slane %v1428, 3
      %v1442 = vadd.f32 %v339, %v1434
      %v1443 = vadd.f32 %v340, %v1435
      %v1444 = vadd.f32 %v341, %v1436
      %v1445 = vadd.f32 %v342, %v1437
      %v1446 = vsub.f32 0.0, %v1442
      %v1447 = vsub.f32 0.0, %v1443
      %v1448 = vsub.f32 0.0, %v1444
      %v1449 = vsub.f32 0.0, %v1445
      %v1450 = vmul.f32 %v1446, 1.442695
      %v1451 = vpow.pop %v1450
      %v1452 = vmul.f32 %v1447, 1.442695
      %v1453 = vpow.pop %v1452
      %v1454 = vmul.f32 %v1448, 1.442695
      %v1455 = vpow.pop %v1454
      %v1456 = vmul.f32 %v1449, 1.442695
      %v1457 = vpow.pop %v1456
      %v1458 = vadd.f32 %v1451, 1.0
      %v1459 = vadd.f32 %v1453, 1.0
      %v1460 = vadd.f32 %v1455, 1.0
      %v1461 = vadd.f32 %v1457, 1.0
      %v1462 = vrcp.pop %v1458
      %v1463 = vrcp.pop %v1459
      %v1464 = vrcp.pop %v1460
      %v1465 = vrcp.pop %v1461
      %v1466 = vtanh.pop %v1443
      %v1467 = vtanh.pop %v1445
      %v1470 = vrot.slane %v1361, 7
      %v1471 = vrot.slane %v1362, 7
      %v1474 = vmul.f32 %v1462, %v1470
      %v1475 = vmul.f32 %v1464, %v1471
      %1478 = vrot.lane.b32.xlu0 %v1466, 64
      %v1479 = vpop.permute.xlu0 %1478
      %1480 = vrot.lane.b32.xlu0 %v1467, 64
      %v1481 = vpop.permute.xlu0 %1480
      %v1484 = vmul.f32 %v1462, %v1479
      %v1485 = vmul.f32 %v1464, %v1481
      %1488 = vrot.lane.b32.xlu0 %v1484, 64
      %v1489 = vpop.permute.xlu0 %1488
      %1490 = vrot.lane.b32.xlu0 %v1485, 64
      %v1491 = vpop.permute.xlu0 %1490
      %v1494 = vadd.f32 %v1474, %v1489
      %v1495 = vadd.f32 %v1475, %v1491
      %v1496 = vtanh.pop %v1494
      %v1497 = vtanh.pop %v1495
      %1500 = vrot.lane.b32.xlu0 %v1496, 64
      %v1501 = vpop.permute.xlu0 %1500
      %1502 = vrot.lane.b32.xlu0 %v1497, 64
      %v1503 = vpop.permute.xlu0 %1502
      %v1506 = vmul.f32 %v1463, %v1501
      %v1507 = vmul.f32 %v1465, %v1503
      %v1508 = vmul.f32 %v508, %v1494
      %v1509 = vmul.f32 %v513, %v1495
      %1510 = vrot.lane.b32.xlu0 %v1470, 64
      %v1511 = vpop.permute.xlu0 %1510
      %1512 = vrot.lane.b32.xlu0 %v1471, 64
      %v1513 = vpop.permute.xlu0 %1512
      %v1516 = vmul.f32 %v522, %v1511
      %v1517 = vmul.f32 %v527, %v1513
      %1520 = vrot.lane.b32.xlu0 %v1516, 64
      %v1521 = vpop.permute.xlu0 %1520
      %1522 = vrot.lane.b32.xlu0 %v1517, 64
      %v1523 = vpop.permute.xlu0 %1522
      %v1526 = vadd.f32 %v1508, %v1521
      %v1527 = vadd.f32 %v1509, %v1523
      %v1528 = vmul.f32 %v508, %v1506
      %v1529 = vmul.f32 %v513, %v1507
      %v1532 = vrot.slane %v1373, 7
      %v1533 = vrot.slane %v1374, 7
      %v1536 = vmul.f32 %v522, %v1532
      %v1537 = vmul.f32 %v527, %v1533
      %v1538 = vadd.f32 %v1528, %v1536
      %v1539 = vadd.f32 %v1529, %v1537
      %vm1540 = vcmask 522246
      %1541 = vst.msk [vmem:[%s308] sm:$0x40] %vm1540, %v1528
      %1542 = vst.msk [vmem:[%s308 + $0x8] sm:$0x40] %vm1540, %v1529
      %v1543 = vpack.c.bf16 %v1538, %v1538
      %v1544 = vpack.c.bf16 %v1539, %v1539
      %v1547 = vunpack.c.l.b16 %v1543
      %v1548 = vunpack.c.l.b16 %v1544
      %v1549 = vrot.slane %v1547, 6
      %v1550 = vrot.slane %v1548, 5
      %v1551 = vsel %vm563, %v1550, %v1549
      %v1552 = vpack.c.b16 %v1551, %v1551
      %v1554 = vsel %vm384, %v1552, 0
      %1556 = vmatprep.subr.bf16.mxu0 %v369
      %1557 = vmatpush1.bf16.msra.mxu0 %v368
      %1558 = vmatprep.subr.bf16.mxu0 %v371
      %1559 = vmatpush1.bf16.msra.mxu0 %v370
      %1560 = vmatprep.subr.bf16.mxu0 %v373
      %1561 = vmatpush1.bf16.msra.mxu0 %v372
      %1562 = vmatprep.subr.bf16.mxu0 %v375
      %1563 = vmatpush1.bf16.msra.mxu0 %v374
      %1564 = vmatprep.subr.bf16.mxu0 0
      %1565 = vmatpush1.bf16.msra.mxu0 0
      %1566 = vmatprep.subr.bf16.mxu0 0
      %1567 = vmatpush1.bf16.msra.mxu0 0
      %1568 = vmatprep.subr.bf16.mxu0 0
      %1569 = vmatpush1.bf16.msra.mxu0 0
      %1570 = vmatprep.subr.bf16.mxu0 0
      %1571 = vmatpush1.bf16.msra.mxu0 0
      %1572 = vmatprep.subr.bf16.mxu0 0
      %1573 = vmatpush1.bf16.msra.mxu0 0
      %1574 = vmatprep.subr.bf16.mxu0 0
      %1575 = vmatpush1.bf16.msra.mxu0 0
      %1576 = vmatprep.subr.bf16.mxu0 0
      %1577 = vmatpush1.bf16.msra.mxu0 0
      %1578 = vmatprep.subr.bf16.mxu0 0
      %1579 = vmatpush1.bf16.msra.mxu0 0
      %1580 = vmatprep.subr.bf16.mxu0 0
      %1581 = vmatpush1.bf16.msra.mxu0 0
      %1582 = vmatprep.subr.bf16.mxu0 0
      %1583 = vmatpush1.bf16.msra.mxu0 0
      %1584 = vmatprep.subr.bf16.mxu0 0
      %1585 = vmatpush1.bf16.msra.mxu0 0
      %1586 = vmatprep.subr.bf16.mxu0 0
      %1587 = vmatpush1.bf16.msra.mxu0 0
      %1588 = vmatprep.mubr.bf16.mxu0 0
      %1589 = vmatmul.mubr.bf16.gmra.mrb[0].mxu0 %v1554
      %v1590 = vpop.f32.mrb[0].mxu0
      %v1591 = vadd.f32 0.0, %v1590
      %v1592 = vpop.f32.mrb[0].mxu0
      %v1593 = vadd.f32 0.0, %v1592
      %v1594 = vpop.f32.mrb[0].mxu0
      %v1595 = vpop.f32.mrb[0].mxu0
      %1596 = vdwg.mxu0
      %v1599 = vrot.slane %v1591, 1
      %v1600 = vrot.slane %v1593, 1
      %v1601 = vrot.slane %v1591, 2
      %v1602 = vrot.slane %v1593, 2
      %v1607 = vadd.f32 %v339, %v1599
      %v1608 = vadd.f32 %v340, %v1600
      %v1609 = vadd.f32 %v341, %v1601
      %v1610 = vadd.f32 %v342, %v1602
      %v1611 = vsub.f32 0.0, %v1607
      %v1612 = vsub.f32 0.0, %v1608
      %v1613 = vsub.f32 0.0, %v1609
      %v1614 = vsub.f32 0.0, %v1610
      %v1615 = vmul.f32 %v1611, 1.442695
      %v1616 = vpow.pop %v1615
      %v1617 = vmul.f32 %v1612, 1.442695
      %v1618 = vpow.pop %v1617
      %v1619 = vmul.f32 %v1613, 1.442695
      %v1620 = vpow.pop %v1619
      %v1621 = vmul.f32 %v1614, 1.442695
      %v1622 = vpow.pop %v1621
      %v1623 = vadd.f32 %v1616, 1.0
      %v1624 = vadd.f32 %v1618, 1.0
      %v1625 = vadd.f32 %v1620, 1.0
      %v1626 = vadd.f32 %v1622, 1.0
      %v1627 = vrcp.pop %v1623
      %v1628 = vrcp.pop %v1624
      %v1629 = vrcp.pop %v1625
      %v1630 = vrcp.pop %v1626
      %v1631 = vtanh.pop %v1608
      %v1632 = vtanh.pop %v1610
      %v1635 = vrot.slane %v1526, 7
      %v1636 = vrot.slane %v1527, 7
      %v1639 = vmul.f32 %v1627, %v1635
      %v1640 = vmul.f32 %v1629, %v1636
      %1643 = vrot.lane.b32.xlu0 %v1631, 64
      %v1644 = vpop.permute.xlu0 %1643
      %1645 = vrot.lane.b32.xlu0 %v1632, 64
      %v1646 = vpop.permute.xlu0 %1645
      %v1649 = vmul.f32 %v1627, %v1644
      %v1650 = vmul.f32 %v1629, %v1646
      %1653 = vrot.lane.b32.xlu0 %v1649, 64
      %v1654 = vpop.permute.xlu0 %1653
      %1655 = vrot.lane.b32.xlu0 %v1650, 64
      %v1656 = vpop.permute.xlu0 %1655
      %v1659 = vadd.f32 %v1639, %v1654
      %v1660 = vadd.f32 %v1640, %v1656
      %v1661 = vtanh.pop %v1659
      %v1662 = vtanh.pop %v1660
      %1665 = vrot.lane.b32.xlu0 %v1661, 64
      %v1666 = vpop.permute.xlu0 %1665
      %1667 = vrot.lane.b32.xlu0 %v1662, 64
      %v1668 = vpop.permute.xlu0 %1667
      %v1671 = vmul.f32 %v1628, %v1666
      %v1672 = vmul.f32 %v1630, %v1668
      %v1673 = vmul.f32 %v508, %v1659
      %v1674 = vmul.f32 %v513, %v1660
      %1675 = vrot.lane.b32.xlu0 %v1635, 64
      %v1676 = vpop.permute.xlu0 %1675
      %1677 = vrot.lane.b32.xlu0 %v1636, 64
      %v1678 = vpop.permute.xlu0 %1677
      %v1681 = vmul.f32 %v522, %v1676
      %v1682 = vmul.f32 %v527, %v1678
      %1685 = vrot.lane.b32.xlu0 %v1681, 64
      %v1686 = vpop.permute.xlu0 %1685
      %1687 = vrot.lane.b32.xlu0 %v1682, 64
      %v1688 = vpop.permute.xlu0 %1687
      %v1691 = vadd.f32 %v1673, %v1686
      %v1692 = vadd.f32 %v1674, %v1688
      %v1693 = vmul.f32 %v508, %v1671
      %v1694 = vmul.f32 %v513, %v1672
      %v1697 = vrot.slane %v1538, 7
      %v1698 = vrot.slane %v1539, 7
      %v1701 = vmul.f32 %v522, %v1697
      %v1702 = vmul.f32 %v527, %v1698
      %v1703 = vadd.f32 %v1693, %v1701
      %v1704 = vadd.f32 %v1694, %v1702
      %vm1705 = vcmask 523271
      %1706 = vst.msk [vmem:[%s308] sm:$0x80] %vm1705, %v1693
      %1707 = vst.msk [vmem:[%s308 + $0x8] sm:$0x80] %vm1705, %v1694
      %v1710 = vrot.slane %v1704, 7
      %1713 = vst.msk [vmem:[#allocation2 - $0x7] sm:$0x80] %vm1705, %v1703
      %1714 = vst.msk [vmem:[#allocation2 + $0x1] sm:$0x1] %vm553, %v1710
      %v1717 = vrot.slane %v1692, 7
      %1718 = vrot.lane.b32.xlu0 %v1691, 64
      %v1719 = vpop.permute.xlu0 %1718
      %1720 = vrot.lane.b32.xlu0 %v1717, 64
      %v1721 = vpop.permute.xlu0 %1720
      %1724 = vst.msk [vmem:[#allocation3 - $0x7] sm:$0x80] %vm1705, %v1719
      %1725 = vst.msk [vmem:[#allocation3 + $0x1] sm:$0x1] %vm553, %v1721
      // Predicated region
      $region37: #{encoder_lstm_forward.23} parent=31 // pred_check
        %p1726 = pneg %p318
      $region38: #{encoder_lstm_forward.23} parent=31 // pred_check_branch
        %1728 = sbr.rel (%p1726) target = $region40
      $region39: #{encoder_lstm_forward.23} parent=31 // pred_region
        %1729 = vst.msk [vmem:[%s312 - $0x7] sm:$0x80] %vm1705, %v1703
        %1730 = vst.msk [vmem:[%s312 + $0x1] sm:$0x1] %vm553, %v1710
        %1731 = vst.msk [vmem:[%s316 - $0x7] sm:$0x80] %vm1705, %v1719
        %1732 = vst.msk [vmem:[%s316 + $0x1] sm:$0x1] %vm553, %v1721
      $region40: #{encoder_lstm_forward.23} parent=31 // pred_fallthru
        _
      %p1733 = scmp.lt.s32.totalorder %s21, 1
      %s1734 = scalar_select %p1733, %s21, 1
      %p1735 = scmp.lt.s32.totalorder %s22, 0
      %s1736 = scalar_select %p1735, %s22, 0
      %s1737 = smul.addr %s1734, 2
      %s1738 = sadd.s32 %s1736, %s1737
      %s1739 = smul.addr %s1738, 8
      %s1740 = scalar_lea.vmem %s3, %s1739
      %p1741 = scmp.lt.s32.totalorder %s21, 1
      %s1742 = scalar_select %p1741, %s21, 1
      %s1743 = smul.addr %s1742, 2
      %s1744 = scalar_lea.vmem %s4, %s1743
      %p1745 = scmp.lt.s32.totalorder %s21, 1
      %s1746 = scalar_select %p1745, %s21, 1
      %s1747 = smul.addr %s1746, 2
      %s1748 = scalar_lea.vmem %s5, %s1747
      // Predicated region
      $region41: #{encoder_lstm_forward.23} parent=31 // pred_check
        %p1749 = pneg %p129
      $region42: #{encoder_lstm_forward.23} parent=31 // pred_check_branch
        %1751 = sbr.rel (%p1749) target = $region44
      $region43: #{encoder_lstm_forward.23} parent=31 // pred_region
        _
      $region44: #{encoder_lstm_forward.23} parent=31 // pred_fallthru
        _
      // Predicated region
      $region45: #{encoder_lstm_forward.23} parent=31 // pred_check
        %p1752 = pneg %p155
      $region46: #{encoder_lstm_forward.23} parent=31 // pred_check_branch
        %1754 = sbr.rel (%p1752) target = $region48
      $region47: #{encoder_lstm_forward.23} parent=31 // pred_region
        _
      $region48: #{encoder_lstm_forward.23} parent=31 // pred_fallthru
        _
      // Predicated region
      $region49: #{encoder_lstm_forward.23} parent=31 // pred_check
        %p1755 = pneg %p181
      $region50: #{encoder_lstm_forward.23} parent=31 // pred_check_branch
        %1757 = sbr.rel (%p1755) target = $region52
      $region51: #{encoder_lstm_forward.23} parent=31 // pred_region
        _
      $region52: #{encoder_lstm_forward.23} parent=31 // pred_fallthru
        _
    $region32: #{encoder_lstm_forward.23} parent=5 // pred_fallthru
      _
    %p1758 = scmp.le.s32.totalorder 2, %s12
    // Predicated region
    $region53: #{encoder_lstm_forward.23} parent=5 // pred_check
      %p1759 = pneg %p1758
    $region54: #{encoder_lstm_forward.23} parent=5 // pred_check_branch
      %1761 = sbr.rel (%p1759) target = $region56
    $region55: #{encoder_lstm_forward.23} parent=5 // pred_region
      %s1762 = ssub.s32 %s12, 2
      // Predicated region
      $region57: #{encoder_lstm_forward.23} parent=55 // pred_check
        %p1763 = pneg %p135
      $region58: #{encoder_lstm_forward.23} parent=55 // pred_check_branch
        %1765 = sbr.rel (%p1763) target = $region60
      $region59: #{encoder_lstm_forward.23} parent=55 // pred_region
        %p1766 = scmp.lt.s32.totalorder %s23, 1
        %s1767 = scalar_select %p1766, %s23, 1
        %p1768 = scmp.lt.s32.totalorder %s24, 0
        %s1769 = scalar_select %p1768, %s24, 0
        %s1770 = smul.addr %s1767, 2
        %s1771 = sadd.s32 %s1769, %s1770
        %s1772 = smul.addr %s1771, 8
        %s1773 = scalar_lea.vmem %s3, %s1772
      $region60: #{encoder_lstm_forward.23} parent=55 // pred_fallthru
        _
      // Predicated region
      $region61: #{encoder_lstm_forward.23} parent=55 // pred_check
        %p1774 = pneg %p161
      $region62: #{encoder_lstm_forward.23} parent=55 // pred_check_branch
        %1776 = sbr.rel (%p1774) target = $region64
      $region63: #{encoder_lstm_forward.23} parent=55 // pred_region
        %p1777 = scmp.lt.s32.totalorder %s23, 1
        %s1778 = scalar_select %p1777, %s23, 1
        %s1779 = smul.addr %s1778, 2
        %s1780 = scalar_lea.vmem %s4, %s1779
      $region64: #{encoder_lstm_forward.23} parent=55 // pred_fallthru
        _
      // Predicated region
      $region65: #{encoder_lstm_forward.23} parent=55 // pred_check
        %p1781 = pneg %p187
      $region66: #{encoder_lstm_forward.23} parent=55 // pred_check_branch
        %1783 = sbr.rel (%p1781) target = $region68
      $region67: #{encoder_lstm_forward.23} parent=55 // pred_region
        %p1784 = scmp.lt.s32.totalorder %s23, 1
        %s1785 = scalar_select %p1784, %s23, 1
        %s1786 = smul.addr %s1785, 2
        %s1787 = scalar_lea.vmem %s5, %s1786
      $region68: #{encoder_lstm_forward.23} parent=55 // pred_fallthru
        _
    $region56: #{encoder_lstm_forward.23} parent=5 // pred_fallthru
      _
  $region6: #{encoder_lstm_forward.23} parent=0 // loop_footer
    %s16 = sadd.s32 1, %s12
  $region7: #{encoder_lstm_forward.23} parent=0 // loop_footer_branch
    %11 = sbr.rel target = $region3
  $region8: #{encoder_lstm_forward.23} parent=0 // loop_exit
    _

</llo_original>
